<compile_context>
chip_gen: v6e
topology: v6e:2x2x1
jax: 0.10.0
libtpu: 0.0.40
codegen_flags: <defaults>
</compile_context>

<pallas_src>
import math
from functools import partial

import jax
import jax.numpy as jnp
from jax import lax
from jax.experimental import pallas as pl
from jax.experimental.pallas import tpu as pltpu  # noqa: F401  (TPU backend)

# ----------------------------- config ---------------------------------------
HIDDEN = 64
NUM_HEADS = 4
HEAD = HIDDEN // NUM_HEADS
EPS = 1e-7
BUCKET = 8              # position_bucket_size
MAX_POS = 64            # max_position_embeddings
N_REL = 2 * BUCKET - 1  # number of relative-position buckets
NEG_INF = -1e30


# ----------------------------- fused kernel ---------------------------------
def _fused_attention_kernel(q_ref, kv_ref, mask_ref, rel_ref,
                            w_qkv_ref, b_qkv_ref, wo_ref, bo_ref,
                            ln_g_ref, ln_b_ref, c2p_ref, p2c_ref, o_ref,
                            *, B, Lq, Lk, nh, hd, R, scale, eps):
    H = nh * hd
    f32 = jnp.float32

    def _ln(x):  # LayerNorm over the last dim, no affine
        m = jnp.mean(x, axis=-1, keepdims=True)
        v = jnp.mean((x - m) ** 2, axis=-1, keepdims=True)
        return (x - m) * lax.rsqrt(v + eps)

    # ---- [L, B*H] -> [B*L, H] batch-major rows (leading-dim transpose only)
    qf = q_ref[...].astype(f32).reshape(Lq, B, H).transpose(1, 0, 2).reshape(B * Lq, H)
    kvf = kv_ref[...].astype(f32).reshape(Lk, B, H).transpose(1, 0, 2).reshape(B * Lk, H)

    # ---- pre-LayerNorm (no affine) of all q/kv rows, then ONE fused QKV
    #      projection over q rows + kv rows + (un-normalized) relative rows.
    xn = _ln(jnp.concatenate([qf, kvf], axis=0))                        # [B*(Lq+Lk), H]
    x_all = jnp.concatenate([xn, rel_ref[...].astype(f32)], axis=0)     # [B*(Lq+Lk)+R, H]
    proj = (jnp.dot(x_all, w_qkv_ref[...], preferred_element_type=f32)
            + b_qkv_ref[...])                                           # [., 3H]

    nq, nk = B * Lq, B * Lk
    query = proj[:nq, 0:H]                     # [B*Lq, H]
    key = proj[nq:nq + nk, H:2 * H]            # [B*Lk, H]
    value = proj[nq:nq + nk, 2 * H:3 * H]      # [B*Lk, H]
    query_pos = proj[nq + nk:, 0:H]            # [R, H]  (dropout = identity, eval)
    key_pos = proj[nq + nk:, H:2 * H]          # [R, H]

    # ---- head-major batched layout [nh*B, L, hd] (batch index = h*B + b so
    #      every transpose below is a rank-3 leading-dim swap).
    def heads(x, L):
        return x.reshape(B * L, nh, hd).transpose(1, 0, 2).reshape(nh * B, L, hd)

    def pos_heads(x):  # [R, H] -> [nh*B, R, hd], replicated over the batch
        xh = x.reshape(R, nh, hd).transpose(1, 0, 2)                    # [nh, R, hd]
        return jnp.broadcast_to(xh[:, None], (nh, B, R, hd)).reshape(nh * B, R, hd)

    q_h, k_h, v_h = heads(query, Lq), heads(key, Lk), heads(value, Lk)
    qp_h, kp_h = pos_heads(query_pos), pos_heads(key_pos)

    # ---- all-heads batched MXU dots ('bqd,bkd->bqk' pattern, batch leading)
    dn = (((2,), (2,)), ((0,), (0,)))
    cc = lax.dot_general(q_h, k_h, dn, preferred_element_type=f32)      # [nh*B, Lq, Lk]
    cp = lax.dot_general(q_h, kp_h, dn, preferred_element_type=f32)     # [nh*B, Lq, R]
    pc = lax.dot_general(k_h, qp_h, dn, preferred_element_type=f32)     # [nh*B, Lk, R]

    # ---- relative-position "gather" as two lane-dense MXU matmuls against
    #      constant scatter matrices (replaces the one-hot VALU/XLU reduce).
    bias_c2p = jnp.dot(cp.reshape(nh * B, Lq * R), c2p_ref[...],
                       preferred_element_type=f32).reshape(nh * B, Lq, Lk)
    bias_p2c = jnp.dot(pc.reshape(nh * B, Lk * R), p2c_ref[...],
                       preferred_element_type=f32).reshape(nh * B, Lq, Lk)

    # ---- masked softmax over keys, once for every (head, batch) pair
    madd = mask_ref[...]                                                # 0 / -1e30
    s = (cc + bias_c2p + bias_p2c) * scale + madd
    s = s - jnp.max(s, axis=-1, keepdims=True)
    p = jnp.exp(s)
    probs = p / jnp.sum(p, axis=-1, keepdims=True)   # exact divide (parity with ref)
    probs = jnp.where(madd < -0.5, 0.0, probs)       # MaskedSoftmax zero-fill

    # ---- context, output projection, post-LayerNorm (affine)
    ctx = lax.dot_general(probs, v_h, (((2,), (1,)), ((0,), (0,))),
                          preferred_element_type=f32)                   # [nh*B, Lq, hd]
    ctx2d = ctx.reshape(nh, B * Lq, hd).transpose(1, 0, 2).reshape(B * Lq, H)
    out = jnp.dot(ctx2d, wo_ref[...], preferred_element_type=f32) + bo_ref[...]
    y = _ln(out) * ln_g_ref[...] + ln_b_ref[...]                        # [B*Lq, H]

    # ---- lane-dense [Lq, B*H] output slab; wrapper reshape to [Lq, B, H] is free
    o_ref[...] = y.reshape(B, Lq, H).transpose(1, 0, 2).reshape(Lq, B * H).astype(o_ref.dtype)


# ----------------------------- relative position glue ------------------------
def make_log_bucket_position(relative_pos, bucket_size, max_position):
    sign = jnp.sign(relative_pos)
    mid = bucket_size // 2
    abs_pos = jnp.where(
        (relative_pos < mid) & (relative_pos > -mid), mid - 1, jnp.abs(relative_pos)
    )
    log_pos = (
        jnp.ceil(
            jnp.log(abs_pos.astype(jnp.float32) / mid)
            / math.log((max_position - 1) / mid)
            * (mid - 1)
        ).astype(jnp.int32)
        + mid
    )
    bucket_pos = jnp.where(abs_pos <= mid, relative_pos, log_pos * sign)
    return bucket_pos.astype(jnp.int32)


def build_position_indices():
    rng = jnp.arange(MAX_POS, dtype=jnp.int32)
    rel = rng[:, None] - rng[None, :]
    bucket = make_log_bucket_position(rel, BUCKET, MAX_POS)
    return BUCKET - 1 + bucket  # values in [0, 2*BUCKET-2]


# ----------------------------- module forward --------------------------------
def attention_forward(params, q, kv, attention_mask, relative_embedding):
    """q: [Lq, B, H], kv: [Lk, B, H], attention_mask broadcastable to
    [B, num_heads, Lq, Lk] (True = masked). Returns [Lq, B, H]."""
    Lq, B, H = q.shape
    Lk = kv.shape[0]
    nh, hd, R = NUM_HEADS, HEAD, N_REL
    scale = 1.0 / math.sqrt(3 * hd)

    # lane-dense 2-D input slabs [L, B*H] (plain reshapes, no XLA transposes)
    q2 = q.reshape(Lq, B * H)
    kv2 = kv.reshape(Lk, B * H)

    # additive mask (0 / -1e30) in the kernel's head-major batch order
    mask_b = jnp.broadcast_to(jnp.asarray(attention_mask, dtype=bool), (B, nh, Lq, Lk))
    madd = jnp.where(mask_b, jnp.float32(NEG_INF), jnp.float32(0.0))
    madd = jnp.transpose(madd, (1, 0, 2, 3)).reshape(nh * B, Lq, Lk)

    # constant scatter matrices: turn the per-head [L, R] relative-score tables
    # into [Lq, Lk] biases with one MXU matmul each (no R-wide lane axis in VMEM)
    pos_idx = params["position_indices"][:Lq, :Lk]                      # [Lq, Lk] in [0, R)
    qi = jnp.arange(Lq, dtype=jnp.int32)
    ki = jnp.arange(Lk, dtype=jnp.int32)
    ri = jnp.arange(R, dtype=jnp.int32)
    hit = ri[None, :, None, None] == pos_idx[None, None, :, :]          # [1, R, Lq, Lk]
    c2p_scatter = ((qi[:, None, None, None] == qi[None, None, :, None]) & hit
                   ).astype(jnp.float32).reshape(Lq * R, Lq * Lk)
    p2c_scatter = ((ki[:, None, None, None] == ki[None, None, None, :]) & hit
                   ).astype(jnp.float32).reshape(Lk * R, Lq * Lk)

    # fused QKV weight / bias slabs
    w_qkv = jnp.concatenate([params["wq"], params["wk"], params["wv"]], axis=1)
    b_qkv = jnp.concatenate([params["bq"], params["bk"], params["bv"]], axis=1)

    kern = partial(_fused_attention_kernel, B=B, Lq=Lq, Lk=Lk, nh=nh, hd=hd, R=R,
                   scale=scale, eps=EPS)

    # single invocation, no grid: every operand lives whole in VMEM (defaults);
    # total resident footprint is < 1 MiB on every TPU generation.
    # (On v7x one could re-introduce grid=(B,) + dimension_semantics=("parallel",)
    #  to shard batches across the two TensorCores.)
    out2 = pl.pallas_call(
        kern,
        out_shape=jax.ShapeDtypeStruct((Lq, B * H), jnp.float32),
    )(q2, kv2, madd, relative_embedding, w_qkv, b_qkv,
      params["wo"], params["bo"], params["ln_g"], params["ln_b"],
      c2p_scatter, p2c_scatter)

    return out2.reshape(Lq, B, H)   # [Lq, B, H]


# ----------------------------- pure-JAX reference (validation) ---------------
def attention_reference(params, q, kv, attention_mask, relative_embedding):
    Lq, B, H = q.shape
    Lk = kv.shape[0]
    nh, hd = NUM_HEADS, HEAD
    scale = 1.0 / math.sqrt(3 * hd)
    hi = "highest"

    def ln(x):
        m = jnp.mean(x, axis=-1, keepdims=True)
        v = jnp.mean((x - m) ** 2, axis=-1, keepdims=True)
        return (x - m) / jnp.sqrt(v + EPS)

    qn, kvn = ln(q), ln(kv)
    query = jnp.dot(qn, params["wq"], precision=hi) + params["bq"]
    key = jnp.dot(kvn, params["wk"], precision=hi) + params["bk"]
    value = jnp.dot(kvn, params["wv"], precision=hi) + params["bv"]
    query_pos = jnp.dot(relative_embedding, params["wq"], precision=hi) + params["bq"]
    key_pos = jnp.dot(relative_embedding, params["wk"], precision=hi) + params["bk"]

    pos_idx = params["position_indices"][:Lq, :Lk]
    qp_g = query_pos[pos_idx].reshape(Lq, Lk, nh, hd)
    kp_g = key_pos[pos_idx].reshape(Lq, Lk, nh, hd)

    q4 = query.reshape(Lq, B, nh, hd).transpose(1, 2, 0, 3)             # [B, nh, Lq, hd]
    k4 = key.reshape(Lk, B, nh, hd).transpose(1, 2, 0, 3)
    v4 = value.reshape(Lk, B, nh, hd).transpose(1, 2, 0, 3)

    scores = jnp.einsum("bhqd,bhkd->bhqk", q4, k4, precision=hi) * scale
    scores = scores + jnp.einsum("bhqd,qkhd->bhqk", q4, kp_g, precision=hi) * scale
    scores = scores + jnp.einsum("bhkd,qkhd->bhqk", k4, qp_g, precision=hi) * scale

    mask = jnp.broadcast_to(jnp.asarray(attention_mask, dtype=bool), (B, nh, Lq, Lk))
    scores = jnp.where(mask, -jnp.inf, scores)
    probs = jax.nn.softmax(scores, axis=-1)
    probs = jnp.where(mask, 0.0, probs)

    ctx = jnp.einsum("bhqk,bhkd->bhqd", probs, v4, precision=hi)
    ctx = ctx.transpose(2, 0, 1, 3).reshape(Lq, B, H)
    out = jnp.dot(ctx, params["wo"], precision=hi) + params["bo"]
    return ln(out) * params["ln_g"] + params["ln_b"]


# ----------------------------- parameter init --------------------------------
def trunc_normal(key, shape, std):
    return std * jax.random.truncated_normal(key, -2.0, 2.0, shape, jnp.float32)


def init_attention_params(key):
    std = math.sqrt(2.0 / (5.0 * HIDDEN))
    ks = jax.random.split(key, 4)
    return {
        "wq": trunc_normal(ks[0], (HIDDEN, HIDDEN), std),
        "wk": trunc_normal(ks[1], (HIDDEN, HIDDEN), std),
        "wv": trunc_normal(ks[2], (HIDDEN, HIDDEN), std),
        "wo": trunc_normal(ks[3], (HIDDEN, HIDDEN), std),
        "bq": jnp.zeros((1, HIDDEN), jnp.float32),
        "bk": jnp.zeros((1, HIDDEN), jnp.float32),
        "bv": jnp.zeros((1, HIDDEN), jnp.float32),
        "bo": jnp.zeros((1, HIDDEN), jnp.float32),
        "ln_g": jnp.ones((1, HIDDEN), jnp.float32),
        "ln_b": jnp.zeros((1, HIDDEN), jnp.float32),
        "position_indices": build_position_indices(),
    }


# ----------------------------- main ------------------------------------------
if __name__ == "__main__":
    key = jax.random.PRNGKey(0)
    kparam, kq, kkv, krel = jax.random.split(key, 4)

    B = 2          # batch
    Lq = 16        # query sequence length
    Lk = 16        # key/value sequence length

    params = init_attention_params(kparam)

    q = jax.random.normal(kq, (Lq, B, HIDDEN), jnp.float32)
    kv = jax.random.normal(kkv, (Lk, B, HIDDEN), jnp.float32)

    # attention_mask (True = masked): causal + padding (last 3 keys of batch 1)
    causal = jnp.triu(jnp.ones((Lq, Lk), bool), 1)
    padding = jnp.zeros((B, 1, 1, Lk), bool).at[1, :, :, Lk - 3:].set(True)
    attention_mask = causal[None, None, :, :] | padding               # [B, 1, Lq, Lk]

    relative_embedding = jax.random.normal(krel, (N_REL, HIDDEN), jnp.float32)

    out = jax.jit(attention_forward)(params, q, kv, attention_mask, relative_embedding)
    out = jax.block_until_ready(out)

    assert out.shape == (Lq, B, HIDDEN)
    assert bool(jnp.all(jnp.isfinite(out)))

    # validate against a pure-JAX (XLA) mirror of the PyTorch module
    ref = attention_reference(params, q, kv, attention_mask, relative_embedding)
    max_diff = float(jnp.max(jnp.abs(out - ref)))
    assert max_diff < 5e-2, f"kernel mismatch vs reference: max|diff| = {max_diff}"

    print("KERNEL_OK")
</pallas_src>

<mosaic_0001>
module attributes {stable_mosaic.version = 11 : i64} {
  func.func @_fused_attention_kernel(%arg0: memref<16x128xf32, #tpu.memory_space<vmem>>, %arg1: memref<16x128xf32, #tpu.memory_space<vmem>>, %arg2: memref<8x16x16xf32, #tpu.memory_space<vmem>>, %arg3: memref<15x64xf32, #tpu.memory_space<vmem>>, %arg4: memref<64x192xf32, #tpu.memory_space<vmem>>, %arg5: memref<1x192xf32, #tpu.memory_space<vmem>>, %arg6: memref<64x64xf32, #tpu.memory_space<vmem>>, %arg7: memref<1x64xf32, #tpu.memory_space<vmem>>, %arg8: memref<1x64xf32, #tpu.memory_space<vmem>>, %arg9: memref<1x64xf32, #tpu.memory_space<vmem>>, %arg10: memref<240x256xf32, #tpu.memory_space<vmem>>, %arg11: memref<240x256xf32, #tpu.memory_space<vmem>>, %arg12: memref<16x128xf32, #tpu.memory_space<vmem>>) attributes {dimension_semantics = [], scalar_prefetch = 0 : i64, scratch_operands = 0 : i64, tpu.core_type = #tpu.core_type<tc>} {
    %c0 = arith.constant 0 : index
    %c0_0 = arith.constant 0 : index
    %0 = vector.load %arg0[%c0, %c0_0] : memref<16x128xf32, #tpu.memory_space<vmem>>, vector<16x128xf32>
    %1 = vector.shape_cast %0 : vector<16x128xf32> to vector<16x2x64xf32>
    %2 = tpu.transpose %1, [1, 0, 2] : vector<16x2x64xf32> -> vector<2x16x64xf32>
    %3 = vector.shape_cast %2 : vector<2x16x64xf32> to vector<32x64xf32>
    %c0_1 = arith.constant 0 : index
    %c0_2 = arith.constant 0 : index
    %4 = vector.load %arg1[%c0_1, %c0_2] : memref<16x128xf32, #tpu.memory_space<vmem>>, vector<16x128xf32>
    %5 = vector.shape_cast %4 : vector<16x128xf32> to vector<16x2x64xf32>
    %6 = tpu.transpose %5, [1, 0, 2] : vector<16x2x64xf32> -> vector<2x16x64xf32>
    %7 = vector.shape_cast %6 : vector<2x16x64xf32> to vector<32x64xf32>
    %8 = tpu.concatenate %3, %7 in 0 : vector<32x64xf32>, vector<32x64xf32> -> vector<64x64xf32>
    %cst = arith.constant dense<0.000000e+00> : vector<64xf32>
    %9 = vector.multi_reduction <add>, %8, %cst [1] : vector<64x64xf32> to vector<64xf32>
    %10 = vector.shape_cast %9 : vector<64xf32> to vector<64x1xf32>
    %cst_3 = arith.constant 6.400000e+01 : f32
    %11 = vector.broadcast %cst_3 : f32 to vector<64x1xf32>
    %12 = arith.divf %10, %11 : vector<64x1xf32>
    %13 = vector.broadcast %12 : vector<64x1xf32> to vector<64x64xf32>
    %14 = arith.subf %8, %13 : vector<64x64xf32>
    %15 = arith.mulf %14, %14 : vector<64x64xf32>
    %cst_4 = arith.constant dense<0.000000e+00> : vector<64xf32>
    %16 = vector.multi_reduction <add>, %15, %cst_4 [1] : vector<64x64xf32> to vector<64xf32>
    %17 = vector.shape_cast %16 : vector<64xf32> to vector<64x1xf32>
    %cst_5 = arith.constant 6.400000e+01 : f32
    %18 = vector.broadcast %cst_5 : f32 to vector<64x1xf32>
    %19 = arith.divf %17, %18 : vector<64x1xf32>
    %20 = vector.broadcast %12 : vector<64x1xf32> to vector<64x64xf32>
    %21 = arith.subf %8, %20 : vector<64x64xf32>
    %cst_6 = arith.constant 1.000000e-07 : f32
    %22 = vector.broadcast %cst_6 : f32 to vector<64x1xf32>
    %23 = arith.addf %19, %22 : vector<64x1xf32>
    %24 = math.rsqrt %23 : vector<64x1xf32>
    %25 = vector.broadcast %24 : vector<64x1xf32> to vector<64x64xf32>
    %26 = arith.mulf %21, %25 : vector<64x64xf32>
    %c0_7 = arith.constant 0 : index
    %c0_8 = arith.constant 0 : index
    %27 = vector.load %arg3[%c0_7, %c0_8] : memref<15x64xf32, #tpu.memory_space<vmem>>, vector<15x64xf32>
    %28 = tpu.concatenate %26, %27 in 0 : vector<64x64xf32>, vector<15x64xf32> -> vector<79x64xf32>
    %c0_9 = arith.constant 0 : index
    %c0_10 = arith.constant 0 : index
    %29 = vector.load %arg4[%c0_9, %c0_10] : memref<64x192xf32, #tpu.memory_space<vmem>>, vector<64x192xf32>
    %cst_11 = arith.constant dense<0.000000e+00> : vector<79x192xf32>
    %30 = tpu.matmul %28, %29, %cst_11 {dimension_numbers = #tpu.dot_dimension_numbers<[1], [0], [0], [1], [0, 0, 1, 1], [], []>} : vector<79x64xf32>, vector<64x192xf32>, vector<79x192xf32> -> vector<79x192xf32>
    %c0_12 = arith.constant 0 : index
    %c0_13 = arith.constant 0 : index
    %31 = vector.load %arg5[%c0_12, %c0_13] : memref<1x192xf32, #tpu.memory_space<vmem>>, vector<1x192xf32>
    %32 = vector.broadcast %31 : vector<1x192xf32> to vector<79x192xf32>
    %33 = arith.addf %30, %32 : vector<79x192xf32>
    %34 = vector.extract_strided_slice %33 {offsets = [0, 0], sizes = [32, 64], strides = [1, 1]} : vector<79x192xf32> to vector<32x64xf32>
    %35 = vector.extract_strided_slice %33 {offsets = [32, 64], sizes = [32, 64], strides = [1, 1]} : vector<79x192xf32> to vector<32x64xf32>
    %36 = vector.extract_strided_slice %33 {offsets = [32, 128], sizes = [32, 64], strides = [1, 1]} : vector<79x192xf32> to vector<32x64xf32>
    %37 = vector.extract_strided_slice %33 {offsets = [64, 0], sizes = [15, 64], strides = [1, 1]} : vector<79x192xf32> to vector<15x64xf32>
    %38 = vector.extract_strided_slice %33 {offsets = [64, 64], sizes = [15, 64], strides = [1, 1]} : vector<79x192xf32> to vector<15x64xf32>
    %39 = vector.shape_cast %34 : vector<32x64xf32> to vector<32x4x16xf32>
    %40 = tpu.transpose %39, [1, 0, 2] : vector<32x4x16xf32> -> vector<4x32x16xf32>
    %41 = vector.shape_cast %40 : vector<4x32x16xf32> to vector<8x16x16xf32>
    %42 = vector.shape_cast %35 : vector<32x64xf32> to vector<32x4x16xf32>
    %43 = tpu.transpose %42, [1, 0, 2] : vector<32x4x16xf32> -> vector<4x32x16xf32>
    %44 = vector.shape_cast %43 : vector<4x32x16xf32> to vector<8x16x16xf32>
    %45 = vector.shape_cast %36 : vector<32x64xf32> to vector<32x4x16xf32>
    %46 = tpu.transpose %45, [1, 0, 2] : vector<32x4x16xf32> -> vector<4x32x16xf32>
    %47 = vector.shape_cast %46 : vector<4x32x16xf32> to vector<8x16x16xf32>
    %48 = vector.shape_cast %37 : vector<15x64xf32> to vector<15x4x16xf32>
    %49 = tpu.transpose %48, [1, 0, 2] : vector<15x4x16xf32> -> vector<4x15x16xf32>
    %50 = vector.shape_cast %49 : vector<4x15x16xf32> to vector<4x1x15x16xf32>
    %51 = vector.shape_cast %50 : vector<4x1x15x16xf32> to vector<4x1x15x16xf32>
    %52 = vector.broadcast %51 : vector<4x1x15x16xf32> to vector<4x2x15x16xf32>
    %53 = vector.shape_cast %52 : vector<4x2x15x16xf32> to vector<8x15x16xf32>
    %54 = vector.shape_cast %38 : vector<15x64xf32> to vector<15x4x16xf32>
    %55 = tpu.transpose %54, [1, 0, 2] : vector<15x4x16xf32> -> vector<4x15x16xf32>
    %56 = vector.shape_cast %55 : vector<4x15x16xf32> to vector<4x1x15x16xf32>
    %57 = vector.shape_cast %56 : vector<4x1x15x16xf32> to vector<4x1x15x16xf32>
    %58 = vector.broadcast %57 : vector<4x1x15x16xf32> to vector<4x2x15x16xf32>
    %59 = vector.shape_cast %58 : vector<4x2x15x16xf32> to vector<8x15x16xf32>
    %cst_14 = arith.constant dense<0.000000e+00> : vector<8x16x16xf32>
    %60 = tpu.matmul %41, %44, %cst_14 {dimension_numbers = #tpu.dot_dimension_numbers<[2], [2], [1], [1], [0, 0, 0, 1, 1, 1], [0], [0]>} : vector<8x16x16xf32>, vector<8x16x16xf32>, vector<8x16x16xf32> -> vector<8x16x16xf32>
    %cst_15 = arith.constant dense<0.000000e+00> : vector<8x16x15xf32>
    %61 = tpu.matmul %41, %59, %cst_15 {dimension_numbers = #tpu.dot_dimension_numbers<[2], [2], [1], [1], [0, 0, 0, 1, 1, 1], [0], [0]>} : vector<8x16x16xf32>, vector<8x15x16xf32>, vector<8x16x15xf32> -> vector<8x16x15xf32>
    %cst_16 = arith.constant dense<0.000000e+00> : vector<8x16x15xf32>
    %62 = tpu.matmul %44, %53, %cst_16 {dimension_numbers = #tpu.dot_dimension_numbers<[2], [2], [1], [1], [0, 0, 0, 1, 1, 1], [0], [0]>} : vector<8x16x16xf32>, vector<8x15x16xf32>, vector<8x16x15xf32> -> vector<8x16x15xf32>
    %63 = vector.shape_cast %61 : vector<8x16x15xf32> to vector<8x240xf32>
    %c0_17 = arith.constant 0 : index
    %c0_18 = arith.constant 0 : index
    %64 = vector.load %arg10[%c0_17, %c0_18] : memref<240x256xf32, #tpu.memory_space<vmem>>, vector<240x256xf32>
    %cst_19 = arith.constant dense<0.000000e+00> : vector<8x256xf32>
    %65 = tpu.matmul %63, %64, %cst_19 {dimension_numbers = #tpu.dot_dimension_numbers<[1], [0], [0], [1], [0, 0, 1, 1], [], []>} : vector<8x240xf32>, vector<240x256xf32>, vector<8x256xf32> -> vector<8x256xf32>
    %66 = vector.shape_cast %65 : vector<8x256xf32> to vector<8x16x16xf32>
    %67 = vector.shape_cast %62 : vector<8x16x15xf32> to vector<8x240xf32>
    %c0_20 = arith.constant 0 : index
    %c0_21 = arith.constant 0 : index
    %68 = vector.load %arg11[%c0_20, %c0_21] : memref<240x256xf32, #tpu.memory_space<vmem>>, vector<240x256xf32>
    %cst_22 = arith.constant dense<0.000000e+00> : vector<8x256xf32>
    %69 = tpu.matmul %67, %68, %cst_22 {dimension_numbers = #tpu.dot_dimension_numbers<[1], [0], [0], [1], [0, 0, 1, 1], [], []>} : vector<8x240xf32>, vector<240x256xf32>, vector<8x256xf32> -> vector<8x256xf32>
    %70 = vector.shape_cast %69 : vector<8x256xf32> to vector<8x16x16xf32>
    %c0_23 = arith.constant 0 : index
    %c0_24 = arith.constant 0 : index
    %c0_25 = arith.constant 0 : index
    %71 = vector.load %arg2[%c0_23, %c0_24, %c0_25] : memref<8x16x16xf32, #tpu.memory_space<vmem>>, vector<8x16x16xf32>
    %72 = arith.addf %60, %66 : vector<8x16x16xf32>
    %73 = arith.addf %72, %70 : vector<8x16x16xf32>
    %cst_26 = arith.constant 0.144337565 : f32
    %74 = vector.broadcast %cst_26 : f32 to vector<8x16x16xf32>
    %75 = arith.mulf %73, %74 : vector<8x16x16xf32>
    %76 = arith.addf %75, %71 : vector<8x16x16xf32>
    %cst_27 = arith.constant dense<0xFF800000> : vector<8x16xf32>
    %77 = vector.multi_reduction <maximumf>, %76, %cst_27 [2] : vector<8x16x16xf32> to vector<8x16xf32>
    %78 = vector.shape_cast %77 : vector<8x16xf32> to vector<8x16x1xf32>
    %79 = vector.broadcast %78 : vector<8x16x1xf32> to vector<8x16x16xf32>
    %80 = arith.subf %76, %79 : vector<8x16x16xf32>
    %81 = math.exp %80 : vector<8x16x16xf32>
    %cst_28 = arith.constant dense<0.000000e+00> : vector<8x16xf32>
    %82 = vector.multi_reduction <add>, %81, %cst_28 [2] : vector<8x16x16xf32> to vector<8x16xf32>
    %83 = vector.shape_cast %82 : vector<8x16xf32> to vector<8x16x1xf32>
    %84 = vector.broadcast %83 : vector<8x16x1xf32> to vector<8x16x16xf32>
    %85 = arith.divf %81, %84 : vector<8x16x16xf32>
    %cst_29 = arith.constant -5.000000e-01 : f32
    %86 = vector.broadcast %cst_29 : f32 to vector<8x16x16xf32>
    %87 = arith.cmpf olt, %71, %86 : vector<8x16x16xf32>
    %cst_30 = arith.constant 0.000000e+00 : f32
    %88 = vector.broadcast %cst_30 : f32 to vector<8x16x16xf32>
    %89 = arith.select %87, %88, %85 : vector<8x16x16xi1>, vector<8x16x16xf32>
    %cst_31 = arith.constant dense<0.000000e+00> : vector<8x16x16xf32>
    %90 = tpu.matmul %89, %47, %cst_31 {dimension_numbers = #tpu.dot_dimension_numbers<[2], [1], [1], [2], [0, 0, 0, 1, 1, 2], [0], [0]>} : vector<8x16x16xf32>, vector<8x16x16xf32>, vector<8x16x16xf32> -> vector<8x16x16xf32>
    %91 = vector.shape_cast %90 : vector<8x16x16xf32> to vector<4x32x16xf32>
    %92 = tpu.transpose %91, [1, 0, 2] : vector<4x32x16xf32> -> vector<32x4x16xf32>
    %93 = vector.shape_cast %92 : vector<32x4x16xf32> to vector<32x64xf32>
    %c0_32 = arith.constant 0 : index
    %c0_33 = arith.constant 0 : index
    %94 = vector.load %arg6[%c0_32, %c0_33] : memref<64x64xf32, #tpu.memory_space<vmem>>, vector<64x64xf32>
    %cst_34 = arith.constant dense<0.000000e+00> : vector<32x64xf32>
    %95 = tpu.matmul %93, %94, %cst_34 {dimension_numbers = #tpu.dot_dimension_numbers<[1], [0], [0], [1], [0, 0, 1, 1], [], []>} : vector<32x64xf32>, vector<64x64xf32>, vector<32x64xf32> -> vector<32x64xf32>
    %c0_35 = arith.constant 0 : index
    %c0_36 = arith.constant 0 : index
    %96 = vector.load %arg7[%c0_35, %c0_36] : memref<1x64xf32, #tpu.memory_space<vmem>>, vector<1x64xf32>
    %97 = vector.broadcast %96 : vector<1x64xf32> to vector<32x64xf32>
    %98 = arith.addf %95, %97 : vector<32x64xf32>
    %cst_37 = arith.constant dense<0.000000e+00> : vector<32xf32>
    %99 = vector.multi_reduction <add>, %98, %cst_37 [1] : vector<32x64xf32> to vector<32xf32>
    %100 = vector.shape_cast %99 : vector<32xf32> to vector<32x1xf32>
    %cst_38 = arith.constant 6.400000e+01 : f32
    %101 = vector.broadcast %cst_38 : f32 to vector<32x1xf32>
    %102 = arith.divf %100, %101 : vector<32x1xf32>
    %103 = vector.broadcast %102 : vector<32x1xf32> to vector<32x64xf32>
    %104 = arith.subf %98, %103 : vector<32x64xf32>
    %105 = arith.mulf %104, %104 : vector<32x64xf32>
    %cst_39 = arith.constant dense<0.000000e+00> : vector<32xf32>
    %106 = vector.multi_reduction <add>, %105, %cst_39 [1] : vector<32x64xf32> to vector<32xf32>
    %107 = vector.shape_cast %106 : vector<32xf32> to vector<32x1xf32>
    %cst_40 = arith.constant 6.400000e+01 : f32
    %108 = vector.broadcast %cst_40 : f32 to vector<32x1xf32>
    %109 = arith.divf %107, %108 : vector<32x1xf32>
    %110 = vector.broadcast %102 : vector<32x1xf32> to vector<32x64xf32>
    %111 = arith.subf %98, %110 : vector<32x64xf32>
    %cst_41 = arith.constant 1.000000e-07 : f32
    %112 = vector.broadcast %cst_41 : f32 to vector<32x1xf32>
    %113 = arith.addf %109, %112 : vector<32x1xf32>
    %114 = math.rsqrt %113 : vector<32x1xf32>
    %115 = vector.broadcast %114 : vector<32x1xf32> to vector<32x64xf32>
    %116 = arith.mulf %111, %115 : vector<32x64xf32>
    %c0_42 = arith.constant 0 : index
    %c0_43 = arith.constant 0 : index
    %117 = vector.load %arg8[%c0_42, %c0_43] : memref<1x64xf32, #tpu.memory_space<vmem>>, vector<1x64xf32>
    %118 = vector.broadcast %117 : vector<1x64xf32> to vector<32x64xf32>
    %119 = arith.mulf %116, %118 : vector<32x64xf32>
    %c0_44 = arith.constant 0 : index
    %c0_45 = arith.constant 0 : index
    %120 = vector.load %arg9[%c0_44, %c0_45] : memref<1x64xf32, #tpu.memory_space<vmem>>, vector<1x64xf32>
    %121 = vector.broadcast %120 : vector<1x64xf32> to vector<32x64xf32>
    %122 = arith.addf %119, %121 : vector<32x64xf32>
    %123 = vector.shape_cast %122 : vector<32x64xf32> to vector<2x16x64xf32>
    %124 = tpu.transpose %123, [1, 0, 2] : vector<2x16x64xf32> -> vector<16x2x64xf32>
    %125 = vector.shape_cast %124 : vector<16x2x64xf32> to vector<16x128xf32>
    %c0_46 = arith.constant 0 : index
    %c0_47 = arith.constant 0 : index
    %126 = vector.load %arg12[%c0_46, %c0_47] : memref<16x128xf32, #tpu.memory_space<vmem>>, vector<16x128xf32>
    tpu.vector_store %arg12[%c0_46, %c0_47], %125 {strides = array<i32>} : memref<16x128xf32, #tpu.memory_space<vmem>>, vector<16x128xf32>,
    return
  }
}

</mosaic_0001>

<llo_original>
// kernel: attention_forward.1
$region0: #{attention_forward.1}
  #allocation0 [shape = 'u32[]', space=smem, size = 0x4, offset = 0x4, fixed_abs, tag = 'smem constant byte address 0x4 - core index']
  #allocation1 [shape = 'u32[144,128]{1,0:T(1,128)}', space=vmem, size = 0x12000, scoped, tag = 'internal scratch']
  %s0 = inlined_call_operand.vmem [shape: f32[16,128], index: 0, kind: input, shape index: {}]
  %s1 = inlined_call_operand.vmem [shape: f32[16,128], index: 1, kind: input, shape index: {}]
  %s2 = inlined_call_operand.vmem [shape: f32[8,16,16], index: 2, kind: input, shape index: {}]
  %s3 = inlined_call_operand.vmem [shape: f32[15,64], index: 3, kind: input, shape index: {}]
  %s4 = inlined_call_operand.vmem [shape: f32[64,192], index: 4, kind: input, shape index: {}]
  %s5 = inlined_call_operand.vmem [shape: f32[1,192], index: 5, kind: input, shape index: {}]
  %s6 = inlined_call_operand.vmem [shape: f32[64,64], index: 6, kind: input, shape index: {}]
  %s7 = inlined_call_operand.vmem [shape: f32[1,64], index: 7, kind: input, shape index: {}]
  %s8 = inlined_call_operand.vmem [shape: f32[1,64], index: 8, kind: input, shape index: {}]
  %s9 = inlined_call_operand.vmem [shape: f32[1,64], index: 9, kind: input, shape index: {}]
  %s10 = inlined_call_operand.vmem [shape: f32[240,256], index: 10, kind: input, shape index: {}]
  %s11 = inlined_call_operand.vmem [shape: f32[240,256], index: 11, kind: input, shape index: {}]
  %s12 = inlined_call_operand.vmem [shape: f32[16,128], index: 12, kind: output, shape index: {}]
  %s13 = sld [smem:[#allocation0]]
  $region58: #{attention_forward.1} parent=0
    _
  %s15 = ssub.s32 1, %s13
  %s16 = scalar_select 0, %s15, %s13
  // Predicated region
  $region2: #{attention_forward.1} parent=0 // pred_check
    _
  $region3: #{attention_forward.1} parent=0 // pred_check_branch
    %18 = sbr.rel (0) target = $region5
  $region4: #{attention_forward.1} parent=0 // pred_region
    _
  $region5: #{attention_forward.1} parent=0 // pred_fallthru
    _
  // Predicated region
  $region6: #{attention_forward.1} parent=0 // pred_check
    _
  $region7: #{attention_forward.1} parent=0 // pred_check_branch
    %20 = sbr.rel (0) target = $region9
  $region8: #{attention_forward.1} parent=0 // pred_region
    _
  $region9: #{attention_forward.1} parent=0 // pred_fallthru
    _
  // Predicated region
  $region10: #{attention_forward.1} parent=0 // pred_check
    _
  $region11: #{attention_forward.1} parent=0 // pred_check_branch
    %22 = sbr.rel (0) target = $region13
  $region12: #{attention_forward.1} parent=0 // pred_region
    _
  $region13: #{attention_forward.1} parent=0 // pred_fallthru
    _
  // Predicated region
  $region14: #{attention_forward.1} parent=0 // pred_check
    _
  $region15: #{attention_forward.1} parent=0 // pred_check_branch
    %24 = sbr.rel (0) target = $region17
  $region16: #{attention_forward.1} parent=0 // pred_region
    _
  $region17: #{attention_forward.1} parent=0 // pred_fallthru
    _
  // Predicated region
  $region18: #{attention_forward.1} parent=0 // pred_check
    _
  $region19: #{attention_forward.1} parent=0 // pred_check_branch
    %26 = sbr.rel (0) target = $region21
  $region20: #{attention_forward.1} parent=0 // pred_region
    _
  $region21: #{attention_forward.1} parent=0 // pred_fallthru
    _
  // Predicated region
  $region22: #{attention_forward.1} parent=0 // pred_check
    _
  $region23: #{attention_forward.1} parent=0 // pred_check_branch
    %28 = sbr.rel (0) target = $region25
  $region24: #{attention_forward.1} parent=0 // pred_region
    _
  $region25: #{attention_forward.1} parent=0 // pred_fallthru
    _
  // Predicated region
  $region26: #{attention_forward.1} parent=0 // pred_check
    _
  $region27: #{attention_forward.1} parent=0 // pred_check_branch
    %30 = sbr.rel (0) target = $region29
  $region28: #{attention_forward.1} parent=0 // pred_region
    _
  $region29: #{attention_forward.1} parent=0 // pred_fallthru
    _
  // Predicated region
  $region30: #{attention_forward.1} parent=0 // pred_check
    _
  $region31: #{attention_forward.1} parent=0 // pred_check_branch
    %32 = sbr.rel (0) target = $region33
  $region32: #{attention_forward.1} parent=0 // pred_region
    _
  $region33: #{attention_forward.1} parent=0 // pred_fallthru
    _
  // Predicated region
  $region34: #{attention_forward.1} parent=0 // pred_check
    _
  $region35: #{attention_forward.1} parent=0 // pred_check_branch
    %34 = sbr.rel (0) target = $region37
  $region36: #{attention_forward.1} parent=0 // pred_region
    _
  $region37: #{attention_forward.1} parent=0 // pred_fallthru
    _
  // Predicated region
  $region38: #{attention_forward.1} parent=0 // pred_check
    _
  $region39: #{attention_forward.1} parent=0 // pred_check_branch
    %36 = sbr.rel (0) target = $region41
  $region40: #{attention_forward.1} parent=0 // pred_region
    _
  $region41: #{attention_forward.1} parent=0 // pred_fallthru
    _
  // Predicated region
  $region42: #{attention_forward.1} parent=0 // pred_check
    _
  $region43: #{attention_forward.1} parent=0 // pred_check_branch
    %38 = sbr.rel (0) target = $region45
  $region44: #{attention_forward.1} parent=0 // pred_region
    _
  $region45: #{attention_forward.1} parent=0 // pred_fallthru
    _
  // Predicated region
  $region46: #{attention_forward.1} parent=0 // pred_check
    _
  $region47: #{attention_forward.1} parent=0 // pred_check_branch
    %40 = sbr.rel (0) target = $region49
  $region48: #{attention_forward.1} parent=0 // pred_region
    _
  $region49: #{attention_forward.1} parent=0 // pred_fallthru
    _
  %v41 = vld [vmem:[%s0] sm:$0xff]
  %v42 = vld [vmem:[%s0 + $0x8] sm:$0xff]
  %45 = vrot.lane.b32.xlu0 %v41, 64
  %v46 = vpop.permute.xlu0 %45
  %47 = vrot.lane.b32.xlu0 %v42, 64
  %v48 = vpop.permute.xlu0 %47
  %v51 = vcombine.high %v41, 0.0
  %v53 = vunpack.c.l.s4 1983009808
  %v54 = vunpack.c.0.s8 %v53
  %v55 = vlaneseq
  %v56 = vshrl.u32 %v55, 7
  %v57 = vsub.s32 %v54, %v56
  %v58 = vrot.slane %v41, %v57
  %v60 = vunpack.c.l.s4 1983009808
  %v61 = vunpack.c.0.s8 %v60
  %v62 = vlaneseq
  %v63 = vshrl.u32 %v62, 7
  %v64 = vsub.s32 %v61, %v63
  %v65 = vrot.slane %v51, %v64
  %v66 = vcombine.high %v46, 0.0
  %v68 = vunpack.c.l.s4 1983009808
  %v69 = vunpack.c.0.s8 %v68
  %v70 = vlaneseq
  %v71 = vshrl.u32 %v70, 7
  %v72 = vsub.s32 %v69, %v71
  %v73 = vrot.slane %v46, %v72
  %v75 = vunpack.c.l.s4 1983009808
  %v76 = vunpack.c.0.s8 %v75
  %v77 = vlaneseq
  %v78 = vshrl.u32 %v77, 7
  %v79 = vsub.s32 %v76, %v78
  %v80 = vrot.slane %v66, %v79
  %v81 = vcombine.low %v58, %v73
  %v82 = vcombine.high %v58, %v73
  %v84 = vunpack.c.l.s4 1934713408
  %v85 = vunpack.c.0.s8 %v84
  %v86 = vlaneseq
  %v87 = vshrl.u32 %v86, 7
  %v88 = vsub.s32 %v85, %v87
  %v89 = vrot.slane %v81, %v88
  %v91 = vunpack.c.l.s4 1934713408
  %v92 = vunpack.c.0.s8 %v91
  %v93 = vlaneseq
  %v94 = vshrl.u32 %v93, 7
  %v95 = vsub.s32 %v92, %v94
  %v96 = vrot.slane %v82, %v95
  %v97 = vcombine.low %v65, %v80
  %v98 = vcombine.high %v65, %v80
  %v100 = vunpack.c.l.s4 1934713408
  %v101 = vunpack.c.0.s8 %v100
  %v102 = vlaneseq
  %v103 = vshrl.u32 %v102, 7
  %v104 = vsub.s32 %v101, %v103
  %v105 = vrot.slane %v97, %v104
  %v107 = vunpack.c.l.s4 1934713408
  %v108 = vunpack.c.0.s8 %v107
  %v109 = vlaneseq
  %v110 = vshrl.u32 %v109, 7
  %v111 = vsub.s32 %v108, %v110
  %v112 = vrot.slane %v98, %v111
  %v113 = vcombine.high %v89, 0.0
  %v114 = vcombine.high %v96, 0.0
  %v115 = vcombine.high %v105, 0.0
  %v116 = vcombine.high %v112, 0.0
  %v117 = vcombine.high %v42, 0.0
  %v119 = vunpack.c.l.s4 1983009808
  %v120 = vunpack.c.0.s8 %v119
  %v121 = vlaneseq
  %v122 = vshrl.u32 %v121, 7
  %v123 = vsub.s32 %v120, %v122
  %v124 = vrot.slane %v42, %v123
  %v126 = vunpack.c.l.s4 1983009808
  %v127 = vunpack.c.0.s8 %v126
  %v128 = vlaneseq
  %v129 = vshrl.u32 %v128, 7
  %v130 = vsub.s32 %v127, %v129
  %v131 = vrot.slane %v117, %v130
  %v132 = vcombine.high %v48, 0.0
  %v134 = vunpack.c.l.s4 1983009808
  %v135 = vunpack.c.0.s8 %v134
  %v136 = vlaneseq
  %v137 = vshrl.u32 %v136, 7
  %v138 = vsub.s32 %v135, %v137
  %v139 = vrot.slane %v48, %v138
  %v141 = vunpack.c.l.s4 1983009808
  %v142 = vunpack.c.0.s8 %v141
  %v143 = vlaneseq
  %v144 = vshrl.u32 %v143, 7
  %v145 = vsub.s32 %v142, %v144
  %v146 = vrot.slane %v132, %v145
  %v147 = vcombine.low %v124, %v139
  %v148 = vcombine.high %v124, %v139
  %v150 = vunpack.c.l.s4 1934713408
  %v151 = vunpack.c.0.s8 %v150
  %v152 = vlaneseq
  %v153 = vshrl.u32 %v152, 7
  %v154 = vsub.s32 %v151, %v153
  %v155 = vrot.slane %v147, %v154
  %v157 = vunpack.c.l.s4 1934713408
  %v158 = vunpack.c.0.s8 %v157
  %v159 = vlaneseq
  %v160 = vshrl.u32 %v159, 7
  %v161 = vsub.s32 %v158, %v160
  %v162 = vrot.slane %v148, %v161
  %v163 = vcombine.low %v131, %v146
  %v164 = vcombine.high %v131, %v146
  %v166 = vunpack.c.l.s4 1934713408
  %v167 = vunpack.c.0.s8 %v166
  %v168 = vlaneseq
  %v169 = vshrl.u32 %v168, 7
  %v170 = vsub.s32 %v167, %v169
  %v171 = vrot.slane %v163, %v170
  %v173 = vunpack.c.l.s4 1934713408
  %v174 = vunpack.c.0.s8 %v173
  %v175 = vlaneseq
  %v176 = vshrl.u32 %v175, 7
  %v177 = vsub.s32 %v174, %v176
  %v178 = vrot.slane %v164, %v177
  %v179 = vcombine.high %v155, 0.0
  %v180 = vcombine.high %v162, 0.0
  %v181 = vcombine.high %v171, 0.0
  %v182 = vcombine.high %v178, 0.0
  %v183 = vcombine.low %v89, %v96
  %v185 = vunpack.c.l.s4 1983009808
  %v186 = vunpack.c.0.s8 %v185
  %v187 = vlaneseq
  %v188 = vshrl.u32 %v187, 7
  %v189 = vsub.s32 %v186, %v188
  %v190 = vrot.slane %v183, %v189
  %v191 = vcombine.low %v113, %v114
  %v193 = vunpack.c.l.s4 1983009808
  %v194 = vunpack.c.0.s8 %v193
  %v195 = vlaneseq
  %v196 = vshrl.u32 %v195, 7
  %v197 = vsub.s32 %v194, %v196
  %v198 = vrot.slane %v191, %v197
  %v199 = vcombine.low %v105, %v112
  %v201 = vunpack.c.l.s4 1983009808
  %v202 = vunpack.c.0.s8 %v201
  %v203 = vlaneseq
  %v204 = vshrl.u32 %v203, 7
  %v205 = vsub.s32 %v202, %v204
  %v206 = vrot.slane %v199, %v205
  %v207 = vcombine.low %v115, %v116
  %v209 = vunpack.c.l.s4 1983009808
  %v210 = vunpack.c.0.s8 %v209
  %v211 = vlaneseq
  %v212 = vshrl.u32 %v211, 7
  %v213 = vsub.s32 %v210, %v212
  %v214 = vrot.slane %v207, %v213
  %v215 = vcombine.low %v190, %v198
  %v217 = vunpack.c.l.s4 1934713408
  %v218 = vunpack.c.0.s8 %v217
  %v219 = vlaneseq
  %v220 = vshrl.u32 %v219, 7
  %v221 = vsub.s32 %v218, %v220
  %v222 = vrot.slane %v215, %v221
  %v223 = vcombine.low %v206, %v214
  %v225 = vunpack.c.l.s4 1934713408
  %v226 = vunpack.c.0.s8 %v225
  %v227 = vlaneseq
  %v228 = vshrl.u32 %v227, 7
  %v229 = vsub.s32 %v226, %v228
  %v230 = vrot.slane %v223, %v229
  %v231 = vcombine.low %v222, %v230
  %v232 = vcombine.high %v222, %v230
  %v233 = vcombine.low %v155, %v162
  %v235 = vunpack.c.l.s4 1983009808
  %v236 = vunpack.c.0.s8 %v235
  %v237 = vlaneseq
  %v238 = vshrl.u32 %v237, 7
  %v239 = vsub.s32 %v236, %v238
  %v240 = vrot.slane %v233, %v239
  %v241 = vcombine.low %v179, %v180
  %v243 = vunpack.c.l.s4 1983009808
  %v244 = vunpack.c.0.s8 %v243
  %v245 = vlaneseq
  %v246 = vshrl.u32 %v245, 7
  %v247 = vsub.s32 %v244, %v246
  %v248 = vrot.slane %v241, %v247
  %v249 = vcombine.low %v171, %v178
  %v251 = vunpack.c.l.s4 1983009808
  %v252 = vunpack.c.0.s8 %v251
  %v253 = vlaneseq
  %v254 = vshrl.u32 %v253, 7
  %v255 = vsub.s32 %v252, %v254
  %v256 = vrot.slane %v249, %v255
  %v257 = vcombine.low %v181, %v182
  %v259 = vunpack.c.l.s4 1983009808
  %v260 = vunpack.c.0.s8 %v259
  %v261 = vlaneseq
  %v262 = vshrl.u32 %v261, 7
  %v263 = vsub.s32 %v260, %v262
  %v264 = vrot.slane %v257, %v263
  %v265 = vcombine.low %v240, %v248
  %v267 = vunpack.c.l.s4 1934713408
  %v268 = vunpack.c.0.s8 %v267
  %v269 = vlaneseq
  %v270 = vshrl.u32 %v269, 7
  %v271 = vsub.s32 %v268, %v270
  %v272 = vrot.slane %v265, %v271
  %v273 = vcombine.low %v256, %v264
  %v275 = vunpack.c.l.s4 1934713408
  %v276 = vunpack.c.0.s8 %v275
  %v277 = vlaneseq
  %v278 = vshrl.u32 %v277, 7
  %v279 = vsub.s32 %v276, %v278
  %v280 = vrot.slane %v273, %v279
  %v281 = vcombine.low %v272, %v280
  %v282 = vcombine.high %v272, %v280
  %v283 = vld [vmem:[%s1] sm:$0xff]
  %v284 = vld [vmem:[%s1 + $0x8] sm:$0xff]
  %287 = vrot.lane.b32.xlu0 %v283, 64
  %v288 = vpop.permute.xlu0 %287
  %289 = vrot.lane.b32.xlu0 %v284, 64
  %v290 = vpop.permute.xlu0 %289
  %v293 = vcombine.high %v283, 0.0
  %v295 = vunpack.c.l.s4 1983009808
  %v296 = vunpack.c.0.s8 %v295
  %v297 = vlaneseq
  %v298 = vshrl.u32 %v297, 7
  %v299 = vsub.s32 %v296, %v298
  %v300 = vrot.slane %v283, %v299
  %v302 = vunpack.c.l.s4 1983009808
  %v303 = vunpack.c.0.s8 %v302
  %v304 = vlaneseq
  %v305 = vshrl.u32 %v304, 7
  %v306 = vsub.s32 %v303, %v305
  %v307 = vrot.slane %v293, %v306
  %v308 = vcombine.high %v288, 0.0
  %v310 = vunpack.c.l.s4 1983009808
  %v311 = vunpack.c.0.s8 %v310
  %v312 = vlaneseq
  %v313 = vshrl.u32 %v312, 7
  %v314 = vsub.s32 %v311, %v313
  %v315 = vrot.slane %v288, %v314
  %v317 = vunpack.c.l.s4 1983009808
  %v318 = vunpack.c.0.s8 %v317
  %v319 = vlaneseq
  %v320 = vshrl.u32 %v319, 7
  %v321 = vsub.s32 %v318, %v320
  %v322 = vrot.slane %v308, %v321
  %v323 = vcombine.low %v300, %v315
  %v324 = vcombine.high %v300, %v315
  %v326 = vunpack.c.l.s4 1934713408
  %v327 = vunpack.c.0.s8 %v326
  %v328 = vlaneseq
  %v329 = vshrl.u32 %v328, 7
  %v330 = vsub.s32 %v327, %v329
  %v331 = vrot.slane %v323, %v330
  %v333 = vunpack.c.l.s4 1934713408
  %v334 = vunpack.c.0.s8 %v333
  %v335 = vlaneseq
  %v336 = vshrl.u32 %v335, 7
  %v337 = vsub.s32 %v334, %v336
  %v338 = vrot.slane %v324, %v337
  %v339 = vcombine.low %v307, %v322
  %v340 = vcombine.high %v307, %v322
  %v342 = vunpack.c.l.s4 1934713408
  %v343 = vunpack.c.0.s8 %v342
  %v344 = vlaneseq
  %v345 = vshrl.u32 %v344, 7
  %v346 = vsub.s32 %v343, %v345
  %v347 = vrot.slane %v339, %v346
  %v349 = vunpack.c.l.s4 1934713408
  %v350 = vunpack.c.0.s8 %v349
  %v351 = vlaneseq
  %v352 = vshrl.u32 %v351, 7
  %v353 = vsub.s32 %v350, %v352
  %v354 = vrot.slane %v340, %v353
  %v355 = vcombine.high %v331, 0.0
  %v356 = vcombine.high %v338, 0.0
  %v357 = vcombine.high %v347, 0.0
  %v358 = vcombine.high %v354, 0.0
  %v359 = vcombine.high %v284, 0.0
  %v361 = vunpack.c.l.s4 1983009808
  %v362 = vunpack.c.0.s8 %v361
  %v363 = vlaneseq
  %v364 = vshrl.u32 %v363, 7
  %v365 = vsub.s32 %v362, %v364
  %v366 = vrot.slane %v284, %v365
  %v368 = vunpack.c.l.s4 1983009808
  %v369 = vunpack.c.0.s8 %v368
  %v370 = vlaneseq
  %v371 = vshrl.u32 %v370, 7
  %v372 = vsub.s32 %v369, %v371
  %v373 = vrot.slane %v359, %v372
  %v374 = vcombine.high %v290, 0.0
  %v376 = vunpack.c.l.s4 1983009808
  %v377 = vunpack.c.0.s8 %v376
  %v378 = vlaneseq
  %v379 = vshrl.u32 %v378, 7
  %v380 = vsub.s32 %v377, %v379
  %v381 = vrot.slane %v290, %v380
  %v383 = vunpack.c.l.s4 1983009808
  %v384 = vunpack.c.0.s8 %v383
  %v385 = vlaneseq
  %v386 = vshrl.u32 %v385, 7
  %v387 = vsub.s32 %v384, %v386
  %v388 = vrot.slane %v374, %v387
  %v389 = vcombine.low %v366, %v381
  %v390 = vcombine.high %v366, %v381
  %v392 = vunpack.c.l.s4 1934713408
  %v393 = vunpack.c.0.s8 %v392
  %v394 = vlaneseq
  %v395 = vshrl.u32 %v394, 7
  %v396 = vsub.s32 %v393, %v395
  %v397 = vrot.slane %v389, %v396
  %v399 = vunpack.c.l.s4 1934713408
  %v400 = vunpack.c.0.s8 %v399
  %v401 = vlaneseq
  %v402 = vshrl.u32 %v401, 7
  %v403 = vsub.s32 %v400, %v402
  %v404 = vrot.slane %v390, %v403
  %v405 = vcombine.low %v373, %v388
  %v406 = vcombine.high %v373, %v388
  %v408 = vunpack.c.l.s4 1934713408
  %v409 = vunpack.c.0.s8 %v408
  %v410 = vlaneseq
  %v411 = vshrl.u32 %v410, 7
  %v412 = vsub.s32 %v409, %v411
  %v413 = vrot.slane %v405, %v412
  %v415 = vunpack.c.l.s4 1934713408
  %v416 = vunpack.c.0.s8 %v415
  %v417 = vlaneseq
  %v418 = vshrl.u32 %v417, 7
  %v419 = vsub.s32 %v416, %v418
  %v420 = vrot.slane %v406, %v419
  %v421 = vcombine.high %v397, 0.0
  %v422 = vcombine.high %v404, 0.0
  %v423 = vcombine.high %v413, 0.0
  %v424 = vcombine.high %v420, 0.0
  %v425 = vcombine.low %v331, %v338
  %v427 = vunpack.c.l.s4 1983009808
  %v428 = vunpack.c.0.s8 %v427
  %v429 = vlaneseq
  %v430 = vshrl.u32 %v429, 7
  %v431 = vsub.s32 %v428, %v430
  %v432 = vrot.slane %v425, %v431
  %v433 = vcombine.low %v355, %v356
  %v435 = vunpack.c.l.s4 1983009808
  %v436 = vunpack.c.0.s8 %v435
  %v437 = vlaneseq
  %v438 = vshrl.u32 %v437, 7
  %v439 = vsub.s32 %v436, %v438
  %v440 = vrot.slane %v433, %v439
  %v441 = vcombine.low %v347, %v354
  %v443 = vunpack.c.l.s4 1983009808
  %v444 = vunpack.c.0.s8 %v443
  %v445 = vlaneseq
  %v446 = vshrl.u32 %v445, 7
  %v447 = vsub.s32 %v444, %v446
  %v448 = vrot.slane %v441, %v447
  %v449 = vcombine.low %v357, %v358
  %v451 = vunpack.c.l.s4 1983009808
  %v452 = vunpack.c.0.s8 %v451
  %v453 = vlaneseq
  %v454 = vshrl.u32 %v453, 7
  %v455 = vsub.s32 %v452, %v454
  %v456 = vrot.slane %v449, %v455
  %v457 = vcombine.low %v432, %v440
  %v459 = vunpack.c.l.s4 1934713408
  %v460 = vunpack.c.0.s8 %v459
  %v461 = vlaneseq
  %v462 = vshrl.u32 %v461, 7
  %v463 = vsub.s32 %v460, %v462
  %v464 = vrot.slane %v457, %v463
  %v465 = vcombine.low %v448, %v456
  %v467 = vunpack.c.l.s4 1934713408
  %v468 = vunpack.c.0.s8 %v467
  %v469 = vlaneseq
  %v470 = vshrl.u32 %v469, 7
  %v471 = vsub.s32 %v468, %v470
  %v472 = vrot.slane %v465, %v471
  %v473 = vcombine.low %v464, %v472
  %v474 = vcombine.high %v464, %v472
  %v475 = vcombine.low %v397, %v404
  %v477 = vunpack.c.l.s4 1983009808
  %v478 = vunpack.c.0.s8 %v477
  %v479 = vlaneseq
  %v480 = vshrl.u32 %v479, 7
  %v481 = vsub.s32 %v478, %v480
  %v482 = vrot.slane %v475, %v481
  %v483 = vcombine.low %v421, %v422
  %v485 = vunpack.c.l.s4 1983009808
  %v486 = vunpack.c.0.s8 %v485
  %v487 = vlaneseq
  %v488 = vshrl.u32 %v487, 7
  %v489 = vsub.s32 %v486, %v488
  %v490 = vrot.slane %v483, %v489
  %v491 = vcombine.low %v413, %v420
  %v493 = vunpack.c.l.s4 1983009808
  %v494 = vunpack.c.0.s8 %v493
  %v495 = vlaneseq
  %v496 = vshrl.u32 %v495, 7
  %v497 = vsub.s32 %v494, %v496
  %v498 = vrot.slane %v491, %v497
  %v499 = vcombine.low %v423, %v424
  %v501 = vunpack.c.l.s4 1983009808
  %v502 = vunpack.c.0.s8 %v501
  %v503 = vlaneseq
  %v504 = vshrl.u32 %v503, 7
  %v505 = vsub.s32 %v502, %v504
  %v506 = vrot.slane %v499, %v505
  %v507 = vcombine.low %v482, %v490
  %v509 = vunpack.c.l.s4 1934713408
  %v510 = vunpack.c.0.s8 %v509
  %v511 = vlaneseq
  %v512 = vshrl.u32 %v511, 7
  %v513 = vsub.s32 %v510, %v512
  %v514 = vrot.slane %v507, %v513
  %v515 = vcombine.low %v498, %v506
  %v517 = vunpack.c.l.s4 1934713408
  %v518 = vunpack.c.0.s8 %v517
  %v519 = vlaneseq
  %v520 = vshrl.u32 %v519, 7
  %v521 = vsub.s32 %v518, %v520
  %v522 = vrot.slane %v515, %v521
  %v523 = vcombine.low %v514, %v522
  %v524 = vcombine.high %v514, %v522
  %vm525 = vcmask 523264
  %v526 = vsel %vm525, %v231, 0.0
  %527 = vadd.xlane.f32.xlu0 %v526
  %v528 = vpop.xlane.xlu0 %527
  %v529 = vsel %vm525, %v281, 0.0
  %530 = vadd.xlane.f32.xlu0 %v529
  %v531 = vpop.xlane.xlu0 %530
  %v532 = vsel %vm525, %v232, 0.0
  %533 = vadd.xlane.f32.xlu0 %v532
  %v534 = vpop.xlane.xlu0 %533
  %v535 = vsel %vm525, %v282, 0.0
  %536 = vadd.xlane.f32.xlu0 %v535
  %v537 = vpop.xlane.xlu0 %536
  %v538 = vsel %vm525, %v473, 0.0
  %539 = vadd.xlane.f32.xlu0 %v538
  %v540 = vpop.xlane.xlu0 %539
  %v541 = vsel %vm525, %v523, 0.0
  %542 = vadd.xlane.f32.xlu0 %v541
  %v543 = vpop.xlane.xlu0 %542
  %v544 = vsel %vm525, %v474, 0.0
  %545 = vadd.xlane.f32.xlu0 %v544
  %v546 = vpop.xlane.xlu0 %545
  %v547 = vsel %vm525, %v524, 0.0
  %548 = vadd.xlane.f32.xlu0 %v547
  %v549 = vpop.xlane.xlu0 %548
  %v550 = vrcp.pop 64.0
  %v551 = vmul.f32 %v528, %v550
  %v552 = vmul.f32 %v531, %v550
  %v553 = vmul.f32 %v534, %v550
  %v554 = vmul.f32 %v537, %v550
  %v555 = vmul.f32 %v540, %v550
  %v556 = vmul.f32 %v543, %v550
  %v557 = vmul.f32 %v546, %v550
  %v558 = vmul.f32 %v549, %v550
  %v559 = vsub.f32 %v231, %v551
  %v560 = vsub.f32 %v281, %v552
  %v561 = vsub.f32 %v232, %v553
  %v562 = vsub.f32 %v282, %v554
  %v563 = vsub.f32 %v473, %v555
  %v564 = vsub.f32 %v523, %v556
  %v565 = vsub.f32 %v474, %v557
  %v566 = vsub.f32 %v524, %v558
  %v567 = vmul.f32 %v559, %v559
  %v568 = vmul.f32 %v560, %v560
  %v569 = vmul.f32 %v561, %v561
  %v570 = vmul.f32 %v562, %v562
  %v571 = vmul.f32 %v563, %v563
  %v572 = vmul.f32 %v564, %v564
  %v573 = vmul.f32 %v565, %v565
  %v574 = vmul.f32 %v566, %v566
  %v575 = vsel %vm525, %v567, 0.0
  %576 = vadd.xlane.f32.xlu0 %v575
  %v577 = vpop.xlane.xlu0 %576
  %v578 = vsel %vm525, %v568, 0.0
  %579 = vadd.xlane.f32.xlu0 %v578
  %v580 = vpop.xlane.xlu0 %579
  %v581 = vsel %vm525, %v569, 0.0
  %582 = vadd.xlane.f32.xlu0 %v581
  %v583 = vpop.xlane.xlu0 %582
  %v584 = vsel %vm525, %v570, 0.0
  %585 = vadd.xlane.f32.xlu0 %v584
  %v586 = vpop.xlane.xlu0 %585
  %v587 = vsel %vm525, %v571, 0.0
  %588 = vadd.xlane.f32.xlu0 %v587
  %v589 = vpop.xlane.xlu0 %588
  %v590 = vsel %vm525, %v572, 0.0
  %591 = vadd.xlane.f32.xlu0 %v590
  %v592 = vpop.xlane.xlu0 %591
  %v593 = vsel %vm525, %v573, 0.0
  %594 = vadd.xlane.f32.xlu0 %v593
  %v595 = vpop.xlane.xlu0 %594
  %v596 = vsel %vm525, %v574, 0.0
  %597 = vadd.xlane.f32.xlu0 %v596
  %v598 = vpop.xlane.xlu0 %597
  %v599 = vmul.f32 %v577, %v550
  %v600 = vmul.f32 %v580, %v550
  %v601 = vmul.f32 %v583, %v550
  %v602 = vmul.f32 %v586, %v550
  %v603 = vmul.f32 %v589, %v550
  %v604 = vmul.f32 %v592, %v550
  %v605 = vmul.f32 %v595, %v550
  %v606 = vmul.f32 %v598, %v550
  %v607 = vadd.f32 %v599, 1e-07
  %v608 = vadd.f32 %v600, 1e-07
  %v609 = vadd.f32 %v601, 1e-07
  %v610 = vadd.f32 %v602, 1e-07
  %v611 = vadd.f32 %v603, 1e-07
  %v612 = vadd.f32 %v604, 1e-07
  %v613 = vadd.f32 %v605, 1e-07
  %v614 = vadd.f32 %v606, 1e-07
  %v615 = vrsqrt.pop %v607
  %v616 = vrsqrt.pop %v608
  %v617 = vrsqrt.pop %v609
  %v618 = vrsqrt.pop %v610
  %v619 = vrsqrt.pop %v611
  %v620 = vrsqrt.pop %v612
  %v621 = vrsqrt.pop %v613
  %v622 = vrsqrt.pop %v614
  %v623 = vmul.f32 %v559, %v615
  %v624 = vmul.f32 %v560, %v616
  %v625 = vmul.f32 %v561, %v617
  %v626 = vmul.f32 %v562, %v618
  %v627 = vmul.f32 %v563, %v619
  %v628 = vmul.f32 %v564, %v620
  %v629 = vmul.f32 %v565, %v621
  %v630 = vmul.f32 %v566, %v622
  %v631 = vld [vmem:[%s3] sm:$0xff]
  %v632 = vld [vmem:[%s3 + $0x8] sm:$0x7f]
  %v633 = vld [vmem:[%s4] sm:$0xff]
  %v634 = vld [vmem:[%s4 + $0x8] sm:$0xff]
  %v635 = vld [vmem:[%s4 + $0x10] sm:$0xff]
  %v636 = vld [vmem:[%s4 + $0x18] sm:$0xff]
  %v637 = vld [vmem:[%s4 + $0x20] sm:$0xff]
  %v638 = vld [vmem:[%s4 + $0x28] sm:$0xff]
  %v639 = vld [vmem:[%s4 + $0x30] sm:$0xff]
  %v640 = vld [vmem:[%s4 + $0x38] sm:$0xff]
  %v641 = vld [vmem:[%s4 + $0x40] sm:$0xff]
  %v642 = vld [vmem:[%s4 + $0x48] sm:$0xff]
  %v643 = vld [vmem:[%s4 + $0x50] sm:$0xff]
  %v644 = vld [vmem:[%s4 + $0x58] sm:$0xff]
  %v645 = vld [vmem:[%s4 + $0x60] sm:$0xff]
  %v646 = vld [vmem:[%s4 + $0x68] sm:$0xff]
  %v647 = vld [vmem:[%s4 + $0x70] sm:$0xff]
  %v648 = vld [vmem:[%s4 + $0x78] sm:$0xff]
  %v649 = vld [vmem:[%s5] sm:$0x3]
  %v651 = vlaneseq
  %v652 = vshrl.u32 %v651, 7
  %v653 = vsub.s32 0, %v652
  %v654 = vrot.slane %v649, %v653
  %v655 = vlaneseq
  %v656 = vshrl.u32 %v655, 7
  %v657 = vsub.s32 1, %v656
  %v658 = vrot.slane %v649, %v657
  %v662 = vsel %vm525, %v623, 0
  %v665 = vsel %vm525, %v624, 0
  %v668 = vsel %vm525, %v625, 0
  %v671 = vsel %vm525, %v626, 0
  %v674 = vsel %vm525, %v627, 0
  %v677 = vsel %vm525, %v628, 0
  %v680 = vsel %vm525, %v629, 0
  %v683 = vsel %vm525, %v630, 0
  %v686 = vsel %vm525, %v631, 0
  %v689 = vsel %vm525, %v632, 0
  %691 = vmatprep.subr.mxu0 0.0
  %692 = vmatpush1.msra.mxu0 0.0
  %693 = vmatprep.subr.mxu0 0.0
  %694 = vmatpush1.msra.mxu0 0.0
  %695 = vmatprep.subr.mxu0 0.0
  %696 = vmatpush1.msra.mxu0 0.0
  %697 = vmatprep.subr.mxu0 0.0
  %698 = vmatpush1.msra.mxu0 0.0
  %699 = vmatprep.subr.mxu0 0.0
  %700 = vmatpush1.msra.mxu0 0.0
  %701 = vmatprep.subr.mxu0 0.0
  %702 = vmatpush1.msra.mxu0 0.0
  %703 = vmatprep.subr.mxu0 0.0
  %704 = vmatpush1.msra.mxu0 0.0
  %705 = vmatprep.subr.mxu0 0.0
  %706 = vmatpush1.msra.mxu0 0.0
  %707 = vmatprep.subr.mxu0 %v648
  %708 = vmatpush1.msra.mxu0 %v647
  %709 = vmatprep.subr.mxu0 %v646
  %710 = vmatpush1.msra.mxu0 %v645
  %711 = vmatprep.subr.mxu0 %v644
  %712 = vmatpush1.msra.mxu0 %v643
  %713 = vmatprep.subr.mxu0 %v642
  %714 = vmatpush1.msra.mxu0 %v641
  %715 = vmatprep.subr.mxu0 %v640
  %716 = vmatpush1.msra.mxu0 %v639
  %717 = vmatprep.subr.mxu0 %v638
  %718 = vmatpush1.msra.mxu0 %v637
  %719 = vmatprep.subr.mxu0 %v636
  %720 = vmatpush1.msra.mxu0 %v635
  %721 = vmatprep.subr.mxu0 %v634
  %722 = vmatpush1.msra.mxu0 %v633
  %723 = vmatprep.subr.mxu0 0.0
  %724 = vmatpush2.msra.mxu0 0.0
  %725 = vmatprep.subr.mxu0 0.0
  %726 = vmatpush2.msra.mxu0 0.0
  %727 = vmatprep.subr.mxu0 0.0
  %728 = vmatpush2.msra.mxu0 0.0
  %729 = vmatprep.subr.mxu0 0.0
  %730 = vmatpush2.msra.mxu0 0.0
  %731 = vmatprep.subr.mxu0 0.0
  %732 = vmatpush2.msra.mxu0 0.0
  %733 = vmatprep.subr.mxu0 0.0
  %734 = vmatpush2.msra.mxu0 0.0
  %735 = vmatprep.subr.mxu0 0.0
  %736 = vmatpush2.msra.mxu0 0.0
  %737 = vmatprep.subr.mxu0 0.0
  %738 = vmatpush2.msra.mxu0 0.0
  %739 = vmatprep.subr.mxu0 0.0
  %740 = vmatpush2.msra.mxu0 0.0
  %741 = vmatprep.subr.mxu0 0.0
  %742 = vmatpush2.msra.mxu0 0.0
  %743 = vmatprep.subr.mxu0 0.0
  %744 = vmatpush2.msra.mxu0 0.0
  %745 = vmatprep.subr.mxu0 0.0
  %746 = vmatpush2.msra.mxu0 0.0
  %747 = vmatprep.subr.mxu0 0.0
  %748 = vmatpush2.msra.mxu0 0.0
  %749 = vmatprep.subr.mxu0 0.0
  %750 = vmatpush2.msra.mxu0 0.0
  %751 = vmatprep.subr.mxu0 0.0
  %752 = vmatpush2.msra.mxu0 0.0
  %753 = vmatprep.subr.mxu0 0.0
  %754 = vmatpush2.msra.mxu0 0.0
  %755 = vmatprep.mubr.f32.mxu0 0.0
  %756 = vmatmul.mubr.f32.gmra.mxu0 %v662
  %v757 = vpop.f32.mrf.mxu0
  %v758 = vadd.f32 %v654, %v757
  %v759 = vpop.f32.mrf.mxu0
  %760 = vmatprep.mubr.f32.mxu0 0.0
  %761 = vmatmul.mubr.f32.gmra.mxu0 %v665
  %v762 = vpop.f32.mrf.mxu0
  %v763 = vadd.f32 %v654, %v762
  %v764 = vpop.f32.mrf.mxu0
  %765 = vmatprep.mubr.f32.mxu0 0.0
  %766 = vmatmul.mubr.f32.gmra.mxu0 %v668
  %v767 = vpop.f32.mrf.mxu0
  %v768 = vadd.f32 %v654, %v767
  %v769 = vpop.f32.mrf.mxu0
  %770 = vmatprep.mubr.f32.mxu0 0.0
  %771 = vmatmul.mubr.f32.gmra.mxu0 %v671
  %v772 = vpop.f32.mrf.mxu0
  %v773 = vadd.f32 %v654, %v772
  %v774 = vpop.f32.mrf.mxu0
  %775 = vmatprep.mubr.f32.mxu0 0.0
  %776 = vmatmul.mubr.f32.gmra.mxu0 %v674
  %v777 = vpop.f32.mrf.mxu0
  %v778 = vadd.f32 %v654, %v777
  %v779 = vpop.f32.mrf.mxu0
  %v780 = vadd.f32 %v658, %v779
  %781 = vmatprep.mubr.f32.mxu0 0.0
  %782 = vmatmul.mubr.f32.gmra.mxu0 %v677
  %v783 = vpop.f32.mrf.mxu0
  %v784 = vadd.f32 %v654, %v783
  %v785 = vpop.f32.mrf.mxu0
  %v786 = vadd.f32 %v658, %v785
  %787 = vmatprep.mubr.f32.mxu0 0.0
  %788 = vmatmul.mubr.f32.gmra.mxu0 %v680
  %v789 = vpop.f32.mrf.mxu0
  %v790 = vadd.f32 %v654, %v789
  %v791 = vpop.f32.mrf.mxu0
  %v792 = vadd.f32 %v658, %v791
  %793 = vmatprep.mubr.f32.mxu0 0.0
  %794 = vmatmul.mubr.f32.gmra.mxu0 %v683
  %v795 = vpop.f32.mrf.mxu0
  %v796 = vadd.f32 %v654, %v795
  %v797 = vpop.f32.mrf.mxu0
  %v798 = vadd.f32 %v658, %v797
  %799 = vmatprep.mubr.f32.mxu0 0.0
  %800 = vmatmul.mubr.f32.gmra.mxu0 %v686
  %v801 = vpop.f32.mrf.mxu0
  %v802 = vadd.f32 %v654, %v801
  %v803 = vpop.f32.mrf.mxu0
  %804 = vmatprep.mubr.f32.mxu0 0.0
  %805 = vmatmul.mubr.f32.gmra.mxu0 %v689
  %v806 = vpop.f32.mrf.mxu0
  %v807 = vadd.f32 %v654, %v806
  %v808 = vpop.f32.mrf.mxu0
  %809 = vdwg.mxu0
  %814 = vrot.lane.b32.xlu0 %v758, 112
  %v815 = vpop.permute.xlu0 %814
  %816 = vrot.lane.b32.xlu0 %v763, 112
  %v817 = vpop.permute.xlu0 %816
  %818 = vrot.lane.b32.xlu0 %v768, 112
  %v819 = vpop.permute.xlu0 %818
  %820 = vrot.lane.b32.xlu0 %v773, 112
  %v821 = vpop.permute.xlu0 %820
  %826 = vrot.lane.b32.xlu0 %v758, 96
  %v827 = vpop.permute.xlu0 %826
  %828 = vrot.lane.b32.xlu0 %v763, 96
  %v829 = vpop.permute.xlu0 %828
  %830 = vrot.lane.b32.xlu0 %v768, 96
  %v831 = vpop.permute.xlu0 %830
  %832 = vrot.lane.b32.xlu0 %v773, 96
  %v833 = vpop.permute.xlu0 %832
  %838 = vrot.lane.b32.xlu0 %v758, 80
  %v839 = vpop.permute.xlu0 %838
  %840 = vrot.lane.b32.xlu0 %v763, 80
  %v841 = vpop.permute.xlu0 %840
  %842 = vrot.lane.b32.xlu0 %v768, 80
  %v843 = vpop.permute.xlu0 %842
  %844 = vrot.lane.b32.xlu0 %v773, 80
  %v845 = vpop.permute.xlu0 %844
  %v850 = vcombine.low %v758, %v827
  %v851 = vcombine.high %v758, %v827
  %v853 = vunpack.c.l.s4 1983009808
  %v854 = vunpack.c.0.s8 %v853
  %v855 = vlaneseq
  %v856 = vshrl.u32 %v855, 7
  %v857 = vsub.s32 %v854, %v856
  %v858 = vrot.slane %v850, %v857
  %v860 = vunpack.c.l.s4 1983009808
  %v861 = vunpack.c.0.s8 %v860
  %v862 = vlaneseq
  %v863 = vshrl.u32 %v862, 7
  %v864 = vsub.s32 %v861, %v863
  %v865 = vrot.slane %v851, %v864
  %v866 = vcombine.low %v815, %v839
  %v867 = vcombine.high %v815, %v839
  %v869 = vunpack.c.l.s4 1983009808
  %v870 = vunpack.c.0.s8 %v869
  %v871 = vlaneseq
  %v872 = vshrl.u32 %v871, 7
  %v873 = vsub.s32 %v870, %v872
  %v874 = vrot.slane %v866, %v873
  %v876 = vunpack.c.l.s4 1983009808
  %v877 = vunpack.c.0.s8 %v876
  %v878 = vlaneseq
  %v879 = vshrl.u32 %v878, 7
  %v880 = vsub.s32 %v877, %v879
  %v881 = vrot.slane %v867, %v880
  %v882 = vcombine.low %v858, %v874
  %v883 = vcombine.high %v858, %v874
  %v885 = vunpack.c.l.s4 1934713408
  %v886 = vunpack.c.0.s8 %v885
  %v887 = vlaneseq
  %v888 = vshrl.u32 %v887, 7
  %v889 = vsub.s32 %v886, %v888
  %v890 = vrot.slane %v882, %v889
  %v892 = vunpack.c.l.s4 1934713408
  %v893 = vunpack.c.0.s8 %v892
  %v894 = vlaneseq
  %v895 = vshrl.u32 %v894, 7
  %v896 = vsub.s32 %v893, %v895
  %v897 = vrot.slane %v883, %v896
  %v898 = vcombine.low %v865, %v881
  %v899 = vcombine.high %v865, %v881
  %v901 = vunpack.c.l.s4 1934713408
  %v902 = vunpack.c.0.s8 %v901
  %v903 = vlaneseq
  %v904 = vshrl.u32 %v903, 7
  %v905 = vsub.s32 %v902, %v904
  %v906 = vrot.slane %v898, %v905
  %v908 = vunpack.c.l.s4 1934713408
  %v909 = vunpack.c.0.s8 %v908
  %v910 = vlaneseq
  %v911 = vshrl.u32 %v910, 7
  %v912 = vsub.s32 %v909, %v911
  %v913 = vrot.slane %v899, %v912
  %v914 = vcombine.high %v890, 0.0
  %v915 = vcombine.high %v897, 0.0
  %v916 = vcombine.high %v906, 0.0
  %v917 = vcombine.high %v913, 0.0
  %v918 = vcombine.low %v763, %v829
  %v919 = vcombine.high %v763, %v829
  %v921 = vunpack.c.l.s4 1983009808
  %v922 = vunpack.c.0.s8 %v921
  %v923 = vlaneseq
  %v924 = vshrl.u32 %v923, 7
  %v925 = vsub.s32 %v922, %v924
  %v926 = vrot.slane %v918, %v925
  %v928 = vunpack.c.l.s4 1983009808
  %v929 = vunpack.c.0.s8 %v928
  %v930 = vlaneseq
  %v931 = vshrl.u32 %v930, 7
  %v932 = vsub.s32 %v929, %v931
  %v933 = vrot.slane %v919, %v932
  %v934 = vcombine.low %v817, %v841
  %v935 = vcombine.high %v817, %v841
  %v937 = vunpack.c.l.s4 1983009808
  %v938 = vunpack.c.0.s8 %v937
  %v939 = vlaneseq
  %v940 = vshrl.u32 %v939, 7
  %v941 = vsub.s32 %v938, %v940
  %v942 = vrot.slane %v934, %v941
  %v944 = vunpack.c.l.s4 1983009808
  %v945 = vunpack.c.0.s8 %v944
  %v946 = vlaneseq
  %v947 = vshrl.u32 %v946, 7
  %v948 = vsub.s32 %v945, %v947
  %v949 = vrot.slane %v935, %v948
  %v950 = vcombine.low %v926, %v942
  %v951 = vcombine.high %v926, %v942
  %v953 = vunpack.c.l.s4 1934713408
  %v954 = vunpack.c.0.s8 %v953
  %v955 = vlaneseq
  %v956 = vshrl.u32 %v955, 7
  %v957 = vsub.s32 %v954, %v956
  %v958 = vrot.slane %v950, %v957
  %v960 = vunpack.c.l.s4 1934713408
  %v961 = vunpack.c.0.s8 %v960
  %v962 = vlaneseq
  %v963 = vshrl.u32 %v962, 7
  %v964 = vsub.s32 %v961, %v963
  %v965 = vrot.slane %v951, %v964
  %v966 = vcombine.low %v933, %v949
  %v967 = vcombine.high %v933, %v949
  %v969 = vunpack.c.l.s4 1934713408
  %v970 = vunpack.c.0.s8 %v969
  %v971 = vlaneseq
  %v972 = vshrl.u32 %v971, 7
  %v973 = vsub.s32 %v970, %v972
  %v974 = vrot.slane %v966, %v973
  %v976 = vunpack.c.l.s4 1934713408
  %v977 = vunpack.c.0.s8 %v976
  %v978 = vlaneseq
  %v979 = vshrl.u32 %v978, 7
  %v980 = vsub.s32 %v977, %v979
  %v981 = vrot.slane %v967, %v980
  %v982 = vcombine.high %v958, 0.0
  %v983 = vcombine.high %v965, 0.0
  %v984 = vcombine.high %v974, 0.0
  %v985 = vcombine.high %v981, 0.0
  %v986 = vcombine.low %v768, %v831
  %v987 = vcombine.high %v768, %v831
  %v989 = vunpack.c.l.s4 1983009808
  %v990 = vunpack.c.0.s8 %v989
  %v991 = vlaneseq
  %v992 = vshrl.u32 %v991, 7
  %v993 = vsub.s32 %v990, %v992
  %v994 = vrot.slane %v986, %v993
  %v996 = vunpack.c.l.s4 1983009808
  %v997 = vunpack.c.0.s8 %v996
  %v998 = vlaneseq
  %v999 = vshrl.u32 %v998, 7
  %v1000 = vsub.s32 %v997, %v999
  %v1001 = vrot.slane %v987, %v1000
  %v1002 = vcombine.low %v819, %v843
  %v1003 = vcombine.high %v819, %v843
  %v1005 = vunpack.c.l.s4 1983009808
  %v1006 = vunpack.c.0.s8 %v1005
  %v1007 = vlaneseq
  %v1008 = vshrl.u32 %v1007, 7
  %v1009 = vsub.s32 %v1006, %v1008
  %v1010 = vrot.slane %v1002, %v1009
  %v1012 = vunpack.c.l.s4 1983009808
  %v1013 = vunpack.c.0.s8 %v1012
  %v1014 = vlaneseq
  %v1015 = vshrl.u32 %v1014, 7
  %v1016 = vsub.s32 %v1013, %v1015
  %v1017 = vrot.slane %v1003, %v1016
  %v1018 = vcombine.low %v994, %v1010
  %v1019 = vcombine.high %v994, %v1010
  %v1021 = vunpack.c.l.s4 1934713408
  %v1022 = vunpack.c.0.s8 %v1021
  %v1023 = vlaneseq
  %v1024 = vshrl.u32 %v1023, 7
  %v1025 = vsub.s32 %v1022, %v1024
  %v1026 = vrot.slane %v1018, %v1025
  %v1028 = vunpack.c.l.s4 1934713408
  %v1029 = vunpack.c.0.s8 %v1028
  %v1030 = vlaneseq
  %v1031 = vshrl.u32 %v1030, 7
  %v1032 = vsub.s32 %v1029, %v1031
  %v1033 = vrot.slane %v1019, %v1032
  %v1034 = vcombine.low %v1001, %v1017
  %v1035 = vcombine.high %v1001, %v1017
  %v1037 = vunpack.c.l.s4 1934713408
  %v1038 = vunpack.c.0.s8 %v1037
  %v1039 = vlaneseq
  %v1040 = vshrl.u32 %v1039, 7
  %v1041 = vsub.s32 %v1038, %v1040
  %v1042 = vrot.slane %v1034, %v1041
  %v1044 = vunpack.c.l.s4 1934713408
  %v1045 = vunpack.c.0.s8 %v1044
  %v1046 = vlaneseq
  %v1047 = vshrl.u32 %v1046, 7
  %v1048 = vsub.s32 %v1045, %v1047
  %v1049 = vrot.slane %v1035, %v1048
  %v1050 = vcombine.high %v1026, 0.0
  %v1051 = vcombine.high %v1033, 0.0
  %v1052 = vcombine.high %v1042, 0.0
  %v1053 = vcombine.high %v1049, 0.0
  %v1054 = vcombine.low %v773, %v833
  %v1055 = vcombine.high %v773, %v833
  %v1057 = vunpack.c.l.s4 1983009808
  %v1058 = vunpack.c.0.s8 %v1057
  %v1059 = vlaneseq
  %v1060 = vshrl.u32 %v1059, 7
  %v1061 = vsub.s32 %v1058, %v1060
  %v1062 = vrot.slane %v1054, %v1061
  %v1064 = vunpack.c.l.s4 1983009808
  %v1065 = vunpack.c.0.s8 %v1064
  %v1066 = vlaneseq
  %v1067 = vshrl.u32 %v1066, 7
  %v1068 = vsub.s32 %v1065, %v1067
  %v1069 = vrot.slane %v1055, %v1068
  %v1070 = vcombine.low %v821, %v845
  %v1071 = vcombine.high %v821, %v845
  %v1073 = vunpack.c.l.s4 1983009808
  %v1074 = vunpack.c.0.s8 %v1073
  %v1075 = vlaneseq
  %v1076 = vshrl.u32 %v1075, 7
  %v1077 = vsub.s32 %v1074, %v1076
  %v1078 = vrot.slane %v1070, %v1077
  %v1080 = vunpack.c.l.s4 1983009808
  %v1081 = vunpack.c.0.s8 %v1080
  %v1082 = vlaneseq
  %v1083 = vshrl.u32 %v1082, 7
  %v1084 = vsub.s32 %v1081, %v1083
  %v1085 = vrot.slane %v1071, %v1084
  %v1086 = vcombine.low %v1062, %v1078
  %v1087 = vcombine.high %v1062, %v1078
  %v1089 = vunpack.c.l.s4 1934713408
  %v1090 = vunpack.c.0.s8 %v1089
  %v1091 = vlaneseq
  %v1092 = vshrl.u32 %v1091, 7
  %v1093 = vsub.s32 %v1090, %v1092
  %v1094 = vrot.slane %v1086, %v1093
  %v1096 = vunpack.c.l.s4 1934713408
  %v1097 = vunpack.c.0.s8 %v1096
  %v1098 = vlaneseq
  %v1099 = vshrl.u32 %v1098, 7
  %v1100 = vsub.s32 %v1097, %v1099
  %v1101 = vrot.slane %v1087, %v1100
  %v1102 = vcombine.low %v1069, %v1085
  %v1103 = vcombine.high %v1069, %v1085
  %v1105 = vunpack.c.l.s4 1934713408
  %v1106 = vunpack.c.0.s8 %v1105
  %v1107 = vlaneseq
  %v1108 = vshrl.u32 %v1107, 7
  %v1109 = vsub.s32 %v1106, %v1108
  %v1110 = vrot.slane %v1102, %v1109
  %v1112 = vunpack.c.l.s4 1934713408
  %v1113 = vunpack.c.0.s8 %v1112
  %v1114 = vlaneseq
  %v1115 = vshrl.u32 %v1114, 7
  %v1116 = vsub.s32 %v1113, %v1115
  %v1117 = vrot.slane %v1103, %v1116
  %v1118 = vcombine.high %v1094, 0.0
  %v1119 = vcombine.high %v1101, 0.0
  %v1120 = vcombine.high %v1110, 0.0
  %v1121 = vcombine.high %v1117, 0.0
  %v1122 = vcombine.low %v890, %v897
  %v1124 = vunpack.c.l.s4 1983009808
  %v1125 = vunpack.c.0.s8 %v1124
  %v1126 = vlaneseq
  %v1127 = vshrl.u32 %v1126, 7
  %v1128 = vsub.s32 %v1125, %v1127
  %v1129 = vrot.slane %v1122, %v1128
  %v1130 = vcombine.low %v914, %v915
  %v1132 = vunpack.c.l.s4 1983009808
  %v1133 = vunpack.c.0.s8 %v1132
  %v1134 = vlaneseq
  %v1135 = vshrl.u32 %v1134, 7
  %v1136 = vsub.s32 %v1133, %v1135
  %v1137 = vrot.slane %v1130, %v1136
  %v1138 = vcombine.low %v906, %v913
  %v1140 = vunpack.c.l.s4 1983009808
  %v1141 = vunpack.c.0.s8 %v1140
  %v1142 = vlaneseq
  %v1143 = vshrl.u32 %v1142, 7
  %v1144 = vsub.s32 %v1141, %v1143
  %v1145 = vrot.slane %v1138, %v1144
  %v1146 = vcombine.low %v916, %v917
  %v1148 = vunpack.c.l.s4 1983009808
  %v1149 = vunpack.c.0.s8 %v1148
  %v1150 = vlaneseq
  %v1151 = vshrl.u32 %v1150, 7
  %v1152 = vsub.s32 %v1149, %v1151
  %v1153 = vrot.slane %v1146, %v1152
  %v1154 = vcombine.low %v1129, %v1137
  %v1155 = vcombine.high %v1129, %v1137
  %v1157 = vunpack.c.l.s4 1934713408
  %v1158 = vunpack.c.0.s8 %v1157
  %v1159 = vlaneseq
  %v1160 = vshrl.u32 %v1159, 7
  %v1161 = vsub.s32 %v1158, %v1160
  %v1162 = vrot.slane %v1154, %v1161
  %v1164 = vunpack.c.l.s4 1934713408
  %v1165 = vunpack.c.0.s8 %v1164
  %v1166 = vlaneseq
  %v1167 = vshrl.u32 %v1166, 7
  %v1168 = vsub.s32 %v1165, %v1167
  %v1169 = vrot.slane %v1155, %v1168
  %v1170 = vcombine.low %v1145, %v1153
  %v1171 = vcombine.high %v1145, %v1153
  %v1173 = vunpack.c.l.s4 1934713408
  %v1174 = vunpack.c.0.s8 %v1173
  %v1175 = vlaneseq
  %v1176 = vshrl.u32 %v1175, 7
  %v1177 = vsub.s32 %v1174, %v1176
  %v1178 = vrot.slane %v1170, %v1177
  %v1180 = vunpack.c.l.s4 1934713408
  %v1181 = vunpack.c.0.s8 %v1180
  %v1182 = vlaneseq
  %v1183 = vshrl.u32 %v1182, 7
  %v1184 = vsub.s32 %v1181, %v1183
  %v1185 = vrot.slane %v1171, %v1184
  %v1186 = vcombine.low %v1162, %v1178
  %v1187 = vcombine.high %v1162, %v1178
  %v1188 = vcombine.low %v1169, %v1185
  %v1189 = vcombine.high %v1169, %v1185
  %v1190 = vcombine.low %v958, %v965
  %v1192 = vunpack.c.l.s4 1983009808
  %v1193 = vunpack.c.0.s8 %v1192
  %v1194 = vlaneseq
  %v1195 = vshrl.u32 %v1194, 7
  %v1196 = vsub.s32 %v1193, %v1195
  %v1197 = vrot.slane %v1190, %v1196
  %v1198 = vcombine.low %v982, %v983
  %v1200 = vunpack.c.l.s4 1983009808
  %v1201 = vunpack.c.0.s8 %v1200
  %v1202 = vlaneseq
  %v1203 = vshrl.u32 %v1202, 7
  %v1204 = vsub.s32 %v1201, %v1203
  %v1205 = vrot.slane %v1198, %v1204
  %v1206 = vcombine.low %v974, %v981
  %v1208 = vunpack.c.l.s4 1983009808
  %v1209 = vunpack.c.0.s8 %v1208
  %v1210 = vlaneseq
  %v1211 = vshrl.u32 %v1210, 7
  %v1212 = vsub.s32 %v1209, %v1211
  %v1213 = vrot.slane %v1206, %v1212
  %v1214 = vcombine.low %v984, %v985
  %v1216 = vunpack.c.l.s4 1983009808
  %v1217 = vunpack.c.0.s8 %v1216
  %v1218 = vlaneseq
  %v1219 = vshrl.u32 %v1218, 7
  %v1220 = vsub.s32 %v1217, %v1219
  %v1221 = vrot.slane %v1214, %v1220
  %v1222 = vcombine.low %v1197, %v1205
  %v1223 = vcombine.high %v1197, %v1205
  %v1225 = vunpack.c.l.s4 1934713408
  %v1226 = vunpack.c.0.s8 %v1225
  %v1227 = vlaneseq
  %v1228 = vshrl.u32 %v1227, 7
  %v1229 = vsub.s32 %v1226, %v1228
  %v1230 = vrot.slane %v1222, %v1229
  %v1232 = vunpack.c.l.s4 1934713408
  %v1233 = vunpack.c.0.s8 %v1232
  %v1234 = vlaneseq
  %v1235 = vshrl.u32 %v1234, 7
  %v1236 = vsub.s32 %v1233, %v1235
  %v1237 = vrot.slane %v1223, %v1236
  %v1238 = vcombine.low %v1213, %v1221
  %v1239 = vcombine.high %v1213, %v1221
  %v1241 = vunpack.c.l.s4 1934713408
  %v1242 = vunpack.c.0.s8 %v1241
  %v1243 = vlaneseq
  %v1244 = vshrl.u32 %v1243, 7
  %v1245 = vsub.s32 %v1242, %v1244
  %v1246 = vrot.slane %v1238, %v1245
  %v1248 = vunpack.c.l.s4 1934713408
  %v1249 = vunpack.c.0.s8 %v1248
  %v1250 = vlaneseq
  %v1251 = vshrl.u32 %v1250, 7
  %v1252 = vsub.s32 %v1249, %v1251
  %v1253 = vrot.slane %v1239, %v1252
  %v1254 = vcombine.low %v1230, %v1246
  %v1255 = vcombine.high %v1230, %v1246
  %v1256 = vcombine.low %v1237, %v1253
  %v1257 = vcombine.high %v1237, %v1253
  %v1258 = vcombine.low %v1026, %v1033
  %v1260 = vunpack.c.l.s4 1983009808
  %v1261 = vunpack.c.0.s8 %v1260
  %v1262 = vlaneseq
  %v1263 = vshrl.u32 %v1262, 7
  %v1264 = vsub.s32 %v1261, %v1263
  %v1265 = vrot.slane %v1258, %v1264
  %v1266 = vcombine.low %v1050, %v1051
  %v1268 = vunpack.c.l.s4 1983009808
  %v1269 = vunpack.c.0.s8 %v1268
  %v1270 = vlaneseq
  %v1271 = vshrl.u32 %v1270, 7
  %v1272 = vsub.s32 %v1269, %v1271
  %v1273 = vrot.slane %v1266, %v1272
  %v1274 = vcombine.low %v1042, %v1049
  %v1276 = vunpack.c.l.s4 1983009808
  %v1277 = vunpack.c.0.s8 %v1276
  %v1278 = vlaneseq
  %v1279 = vshrl.u32 %v1278, 7
  %v1280 = vsub.s32 %v1277, %v1279
  %v1281 = vrot.slane %v1274, %v1280
  %v1282 = vcombine.low %v1052, %v1053
  %v1284 = vunpack.c.l.s4 1983009808
  %v1285 = vunpack.c.0.s8 %v1284
  %v1286 = vlaneseq
  %v1287 = vshrl.u32 %v1286, 7
  %v1288 = vsub.s32 %v1285, %v1287
  %v1289 = vrot.slane %v1282, %v1288
  %v1290 = vcombine.low %v1265, %v1273
  %v1291 = vcombine.high %v1265, %v1273
  %v1293 = vunpack.c.l.s4 1934713408
  %v1294 = vunpack.c.0.s8 %v1293
  %v1295 = vlaneseq
  %v1296 = vshrl.u32 %v1295, 7
  %v1297 = vsub.s32 %v1294, %v1296
  %v1298 = vrot.slane %v1290, %v1297
  %v1300 = vunpack.c.l.s4 1934713408
  %v1301 = vunpack.c.0.s8 %v1300
  %v1302 = vlaneseq
  %v1303 = vshrl.u32 %v1302, 7
  %v1304 = vsub.s32 %v1301, %v1303
  %v1305 = vrot.slane %v1291, %v1304
  %v1306 = vcombine.low %v1281, %v1289
  %v1307 = vcombine.high %v1281, %v1289
  %v1309 = vunpack.c.l.s4 1934713408
  %v1310 = vunpack.c.0.s8 %v1309
  %v1311 = vlaneseq
  %v1312 = vshrl.u32 %v1311, 7
  %v1313 = vsub.s32 %v1310, %v1312
  %v1314 = vrot.slane %v1306, %v1313
  %v1316 = vunpack.c.l.s4 1934713408
  %v1317 = vunpack.c.0.s8 %v1316
  %v1318 = vlaneseq
  %v1319 = vshrl.u32 %v1318, 7
  %v1320 = vsub.s32 %v1317, %v1319
  %v1321 = vrot.slane %v1307, %v1320
  %v1322 = vcombine.low %v1298, %v1314
  %v1323 = vcombine.high %v1298, %v1314
  %v1324 = vcombine.low %v1305, %v1321
  %v1325 = vcombine.high %v1305, %v1321
  %v1326 = vcombine.low %v1094, %v1101
  %v1328 = vunpack.c.l.s4 1983009808
  %v1329 = vunpack.c.0.s8 %v1328
  %v1330 = vlaneseq
  %v1331 = vshrl.u32 %v1330, 7
  %v1332 = vsub.s32 %v1329, %v1331
  %v1333 = vrot.slane %v1326, %v1332
  %v1334 = vcombine.low %v1118, %v1119
  %v1336 = vunpack.c.l.s4 1983009808
  %v1337 = vunpack.c.0.s8 %v1336
  %v1338 = vlaneseq
  %v1339 = vshrl.u32 %v1338, 7
  %v1340 = vsub.s32 %v1337, %v1339
  %v1341 = vrot.slane %v1334, %v1340
  %v1342 = vcombine.low %v1110, %v1117
  %v1344 = vunpack.c.l.s4 1983009808
  %v1345 = vunpack.c.0.s8 %v1344
  %v1346 = vlaneseq
  %v1347 = vshrl.u32 %v1346, 7
  %v1348 = vsub.s32 %v1345, %v1347
  %v1349 = vrot.slane %v1342, %v1348
  %v1350 = vcombine.low %v1120, %v1121
  %v1352 = vunpack.c.l.s4 1983009808
  %v1353 = vunpack.c.0.s8 %v1352
  %v1354 = vlaneseq
  %v1355 = vshrl.u32 %v1354, 7
  %v1356 = vsub.s32 %v1353, %v1355
  %v1357 = vrot.slane %v1350, %v1356
  %v1358 = vcombine.low %v1333, %v1341
  %v1359 = vcombine.high %v1333, %v1341
  %v1361 = vunpack.c.l.s4 1934713408
  %v1362 = vunpack.c.0.s8 %v1361
  %v1363 = vlaneseq
  %v1364 = vshrl.u32 %v1363, 7
  %v1365 = vsub.s32 %v1362, %v1364
  %v1366 = vrot.slane %v1358, %v1365
  %v1368 = vunpack.c.l.s4 1934713408
  %v1369 = vunpack.c.0.s8 %v1368
  %v1370 = vlaneseq
  %v1371 = vshrl.u32 %v1370, 7
  %v1372 = vsub.s32 %v1369, %v1371
  %v1373 = vrot.slane %v1359, %v1372
  %v1374 = vcombine.low %v1349, %v1357
  %v1375 = vcombine.high %v1349, %v1357
  %v1377 = vunpack.c.l.s4 1934713408
  %v1378 = vunpack.c.0.s8 %v1377
  %v1379 = vlaneseq
  %v1380 = vshrl.u32 %v1379, 7
  %v1381 = vsub.s32 %v1378, %v1380
  %v1382 = vrot.slane %v1374, %v1381
  %v1384 = vunpack.c.l.s4 1934713408
  %v1385 = vunpack.c.0.s8 %v1384
  %v1386 = vlaneseq
  %v1387 = vshrl.u32 %v1386, 7
  %v1388 = vsub.s32 %v1385, %v1387
  %v1389 = vrot.slane %v1375, %v1388
  %v1390 = vcombine.low %v1366, %v1382
  %v1391 = vcombine.high %v1366, %v1382
  %v1392 = vcombine.low %v1373, %v1389
  %v1393 = vcombine.high %v1373, %v1389
  %1398 = vrot.lane.b32.xlu0 %v778, 112
  %v1399 = vpop.permute.xlu0 %1398
  %1400 = vrot.lane.b32.xlu0 %v784, 112
  %v1401 = vpop.permute.xlu0 %1400
  %1402 = vrot.lane.b32.xlu0 %v790, 112
  %v1403 = vpop.permute.xlu0 %1402
  %1404 = vrot.lane.b32.xlu0 %v796, 112
  %v1405 = vpop.permute.xlu0 %1404
  %1406 = vrot.lane.b32.xlu0 %v778, 96
  %v1407 = vpop.permute.xlu0 %1406
  %1408 = vrot.lane.b32.xlu0 %v784, 96
  %v1409 = vpop.permute.xlu0 %1408
  %1410 = vrot.lane.b32.xlu0 %v790, 96
  %v1411 = vpop.permute.xlu0 %1410
  %1412 = vrot.lane.b32.xlu0 %v796, 96
  %v1413 = vpop.permute.xlu0 %1412
  %1414 = vrot.lane.b32.xlu0 %v778, 80
  %v1415 = vpop.permute.xlu0 %1414
  %1416 = vrot.lane.b32.xlu0 %v784, 80
  %v1417 = vpop.permute.xlu0 %1416
  %1418 = vrot.lane.b32.xlu0 %v790, 80
  %v1419 = vpop.permute.xlu0 %1418
  %1420 = vrot.lane.b32.xlu0 %v796, 80
  %v1421 = vpop.permute.xlu0 %1420
  %1422 = vrot.lane.b32.xlu0 %v778, 64
  %v1423 = vpop.permute.xlu0 %1422
  %1424 = vrot.lane.b32.xlu0 %v784, 64
  %v1425 = vpop.permute.xlu0 %1424
  %1426 = vrot.lane.b32.xlu0 %v790, 64
  %v1427 = vpop.permute.xlu0 %1426
  %1428 = vrot.lane.b32.xlu0 %v796, 64
  %v1429 = vpop.permute.xlu0 %1428
  %1430 = vrot.lane.b32.xlu0 %v1399, 64
  %v1431 = vpop.permute.xlu0 %1430
  %1432 = vrot.lane.b32.xlu0 %v1401, 64
  %v1433 = vpop.permute.xlu0 %1432
  %1434 = vrot.lane.b32.xlu0 %v1403, 64
  %v1435 = vpop.permute.xlu0 %1434
  %1436 = vrot.lane.b32.xlu0 %v1405, 64
  %v1437 = vpop.permute.xlu0 %1436
  %1438 = vrot.lane.b32.xlu0 %v1407, 64
  %v1439 = vpop.permute.xlu0 %1438
  %1440 = vrot.lane.b32.xlu0 %v1409, 64
  %v1441 = vpop.permute.xlu0 %1440
  %1442 = vrot.lane.b32.xlu0 %v1411, 64
  %v1443 = vpop.permute.xlu0 %1442
  %1444 = vrot.lane.b32.xlu0 %v1413, 64
  %v1445 = vpop.permute.xlu0 %1444
  %1446 = vrot.lane.b32.xlu0 %v1415, 64
  %v1447 = vpop.permute.xlu0 %1446
  %1448 = vrot.lane.b32.xlu0 %v1417, 64
  %v1449 = vpop.permute.xlu0 %1448
  %1450 = vrot.lane.b32.xlu0 %v1419, 64
  %v1451 = vpop.permute.xlu0 %1450
  %1452 = vrot.lane.b32.xlu0 %v1421, 64
  %v1453 = vpop.permute.xlu0 %1452
  %v1470 = vcombine.low %v1423, %v1439
  %v1471 = vcombine.high %v1423, %v1439
  %v1473 = vunpack.c.l.s4 1983009808
  %v1474 = vunpack.c.0.s8 %v1473
  %v1475 = vlaneseq
  %v1476 = vshrl.u32 %v1475, 7
  %v1477 = vsub.s32 %v1474, %v1476
  %v1478 = vrot.slane %v1470, %v1477
  %v1480 = vunpack.c.l.s4 1983009808
  %v1481 = vunpack.c.0.s8 %v1480
  %v1482 = vlaneseq
  %v1483 = vshrl.u32 %v1482, 7
  %v1484 = vsub.s32 %v1481, %v1483
  %v1485 = vrot.slane %v1471, %v1484
  %v1486 = vcombine.low %v1431, %v1447
  %v1487 = vcombine.high %v1431, %v1447
  %v1489 = vunpack.c.l.s4 1983009808
  %v1490 = vunpack.c.0.s8 %v1489
  %v1491 = vlaneseq
  %v1492 = vshrl.u32 %v1491, 7
  %v1493 = vsub.s32 %v1490, %v1492
  %v1494 = vrot.slane %v1486, %v1493
  %v1496 = vunpack.c.l.s4 1983009808
  %v1497 = vunpack.c.0.s8 %v1496
  %v1498 = vlaneseq
  %v1499 = vshrl.u32 %v1498, 7
  %v1500 = vsub.s32 %v1497, %v1499
  %v1501 = vrot.slane %v1487, %v1500
  %v1502 = vcombine.low %v1478, %v1494
  %v1503 = vcombine.high %v1478, %v1494
  %v1505 = vunpack.c.l.s4 1934713408
  %v1506 = vunpack.c.0.s8 %v1505
  %v1507 = vlaneseq
  %v1508 = vshrl.u32 %v1507, 7
  %v1509 = vsub.s32 %v1506, %v1508
  %v1510 = vrot.slane %v1502, %v1509
  %v1512 = vunpack.c.l.s4 1934713408
  %v1513 = vunpack.c.0.s8 %v1512
  %v1514 = vlaneseq
  %v1515 = vshrl.u32 %v1514, 7
  %v1516 = vsub.s32 %v1513, %v1515
  %v1517 = vrot.slane %v1503, %v1516
  %v1518 = vcombine.low %v1485, %v1501
  %v1519 = vcombine.high %v1485, %v1501
  %v1521 = vunpack.c.l.s4 1934713408
  %v1522 = vunpack.c.0.s8 %v1521
  %v1523 = vlaneseq
  %v1524 = vshrl.u32 %v1523, 7
  %v1525 = vsub.s32 %v1522, %v1524
  %v1526 = vrot.slane %v1518, %v1525
  %v1528 = vunpack.c.l.s4 1934713408
  %v1529 = vunpack.c.0.s8 %v1528
  %v1530 = vlaneseq
  %v1531 = vshrl.u32 %v1530, 7
  %v1532 = vsub.s32 %v1529, %v1531
  %v1533 = vrot.slane %v1519, %v1532
  %v1534 = vcombine.high %v1510, 0.0
  %v1535 = vcombine.high %v1517, 0.0
  %v1536 = vcombine.high %v1526, 0.0
  %v1537 = vcombine.high %v1533, 0.0
  %v1538 = vcombine.low %v1425, %v1441
  %v1539 = vcombine.high %v1425, %v1441
  %v1541 = vunpack.c.l.s4 1983009808
  %v1542 = vunpack.c.0.s8 %v1541
  %v1543 = vlaneseq
  %v1544 = vshrl.u32 %v1543, 7
  %v1545 = vsub.s32 %v1542, %v1544
  %v1546 = vrot.slane %v1538, %v1545
  %v1548 = vunpack.c.l.s4 1983009808
  %v1549 = vunpack.c.0.s8 %v1548
  %v1550 = vlaneseq
  %v1551 = vshrl.u32 %v1550, 7
  %v1552 = vsub.s32 %v1549, %v1551
  %v1553 = vrot.slane %v1539, %v1552
  %v1554 = vcombine.low %v1433, %v1449
  %v1555 = vcombine.high %v1433, %v1449
  %v1557 = vunpack.c.l.s4 1983009808
  %v1558 = vunpack.c.0.s8 %v1557
  %v1559 = vlaneseq
  %v1560 = vshrl.u32 %v1559, 7
  %v1561 = vsub.s32 %v1558, %v1560
  %v1562 = vrot.slane %v1554, %v1561
  %v1564 = vunpack.c.l.s4 1983009808
  %v1565 = vunpack.c.0.s8 %v1564
  %v1566 = vlaneseq
  %v1567 = vshrl.u32 %v1566, 7
  %v1568 = vsub.s32 %v1565, %v1567
  %v1569 = vrot.slane %v1555, %v1568
  %v1570 = vcombine.low %v1546, %v1562
  %v1571 = vcombine.high %v1546, %v1562
  %v1573 = vunpack.c.l.s4 1934713408
  %v1574 = vunpack.c.0.s8 %v1573
  %v1575 = vlaneseq
  %v1576 = vshrl.u32 %v1575, 7
  %v1577 = vsub.s32 %v1574, %v1576
  %v1578 = vrot.slane %v1570, %v1577
  %v1580 = vunpack.c.l.s4 1934713408
  %v1581 = vunpack.c.0.s8 %v1580
  %v1582 = vlaneseq
  %v1583 = vshrl.u32 %v1582, 7
  %v1584 = vsub.s32 %v1581, %v1583
  %v1585 = vrot.slane %v1571, %v1584
  %v1586 = vcombine.low %v1553, %v1569
  %v1587 = vcombine.high %v1553, %v1569
  %v1589 = vunpack.c.l.s4 1934713408
  %v1590 = vunpack.c.0.s8 %v1589
  %v1591 = vlaneseq
  %v1592 = vshrl.u32 %v1591, 7
  %v1593 = vsub.s32 %v1590, %v1592
  %v1594 = vrot.slane %v1586, %v1593
  %v1596 = vunpack.c.l.s4 1934713408
  %v1597 = vunpack.c.0.s8 %v1596
  %v1598 = vlaneseq
  %v1599 = vshrl.u32 %v1598, 7
  %v1600 = vsub.s32 %v1597, %v1599
  %v1601 = vrot.slane %v1587, %v1600
  %v1602 = vcombine.high %v1578, 0.0
  %v1603 = vcombine.high %v1585, 0.0
  %v1604 = vcombine.high %v1594, 0.0
  %v1605 = vcombine.high %v1601, 0.0
  %v1606 = vcombine.low %v1427, %v1443
  %v1607 = vcombine.high %v1427, %v1443
  %v1609 = vunpack.c.l.s4 1983009808
  %v1610 = vunpack.c.0.s8 %v1609
  %v1611 = vlaneseq
  %v1612 = vshrl.u32 %v1611, 7
  %v1613 = vsub.s32 %v1610, %v1612
  %v1614 = vrot.slane %v1606, %v1613
  %v1616 = vunpack.c.l.s4 1983009808
  %v1617 = vunpack.c.0.s8 %v1616
  %v1618 = vlaneseq
  %v1619 = vshrl.u32 %v1618, 7
  %v1620 = vsub.s32 %v1617, %v1619
  %v1621 = vrot.slane %v1607, %v1620
  %v1622 = vcombine.low %v1435, %v1451
  %v1623 = vcombine.high %v1435, %v1451
  %v1625 = vunpack.c.l.s4 1983009808
  %v1626 = vunpack.c.0.s8 %v1625
  %v1627 = vlaneseq
  %v1628 = vshrl.u32 %v1627, 7
  %v1629 = vsub.s32 %v1626, %v1628
  %v1630 = vrot.slane %v1622, %v1629
  %v1632 = vunpack.c.l.s4 1983009808
  %v1633 = vunpack.c.0.s8 %v1632
  %v1634 = vlaneseq
  %v1635 = vshrl.u32 %v1634, 7
  %v1636 = vsub.s32 %v1633, %v1635
  %v1637 = vrot.slane %v1623, %v1636
  %v1638 = vcombine.low %v1614, %v1630
  %v1639 = vcombine.high %v1614, %v1630
  %v1641 = vunpack.c.l.s4 1934713408
  %v1642 = vunpack.c.0.s8 %v1641
  %v1643 = vlaneseq
  %v1644 = vshrl.u32 %v1643, 7
  %v1645 = vsub.s32 %v1642, %v1644
  %v1646 = vrot.slane %v1638, %v1645
  %v1648 = vunpack.c.l.s4 1934713408
  %v1649 = vunpack.c.0.s8 %v1648
  %v1650 = vlaneseq
  %v1651 = vshrl.u32 %v1650, 7
  %v1652 = vsub.s32 %v1649, %v1651
  %v1653 = vrot.slane %v1639, %v1652
  %v1654 = vcombine.low %v1621, %v1637
  %v1655 = vcombine.high %v1621, %v1637
  %v1657 = vunpack.c.l.s4 1934713408
  %v1658 = vunpack.c.0.s8 %v1657
  %v1659 = vlaneseq
  %v1660 = vshrl.u32 %v1659, 7
  %v1661 = vsub.s32 %v1658, %v1660
  %v1662 = vrot.slane %v1654, %v1661
  %v1664 = vunpack.c.l.s4 1934713408
  %v1665 = vunpack.c.0.s8 %v1664
  %v1666 = vlaneseq
  %v1667 = vshrl.u32 %v1666, 7
  %v1668 = vsub.s32 %v1665, %v1667
  %v1669 = vrot.slane %v1655, %v1668
  %v1670 = vcombine.high %v1646, 0.0
  %v1671 = vcombine.high %v1653, 0.0
  %v1672 = vcombine.high %v1662, 0.0
  %v1673 = vcombine.high %v1669, 0.0
  %v1674 = vcombine.low %v1429, %v1445
  %v1675 = vcombine.high %v1429, %v1445
  %v1677 = vunpack.c.l.s4 1983009808
  %v1678 = vunpack.c.0.s8 %v1677
  %v1679 = vlaneseq
  %v1680 = vshrl.u32 %v1679, 7
  %v1681 = vsub.s32 %v1678, %v1680
  %v1682 = vrot.slane %v1674, %v1681
  %v1684 = vunpack.c.l.s4 1983009808
  %v1685 = vunpack.c.0.s8 %v1684
  %v1686 = vlaneseq
  %v1687 = vshrl.u32 %v1686, 7
  %v1688 = vsub.s32 %v1685, %v1687
  %v1689 = vrot.slane %v1675, %v1688
  %v1690 = vcombine.low %v1437, %v1453
  %v1691 = vcombine.high %v1437, %v1453
  %v1693 = vunpack.c.l.s4 1983009808
  %v1694 = vunpack.c.0.s8 %v1693
  %v1695 = vlaneseq
  %v1696 = vshrl.u32 %v1695, 7
  %v1697 = vsub.s32 %v1694, %v1696
  %v1698 = vrot.slane %v1690, %v1697
  %v1700 = vunpack.c.l.s4 1983009808
  %v1701 = vunpack.c.0.s8 %v1700
  %v1702 = vlaneseq
  %v1703 = vshrl.u32 %v1702, 7
  %v1704 = vsub.s32 %v1701, %v1703
  %v1705 = vrot.slane %v1691, %v1704
  %v1706 = vcombine.low %v1682, %v1698
  %v1707 = vcombine.high %v1682, %v1698
  %v1709 = vunpack.c.l.s4 1934713408
  %v1710 = vunpack.c.0.s8 %v1709
  %v1711 = vlaneseq
  %v1712 = vshrl.u32 %v1711, 7
  %v1713 = vsub.s32 %v1710, %v1712
  %v1714 = vrot.slane %v1706, %v1713
  %v1716 = vunpack.c.l.s4 1934713408
  %v1717 = vunpack.c.0.s8 %v1716
  %v1718 = vlaneseq
  %v1719 = vshrl.u32 %v1718, 7
  %v1720 = vsub.s32 %v1717, %v1719
  %v1721 = vrot.slane %v1707, %v1720
  %v1722 = vcombine.low %v1689, %v1705
  %v1723 = vcombine.high %v1689, %v1705
  %v1725 = vunpack.c.l.s4 1934713408
  %v1726 = vunpack.c.0.s8 %v1725
  %v1727 = vlaneseq
  %v1728 = vshrl.u32 %v1727, 7
  %v1729 = vsub.s32 %v1726, %v1728
  %v1730 = vrot.slane %v1722, %v1729
  %v1732 = vunpack.c.l.s4 1934713408
  %v1733 = vunpack.c.0.s8 %v1732
  %v1734 = vlaneseq
  %v1735 = vshrl.u32 %v1734, 7
  %v1736 = vsub.s32 %v1733, %v1735
  %v1737 = vrot.slane %v1723, %v1736
  %v1738 = vcombine.high %v1714, 0.0
  %v1739 = vcombine.high %v1721, 0.0
  %v1740 = vcombine.high %v1730, 0.0
  %v1741 = vcombine.high %v1737, 0.0
  %v1742 = vcombine.low %v1510, %v1517
  %v1744 = vunpack.c.l.s4 1983009808
  %v1745 = vunpack.c.0.s8 %v1744
  %v1746 = vlaneseq
  %v1747 = vshrl.u32 %v1746, 7
  %v1748 = vsub.s32 %v1745, %v1747
  %v1749 = vrot.slane %v1742, %v1748
  %v1750 = vcombine.low %v1534, %v1535
  %v1752 = vunpack.c.l.s4 1983009808
  %v1753 = vunpack.c.0.s8 %v1752
  %v1754 = vlaneseq
  %v1755 = vshrl.u32 %v1754, 7
  %v1756 = vsub.s32 %v1753, %v1755
  %v1757 = vrot.slane %v1750, %v1756
  %v1758 = vcombine.low %v1526, %v1533
  %v1760 = vunpack.c.l.s4 1983009808
  %v1761 = vunpack.c.0.s8 %v1760
  %v1762 = vlaneseq
  %v1763 = vshrl.u32 %v1762, 7
  %v1764 = vsub.s32 %v1761, %v1763
  %v1765 = vrot.slane %v1758, %v1764
  %v1766 = vcombine.low %v1536, %v1537
  %v1768 = vunpack.c.l.s4 1983009808
  %v1769 = vunpack.c.0.s8 %v1768
  %v1770 = vlaneseq
  %v1771 = vshrl.u32 %v1770, 7
  %v1772 = vsub.s32 %v1769, %v1771
  %v1773 = vrot.slane %v1766, %v1772
  %v1774 = vcombine.low %v1749, %v1757
  %v1775 = vcombine.high %v1749, %v1757
  %v1777 = vunpack.c.l.s4 1934713408
  %v1778 = vunpack.c.0.s8 %v1777
  %v1779 = vlaneseq
  %v1780 = vshrl.u32 %v1779, 7
  %v1781 = vsub.s32 %v1778, %v1780
  %v1782 = vrot.slane %v1774, %v1781
  %v1784 = vunpack.c.l.s4 1934713408
  %v1785 = vunpack.c.0.s8 %v1784
  %v1786 = vlaneseq
  %v1787 = vshrl.u32 %v1786, 7
  %v1788 = vsub.s32 %v1785, %v1787
  %v1789 = vrot.slane %v1775, %v1788
  %v1790 = vcombine.low %v1765, %v1773
  %v1791 = vcombine.high %v1765, %v1773
  %v1793 = vunpack.c.l.s4 1934713408
  %v1794 = vunpack.c.0.s8 %v1793
  %v1795 = vlaneseq
  %v1796 = vshrl.u32 %v1795, 7
  %v1797 = vsub.s32 %v1794, %v1796
  %v1798 = vrot.slane %v1790, %v1797
  %v1800 = vunpack.c.l.s4 1934713408
  %v1801 = vunpack.c.0.s8 %v1800
  %v1802 = vlaneseq
  %v1803 = vshrl.u32 %v1802, 7
  %v1804 = vsub.s32 %v1801, %v1803
  %v1805 = vrot.slane %v1791, %v1804
  %v1806 = vcombine.low %v1782, %v1798
  %v1807 = vcombine.high %v1782, %v1798
  %v1808 = vcombine.low %v1789, %v1805
  %v1809 = vcombine.high %v1789, %v1805
  %v1810 = vcombine.low %v1578, %v1585
  %v1812 = vunpack.c.l.s4 1983009808
  %v1813 = vunpack.c.0.s8 %v1812
  %v1814 = vlaneseq
  %v1815 = vshrl.u32 %v1814, 7
  %v1816 = vsub.s32 %v1813, %v1815
  %v1817 = vrot.slane %v1810, %v1816
  %v1818 = vcombine.low %v1602, %v1603
  %v1820 = vunpack.c.l.s4 1983009808
  %v1821 = vunpack.c.0.s8 %v1820
  %v1822 = vlaneseq
  %v1823 = vshrl.u32 %v1822, 7
  %v1824 = vsub.s32 %v1821, %v1823
  %v1825 = vrot.slane %v1818, %v1824
  %v1826 = vcombine.low %v1594, %v1601
  %v1828 = vunpack.c.l.s4 1983009808
  %v1829 = vunpack.c.0.s8 %v1828
  %v1830 = vlaneseq
  %v1831 = vshrl.u32 %v1830, 7
  %v1832 = vsub.s32 %v1829, %v1831
  %v1833 = vrot.slane %v1826, %v1832
  %v1834 = vcombine.low %v1604, %v1605
  %v1836 = vunpack.c.l.s4 1983009808
  %v1837 = vunpack.c.0.s8 %v1836
  %v1838 = vlaneseq
  %v1839 = vshrl.u32 %v1838, 7
  %v1840 = vsub.s32 %v1837, %v1839
  %v1841 = vrot.slane %v1834, %v1840
  %v1842 = vcombine.low %v1817, %v1825
  %v1843 = vcombine.high %v1817, %v1825
  %v1845 = vunpack.c.l.s4 1934713408
  %v1846 = vunpack.c.0.s8 %v1845
  %v1847 = vlaneseq
  %v1848 = vshrl.u32 %v1847, 7
  %v1849 = vsub.s32 %v1846, %v1848
  %v1850 = vrot.slane %v1842, %v1849
  %v1852 = vunpack.c.l.s4 1934713408
  %v1853 = vunpack.c.0.s8 %v1852
  %v1854 = vlaneseq
  %v1855 = vshrl.u32 %v1854, 7
  %v1856 = vsub.s32 %v1853, %v1855
  %v1857 = vrot.slane %v1843, %v1856
  %v1858 = vcombine.low %v1833, %v1841
  %v1859 = vcombine.high %v1833, %v1841
  %v1861 = vunpack.c.l.s4 1934713408
  %v1862 = vunpack.c.0.s8 %v1861
  %v1863 = vlaneseq
  %v1864 = vshrl.u32 %v1863, 7
  %v1865 = vsub.s32 %v1862, %v1864
  %v1866 = vrot.slane %v1858, %v1865
  %v1868 = vunpack.c.l.s4 1934713408
  %v1869 = vunpack.c.0.s8 %v1868
  %v1870 = vlaneseq
  %v1871 = vshrl.u32 %v1870, 7
  %v1872 = vsub.s32 %v1869, %v1871
  %v1873 = vrot.slane %v1859, %v1872
  %v1874 = vcombine.low %v1850, %v1866
  %v1875 = vcombine.high %v1850, %v1866
  %v1876 = vcombine.low %v1857, %v1873
  %v1877 = vcombine.high %v1857, %v1873
  %v1878 = vcombine.low %v1646, %v1653
  %v1880 = vunpack.c.l.s4 1983009808
  %v1881 = vunpack.c.0.s8 %v1880
  %v1882 = vlaneseq
  %v1883 = vshrl.u32 %v1882, 7
  %v1884 = vsub.s32 %v1881, %v1883
  %v1885 = vrot.slane %v1878, %v1884
  %v1886 = vcombine.low %v1670, %v1671
  %v1888 = vunpack.c.l.s4 1983009808
  %v1889 = vunpack.c.0.s8 %v1888
  %v1890 = vlaneseq
  %v1891 = vshrl.u32 %v1890, 7
  %v1892 = vsub.s32 %v1889, %v1891
  %v1893 = vrot.slane %v1886, %v1892
  %v1894 = vcombine.low %v1662, %v1669
  %v1896 = vunpack.c.l.s4 1983009808
  %v1897 = vunpack.c.0.s8 %v1896
  %v1898 = vlaneseq
  %v1899 = vshrl.u32 %v1898, 7
  %v1900 = vsub.s32 %v1897, %v1899
  %v1901 = vrot.slane %v1894, %v1900
  %v1902 = vcombine.low %v1672, %v1673
  %v1904 = vunpack.c.l.s4 1983009808
  %v1905 = vunpack.c.0.s8 %v1904
  %v1906 = vlaneseq
  %v1907 = vshrl.u32 %v1906, 7
  %v1908 = vsub.s32 %v1905, %v1907
  %v1909 = vrot.slane %v1902, %v1908
  %v1910 = vcombine.low %v1885, %v1893
  %v1911 = vcombine.high %v1885, %v1893
  %v1913 = vunpack.c.l.s4 1934713408
  %v1914 = vunpack.c.0.s8 %v1913
  %v1915 = vlaneseq
  %v1916 = vshrl.u32 %v1915, 7
  %v1917 = vsub.s32 %v1914, %v1916
  %v1918 = vrot.slane %v1910, %v1917
  %v1920 = vunpack.c.l.s4 1934713408
  %v1921 = vunpack.c.0.s8 %v1920
  %v1922 = vlaneseq
  %v1923 = vshrl.u32 %v1922, 7
  %v1924 = vsub.s32 %v1921, %v1923
  %v1925 = vrot.slane %v1911, %v1924
  %v1926 = vcombine.low %v1901, %v1909
  %v1927 = vcombine.high %v1901, %v1909
  %v1929 = vunpack.c.l.s4 1934713408
  %v1930 = vunpack.c.0.s8 %v1929
  %v1931 = vlaneseq
  %v1932 = vshrl.u32 %v1931, 7
  %v1933 = vsub.s32 %v1930, %v1932
  %v1934 = vrot.slane %v1926, %v1933
  %v1936 = vunpack.c.l.s4 1934713408
  %v1937 = vunpack.c.0.s8 %v1936
  %v1938 = vlaneseq
  %v1939 = vshrl.u32 %v1938, 7
  %v1940 = vsub.s32 %v1937, %v1939
  %v1941 = vrot.slane %v1927, %v1940
  %v1942 = vcombine.low %v1918, %v1934
  %v1943 = vcombine.high %v1918, %v1934
  %v1944 = vcombine.low %v1925, %v1941
  %v1945 = vcombine.high %v1925, %v1941
  %v1946 = vcombine.low %v1714, %v1721
  %v1948 = vunpack.c.l.s4 1983009808
  %v1949 = vunpack.c.0.s8 %v1948
  %v1950 = vlaneseq
  %v1951 = vshrl.u32 %v1950, 7
  %v1952 = vsub.s32 %v1949, %v1951
  %v1953 = vrot.slane %v1946, %v1952
  %v1954 = vcombine.low %v1738, %v1739
  %v1956 = vunpack.c.l.s4 1983009808
  %v1957 = vunpack.c.0.s8 %v1956
  %v1958 = vlaneseq
  %v1959 = vshrl.u32 %v1958, 7
  %v1960 = vsub.s32 %v1957, %v1959
  %v1961 = vrot.slane %v1954, %v1960
  %v1962 = vcombine.low %v1730, %v1737
  %v1964 = vunpack.c.l.s4 1983009808
  %v1965 = vunpack.c.0.s8 %v1964
  %v1966 = vlaneseq
  %v1967 = vshrl.u32 %v1966, 7
  %v1968 = vsub.s32 %v1965, %v1967
  %v1969 = vrot.slane %v1962, %v1968
  %v1970 = vcombine.low %v1740, %v1741
  %v1972 = vunpack.c.l.s4 1983009808
  %v1973 = vunpack.c.0.s8 %v1972
  %v1974 = vlaneseq
  %v1975 = vshrl.u32 %v1974, 7
  %v1976 = vsub.s32 %v1973, %v1975
  %v1977 = vrot.slane %v1970, %v1976
  %v1978 = vcombine.low %v1953, %v1961
  %v1979 = vcombine.high %v1953, %v1961
  %v1981 = vunpack.c.l.s4 1934713408
  %v1982 = vunpack.c.0.s8 %v1981
  %v1983 = vlaneseq
  %v1984 = vshrl.u32 %v1983, 7
  %v1985 = vsub.s32 %v1982, %v1984
  %v1986 = vrot.slane %v1978, %v1985
  %v1988 = vunpack.c.l.s4 1934713408
  %v1989 = vunpack.c.0.s8 %v1988
  %v1990 = vlaneseq
  %v1991 = vshrl.u32 %v1990, 7
  %v1992 = vsub.s32 %v1989, %v1991
  %v1993 = vrot.slane %v1979, %v1992
  %v1994 = vcombine.low %v1969, %v1977
  %v1995 = vcombine.high %v1969, %v1977
  %v1997 = vunpack.c.l.s4 1934713408
  %v1998 = vunpack.c.0.s8 %v1997
  %v1999 = vlaneseq
  %v2000 = vshrl.u32 %v1999, 7
  %v2001 = vsub.s32 %v1998, %v2000
  %v2002 = vrot.slane %v1994, %v2001
  %v2004 = vunpack.c.l.s4 1934713408
  %v2005 = vunpack.c.0.s8 %v2004
  %v2006 = vlaneseq
  %v2007 = vshrl.u32 %v2006, 7
  %v2008 = vsub.s32 %v2005, %v2007
  %v2009 = vrot.slane %v1995, %v2008
  %v2010 = vcombine.low %v1986, %v2002
  %v2011 = vcombine.high %v1986, %v2002
  %v2012 = vcombine.low %v1993, %v2009
  %v2013 = vcombine.high %v1993, %v2009
  %2018 = vrot.lane.b32.xlu0 %v780, 112
  %v2019 = vpop.permute.xlu0 %2018
  %2020 = vrot.lane.b32.xlu0 %v786, 112
  %v2021 = vpop.permute.xlu0 %2020
  %2022 = vrot.lane.b32.xlu0 %v792, 112
  %v2023 = vpop.permute.xlu0 %2022
  %2024 = vrot.lane.b32.xlu0 %v798, 112
  %v2025 = vpop.permute.xlu0 %2024
  %2030 = vrot.lane.b32.xlu0 %v780, 96
  %v2031 = vpop.permute.xlu0 %2030
  %2032 = vrot.lane.b32.xlu0 %v786, 96
  %v2033 = vpop.permute.xlu0 %2032
  %2034 = vrot.lane.b32.xlu0 %v792, 96
  %v2035 = vpop.permute.xlu0 %2034
  %2036 = vrot.lane.b32.xlu0 %v798, 96
  %v2037 = vpop.permute.xlu0 %2036
  %2042 = vrot.lane.b32.xlu0 %v780, 80
  %v2043 = vpop.permute.xlu0 %2042
  %2044 = vrot.lane.b32.xlu0 %v786, 80
  %v2045 = vpop.permute.xlu0 %2044
  %2046 = vrot.lane.b32.xlu0 %v792, 80
  %v2047 = vpop.permute.xlu0 %2046
  %2048 = vrot.lane.b32.xlu0 %v798, 80
  %v2049 = vpop.permute.xlu0 %2048
  %v2054 = vcombine.low %v780, %v2031
  %v2055 = vcombine.high %v780, %v2031
  %v2057 = vunpack.c.l.s4 1983009808
  %v2058 = vunpack.c.0.s8 %v2057
  %v2059 = vlaneseq
  %v2060 = vshrl.u32 %v2059, 7
  %v2061 = vsub.s32 %v2058, %v2060
  %v2062 = vrot.slane %v2054, %v2061
  %v2064 = vunpack.c.l.s4 1983009808
  %v2065 = vunpack.c.0.s8 %v2064
  %v2066 = vlaneseq
  %v2067 = vshrl.u32 %v2066, 7
  %v2068 = vsub.s32 %v2065, %v2067
  %v2069 = vrot.slane %v2055, %v2068
  %v2070 = vcombine.low %v2019, %v2043
  %v2071 = vcombine.high %v2019, %v2043
  %v2073 = vunpack.c.l.s4 1983009808
  %v2074 = vunpack.c.0.s8 %v2073
  %v2075 = vlaneseq
  %v2076 = vshrl.u32 %v2075, 7
  %v2077 = vsub.s32 %v2074, %v2076
  %v2078 = vrot.slane %v2070, %v2077
  %v2080 = vunpack.c.l.s4 1983009808
  %v2081 = vunpack.c.0.s8 %v2080
  %v2082 = vlaneseq
  %v2083 = vshrl.u32 %v2082, 7
  %v2084 = vsub.s32 %v2081, %v2083
  %v2085 = vrot.slane %v2071, %v2084
  %v2086 = vcombine.low %v2062, %v2078
  %v2087 = vcombine.high %v2062, %v2078
  %v2089 = vunpack.c.l.s4 1934713408
  %v2090 = vunpack.c.0.s8 %v2089
  %v2091 = vlaneseq
  %v2092 = vshrl.u32 %v2091, 7
  %v2093 = vsub.s32 %v2090, %v2092
  %v2094 = vrot.slane %v2086, %v2093
  %v2096 = vunpack.c.l.s4 1934713408
  %v2097 = vunpack.c.0.s8 %v2096
  %v2098 = vlaneseq
  %v2099 = vshrl.u32 %v2098, 7
  %v2100 = vsub.s32 %v2097, %v2099
  %v2101 = vrot.slane %v2087, %v2100
  %v2102 = vcombine.low %v2069, %v2085
  %v2103 = vcombine.high %v2069, %v2085
  %v2105 = vunpack.c.l.s4 1934713408
  %v2106 = vunpack.c.0.s8 %v2105
  %v2107 = vlaneseq
  %v2108 = vshrl.u32 %v2107, 7
  %v2109 = vsub.s32 %v2106, %v2108
  %v2110 = vrot.slane %v2102, %v2109
  %v2112 = vunpack.c.l.s4 1934713408
  %v2113 = vunpack.c.0.s8 %v2112
  %v2114 = vlaneseq
  %v2115 = vshrl.u32 %v2114, 7
  %v2116 = vsub.s32 %v2113, %v2115
  %v2117 = vrot.slane %v2103, %v2116
  %v2118 = vcombine.high %v2094, 0.0
  %v2119 = vcombine.high %v2101, 0.0
  %v2120 = vcombine.high %v2110, 0.0
  %v2121 = vcombine.high %v2117, 0.0
  %v2122 = vcombine.low %v786, %v2033
  %v2123 = vcombine.high %v786, %v2033
  %v2125 = vunpack.c.l.s4 1983009808
  %v2126 = vunpack.c.0.s8 %v2125
  %v2127 = vlaneseq
  %v2128 = vshrl.u32 %v2127, 7
  %v2129 = vsub.s32 %v2126, %v2128
  %v2130 = vrot.slane %v2122, %v2129
  %v2132 = vunpack.c.l.s4 1983009808
  %v2133 = vunpack.c.0.s8 %v2132
  %v2134 = vlaneseq
  %v2135 = vshrl.u32 %v2134, 7
  %v2136 = vsub.s32 %v2133, %v2135
  %v2137 = vrot.slane %v2123, %v2136
  %v2138 = vcombine.low %v2021, %v2045
  %v2139 = vcombine.high %v2021, %v2045
  %v2141 = vunpack.c.l.s4 1983009808
  %v2142 = vunpack.c.0.s8 %v2141
  %v2143 = vlaneseq
  %v2144 = vshrl.u32 %v2143, 7
  %v2145 = vsub.s32 %v2142, %v2144
  %v2146 = vrot.slane %v2138, %v2145
  %v2148 = vunpack.c.l.s4 1983009808
  %v2149 = vunpack.c.0.s8 %v2148
  %v2150 = vlaneseq
  %v2151 = vshrl.u32 %v2150, 7
  %v2152 = vsub.s32 %v2149, %v2151
  %v2153 = vrot.slane %v2139, %v2152
  %v2154 = vcombine.low %v2130, %v2146
  %v2155 = vcombine.high %v2130, %v2146
  %v2157 = vunpack.c.l.s4 1934713408
  %v2158 = vunpack.c.0.s8 %v2157
  %v2159 = vlaneseq
  %v2160 = vshrl.u32 %v2159, 7
  %v2161 = vsub.s32 %v2158, %v2160
  %v2162 = vrot.slane %v2154, %v2161
  %v2164 = vunpack.c.l.s4 1934713408
  %v2165 = vunpack.c.0.s8 %v2164
  %v2166 = vlaneseq
  %v2167 = vshrl.u32 %v2166, 7
  %v2168 = vsub.s32 %v2165, %v2167
  %v2169 = vrot.slane %v2155, %v2168
  %v2170 = vcombine.low %v2137, %v2153
  %v2171 = vcombine.high %v2137, %v2153
  %v2173 = vunpack.c.l.s4 1934713408
  %v2174 = vunpack.c.0.s8 %v2173
  %v2175 = vlaneseq
  %v2176 = vshrl.u32 %v2175, 7
  %v2177 = vsub.s32 %v2174, %v2176
  %v2178 = vrot.slane %v2170, %v2177
  %v2180 = vunpack.c.l.s4 1934713408
  %v2181 = vunpack.c.0.s8 %v2180
  %v2182 = vlaneseq
  %v2183 = vshrl.u32 %v2182, 7
  %v2184 = vsub.s32 %v2181, %v2183
  %v2185 = vrot.slane %v2171, %v2184
  %v2186 = vcombine.high %v2162, 0.0
  %v2187 = vcombine.high %v2169, 0.0
  %v2188 = vcombine.high %v2178, 0.0
  %v2189 = vcombine.high %v2185, 0.0
  %v2190 = vcombine.low %v792, %v2035
  %v2191 = vcombine.high %v792, %v2035
  %v2193 = vunpack.c.l.s4 1983009808
  %v2194 = vunpack.c.0.s8 %v2193
  %v2195 = vlaneseq
  %v2196 = vshrl.u32 %v2195, 7
  %v2197 = vsub.s32 %v2194, %v2196
  %v2198 = vrot.slane %v2190, %v2197
  %v2200 = vunpack.c.l.s4 1983009808
  %v2201 = vunpack.c.0.s8 %v2200
  %v2202 = vlaneseq
  %v2203 = vshrl.u32 %v2202, 7
  %v2204 = vsub.s32 %v2201, %v2203
  %v2205 = vrot.slane %v2191, %v2204
  %v2206 = vcombine.low %v2023, %v2047
  %v2207 = vcombine.high %v2023, %v2047
  %v2209 = vunpack.c.l.s4 1983009808
  %v2210 = vunpack.c.0.s8 %v2209
  %v2211 = vlaneseq
  %v2212 = vshrl.u32 %v2211, 7
  %v2213 = vsub.s32 %v2210, %v2212
  %v2214 = vrot.slane %v2206, %v2213
  %v2216 = vunpack.c.l.s4 1983009808
  %v2217 = vunpack.c.0.s8 %v2216
  %v2218 = vlaneseq
  %v2219 = vshrl.u32 %v2218, 7
  %v2220 = vsub.s32 %v2217, %v2219
  %v2221 = vrot.slane %v2207, %v2220
  %v2222 = vcombine.low %v2198, %v2214
  %v2223 = vcombine.high %v2198, %v2214
  %v2225 = vunpack.c.l.s4 1934713408
  %v2226 = vunpack.c.0.s8 %v2225
  %v2227 = vlaneseq
  %v2228 = vshrl.u32 %v2227, 7
  %v2229 = vsub.s32 %v2226, %v2228
  %v2230 = vrot.slane %v2222, %v2229
  %v2232 = vunpack.c.l.s4 1934713408
  %v2233 = vunpack.c.0.s8 %v2232
  %v2234 = vlaneseq
  %v2235 = vshrl.u32 %v2234, 7
  %v2236 = vsub.s32 %v2233, %v2235
  %v2237 = vrot.slane %v2223, %v2236
  %v2238 = vcombine.low %v2205, %v2221
  %v2239 = vcombine.high %v2205, %v2221
  %v2241 = vunpack.c.l.s4 1934713408
  %v2242 = vunpack.c.0.s8 %v2241
  %v2243 = vlaneseq
  %v2244 = vshrl.u32 %v2243, 7
  %v2245 = vsub.s32 %v2242, %v2244
  %v2246 = vrot.slane %v2238, %v2245
  %v2248 = vunpack.c.l.s4 1934713408
  %v2249 = vunpack.c.0.s8 %v2248
  %v2250 = vlaneseq
  %v2251 = vshrl.u32 %v2250, 7
  %v2252 = vsub.s32 %v2249, %v2251
  %v2253 = vrot.slane %v2239, %v2252
  %v2254 = vcombine.high %v2230, 0.0
  %v2255 = vcombine.high %v2237, 0.0
  %v2256 = vcombine.high %v2246, 0.0
  %v2257 = vcombine.high %v2253, 0.0
  %v2258 = vcombine.low %v798, %v2037
  %v2259 = vcombine.high %v798, %v2037
  %v2261 = vunpack.c.l.s4 1983009808
  %v2262 = vunpack.c.0.s8 %v2261
  %v2263 = vlaneseq
  %v2264 = vshrl.u32 %v2263, 7
  %v2265 = vsub.s32 %v2262, %v2264
  %v2266 = vrot.slane %v2258, %v2265
  %v2268 = vunpack.c.l.s4 1983009808
  %v2269 = vunpack.c.0.s8 %v2268
  %v2270 = vlaneseq
  %v2271 = vshrl.u32 %v2270, 7
  %v2272 = vsub.s32 %v2269, %v2271
  %v2273 = vrot.slane %v2259, %v2272
  %v2274 = vcombine.low %v2025, %v2049
  %v2275 = vcombine.high %v2025, %v2049
  %v2277 = vunpack.c.l.s4 1983009808
  %v2278 = vunpack.c.0.s8 %v2277
  %v2279 = vlaneseq
  %v2280 = vshrl.u32 %v2279, 7
  %v2281 = vsub.s32 %v2278, %v2280
  %v2282 = vrot.slane %v2274, %v2281
  %v2284 = vunpack.c.l.s4 1983009808
  %v2285 = vunpack.c.0.s8 %v2284
  %v2286 = vlaneseq
  %v2287 = vshrl.u32 %v2286, 7
  %v2288 = vsub.s32 %v2285, %v2287
  %v2289 = vrot.slane %v2275, %v2288
  %v2290 = vcombine.low %v2266, %v2282
  %v2291 = vcombine.high %v2266, %v2282
  %v2293 = vunpack.c.l.s4 1934713408
  %v2294 = vunpack.c.0.s8 %v2293
  %v2295 = vlaneseq
  %v2296 = vshrl.u32 %v2295, 7
  %v2297 = vsub.s32 %v2294, %v2296
  %v2298 = vrot.slane %v2290, %v2297
  %v2300 = vunpack.c.l.s4 1934713408
  %v2301 = vunpack.c.0.s8 %v2300
  %v2302 = vlaneseq
  %v2303 = vshrl.u32 %v2302, 7
  %v2304 = vsub.s32 %v2301, %v2303
  %v2305 = vrot.slane %v2291, %v2304
  %v2306 = vcombine.low %v2273, %v2289
  %v2307 = vcombine.high %v2273, %v2289
  %v2309 = vunpack.c.l.s4 1934713408
  %v2310 = vunpack.c.0.s8 %v2309
  %v2311 = vlaneseq
  %v2312 = vshrl.u32 %v2311, 7
  %v2313 = vsub.s32 %v2310, %v2312
  %v2314 = vrot.slane %v2306, %v2313
  %v2316 = vunpack.c.l.s4 1934713408
  %v2317 = vunpack.c.0.s8 %v2316
  %v2318 = vlaneseq
  %v2319 = vshrl.u32 %v2318, 7
  %v2320 = vsub.s32 %v2317, %v2319
  %v2321 = vrot.slane %v2307, %v2320
  %v2322 = vcombine.high %v2298, 0.0
  %v2323 = vcombine.high %v2305, 0.0
  %v2324 = vcombine.high %v2314, 0.0
  %v2325 = vcombine.high %v2321, 0.0
  %v2326 = vcombine.low %v2094, %v2101
  %v2328 = vunpack.c.l.s4 1983009808
  %v2329 = vunpack.c.0.s8 %v2328
  %v2330 = vlaneseq
  %v2331 = vshrl.u32 %v2330, 7
  %v2332 = vsub.s32 %v2329, %v2331
  %v2333 = vrot.slane %v2326, %v2332
  %v2334 = vcombine.low %v2118, %v2119
  %v2336 = vunpack.c.l.s4 1983009808
  %v2337 = vunpack.c.0.s8 %v2336
  %v2338 = vlaneseq
  %v2339 = vshrl.u32 %v2338, 7
  %v2340 = vsub.s32 %v2337, %v2339
  %v2341 = vrot.slane %v2334, %v2340
  %v2342 = vcombine.low %v2110, %v2117
  %v2344 = vunpack.c.l.s4 1983009808
  %v2345 = vunpack.c.0.s8 %v2344
  %v2346 = vlaneseq
  %v2347 = vshrl.u32 %v2346, 7
  %v2348 = vsub.s32 %v2345, %v2347
  %v2349 = vrot.slane %v2342, %v2348
  %v2350 = vcombine.low %v2120, %v2121
  %v2352 = vunpack.c.l.s4 1983009808
  %v2353 = vunpack.c.0.s8 %v2352
  %v2354 = vlaneseq
  %v2355 = vshrl.u32 %v2354, 7
  %v2356 = vsub.s32 %v2353, %v2355
  %v2357 = vrot.slane %v2350, %v2356
  %v2358 = vcombine.low %v2333, %v2341
  %v2359 = vcombine.high %v2333, %v2341
  %v2361 = vunpack.c.l.s4 1934713408
  %v2362 = vunpack.c.0.s8 %v2361
  %v2363 = vlaneseq
  %v2364 = vshrl.u32 %v2363, 7
  %v2365 = vsub.s32 %v2362, %v2364
  %v2366 = vrot.slane %v2358, %v2365
  %v2368 = vunpack.c.l.s4 1934713408
  %v2369 = vunpack.c.0.s8 %v2368
  %v2370 = vlaneseq
  %v2371 = vshrl.u32 %v2370, 7
  %v2372 = vsub.s32 %v2369, %v2371
  %v2373 = vrot.slane %v2359, %v2372
  %v2374 = vcombine.low %v2349, %v2357
  %v2375 = vcombine.high %v2349, %v2357
  %v2377 = vunpack.c.l.s4 1934713408
  %v2378 = vunpack.c.0.s8 %v2377
  %v2379 = vlaneseq
  %v2380 = vshrl.u32 %v2379, 7
  %v2381 = vsub.s32 %v2378, %v2380
  %v2382 = vrot.slane %v2374, %v2381
  %v2384 = vunpack.c.l.s4 1934713408
  %v2385 = vunpack.c.0.s8 %v2384
  %v2386 = vlaneseq
  %v2387 = vshrl.u32 %v2386, 7
  %v2388 = vsub.s32 %v2385, %v2387
  %v2389 = vrot.slane %v2375, %v2388
  %v2390 = vcombine.low %v2366, %v2382
  %v2391 = vcombine.high %v2366, %v2382
  %v2392 = vcombine.low %v2373, %v2389
  %v2393 = vcombine.high %v2373, %v2389
  %v2394 = vcombine.low %v2162, %v2169
  %v2396 = vunpack.c.l.s4 1983009808
  %v2397 = vunpack.c.0.s8 %v2396
  %v2398 = vlaneseq
  %v2399 = vshrl.u32 %v2398, 7
  %v2400 = vsub.s32 %v2397, %v2399
  %v2401 = vrot.slane %v2394, %v2400
  %v2402 = vcombine.low %v2186, %v2187
  %v2404 = vunpack.c.l.s4 1983009808
  %v2405 = vunpack.c.0.s8 %v2404
  %v2406 = vlaneseq
  %v2407 = vshrl.u32 %v2406, 7
  %v2408 = vsub.s32 %v2405, %v2407
  %v2409 = vrot.slane %v2402, %v2408
  %v2410 = vcombine.low %v2178, %v2185
  %v2412 = vunpack.c.l.s4 1983009808
  %v2413 = vunpack.c.0.s8 %v2412
  %v2414 = vlaneseq
  %v2415 = vshrl.u32 %v2414, 7
  %v2416 = vsub.s32 %v2413, %v2415
  %v2417 = vrot.slane %v2410, %v2416
  %v2418 = vcombine.low %v2188, %v2189
  %v2420 = vunpack.c.l.s4 1983009808
  %v2421 = vunpack.c.0.s8 %v2420
  %v2422 = vlaneseq
  %v2423 = vshrl.u32 %v2422, 7
  %v2424 = vsub.s32 %v2421, %v2423
  %v2425 = vrot.slane %v2418, %v2424
  %v2426 = vcombine.low %v2401, %v2409
  %v2427 = vcombine.high %v2401, %v2409
  %v2429 = vunpack.c.l.s4 1934713408
  %v2430 = vunpack.c.0.s8 %v2429
  %v2431 = vlaneseq
  %v2432 = vshrl.u32 %v2431, 7
  %v2433 = vsub.s32 %v2430, %v2432
  %v2434 = vrot.slane %v2426, %v2433
  %v2436 = vunpack.c.l.s4 1934713408
  %v2437 = vunpack.c.0.s8 %v2436
  %v2438 = vlaneseq
  %v2439 = vshrl.u32 %v2438, 7
  %v2440 = vsub.s32 %v2437, %v2439
  %v2441 = vrot.slane %v2427, %v2440
  %v2442 = vcombine.low %v2417, %v2425
  %v2443 = vcombine.high %v2417, %v2425
  %v2445 = vunpack.c.l.s4 1934713408
  %v2446 = vunpack.c.0.s8 %v2445
  %v2447 = vlaneseq
  %v2448 = vshrl.u32 %v2447, 7
  %v2449 = vsub.s32 %v2446, %v2448
  %v2450 = vrot.slane %v2442, %v2449
  %v2452 = vunpack.c.l.s4 1934713408
  %v2453 = vunpack.c.0.s8 %v2452
  %v2454 = vlaneseq
  %v2455 = vshrl.u32 %v2454, 7
  %v2456 = vsub.s32 %v2453, %v2455
  %v2457 = vrot.slane %v2443, %v2456
  %v2458 = vcombine.low %v2434, %v2450
  %v2459 = vcombine.high %v2434, %v2450
  %v2460 = vcombine.low %v2441, %v2457
  %v2461 = vcombine.high %v2441, %v2457
  %v2462 = vcombine.low %v2230, %v2237
  %v2464 = vunpack.c.l.s4 1983009808
  %v2465 = vunpack.c.0.s8 %v2464
  %v2466 = vlaneseq
  %v2467 = vshrl.u32 %v2466, 7
  %v2468 = vsub.s32 %v2465, %v2467
  %v2469 = vrot.slane %v2462, %v2468
  %v2470 = vcombine.low %v2254, %v2255
  %v2472 = vunpack.c.l.s4 1983009808
  %v2473 = vunpack.c.0.s8 %v2472
  %v2474 = vlaneseq
  %v2475 = vshrl.u32 %v2474, 7
  %v2476 = vsub.s32 %v2473, %v2475
  %v2477 = vrot.slane %v2470, %v2476
  %v2478 = vcombine.low %v2246, %v2253
  %v2480 = vunpack.c.l.s4 1983009808
  %v2481 = vunpack.c.0.s8 %v2480
  %v2482 = vlaneseq
  %v2483 = vshrl.u32 %v2482, 7
  %v2484 = vsub.s32 %v2481, %v2483
  %v2485 = vrot.slane %v2478, %v2484
  %v2486 = vcombine.low %v2256, %v2257
  %v2488 = vunpack.c.l.s4 1983009808
  %v2489 = vunpack.c.0.s8 %v2488
  %v2490 = vlaneseq
  %v2491 = vshrl.u32 %v2490, 7
  %v2492 = vsub.s32 %v2489, %v2491
  %v2493 = vrot.slane %v2486, %v2492
  %v2494 = vcombine.low %v2469, %v2477
  %v2495 = vcombine.high %v2469, %v2477
  %v2497 = vunpack.c.l.s4 1934713408
  %v2498 = vunpack.c.0.s8 %v2497
  %v2499 = vlaneseq
  %v2500 = vshrl.u32 %v2499, 7
  %v2501 = vsub.s32 %v2498, %v2500
  %v2502 = vrot.slane %v2494, %v2501
  %v2504 = vunpack.c.l.s4 1934713408
  %v2505 = vunpack.c.0.s8 %v2504
  %v2506 = vlaneseq
  %v2507 = vshrl.u32 %v2506, 7
  %v2508 = vsub.s32 %v2505, %v2507
  %v2509 = vrot.slane %v2495, %v2508
  %v2510 = vcombine.low %v2485, %v2493
  %v2511 = vcombine.high %v2485, %v2493
  %v2513 = vunpack.c.l.s4 1934713408
  %v2514 = vunpack.c.0.s8 %v2513
  %v2515 = vlaneseq
  %v2516 = vshrl.u32 %v2515, 7
  %v2517 = vsub.s32 %v2514, %v2516
  %v2518 = vrot.slane %v2510, %v2517
  %v2520 = vunpack.c.l.s4 1934713408
  %v2521 = vunpack.c.0.s8 %v2520
  %v2522 = vlaneseq
  %v2523 = vshrl.u32 %v2522, 7
  %v2524 = vsub.s32 %v2521, %v2523
  %v2525 = vrot.slane %v2511, %v2524
  %v2526 = vcombine.low %v2502, %v2518
  %v2527 = vcombine.high %v2502, %v2518
  %v2528 = vcombine.low %v2509, %v2525
  %v2529 = vcombine.high %v2509, %v2525
  %v2530 = vcombine.low %v2298, %v2305
  %v2532 = vunpack.c.l.s4 1983009808
  %v2533 = vunpack.c.0.s8 %v2532
  %v2534 = vlaneseq
  %v2535 = vshrl.u32 %v2534, 7
  %v2536 = vsub.s32 %v2533, %v2535
  %v2537 = vrot.slane %v2530, %v2536
  %v2538 = vcombine.low %v2322, %v2323
  %v2540 = vunpack.c.l.s4 1983009808
  %v2541 = vunpack.c.0.s8 %v2540
  %v2542 = vlaneseq
  %v2543 = vshrl.u32 %v2542, 7
  %v2544 = vsub.s32 %v2541, %v2543
  %v2545 = vrot.slane %v2538, %v2544
  %v2546 = vcombine.low %v2314, %v2321
  %v2548 = vunpack.c.l.s4 1983009808
  %v2549 = vunpack.c.0.s8 %v2548
  %v2550 = vlaneseq
  %v2551 = vshrl.u32 %v2550, 7
  %v2552 = vsub.s32 %v2549, %v2551
  %v2553 = vrot.slane %v2546, %v2552
  %v2554 = vcombine.low %v2324, %v2325
  %v2556 = vunpack.c.l.s4 1983009808
  %v2557 = vunpack.c.0.s8 %v2556
  %v2558 = vlaneseq
  %v2559 = vshrl.u32 %v2558, 7
  %v2560 = vsub.s32 %v2557, %v2559
  %v2561 = vrot.slane %v2554, %v2560
  %v2562 = vcombine.low %v2537, %v2545
  %v2563 = vcombine.high %v2537, %v2545
  %v2565 = vunpack.c.l.s4 1934713408
  %v2566 = vunpack.c.0.s8 %v2565
  %v2567 = vlaneseq
  %v2568 = vshrl.u32 %v2567, 7
  %v2569 = vsub.s32 %v2566, %v2568
  %v2570 = vrot.slane %v2562, %v2569
  %v2572 = vunpack.c.l.s4 1934713408
  %v2573 = vunpack.c.0.s8 %v2572
  %v2574 = vlaneseq
  %v2575 = vshrl.u32 %v2574, 7
  %v2576 = vsub.s32 %v2573, %v2575
  %v2577 = vrot.slane %v2563, %v2576
  %v2578 = vcombine.low %v2553, %v2561
  %v2579 = vcombine.high %v2553, %v2561
  %v2581 = vunpack.c.l.s4 1934713408
  %v2582 = vunpack.c.0.s8 %v2581
  %v2583 = vlaneseq
  %v2584 = vshrl.u32 %v2583, 7
  %v2585 = vsub.s32 %v2582, %v2584
  %v2586 = vrot.slane %v2578, %v2585
  %v2588 = vunpack.c.l.s4 1934713408
  %v2589 = vunpack.c.0.s8 %v2588
  %v2590 = vlaneseq
  %v2591 = vshrl.u32 %v2590, 7
  %v2592 = vsub.s32 %v2589, %v2591
  %v2593 = vrot.slane %v2579, %v2592
  %v2594 = vcombine.low %v2570, %v2586
  %v2595 = vcombine.high %v2570, %v2586
  %v2596 = vcombine.low %v2577, %v2593
  %v2597 = vcombine.high %v2577, %v2593
  %2600 = vrot.lane.b32.xlu0 %v802, 112
  %v2601 = vpop.permute.xlu0 %2600
  %2602 = vrot.lane.b32.xlu0 %v807, 112
  %v2603 = vpop.permute.xlu0 %2602
  %2606 = vrot.lane.b32.xlu0 %v802, 96
  %v2607 = vpop.permute.xlu0 %2606
  %2608 = vrot.lane.b32.xlu0 %v807, 96
  %v2609 = vpop.permute.xlu0 %2608
  %2612 = vrot.lane.b32.xlu0 %v802, 80
  %v2613 = vpop.permute.xlu0 %2612
  %2614 = vrot.lane.b32.xlu0 %v807, 80
  %v2615 = vpop.permute.xlu0 %2614
  %v2618 = vcombine.low %v802, %v2607
  %v2619 = vcombine.high %v802, %v2607
  %v2621 = vunpack.c.l.s4 1983009808
  %v2622 = vunpack.c.0.s8 %v2621
  %v2623 = vlaneseq
  %v2624 = vshrl.u32 %v2623, 7
  %v2625 = vsub.s32 %v2622, %v2624
  %v2626 = vrot.slane %v2618, %v2625
  %v2628 = vunpack.c.l.s4 1983009808
  %v2629 = vunpack.c.0.s8 %v2628
  %v2630 = vlaneseq
  %v2631 = vshrl.u32 %v2630, 7
  %v2632 = vsub.s32 %v2629, %v2631
  %v2633 = vrot.slane %v2619, %v2632
  %v2634 = vcombine.low %v2601, %v2613
  %v2635 = vcombine.high %v2601, %v2613
  %v2637 = vunpack.c.l.s4 1983009808
  %v2638 = vunpack.c.0.s8 %v2637
  %v2639 = vlaneseq
  %v2640 = vshrl.u32 %v2639, 7
  %v2641 = vsub.s32 %v2638, %v2640
  %v2642 = vrot.slane %v2634, %v2641
  %v2644 = vunpack.c.l.s4 1983009808
  %v2645 = vunpack.c.0.s8 %v2644
  %v2646 = vlaneseq
  %v2647 = vshrl.u32 %v2646, 7
  %v2648 = vsub.s32 %v2645, %v2647
  %v2649 = vrot.slane %v2635, %v2648
  %v2650 = vcombine.low %v2626, %v2642
  %v2651 = vcombine.high %v2626, %v2642
  %v2653 = vunpack.c.l.s4 1934713408
  %v2654 = vunpack.c.0.s8 %v2653
  %v2655 = vlaneseq
  %v2656 = vshrl.u32 %v2655, 7
  %v2657 = vsub.s32 %v2654, %v2656
  %v2658 = vrot.slane %v2650, %v2657
  %v2660 = vunpack.c.l.s4 1934713408
  %v2661 = vunpack.c.0.s8 %v2660
  %v2662 = vlaneseq
  %v2663 = vshrl.u32 %v2662, 7
  %v2664 = vsub.s32 %v2661, %v2663
  %v2665 = vrot.slane %v2651, %v2664
  %v2666 = vcombine.low %v2633, %v2649
  %v2667 = vcombine.high %v2633, %v2649
  %v2669 = vunpack.c.l.s4 1934713408
  %v2670 = vunpack.c.0.s8 %v2669
  %v2671 = vlaneseq
  %v2672 = vshrl.u32 %v2671, 7
  %v2673 = vsub.s32 %v2670, %v2672
  %v2674 = vrot.slane %v2666, %v2673
  %v2676 = vunpack.c.l.s4 1934713408
  %v2677 = vunpack.c.0.s8 %v2676
  %v2678 = vlaneseq
  %v2679 = vshrl.u32 %v2678, 7
  %v2680 = vsub.s32 %v2677, %v2679
  %v2681 = vrot.slane %v2667, %v2680
  %v2682 = vcombine.high %v2658, 0.0
  %v2683 = vcombine.high %v2665, 0.0
  %v2684 = vcombine.high %v2674, 0.0
  %v2685 = vcombine.high %v2681, 0.0
  %v2686 = vcombine.low %v807, %v2609
  %v2687 = vcombine.high %v807, %v2609
  %v2689 = vunpack.c.l.s4 1983009808
  %v2690 = vunpack.c.0.s8 %v2689
  %v2691 = vlaneseq
  %v2692 = vshrl.u32 %v2691, 7
  %v2693 = vsub.s32 %v2690, %v2692
  %v2694 = vrot.slane %v2686, %v2693
  %v2696 = vunpack.c.l.s4 1983009808
  %v2697 = vunpack.c.0.s8 %v2696
  %v2698 = vlaneseq
  %v2699 = vshrl.u32 %v2698, 7
  %v2700 = vsub.s32 %v2697, %v2699
  %v2701 = vrot.slane %v2687, %v2700
  %v2702 = vcombine.low %v2603, %v2615
  %v2703 = vcombine.high %v2603, %v2615
  %v2705 = vunpack.c.l.s4 1983009808
  %v2706 = vunpack.c.0.s8 %v2705
  %v2707 = vlaneseq
  %v2708 = vshrl.u32 %v2707, 7
  %v2709 = vsub.s32 %v2706, %v2708
  %v2710 = vrot.slane %v2702, %v2709
  %v2712 = vunpack.c.l.s4 1983009808
  %v2713 = vunpack.c.0.s8 %v2712
  %v2714 = vlaneseq
  %v2715 = vshrl.u32 %v2714, 7
  %v2716 = vsub.s32 %v2713, %v2715
  %v2717 = vrot.slane %v2703, %v2716
  %v2718 = vcombine.low %v2694, %v2710
  %v2719 = vcombine.high %v2694, %v2710
  %v2721 = vunpack.c.l.s4 1934713408
  %v2722 = vunpack.c.0.s8 %v2721
  %v2723 = vlaneseq
  %v2724 = vshrl.u32 %v2723, 7
  %v2725 = vsub.s32 %v2722, %v2724
  %v2726 = vrot.slane %v2718, %v2725
  %v2728 = vunpack.c.l.s4 1934713408
  %v2729 = vunpack.c.0.s8 %v2728
  %v2730 = vlaneseq
  %v2731 = vshrl.u32 %v2730, 7
  %v2732 = vsub.s32 %v2729, %v2731
  %v2733 = vrot.slane %v2719, %v2732
  %v2734 = vcombine.low %v2701, %v2717
  %v2735 = vcombine.high %v2701, %v2717
  %v2737 = vunpack.c.l.s4 1934713408
  %v2738 = vunpack.c.0.s8 %v2737
  %v2739 = vlaneseq
  %v2740 = vshrl.u32 %v2739, 7
  %v2741 = vsub.s32 %v2738, %v2740
  %v2742 = vrot.slane %v2734, %v2741
  %v2743 = vcombine.high %v2726, 0.0
  %v2744 = vcombine.high %v2733, 0.0
  %v2746 = vunpack.c.l.s4 1934713408
  %v2747 = vunpack.c.0.s8 %v2746
  %v2748 = vlaneseq
  %v2749 = vshrl.u32 %v2748, 7
  %v2750 = vsub.s32 %v2747, %v2749
  %v2751 = vrot.slane %v2735, %v2750
  %v2752 = vcombine.low %v2658, %v2665
  %v2754 = vunpack.c.l.s4 1983009808
  %v2755 = vunpack.c.0.s8 %v2754
  %v2756 = vlaneseq
  %v2757 = vshrl.u32 %v2756, 7
  %v2758 = vsub.s32 %v2755, %v2757
  %v2759 = vrot.slane %v2752, %v2758
  %v2760 = vcombine.low %v2682, %v2683
  %v2762 = vunpack.c.l.s4 1983009808
  %v2763 = vunpack.c.0.s8 %v2762
  %v2764 = vlaneseq
  %v2765 = vshrl.u32 %v2764, 7
  %v2766 = vsub.s32 %v2763, %v2765
  %v2767 = vrot.slane %v2760, %v2766
  %v2768 = vcombine.low %v2674, %v2681
  %v2770 = vunpack.c.l.s4 1983009808
  %v2771 = vunpack.c.0.s8 %v2770
  %v2772 = vlaneseq
  %v2773 = vshrl.u32 %v2772, 7
  %v2774 = vsub.s32 %v2771, %v2773
  %v2775 = vrot.slane %v2768, %v2774
  %v2776 = vcombine.low %v2684, %v2685
  %v2778 = vunpack.c.l.s4 1983009808
  %v2779 = vunpack.c.0.s8 %v2778
  %v2780 = vlaneseq
  %v2781 = vshrl.u32 %v2780, 7
  %v2782 = vsub.s32 %v2779, %v2781
  %v2783 = vrot.slane %v2776, %v2782
  %v2784 = vcombine.low %v2759, %v2767
  %v2785 = vcombine.high %v2759, %v2767
  %v2787 = vunpack.c.l.s4 1934713408
  %v2788 = vunpack.c.0.s8 %v2787
  %v2789 = vlaneseq
  %v2790 = vshrl.u32 %v2789, 7
  %v2791 = vsub.s32 %v2788, %v2790
  %v2792 = vrot.slane %v2784, %v2791
  %v2794 = vunpack.c.l.s4 1934713408
  %v2795 = vunpack.c.0.s8 %v2794
  %v2796 = vlaneseq
  %v2797 = vshrl.u32 %v2796, 7
  %v2798 = vsub.s32 %v2795, %v2797
  %v2799 = vrot.slane %v2785, %v2798
  %v2800 = vcombine.low %v2775, %v2783
  %v2801 = vcombine.high %v2775, %v2783
  %v2803 = vunpack.c.l.s4 1934713408
  %v2804 = vunpack.c.0.s8 %v2803
  %v2805 = vlaneseq
  %v2806 = vshrl.u32 %v2805, 7
  %v2807 = vsub.s32 %v2804, %v2806
  %v2808 = vrot.slane %v2800, %v2807
  %v2810 = vunpack.c.l.s4 1934713408
  %v2811 = vunpack.c.0.s8 %v2810
  %v2812 = vlaneseq
  %v2813 = vshrl.u32 %v2812, 7
  %v2814 = vsub.s32 %v2811, %v2813
  %v2815 = vrot.slane %v2801, %v2814
  %v2816 = vcombine.low %v2792, %v2808
  %v2817 = vcombine.high %v2792, %v2808
  %v2818 = vcombine.low %v2799, %v2815
  %v2819 = vcombine.high %v2799, %v2815
  %v2820 = vcombine.low %v2726, %v2733
  %v2822 = vunpack.c.l.s4 1983009808
  %v2823 = vunpack.c.0.s8 %v2822
  %v2824 = vlaneseq
  %v2825 = vshrl.u32 %v2824, 7
  %v2826 = vsub.s32 %v2823, %v2825
  %v2827 = vrot.slane %v2820, %v2826
  %v2828 = vcombine.low %v2743, %v2744
  %v2830 = vunpack.c.l.s4 1983009808
  %v2831 = vunpack.c.0.s8 %v2830
  %v2832 = vlaneseq
  %v2833 = vshrl.u32 %v2832, 7
  %v2834 = vsub.s32 %v2831, %v2833
  %v2835 = vrot.slane %v2828, %v2834
  %v2836 = vcombine.low %v2742, %v2751
  %v2838 = vunpack.c.l.s4 1983009808
  %v2839 = vunpack.c.0.s8 %v2838
  %v2840 = vlaneseq
  %v2841 = vshrl.u32 %v2840, 7
  %v2842 = vsub.s32 %v2839, %v2841
  %v2843 = vrot.slane %v2836, %v2842
  %v2844 = vcombine.high %v2742, 0.0
  %v2846 = vunpack.c.l.s4 1983009808
  %v2847 = vunpack.c.0.s8 %v2846
  %v2848 = vlaneseq
  %v2849 = vshrl.u32 %v2848, 7
  %v2850 = vsub.s32 %v2847, %v2849
  %v2851 = vrot.slane %v2844, %v2850
  %v2852 = vcombine.low %v2827, %v2835
  %v2853 = vcombine.high %v2827, %v2835
  %v2855 = vunpack.c.l.s4 1934713408
  %v2856 = vunpack.c.0.s8 %v2855
  %v2857 = vlaneseq
  %v2858 = vshrl.u32 %v2857, 7
  %v2859 = vsub.s32 %v2856, %v2858
  %v2860 = vrot.slane %v2852, %v2859
  %v2862 = vunpack.c.l.s4 1934713408
  %v2863 = vunpack.c.0.s8 %v2862
  %v2864 = vlaneseq
  %v2865 = vshrl.u32 %v2864, 7
  %v2866 = vsub.s32 %v2863, %v2865
  %v2867 = vrot.slane %v2853, %v2866
  %v2868 = vcombine.low %v2843, %v2851
  %v2869 = vcombine.high %v2843, %v2851
  %v2871 = vunpack.c.l.s4 1934713408
  %v2872 = vunpack.c.0.s8 %v2871
  %v2873 = vlaneseq
  %v2874 = vshrl.u32 %v2873, 7
  %v2875 = vsub.s32 %v2872, %v2874
  %v2876 = vrot.slane %v2868, %v2875
  %v2878 = vunpack.c.l.s4 1934713408
  %v2879 = vunpack.c.0.s8 %v2878
  %v2880 = vlaneseq
  %v2881 = vshrl.u32 %v2880, 7
  %v2882 = vsub.s32 %v2879, %v2881
  %v2883 = vrot.slane %v2869, %v2882
  %v2884 = vcombine.low %v2860, %v2876
  %v2885 = vcombine.high %v2860, %v2876
  %v2886 = vcombine.low %v2867, %v2883
  %v2887 = vcombine.high %v2867, %v2883
  %2888 = vrot.lane.b32.xlu0 %v802, 64
  %v2889 = vpop.permute.xlu0 %2888
  %2890 = vrot.lane.b32.xlu0 %v807, 64
  %v2891 = vpop.permute.xlu0 %2890
  %2892 = vrot.lane.b32.xlu0 %v2601, 64
  %v2893 = vpop.permute.xlu0 %2892
  %2894 = vrot.lane.b32.xlu0 %v2603, 64
  %v2895 = vpop.permute.xlu0 %2894
  %2896 = vrot.lane.b32.xlu0 %v2607, 64
  %v2897 = vpop.permute.xlu0 %2896
  %2898 = vrot.lane.b32.xlu0 %v2609, 64
  %v2899 = vpop.permute.xlu0 %2898
  %2900 = vrot.lane.b32.xlu0 %v2613, 64
  %v2901 = vpop.permute.xlu0 %2900
  %2902 = vrot.lane.b32.xlu0 %v2615, 64
  %v2903 = vpop.permute.xlu0 %2902
  %v2912 = vcombine.low %v2889, %v2897
  %v2913 = vcombine.high %v2889, %v2897
  %v2915 = vunpack.c.l.s4 1983009808
  %v2916 = vunpack.c.0.s8 %v2915
  %v2917 = vlaneseq
  %v2918 = vshrl.u32 %v2917, 7
  %v2919 = vsub.s32 %v2916, %v2918
  %v2920 = vrot.slane %v2912, %v2919
  %v2922 = vunpack.c.l.s4 1983009808
  %v2923 = vunpack.c.0.s8 %v2922
  %v2924 = vlaneseq
  %v2925 = vshrl.u32 %v2924, 7
  %v2926 = vsub.s32 %v2923, %v2925
  %v2927 = vrot.slane %v2913, %v2926
  %v2928 = vcombine.low %v2893, %v2901
  %v2929 = vcombine.high %v2893, %v2901
  %v2931 = vunpack.c.l.s4 1983009808
  %v2932 = vunpack.c.0.s8 %v2931
  %v2933 = vlaneseq
  %v2934 = vshrl.u32 %v2933, 7
  %v2935 = vsub.s32 %v2932, %v2934
  %v2936 = vrot.slane %v2928, %v2935
  %v2938 = vunpack.c.l.s4 1983009808
  %v2939 = vunpack.c.0.s8 %v2938
  %v2940 = vlaneseq
  %v2941 = vshrl.u32 %v2940, 7
  %v2942 = vsub.s32 %v2939, %v2941
  %v2943 = vrot.slane %v2929, %v2942
  %v2944 = vcombine.low %v2920, %v2936
  %v2945 = vcombine.high %v2920, %v2936
  %v2947 = vunpack.c.l.s4 1934713408
  %v2948 = vunpack.c.0.s8 %v2947
  %v2949 = vlaneseq
  %v2950 = vshrl.u32 %v2949, 7
  %v2951 = vsub.s32 %v2948, %v2950
  %v2952 = vrot.slane %v2944, %v2951
  %v2954 = vunpack.c.l.s4 1934713408
  %v2955 = vunpack.c.0.s8 %v2954
  %v2956 = vlaneseq
  %v2957 = vshrl.u32 %v2956, 7
  %v2958 = vsub.s32 %v2955, %v2957
  %v2959 = vrot.slane %v2945, %v2958
  %v2960 = vcombine.low %v2927, %v2943
  %v2961 = vcombine.high %v2927, %v2943
  %v2963 = vunpack.c.l.s4 1934713408
  %v2964 = vunpack.c.0.s8 %v2963
  %v2965 = vlaneseq
  %v2966 = vshrl.u32 %v2965, 7
  %v2967 = vsub.s32 %v2964, %v2966
  %v2968 = vrot.slane %v2960, %v2967
  %v2970 = vunpack.c.l.s4 1934713408
  %v2971 = vunpack.c.0.s8 %v2970
  %v2972 = vlaneseq
  %v2973 = vshrl.u32 %v2972, 7
  %v2974 = vsub.s32 %v2971, %v2973
  %v2975 = vrot.slane %v2961, %v2974
  %v2976 = vcombine.high %v2952, 0.0
  %v2977 = vcombine.high %v2959, 0.0
  %v2978 = vcombine.high %v2968, 0.0
  %v2979 = vcombine.high %v2975, 0.0
  %v2980 = vcombine.low %v2891, %v2899
  %v2981 = vcombine.high %v2891, %v2899
  %v2983 = vunpack.c.l.s4 1983009808
  %v2984 = vunpack.c.0.s8 %v2983
  %v2985 = vlaneseq
  %v2986 = vshrl.u32 %v2985, 7
  %v2987 = vsub.s32 %v2984, %v2986
  %v2988 = vrot.slane %v2980, %v2987
  %v2990 = vunpack.c.l.s4 1983009808
  %v2991 = vunpack.c.0.s8 %v2990
  %v2992 = vlaneseq
  %v2993 = vshrl.u32 %v2992, 7
  %v2994 = vsub.s32 %v2991, %v2993
  %v2995 = vrot.slane %v2981, %v2994
  %v2996 = vcombine.low %v2895, %v2903
  %v2997 = vcombine.high %v2895, %v2903
  %v2999 = vunpack.c.l.s4 1983009808
  %v3000 = vunpack.c.0.s8 %v2999
  %v3001 = vlaneseq
  %v3002 = vshrl.u32 %v3001, 7
  %v3003 = vsub.s32 %v3000, %v3002
  %v3004 = vrot.slane %v2996, %v3003
  %v3006 = vunpack.c.l.s4 1983009808
  %v3007 = vunpack.c.0.s8 %v3006
  %v3008 = vlaneseq
  %v3009 = vshrl.u32 %v3008, 7
  %v3010 = vsub.s32 %v3007, %v3009
  %v3011 = vrot.slane %v2997, %v3010
  %v3012 = vcombine.low %v2988, %v3004
  %v3013 = vcombine.high %v2988, %v3004
  %v3015 = vunpack.c.l.s4 1934713408
  %v3016 = vunpack.c.0.s8 %v3015
  %v3017 = vlaneseq
  %v3018 = vshrl.u32 %v3017, 7
  %v3019 = vsub.s32 %v3016, %v3018
  %v3020 = vrot.slane %v3012, %v3019
  %v3022 = vunpack.c.l.s4 1934713408
  %v3023 = vunpack.c.0.s8 %v3022
  %v3024 = vlaneseq
  %v3025 = vshrl.u32 %v3024, 7
  %v3026 = vsub.s32 %v3023, %v3025
  %v3027 = vrot.slane %v3013, %v3026
  %v3028 = vcombine.low %v2995, %v3011
  %v3029 = vcombine.high %v2995, %v3011
  %v3031 = vunpack.c.l.s4 1934713408
  %v3032 = vunpack.c.0.s8 %v3031
  %v3033 = vlaneseq
  %v3034 = vshrl.u32 %v3033, 7
  %v3035 = vsub.s32 %v3032, %v3034
  %v3036 = vrot.slane %v3028, %v3035
  %v3037 = vcombine.high %v3020, 0.0
  %v3038 = vcombine.high %v3027, 0.0
  %v3040 = vunpack.c.l.s4 1934713408
  %v3041 = vunpack.c.0.s8 %v3040
  %v3042 = vlaneseq
  %v3043 = vshrl.u32 %v3042, 7
  %v3044 = vsub.s32 %v3041, %v3043
  %v3045 = vrot.slane %v3029, %v3044
  %v3046 = vcombine.low %v2952, %v2959
  %v3048 = vunpack.c.l.s4 1983009808
  %v3049 = vunpack.c.0.s8 %v3048
  %v3050 = vlaneseq
  %v3051 = vshrl.u32 %v3050, 7
  %v3052 = vsub.s32 %v3049, %v3051
  %v3053 = vrot.slane %v3046, %v3052
  %v3054 = vcombine.low %v2976, %v2977
  %v3056 = vunpack.c.l.s4 1983009808
  %v3057 = vunpack.c.0.s8 %v3056
  %v3058 = vlaneseq
  %v3059 = vshrl.u32 %v3058, 7
  %v3060 = vsub.s32 %v3057, %v3059
  %v3061 = vrot.slane %v3054, %v3060
  %v3062 = vcombine.low %v2968, %v2975
  %v3064 = vunpack.c.l.s4 1983009808
  %v3065 = vunpack.c.0.s8 %v3064
  %v3066 = vlaneseq
  %v3067 = vshrl.u32 %v3066, 7
  %v3068 = vsub.s32 %v3065, %v3067
  %v3069 = vrot.slane %v3062, %v3068
  %v3070 = vcombine.low %v2978, %v2979
  %v3072 = vunpack.c.l.s4 1983009808
  %v3073 = vunpack.c.0.s8 %v3072
  %v3074 = vlaneseq
  %v3075 = vshrl.u32 %v3074, 7
  %v3076 = vsub.s32 %v3073, %v3075
  %v3077 = vrot.slane %v3070, %v3076
  %v3078 = vcombine.low %v3053, %v3061
  %v3079 = vcombine.high %v3053, %v3061
  %v3081 = vunpack.c.l.s4 1934713408
  %v3082 = vunpack.c.0.s8 %v3081
  %v3083 = vlaneseq
  %v3084 = vshrl.u32 %v3083, 7
  %v3085 = vsub.s32 %v3082, %v3084
  %v3086 = vrot.slane %v3078, %v3085
  %v3088 = vunpack.c.l.s4 1934713408
  %v3089 = vunpack.c.0.s8 %v3088
  %v3090 = vlaneseq
  %v3091 = vshrl.u32 %v3090, 7
  %v3092 = vsub.s32 %v3089, %v3091
  %v3093 = vrot.slane %v3079, %v3092
  %v3094 = vcombine.low %v3069, %v3077
  %v3095 = vcombine.high %v3069, %v3077
  %v3097 = vunpack.c.l.s4 1934713408
  %v3098 = vunpack.c.0.s8 %v3097
  %v3099 = vlaneseq
  %v3100 = vshrl.u32 %v3099, 7
  %v3101 = vsub.s32 %v3098, %v3100
  %v3102 = vrot.slane %v3094, %v3101
  %v3104 = vunpack.c.l.s4 1934713408
  %v3105 = vunpack.c.0.s8 %v3104
  %v3106 = vlaneseq
  %v3107 = vshrl.u32 %v3106, 7
  %v3108 = vsub.s32 %v3105, %v3107
  %v3109 = vrot.slane %v3095, %v3108
  %v3110 = vcombine.low %v3086, %v3102
  %v3111 = vcombine.high %v3086, %v3102
  %v3112 = vcombine.low %v3093, %v3109
  %v3113 = vcombine.high %v3093, %v3109
  %v3114 = vcombine.low %v3020, %v3027
  %v3116 = vunpack.c.l.s4 1983009808
  %v3117 = vunpack.c.0.s8 %v3116
  %v3118 = vlaneseq
  %v3119 = vshrl.u32 %v3118, 7
  %v3120 = vsub.s32 %v3117, %v3119
  %v3121 = vrot.slane %v3114, %v3120
  %v3122 = vcombine.low %v3037, %v3038
  %v3124 = vunpack.c.l.s4 1983009808
  %v3125 = vunpack.c.0.s8 %v3124
  %v3126 = vlaneseq
  %v3127 = vshrl.u32 %v3126, 7
  %v3128 = vsub.s32 %v3125, %v3127
  %v3129 = vrot.slane %v3122, %v3128
  %v3130 = vcombine.low %v3036, %v3045
  %v3132 = vunpack.c.l.s4 1983009808
  %v3133 = vunpack.c.0.s8 %v3132
  %v3134 = vlaneseq
  %v3135 = vshrl.u32 %v3134, 7
  %v3136 = vsub.s32 %v3133, %v3135
  %v3137 = vrot.slane %v3130, %v3136
  %v3138 = vcombine.high %v3036, 0.0
  %v3140 = vunpack.c.l.s4 1983009808
  %v3141 = vunpack.c.0.s8 %v3140
  %v3142 = vlaneseq
  %v3143 = vshrl.u32 %v3142, 7
  %v3144 = vsub.s32 %v3141, %v3143
  %v3145 = vrot.slane %v3138, %v3144
  %v3146 = vcombine.low %v3121, %v3129
  %v3147 = vcombine.high %v3121, %v3129
  %v3149 = vunpack.c.l.s4 1934713408
  %v3150 = vunpack.c.0.s8 %v3149
  %v3151 = vlaneseq
  %v3152 = vshrl.u32 %v3151, 7
  %v3153 = vsub.s32 %v3150, %v3152
  %v3154 = vrot.slane %v3146, %v3153
  %v3156 = vunpack.c.l.s4 1934713408
  %v3157 = vunpack.c.0.s8 %v3156
  %v3158 = vlaneseq
  %v3159 = vshrl.u32 %v3158, 7
  %v3160 = vsub.s32 %v3157, %v3159
  %v3161 = vrot.slane %v3147, %v3160
  %v3162 = vcombine.low %v3137, %v3145
  %v3163 = vcombine.high %v3137, %v3145
  %v3165 = vunpack.c.l.s4 1934713408
  %v3166 = vunpack.c.0.s8 %v3165
  %v3167 = vlaneseq
  %v3168 = vshrl.u32 %v3167, 7
  %v3169 = vsub.s32 %v3166, %v3168
  %v3170 = vrot.slane %v3162, %v3169
  %v3172 = vunpack.c.l.s4 1934713408
  %v3173 = vunpack.c.0.s8 %v3172
  %v3174 = vlaneseq
  %v3175 = vshrl.u32 %v3174, 7
  %v3176 = vsub.s32 %v3173, %v3175
  %v3177 = vrot.slane %v3163, %v3176
  %v3178 = vcombine.low %v3154, %v3170
  %v3179 = vcombine.high %v3154, %v3170
  %v3180 = vcombine.low %v3161, %v3177
  %v3181 = vcombine.high %v3161, %v3177
  %vm3182 = vcmask 130048
  %v3184 = vsel %vm3182, %v1186, 0
  %v3187 = vsel %vm3182, %v1254, 0
  %v3190 = vsel %vm3182, %v3110, 0
  %v3193 = vsel %vm3182, %v3178, 0
  %3195 = vmatprep.subr.mxu0 0.0
  %3196 = vmatpush1.xpose.msra.mxu0 0.0
  %3197 = vmatprep.subr.mxu0 0.0
  %3198 = vmatpush1.xpose.msra.mxu0 0.0
  %3199 = vmatprep.subr.mxu0 0.0
  %3200 = vmatpush1.xpose.msra.mxu0 0.0
  %3201 = vmatprep.subr.mxu0 0.0
  %3202 = vmatpush1.xpose.msra.mxu0 0.0
  %3203 = vmatprep.subr.mxu0 0.0
  %3204 = vmatpush1.xpose.msra.mxu0 0.0
  %3205 = vmatprep.subr.mxu0 0.0
  %3206 = vmatpush1.xpose.msra.mxu0 0.0
  %3207 = vmatprep.subr.mxu0 0.0
  %3208 = vmatpush1.xpose.msra.mxu0 0.0
  %3209 = vmatprep.subr.mxu0 0.0
  %3210 = vmatpush1.xpose.msra.mxu0 0.0
  %3211 = vmatprep.subr.mxu0 0.0
  %3212 = vmatpush1.xpose.msra.mxu0 0.0
  %3213 = vmatprep.subr.mxu0 0.0
  %3214 = vmatpush1.xpose.msra.mxu0 0.0
  %3215 = vmatprep.subr.mxu0 0.0
  %3216 = vmatpush1.xpose.msra.mxu0 0.0
  %3217 = vmatprep.subr.mxu0 0.0
  %3218 = vmatpush1.xpose.msra.mxu0 0.0
  %3219 = vmatprep.subr.mxu0 0.0
  %3220 = vmatpush1.xpose.msra.mxu0 0.0
  %3221 = vmatprep.subr.mxu0 0.0
  %3222 = vmatpush1.xpose.msra.mxu0 0.0
  %3223 = vmatprep.subr.mxu0 0.0
  %3224 = vmatpush1.xpose.msra.mxu0 %v3193
  %3225 = vmatprep.subr.mxu0 0.0
  %3226 = vmatpush1.xpose.msra.mxu0 %v3190
  %3227 = vmatprep.subr.mxu0 0.0
  %3228 = vmatpush2.xpose.msra.mxu0 0.0
  %3229 = vmatprep.subr.mxu0 0.0
  %3230 = vmatpush2.xpose.msra.mxu0 0.0
  %3231 = vmatprep.subr.mxu0 0.0
  %3232 = vmatpush2.xpose.msra.mxu0 0.0
  %3233 = vmatprep.subr.mxu0 0.0
  %3234 = vmatpush2.xpose.msra.mxu0 0.0
  %3235 = vmatprep.subr.mxu0 0.0
  %3236 = vmatpush2.xpose.msra.mxu0 0.0
  %3237 = vmatprep.subr.mxu0 0.0
  %3238 = vmatpush2.xpose.msra.mxu0 0.0
  %3239 = vmatprep.subr.mxu0 0.0
  %3240 = vmatpush2.xpose.msra.mxu0 0.0
  %3241 = vmatprep.subr.mxu0 0.0
  %3242 = vmatpush2.xpose.msra.mxu0 0.0
  %3243 = vmatprep.subr.mxu0 0.0
  %3244 = vmatpush2.xpose.msra.mxu0 0.0
  %3245 = vmatprep.subr.mxu0 0.0
  %3246 = vmatpush2.xpose.msra.mxu0 0.0
  %3247 = vmatprep.subr.mxu0 0.0
  %3248 = vmatpush2.xpose.msra.mxu0 0.0
  %3249 = vmatprep.subr.mxu0 0.0
  %3250 = vmatpush2.xpose.msra.mxu0 0.0
  %3251 = vmatprep.subr.mxu0 0.0
  %3252 = vmatpush2.xpose.msra.mxu0 0.0
  %3253 = vmatprep.subr.mxu0 0.0
  %3254 = vmatpush2.xpose.msra.mxu0 0.0
  %3255 = vmatprep.subr.mxu0 0.0
  %3256 = vmatpush2.xpose.msra.mxu0 0.0
  %3257 = vmatprep.subr.mxu0 0.0
  %3258 = vmatpush2.xpose.msra.mxu0 0.0
  %3259 = vmatprep.mubr.f32.mxu0 0.0
  %3260 = vmatmul.mubr.f32.gmra.mxu0 %v3184
  %v3261 = vpop.f32.mrf.mxu0
  %v3262 = vadd.f32 0.0, %v3261
  %v3263 = vpop.f32.mrf.mxu0
  %3264 = vmatprep.mubr.f32.mxu0 0.0
  %3265 = vmatmul.mubr.f32.gmra.mxu0 %v3187
  %v3266 = vpop.f32.mrf.mxu0
  %v3267 = vadd.f32 0.0, %v3266
  %v3268 = vpop.f32.mrf.mxu0
  %3269 = vdwg.mxu0
  %v3271 = vsel %vm3182, %v1322, 0
  %v3274 = vsel %vm3182, %v1390, 0
  %3276 = vmatprep.subr.mxu0 0.0
  %3277 = vmatpush1.xpose.msra.mxu0 0.0
  %3278 = vmatprep.subr.mxu0 0.0
  %3279 = vmatpush1.xpose.msra.mxu0 0.0
  %3280 = vmatprep.subr.mxu0 0.0
  %3281 = vmatpush1.xpose.msra.mxu0 0.0
  %3282 = vmatprep.subr.mxu0 0.0
  %3283 = vmatpush1.xpose.msra.mxu0 0.0
  %3284 = vmatprep.subr.mxu0 0.0
  %3285 = vmatpush1.xpose.msra.mxu0 0.0
  %3286 = vmatprep.subr.mxu0 0.0
  %3287 = vmatpush1.xpose.msra.mxu0 0.0
  %3288 = vmatprep.subr.mxu0 0.0
  %3289 = vmatpush1.xpose.msra.mxu0 0.0
  %3290 = vmatprep.subr.mxu0 0.0
  %3291 = vmatpush1.xpose.msra.mxu0 0.0
  %3292 = vmatprep.subr.mxu0 0.0
  %3293 = vmatpush1.xpose.msra.mxu0 0.0
  %3294 = vmatprep.subr.mxu0 0.0
  %3295 = vmatpush1.xpose.msra.mxu0 0.0
  %3296 = vmatprep.subr.mxu0 0.0
  %3297 = vmatpush1.xpose.msra.mxu0 0.0
  %3298 = vmatprep.subr.mxu0 0.0
  %3299 = vmatpush1.xpose.msra.mxu0 0.0
  %3300 = vmatprep.subr.mxu0 0.0
  %3301 = vmatpush1.xpose.msra.mxu0 0.0
  %3302 = vmatprep.subr.mxu0 0.0
  %3303 = vmatpush1.xpose.msra.mxu0 0.0
  %3304 = vmatprep.subr.mxu0 0.0
  %3305 = vmatpush1.xpose.msra.mxu0 %v3193
  %3306 = vmatprep.subr.mxu0 0.0
  %3307 = vmatpush1.xpose.msra.mxu0 %v3190
  %3308 = vmatprep.subr.mxu0 0.0
  %3309 = vmatpush2.xpose.msra.mxu0 0.0
  %3310 = vmatprep.subr.mxu0 0.0
  %3311 = vmatpush2.xpose.msra.mxu0 0.0
  %3312 = vmatprep.subr.mxu0 0.0
  %3313 = vmatpush2.xpose.msra.mxu0 0.0
  %3314 = vmatprep.subr.mxu0 0.0
  %3315 = vmatpush2.xpose.msra.mxu0 0.0
  %3316 = vmatprep.subr.mxu0 0.0
  %3317 = vmatpush2.xpose.msra.mxu0 0.0
  %3318 = vmatprep.subr.mxu0 0.0
  %3319 = vmatpush2.xpose.msra.mxu0 0.0
  %3320 = vmatprep.subr.mxu0 0.0
  %3321 = vmatpush2.xpose.msra.mxu0 0.0
  %3322 = vmatprep.subr.mxu0 0.0
  %3323 = vmatpush2.xpose.msra.mxu0 0.0
  %3324 = vmatprep.subr.mxu0 0.0
  %3325 = vmatpush2.xpose.msra.mxu0 0.0
  %3326 = vmatprep.subr.mxu0 0.0
  %3327 = vmatpush2.xpose.msra.mxu0 0.0
  %3328 = vmatprep.subr.mxu0 0.0
  %3329 = vmatpush2.xpose.msra.mxu0 0.0
  %3330 = vmatprep.subr.mxu0 0.0
  %3331 = vmatpush2.xpose.msra.mxu0 0.0
  %3332 = vmatprep.subr.mxu0 0.0
  %3333 = vmatpush2.xpose.msra.mxu0 0.0
  %3334 = vmatprep.subr.mxu0 0.0
  %3335 = vmatpush2.xpose.msra.mxu0 0.0
  %3336 = vmatprep.subr.mxu0 0.0
  %3337 = vmatpush2.xpose.msra.mxu0 0.0
  %3338 = vmatprep.subr.mxu0 0.0
  %3339 = vmatpush2.xpose.msra.mxu0 0.0
  %3340 = vmatprep.mubr.f32.mxu0 0.0
  %3341 = vmatmul.mubr.f32.gmra.mxu0 %v3271
  %v3342 = vpop.f32.mrf.mxu0
  %v3343 = vadd.f32 0.0, %v3342
  %v3344 = vpop.f32.mrf.mxu0
  %3345 = vmatprep.mubr.f32.mxu0 0.0
  %3346 = vmatmul.mubr.f32.gmra.mxu0 %v3274
  %v3347 = vpop.f32.mrf.mxu0
  %v3348 = vadd.f32 0.0, %v3347
  %v3349 = vpop.f32.mrf.mxu0
  %3350 = vdwg.mxu0
  %v3352 = vsel %vm3182, %v1187, 0
  %v3355 = vsel %vm3182, %v1255, 0
  %v3358 = vsel %vm3182, %v3111, 0
  %v3361 = vsel %vm3182, %v3179, 0
  %3363 = vmatprep.subr.mxu0 0.0
  %3364 = vmatpush1.xpose.msra.mxu0 0.0
  %3365 = vmatprep.subr.mxu0 0.0
  %3366 = vmatpush1.xpose.msra.mxu0 0.0
  %3367 = vmatprep.subr.mxu0 0.0
  %3368 = vmatpush1.xpose.msra.mxu0 0.0
  %3369 = vmatprep.subr.mxu0 0.0
  %3370 = vmatpush1.xpose.msra.mxu0 0.0
  %3371 = vmatprep.subr.mxu0 0.0
  %3372 = vmatpush1.xpose.msra.mxu0 0.0
  %3373 = vmatprep.subr.mxu0 0.0
  %3374 = vmatpush1.xpose.msra.mxu0 0.0
  %3375 = vmatprep.subr.mxu0 0.0
  %3376 = vmatpush1.xpose.msra.mxu0 0.0
  %3377 = vmatprep.subr.mxu0 0.0
  %3378 = vmatpush1.xpose.msra.mxu0 0.0
  %3379 = vmatprep.subr.mxu0 0.0
  %3380 = vmatpush1.xpose.msra.mxu0 0.0
  %3381 = vmatprep.subr.mxu0 0.0
  %3382 = vmatpush1.xpose.msra.mxu0 0.0
  %3383 = vmatprep.subr.mxu0 0.0
  %3384 = vmatpush1.xpose.msra.mxu0 0.0
  %3385 = vmatprep.subr.mxu0 0.0
  %3386 = vmatpush1.xpose.msra.mxu0 0.0
  %3387 = vmatprep.subr.mxu0 0.0
  %3388 = vmatpush1.xpose.msra.mxu0 0.0
  %3389 = vmatprep.subr.mxu0 0.0
  %3390 = vmatpush1.xpose.msra.mxu0 0.0
  %3391 = vmatprep.subr.mxu0 0.0
  %3392 = vmatpush1.xpose.msra.mxu0 %v3361
  %3393 = vmatprep.subr.mxu0 0.0
  %3394 = vmatpush1.xpose.msra.mxu0 %v3358
  %3395 = vmatprep.subr.mxu0 0.0
  %3396 = vmatpush2.xpose.msra.mxu0 0.0
  %3397 = vmatprep.subr.mxu0 0.0
  %3398 = vmatpush2.xpose.msra.mxu0 0.0
  %3399 = vmatprep.subr.mxu0 0.0
  %3400 = vmatpush2.xpose.msra.mxu0 0.0
  %3401 = vmatprep.subr.mxu0 0.0
  %3402 = vmatpush2.xpose.msra.mxu0 0.0
  %3403 = vmatprep.subr.mxu0 0.0
  %3404 = vmatpush2.xpose.msra.mxu0 0.0
  %3405 = vmatprep.subr.mxu0 0.0
  %3406 = vmatpush2.xpose.msra.mxu0 0.0
  %3407 = vmatprep.subr.mxu0 0.0
  %3408 = vmatpush2.xpose.msra.mxu0 0.0
  %3409 = vmatprep.subr.mxu0 0.0
  %3410 = vmatpush2.xpose.msra.mxu0 0.0
  %3411 = vmatprep.subr.mxu0 0.0
  %3412 = vmatpush2.xpose.msra.mxu0 0.0
  %3413 = vmatprep.subr.mxu0 0.0
  %3414 = vmatpush2.xpose.msra.mxu0 0.0
  %3415 = vmatprep.subr.mxu0 0.0
  %3416 = vmatpush2.xpose.msra.mxu0 0.0
  %3417 = vmatprep.subr.mxu0 0.0
  %3418 = vmatpush2.xpose.msra.mxu0 0.0
  %3419 = vmatprep.subr.mxu0 0.0
  %3420 = vmatpush2.xpose.msra.mxu0 0.0
  %3421 = vmatprep.subr.mxu0 0.0
  %3422 = vmatpush2.xpose.msra.mxu0 0.0
  %3423 = vmatprep.subr.mxu0 0.0
  %3424 = vmatpush2.xpose.msra.mxu0 0.0
  %3425 = vmatprep.subr.mxu0 0.0
  %3426 = vmatpush2.xpose.msra.mxu0 0.0
  %3427 = vmatprep.mubr.f32.mxu0 0.0
  %3428 = vmatmul.mubr.f32.gmra.mxu0 %v3352
  %v3429 = vpop.f32.mrf.mxu0
  %v3430 = vadd.f32 0.0, %v3429
  %v3431 = vpop.f32.mrf.mxu0
  %3432 = vmatprep.mubr.f32.mxu0 0.0
  %3433 = vmatmul.mubr.f32.gmra.mxu0 %v3355
  %v3434 = vpop.f32.mrf.mxu0
  %v3435 = vadd.f32 0.0, %v3434
  %v3436 = vpop.f32.mrf.mxu0
  %3437 = vdwg.mxu0
  %v3439 = vsel %vm3182, %v1323, 0
  %v3442 = vsel %vm3182, %v1391, 0
  %3444 = vmatprep.subr.mxu0 0.0
  %3445 = vmatpush1.xpose.msra.mxu0 0.0
  %3446 = vmatprep.subr.mxu0 0.0
  %3447 = vmatpush1.xpose.msra.mxu0 0.0
  %3448 = vmatprep.subr.mxu0 0.0
  %3449 = vmatpush1.xpose.msra.mxu0 0.0
  %3450 = vmatprep.subr.mxu0 0.0
  %3451 = vmatpush1.xpose.msra.mxu0 0.0
  %3452 = vmatprep.subr.mxu0 0.0
  %3453 = vmatpush1.xpose.msra.mxu0 0.0
  %3454 = vmatprep.subr.mxu0 0.0
  %3455 = vmatpush1.xpose.msra.mxu0 0.0
  %3456 = vmatprep.subr.mxu0 0.0
  %3457 = vmatpush1.xpose.msra.mxu0 0.0
  %3458 = vmatprep.subr.mxu0 0.0
  %3459 = vmatpush1.xpose.msra.mxu0 0.0
  %3460 = vmatprep.subr.mxu0 0.0
  %3461 = vmatpush1.xpose.msra.mxu0 0.0
  %3462 = vmatprep.subr.mxu0 0.0
  %3463 = vmatpush1.xpose.msra.mxu0 0.0
  %3464 = vmatprep.subr.mxu0 0.0
  %3465 = vmatpush1.xpose.msra.mxu0 0.0
  %3466 = vmatprep.subr.mxu0 0.0
  %3467 = vmatpush1.xpose.msra.mxu0 0.0
  %3468 = vmatprep.subr.mxu0 0.0
  %3469 = vmatpush1.xpose.msra.mxu0 0.0
  %3470 = vmatprep.subr.mxu0 0.0
  %3471 = vmatpush1.xpose.msra.mxu0 0.0
  %3472 = vmatprep.subr.mxu0 0.0
  %3473 = vmatpush1.xpose.msra.mxu0 %v3361
  %3474 = vmatprep.subr.mxu0 0.0
  %3475 = vmatpush1.xpose.msra.mxu0 %v3358
  %3476 = vmatprep.subr.mxu0 0.0
  %3477 = vmatpush2.xpose.msra.mxu0 0.0
  %3478 = vmatprep.subr.mxu0 0.0
  %3479 = vmatpush2.xpose.msra.mxu0 0.0
  %3480 = vmatprep.subr.mxu0 0.0
  %3481 = vmatpush2.xpose.msra.mxu0 0.0
  %3482 = vmatprep.subr.mxu0 0.0
  %3483 = vmatpush2.xpose.msra.mxu0 0.0
  %3484 = vmatprep.subr.mxu0 0.0
  %3485 = vmatpush2.xpose.msra.mxu0 0.0
  %3486 = vmatprep.subr.mxu0 0.0
  %3487 = vmatpush2.xpose.msra.mxu0 0.0
  %3488 = vmatprep.subr.mxu0 0.0
  %3489 = vmatpush2.xpose.msra.mxu0 0.0
  %3490 = vmatprep.subr.mxu0 0.0
  %3491 = vmatpush2.xpose.msra.mxu0 0.0
  %3492 = vmatprep.subr.mxu0 0.0
  %3493 = vmatpush2.xpose.msra.mxu0 0.0
  %3494 = vmatprep.subr.mxu0 0.0
  %3495 = vmatpush2.xpose.msra.mxu0 0.0
  %3496 = vmatprep.subr.mxu0 0.0
  %3497 = vmatpush2.xpose.msra.mxu0 0.0
  %3498 = vmatprep.subr.mxu0 0.0
  %3499 = vmatpush2.xpose.msra.mxu0 0.0
  %3500 = vmatprep.subr.mxu0 0.0
  %3501 = vmatpush2.xpose.msra.mxu0 0.0
  %3502 = vmatprep.subr.mxu0 0.0
  %3503 = vmatpush2.xpose.msra.mxu0 0.0
  %3504 = vmatprep.subr.mxu0 0.0
  %3505 = vmatpush2.xpose.msra.mxu0 0.0
  %3506 = vmatprep.subr.mxu0 0.0
  %3507 = vmatpush2.xpose.msra.mxu0 0.0
  %3508 = vmatprep.mubr.f32.mxu0 0.0
  %3509 = vmatmul.mubr.f32.gmra.mxu0 %v3439
  %v3510 = vpop.f32.mrf.mxu0
  %v3511 = vadd.f32 0.0, %v3510
  %v3512 = vpop.f32.mrf.mxu0
  %3513 = vmatprep.mubr.f32.mxu0 0.0
  %3514 = vmatmul.mubr.f32.gmra.mxu0 %v3442
  %v3515 = vpop.f32.mrf.mxu0
  %v3516 = vadd.f32 0.0, %v3515
  %v3517 = vpop.f32.mrf.mxu0
  %3518 = vdwg.mxu0
  %v3520 = vsel %vm3182, %v1188, 0
  %v3523 = vsel %vm3182, %v1256, 0
  %v3526 = vsel %vm3182, %v3112, 0
  %v3529 = vsel %vm3182, %v3180, 0
  %3531 = vmatprep.subr.mxu0 0.0
  %3532 = vmatpush1.xpose.msra.mxu0 0.0
  %3533 = vmatprep.subr.mxu0 0.0
  %3534 = vmatpush1.xpose.msra.mxu0 0.0
  %3535 = vmatprep.subr.mxu0 0.0
  %3536 = vmatpush1.xpose.msra.mxu0 0.0
  %3537 = vmatprep.subr.mxu0 0.0
  %3538 = vmatpush1.xpose.msra.mxu0 0.0
  %3539 = vmatprep.subr.mxu0 0.0
  %3540 = vmatpush1.xpose.msra.mxu0 0.0
  %3541 = vmatprep.subr.mxu0 0.0
  %3542 = vmatpush1.xpose.msra.mxu0 0.0
  %3543 = vmatprep.subr.mxu0 0.0
  %3544 = vmatpush1.xpose.msra.mxu0 0.0
  %3545 = vmatprep.subr.mxu0 0.0
  %3546 = vmatpush1.xpose.msra.mxu0 0.0
  %3547 = vmatprep.subr.mxu0 0.0
  %3548 = vmatpush1.xpose.msra.mxu0 0.0
  %3549 = vmatprep.subr.mxu0 0.0
  %3550 = vmatpush1.xpose.msra.mxu0 0.0
  %3551 = vmatprep.subr.mxu0 0.0
  %3552 = vmatpush1.xpose.msra.mxu0 0.0
  %3553 = vmatprep.subr.mxu0 0.0
  %3554 = vmatpush1.xpose.msra.mxu0 0.0
  %3555 = vmatprep.subr.mxu0 0.0
  %3556 = vmatpush1.xpose.msra.mxu0 0.0
  %3557 = vmatprep.subr.mxu0 0.0
  %3558 = vmatpush1.xpose.msra.mxu0 0.0
  %3559 = vmatprep.subr.mxu0 0.0
  %3560 = vmatpush1.xpose.msra.mxu0 %v3529
  %3561 = vmatprep.subr.mxu0 0.0
  %3562 = vmatpush1.xpose.msra.mxu0 %v3526
  %3563 = vmatprep.subr.mxu0 0.0
  %3564 = vmatpush2.xpose.msra.mxu0 0.0
  %3565 = vmatprep.subr.mxu0 0.0
  %3566 = vmatpush2.xpose.msra.mxu0 0.0
  %3567 = vmatprep.subr.mxu0 0.0
  %3568 = vmatpush2.xpose.msra.mxu0 0.0
  %3569 = vmatprep.subr.mxu0 0.0
  %3570 = vmatpush2.xpose.msra.mxu0 0.0
  %3571 = vmatprep.subr.mxu0 0.0
  %3572 = vmatpush2.xpose.msra.mxu0 0.0
  %3573 = vmatprep.subr.mxu0 0.0
  %3574 = vmatpush2.xpose.msra.mxu0 0.0
  %3575 = vmatprep.subr.mxu0 0.0
  %3576 = vmatpush2.xpose.msra.mxu0 0.0
  %3577 = vmatprep.subr.mxu0 0.0
  %3578 = vmatpush2.xpose.msra.mxu0 0.0
  %3579 = vmatprep.subr.mxu0 0.0
  %3580 = vmatpush2.xpose.msra.mxu0 0.0
  %3581 = vmatprep.subr.mxu0 0.0
  %3582 = vmatpush2.xpose.msra.mxu0 0.0
  %3583 = vmatprep.subr.mxu0 0.0
  %3584 = vmatpush2.xpose.msra.mxu0 0.0
  %3585 = vmatprep.subr.mxu0 0.0
  %3586 = vmatpush2.xpose.msra.mxu0 0.0
  %3587 = vmatprep.subr.mxu0 0.0
  %3588 = vmatpush2.xpose.msra.mxu0 0.0
  %3589 = vmatprep.subr.mxu0 0.0
  %3590 = vmatpush2.xpose.msra.mxu0 0.0
  %3591 = vmatprep.subr.mxu0 0.0
  %3592 = vmatpush2.xpose.msra.mxu0 0.0
  %3593 = vmatprep.subr.mxu0 0.0
  %3594 = vmatpush2.xpose.msra.mxu0 0.0
  %3595 = vmatprep.mubr.f32.mxu0 0.0
  %3596 = vmatmul.mubr.f32.gmra.mxu0 %v3520
  %v3597 = vpop.f32.mrf.mxu0
  %v3598 = vadd.f32 0.0, %v3597
  %v3599 = vpop.f32.mrf.mxu0
  %3600 = vmatprep.mubr.f32.mxu0 0.0
  %3601 = vmatmul.mubr.f32.gmra.mxu0 %v3523
  %v3602 = vpop.f32.mrf.mxu0
  %v3603 = vadd.f32 0.0, %v3602
  %v3604 = vpop.f32.mrf.mxu0
  %3605 = vdwg.mxu0
  %v3607 = vsel %vm3182, %v1324, 0
  %v3610 = vsel %vm3182, %v1392, 0
  %3612 = vmatprep.subr.mxu0 0.0
  %3613 = vmatpush1.xpose.msra.mxu0 0.0
  %3614 = vmatprep.subr.mxu0 0.0
  %3615 = vmatpush1.xpose.msra.mxu0 0.0
  %3616 = vmatprep.subr.mxu0 0.0
  %3617 = vmatpush1.xpose.msra.mxu0 0.0
  %3618 = vmatprep.subr.mxu0 0.0
  %3619 = vmatpush1.xpose.msra.mxu0 0.0
  %3620 = vmatprep.subr.mxu0 0.0
  %3621 = vmatpush1.xpose.msra.mxu0 0.0
  %3622 = vmatprep.subr.mxu0 0.0
  %3623 = vmatpush1.xpose.msra.mxu0 0.0
  %3624 = vmatprep.subr.mxu0 0.0
  %3625 = vmatpush1.xpose.msra.mxu0 0.0
  %3626 = vmatprep.subr.mxu0 0.0
  %3627 = vmatpush1.xpose.msra.mxu0 0.0
  %3628 = vmatprep.subr.mxu0 0.0
  %3629 = vmatpush1.xpose.msra.mxu0 0.0
  %3630 = vmatprep.subr.mxu0 0.0
  %3631 = vmatpush1.xpose.msra.mxu0 0.0
  %3632 = vmatprep.subr.mxu0 0.0
  %3633 = vmatpush1.xpose.msra.mxu0 0.0
  %3634 = vmatprep.subr.mxu0 0.0
  %3635 = vmatpush1.xpose.msra.mxu0 0.0
  %3636 = vmatprep.subr.mxu0 0.0
  %3637 = vmatpush1.xpose.msra.mxu0 0.0
  %3638 = vmatprep.subr.mxu0 0.0
  %3639 = vmatpush1.xpose.msra.mxu0 0.0
  %3640 = vmatprep.subr.mxu0 0.0
  %3641 = vmatpush1.xpose.msra.mxu0 %v3529
  %3642 = vmatprep.subr.mxu0 0.0
  %3643 = vmatpush1.xpose.msra.mxu0 %v3526
  %3644 = vmatprep.subr.mxu0 0.0
  %3645 = vmatpush2.xpose.msra.mxu0 0.0
  %3646 = vmatprep.subr.mxu0 0.0
  %3647 = vmatpush2.xpose.msra.mxu0 0.0
  %3648 = vmatprep.subr.mxu0 0.0
  %3649 = vmatpush2.xpose.msra.mxu0 0.0
  %3650 = vmatprep.subr.mxu0 0.0
  %3651 = vmatpush2.xpose.msra.mxu0 0.0
  %3652 = vmatprep.subr.mxu0 0.0
  %3653 = vmatpush2.xpose.msra.mxu0 0.0
  %3654 = vmatprep.subr.mxu0 0.0
  %3655 = vmatpush2.xpose.msra.mxu0 0.0
  %3656 = vmatprep.subr.mxu0 0.0
  %3657 = vmatpush2.xpose.msra.mxu0 0.0
  %3658 = vmatprep.subr.mxu0 0.0
  %3659 = vmatpush2.xpose.msra.mxu0 0.0
  %3660 = vmatprep.subr.mxu0 0.0
  %3661 = vmatpush2.xpose.msra.mxu0 0.0
  %3662 = vmatprep.subr.mxu0 0.0
  %3663 = vmatpush2.xpose.msra.mxu0 0.0
  %3664 = vmatprep.subr.mxu0 0.0
  %3665 = vmatpush2.xpose.msra.mxu0 0.0
  %3666 = vmatprep.subr.mxu0 0.0
  %3667 = vmatpush2.xpose.msra.mxu0 0.0
  %3668 = vmatprep.subr.mxu0 0.0
  %3669 = vmatpush2.xpose.msra.mxu0 0.0
  %3670 = vmatprep.subr.mxu0 0.0
  %3671 = vmatpush2.xpose.msra.mxu0 0.0
  %3672 = vmatprep.subr.mxu0 0.0
  %3673 = vmatpush2.xpose.msra.mxu0 0.0
  %3674 = vmatprep.subr.mxu0 0.0
  %3675 = vmatpush2.xpose.msra.mxu0 0.0
  %3676 = vmatprep.mubr.f32.mxu0 0.0
  %3677 = vmatmul.mubr.f32.gmra.mxu0 %v3607
  %v3678 = vpop.f32.mrf.mxu0
  %v3679 = vadd.f32 0.0, %v3678
  %v3680 = vpop.f32.mrf.mxu0
  %3681 = vmatprep.mubr.f32.mxu0 0.0
  %3682 = vmatmul.mubr.f32.gmra.mxu0 %v3610
  %v3683 = vpop.f32.mrf.mxu0
  %v3684 = vadd.f32 0.0, %v3683
  %v3685 = vpop.f32.mrf.mxu0
  %3686 = vdwg.mxu0
  %v3688 = vsel %vm3182, %v1189, 0
  %v3691 = vsel %vm3182, %v1257, 0
  %v3694 = vsel %vm3182, %v3113, 0
  %v3697 = vsel %vm3182, %v3181, 0
  %3699 = vmatprep.subr.mxu0 0.0
  %3700 = vmatpush1.xpose.msra.mxu0 0.0
  %3701 = vmatprep.subr.mxu0 0.0
  %3702 = vmatpush1.xpose.msra.mxu0 0.0
  %3703 = vmatprep.subr.mxu0 0.0
  %3704 = vmatpush1.xpose.msra.mxu0 0.0
  %3705 = vmatprep.subr.mxu0 0.0
  %3706 = vmatpush1.xpose.msra.mxu0 0.0
  %3707 = vmatprep.subr.mxu0 0.0
  %3708 = vmatpush1.xpose.msra.mxu0 0.0
  %3709 = vmatprep.subr.mxu0 0.0
  %3710 = vmatpush1.xpose.msra.mxu0 0.0
  %3711 = vmatprep.subr.mxu0 0.0
  %3712 = vmatpush1.xpose.msra.mxu0 0.0
  %3713 = vmatprep.subr.mxu0 0.0
  %3714 = vmatpush1.xpose.msra.mxu0 0.0
  %3715 = vmatprep.subr.mxu0 0.0
  %3716 = vmatpush1.xpose.msra.mxu0 0.0
  %3717 = vmatprep.subr.mxu0 0.0
  %3718 = vmatpush1.xpose.msra.mxu0 0.0
  %3719 = vmatprep.subr.mxu0 0.0
  %3720 = vmatpush1.xpose.msra.mxu0 0.0
  %3721 = vmatprep.subr.mxu0 0.0
  %3722 = vmatpush1.xpose.msra.mxu0 0.0
  %3723 = vmatprep.subr.mxu0 0.0
  %3724 = vmatpush1.xpose.msra.mxu0 0.0
  %3725 = vmatprep.subr.mxu0 0.0
  %3726 = vmatpush1.xpose.msra.mxu0 0.0
  %3727 = vmatprep.subr.mxu0 0.0
  %3728 = vmatpush1.xpose.msra.mxu0 %v3697
  %3729 = vmatprep.subr.mxu0 0.0
  %3730 = vmatpush1.xpose.msra.mxu0 %v3694
  %3731 = vmatprep.subr.mxu0 0.0
  %3732 = vmatpush2.xpose.msra.mxu0 0.0
  %3733 = vmatprep.subr.mxu0 0.0
  %3734 = vmatpush2.xpose.msra.mxu0 0.0
  %3735 = vmatprep.subr.mxu0 0.0
  %3736 = vmatpush2.xpose.msra.mxu0 0.0
  %3737 = vmatprep.subr.mxu0 0.0
  %3738 = vmatpush2.xpose.msra.mxu0 0.0
  %3739 = vmatprep.subr.mxu0 0.0
  %3740 = vmatpush2.xpose.msra.mxu0 0.0
  %3741 = vmatprep.subr.mxu0 0.0
  %3742 = vmatpush2.xpose.msra.mxu0 0.0
  %3743 = vmatprep.subr.mxu0 0.0
  %3744 = vmatpush2.xpose.msra.mxu0 0.0
  %3745 = vmatprep.subr.mxu0 0.0
  %3746 = vmatpush2.xpose.msra.mxu0 0.0
  %3747 = vmatprep.subr.mxu0 0.0
  %3748 = vmatpush2.xpose.msra.mxu0 0.0
  %3749 = vmatprep.subr.mxu0 0.0
  %3750 = vmatpush2.xpose.msra.mxu0 0.0
  %3751 = vmatprep.subr.mxu0 0.0
  %3752 = vmatpush2.xpose.msra.mxu0 0.0
  %3753 = vmatprep.subr.mxu0 0.0
  %3754 = vmatpush2.xpose.msra.mxu0 0.0
  %3755 = vmatprep.subr.mxu0 0.0
  %3756 = vmatpush2.xpose.msra.mxu0 0.0
  %3757 = vmatprep.subr.mxu0 0.0
  %3758 = vmatpush2.xpose.msra.mxu0 0.0
  %3759 = vmatprep.subr.mxu0 0.0
  %3760 = vmatpush2.xpose.msra.mxu0 0.0
  %3761 = vmatprep.subr.mxu0 0.0
  %3762 = vmatpush2.xpose.msra.mxu0 0.0
  %3763 = vmatprep.mubr.f32.mxu0 0.0
  %3764 = vmatmul.mubr.f32.gmra.mxu0 %v3688
  %v3765 = vpop.f32.mrf.mxu0
  %v3766 = vadd.f32 0.0, %v3765
  %v3767 = vpop.f32.mrf.mxu0
  %3768 = vmatprep.mubr.f32.mxu0 0.0
  %3769 = vmatmul.mubr.f32.gmra.mxu0 %v3691
  %v3770 = vpop.f32.mrf.mxu0
  %v3771 = vadd.f32 0.0, %v3770
  %v3772 = vpop.f32.mrf.mxu0
  %3773 = vdwg.mxu0
  %v3775 = vsel %vm3182, %v1325, 0
  %v3778 = vsel %vm3182, %v1393, 0
  %3780 = vmatprep.subr.mxu0 0.0
  %3781 = vmatpush1.xpose.msra.mxu0 0.0
  %3782 = vmatprep.subr.mxu0 0.0
  %3783 = vmatpush1.xpose.msra.mxu0 0.0
  %3784 = vmatprep.subr.mxu0 0.0
  %3785 = vmatpush1.xpose.msra.mxu0 0.0
  %3786 = vmatprep.subr.mxu0 0.0
  %3787 = vmatpush1.xpose.msra.mxu0 0.0
  %3788 = vmatprep.subr.mxu0 0.0
  %3789 = vmatpush1.xpose.msra.mxu0 0.0
  %3790 = vmatprep.subr.mxu0 0.0
  %3791 = vmatpush1.xpose.msra.mxu0 0.0
  %3792 = vmatprep.subr.mxu0 0.0
  %3793 = vmatpush1.xpose.msra.mxu0 0.0
  %3794 = vmatprep.subr.mxu0 0.0
  %3795 = vmatpush1.xpose.msra.mxu0 0.0
  %3796 = vmatprep.subr.mxu0 0.0
  %3797 = vmatpush1.xpose.msra.mxu0 0.0
  %3798 = vmatprep.subr.mxu0 0.0
  %3799 = vmatpush1.xpose.msra.mxu0 0.0
  %3800 = vmatprep.subr.mxu0 0.0
  %3801 = vmatpush1.xpose.msra.mxu0 0.0
  %3802 = vmatprep.subr.mxu0 0.0
  %3803 = vmatpush1.xpose.msra.mxu0 0.0
  %3804 = vmatprep.subr.mxu0 0.0
  %3805 = vmatpush1.xpose.msra.mxu0 0.0
  %3806 = vmatprep.subr.mxu0 0.0
  %3807 = vmatpush1.xpose.msra.mxu0 0.0
  %3808 = vmatprep.subr.mxu0 0.0
  %3809 = vmatpush1.xpose.msra.mxu0 %v3697
  %3810 = vmatprep.subr.mxu0 0.0
  %3811 = vmatpush1.xpose.msra.mxu0 %v3694
  %3812 = vmatprep.subr.mxu0 0.0
  %3813 = vmatpush2.xpose.msra.mxu0 0.0
  %3814 = vmatprep.subr.mxu0 0.0
  %3815 = vmatpush2.xpose.msra.mxu0 0.0
  %3816 = vmatprep.subr.mxu0 0.0
  %3817 = vmatpush2.xpose.msra.mxu0 0.0
  %3818 = vmatprep.subr.mxu0 0.0
  %3819 = vmatpush2.xpose.msra.mxu0 0.0
  %3820 = vmatprep.subr.mxu0 0.0
  %3821 = vmatpush2.xpose.msra.mxu0 0.0
  %3822 = vmatprep.subr.mxu0 0.0
  %3823 = vmatpush2.xpose.msra.mxu0 0.0
  %3824 = vmatprep.subr.mxu0 0.0
  %3825 = vmatpush2.xpose.msra.mxu0 0.0
  %3826 = vmatprep.subr.mxu0 0.0
  %3827 = vmatpush2.xpose.msra.mxu0 0.0
  %3828 = vmatprep.subr.mxu0 0.0
  %3829 = vmatpush2.xpose.msra.mxu0 0.0
  %3830 = vmatprep.subr.mxu0 0.0
  %3831 = vmatpush2.xpose.msra.mxu0 0.0
  %3832 = vmatprep.subr.mxu0 0.0
  %3833 = vmatpush2.xpose.msra.mxu0 0.0
  %3834 = vmatprep.subr.mxu0 0.0
  %3835 = vmatpush2.xpose.msra.mxu0 0.0
  %3836 = vmatprep.subr.mxu0 0.0
  %3837 = vmatpush2.xpose.msra.mxu0 0.0
  %3838 = vmatprep.subr.mxu0 0.0
  %3839 = vmatpush2.xpose.msra.mxu0 0.0
  %3840 = vmatprep.subr.mxu0 0.0
  %3841 = vmatpush2.xpose.msra.mxu0 0.0
  %3842 = vmatprep.subr.mxu0 0.0
  %3843 = vmatpush2.xpose.msra.mxu0 0.0
  %3844 = vmatprep.mubr.f32.mxu0 0.0
  %3845 = vmatmul.mubr.f32.gmra.mxu0 %v3775
  %v3846 = vpop.f32.mrf.mxu0
  %v3847 = vadd.f32 0.0, %v3846
  %v3848 = vpop.f32.mrf.mxu0
  %3849 = vmatprep.mubr.f32.mxu0 0.0
  %3850 = vmatmul.mubr.f32.gmra.mxu0 %v3778
  %v3851 = vpop.f32.mrf.mxu0
  %v3852 = vadd.f32 0.0, %v3851
  %v3853 = vpop.f32.mrf.mxu0
  %3854 = vdwg.mxu0
  %v3856 = vsel %vm3182, %v1806, 0
  %v3859 = vsel %vm3182, %v1874, 0
  %v3862 = vsel %vm3182, %v2816, 0
  %v3865 = vsel %vm3182, %v2884, 0
  %3867 = vmatprep.subr.mxu0 0.0
  %3868 = vmatpush1.xpose.msra.mxu0 0.0
  %3869 = vmatprep.subr.mxu0 0.0
  %3870 = vmatpush1.xpose.msra.mxu0 0.0
  %3871 = vmatprep.subr.mxu0 0.0
  %3872 = vmatpush1.xpose.msra.mxu0 0.0
  %3873 = vmatprep.subr.mxu0 0.0
  %3874 = vmatpush1.xpose.msra.mxu0 0.0
  %3875 = vmatprep.subr.mxu0 0.0
  %3876 = vmatpush1.xpose.msra.mxu0 0.0
  %3877 = vmatprep.subr.mxu0 0.0
  %3878 = vmatpush1.xpose.msra.mxu0 0.0
  %3879 = vmatprep.subr.mxu0 0.0
  %3880 = vmatpush1.xpose.msra.mxu0 0.0
  %3881 = vmatprep.subr.mxu0 0.0
  %3882 = vmatpush1.xpose.msra.mxu0 0.0
  %3883 = vmatprep.subr.mxu0 0.0
  %3884 = vmatpush1.xpose.msra.mxu0 0.0
  %3885 = vmatprep.subr.mxu0 0.0
  %3886 = vmatpush1.xpose.msra.mxu0 0.0
  %3887 = vmatprep.subr.mxu0 0.0
  %3888 = vmatpush1.xpose.msra.mxu0 0.0
  %3889 = vmatprep.subr.mxu0 0.0
  %3890 = vmatpush1.xpose.msra.mxu0 0.0
  %3891 = vmatprep.subr.mxu0 0.0
  %3892 = vmatpush1.xpose.msra.mxu0 0.0
  %3893 = vmatprep.subr.mxu0 0.0
  %3894 = vmatpush1.xpose.msra.mxu0 0.0
  %3895 = vmatprep.subr.mxu0 0.0
  %3896 = vmatpush1.xpose.msra.mxu0 %v3865
  %3897 = vmatprep.subr.mxu0 0.0
  %3898 = vmatpush1.xpose.msra.mxu0 %v3862
  %3899 = vmatprep.subr.mxu0 0.0
  %3900 = vmatpush2.xpose.msra.mxu0 0.0
  %3901 = vmatprep.subr.mxu0 0.0
  %3902 = vmatpush2.xpose.msra.mxu0 0.0
  %3903 = vmatprep.subr.mxu0 0.0
  %3904 = vmatpush2.xpose.msra.mxu0 0.0
  %3905 = vmatprep.subr.mxu0 0.0
  %3906 = vmatpush2.xpose.msra.mxu0 0.0
  %3907 = vmatprep.subr.mxu0 0.0
  %3908 = vmatpush2.xpose.msra.mxu0 0.0
  %3909 = vmatprep.subr.mxu0 0.0
  %3910 = vmatpush2.xpose.msra.mxu0 0.0
  %3911 = vmatprep.subr.mxu0 0.0
  %3912 = vmatpush2.xpose.msra.mxu0 0.0
  %3913 = vmatprep.subr.mxu0 0.0
  %3914 = vmatpush2.xpose.msra.mxu0 0.0
  %3915 = vmatprep.subr.mxu0 0.0
  %3916 = vmatpush2.xpose.msra.mxu0 0.0
  %3917 = vmatprep.subr.mxu0 0.0
  %3918 = vmatpush2.xpose.msra.mxu0 0.0
  %3919 = vmatprep.subr.mxu0 0.0
  %3920 = vmatpush2.xpose.msra.mxu0 0.0
  %3921 = vmatprep.subr.mxu0 0.0
  %3922 = vmatpush2.xpose.msra.mxu0 0.0
  %3923 = vmatprep.subr.mxu0 0.0
  %3924 = vmatpush2.xpose.msra.mxu0 0.0
  %3925 = vmatprep.subr.mxu0 0.0
  %3926 = vmatpush2.xpose.msra.mxu0 0.0
  %3927 = vmatprep.subr.mxu0 0.0
  %3928 = vmatpush2.xpose.msra.mxu0 0.0
  %3929 = vmatprep.subr.mxu0 0.0
  %3930 = vmatpush2.xpose.msra.mxu0 0.0
  %3931 = vmatprep.mubr.f32.mxu0 0.0
  %3932 = vmatmul.mubr.f32.gmra.mxu0 %v3856
  %v3933 = vpop.f32.mrf.mxu0
  %v3934 = vadd.f32 0.0, %v3933
  %v3935 = vpop.f32.mrf.mxu0
  %3936 = vmatprep.mubr.f32.mxu0 0.0
  %3937 = vmatmul.mubr.f32.gmra.mxu0 %v3859
  %v3938 = vpop.f32.mrf.mxu0
  %v3939 = vadd.f32 0.0, %v3938
  %v3940 = vpop.f32.mrf.mxu0
  %3941 = vdwg.mxu0
  %v3943 = vsel %vm3182, %v1942, 0
  %v3946 = vsel %vm3182, %v2010, 0
  %3948 = vmatprep.subr.mxu0 0.0
  %3949 = vmatpush1.xpose.msra.mxu0 0.0
  %3950 = vmatprep.subr.mxu0 0.0
  %3951 = vmatpush1.xpose.msra.mxu0 0.0
  %3952 = vmatprep.subr.mxu0 0.0
  %3953 = vmatpush1.xpose.msra.mxu0 0.0
  %3954 = vmatprep.subr.mxu0 0.0
  %3955 = vmatpush1.xpose.msra.mxu0 0.0
  %3956 = vmatprep.subr.mxu0 0.0
  %3957 = vmatpush1.xpose.msra.mxu0 0.0
  %3958 = vmatprep.subr.mxu0 0.0
  %3959 = vmatpush1.xpose.msra.mxu0 0.0
  %3960 = vmatprep.subr.mxu0 0.0
  %3961 = vmatpush1.xpose.msra.mxu0 0.0
  %3962 = vmatprep.subr.mxu0 0.0
  %3963 = vmatpush1.xpose.msra.mxu0 0.0
  %3964 = vmatprep.subr.mxu0 0.0
  %3965 = vmatpush1.xpose.msra.mxu0 0.0
  %3966 = vmatprep.subr.mxu0 0.0
  %3967 = vmatpush1.xpose.msra.mxu0 0.0
  %3968 = vmatprep.subr.mxu0 0.0
  %3969 = vmatpush1.xpose.msra.mxu0 0.0
  %3970 = vmatprep.subr.mxu0 0.0
  %3971 = vmatpush1.xpose.msra.mxu0 0.0
  %3972 = vmatprep.subr.mxu0 0.0
  %3973 = vmatpush1.xpose.msra.mxu0 0.0
  %3974 = vmatprep.subr.mxu0 0.0
  %3975 = vmatpush1.xpose.msra.mxu0 0.0
  %3976 = vmatprep.subr.mxu0 0.0
  %3977 = vmatpush1.xpose.msra.mxu0 %v3865
  %3978 = vmatprep.subr.mxu0 0.0
  %3979 = vmatpush1.xpose.msra.mxu0 %v3862
  %3980 = vmatprep.subr.mxu0 0.0
  %3981 = vmatpush2.xpose.msra.mxu0 0.0
  %3982 = vmatprep.subr.mxu0 0.0
  %3983 = vmatpush2.xpose.msra.mxu0 0.0
  %3984 = vmatprep.subr.mxu0 0.0
  %3985 = vmatpush2.xpose.msra.mxu0 0.0
  %3986 = vmatprep.subr.mxu0 0.0
  %3987 = vmatpush2.xpose.msra.mxu0 0.0
  %3988 = vmatprep.subr.mxu0 0.0
  %3989 = vmatpush2.xpose.msra.mxu0 0.0
  %3990 = vmatprep.subr.mxu0 0.0
  %3991 = vmatpush2.xpose.msra.mxu0 0.0
  %3992 = vmatprep.subr.mxu0 0.0
  %3993 = vmatpush2.xpose.msra.mxu0 0.0
  %3994 = vmatprep.subr.mxu0 0.0
  %3995 = vmatpush2.xpose.msra.mxu0 0.0
  %3996 = vmatprep.subr.mxu0 0.0
  %3997 = vmatpush2.xpose.msra.mxu0 0.0
  %3998 = vmatprep.subr.mxu0 0.0
  %3999 = vmatpush2.xpose.msra.mxu0 0.0
  %4000 = vmatprep.subr.mxu0 0.0
  %4001 = vmatpush2.xpose.msra.mxu0 0.0
  %4002 = vmatprep.subr.mxu0 0.0
  %4003 = vmatpush2.xpose.msra.mxu0 0.0
  %4004 = vmatprep.subr.mxu0 0.0
  %4005 = vmatpush2.xpose.msra.mxu0 0.0
  %4006 = vmatprep.subr.mxu0 0.0
  %4007 = vmatpush2.xpose.msra.mxu0 0.0
  %4008 = vmatprep.subr.mxu0 0.0
  %4009 = vmatpush2.xpose.msra.mxu0 0.0
  %4010 = vmatprep.subr.mxu0 0.0
  %4011 = vmatpush2.xpose.msra.mxu0 0.0
  %4012 = vmatprep.mubr.f32.mxu0 0.0
  %4013 = vmatmul.mubr.f32.gmra.mxu0 %v3943
  %v4014 = vpop.f32.mrf.mxu0
  %v4015 = vadd.f32 0.0, %v4014
  %v4016 = vpop.f32.mrf.mxu0
  %4017 = vmatprep.mubr.f32.mxu0 0.0
  %4018 = vmatmul.mubr.f32.gmra.mxu0 %v3946
  %v4019 = vpop.f32.mrf.mxu0
  %v4020 = vadd.f32 0.0, %v4019
  %v4021 = vpop.f32.mrf.mxu0
  %4022 = vdwg.mxu0
  %v4024 = vsel %vm3182, %v1807, 0
  %v4027 = vsel %vm3182, %v1875, 0
  %v4030 = vsel %vm3182, %v2817, 0
  %v4033 = vsel %vm3182, %v2885, 0
  %4035 = vmatprep.subr.mxu0 0.0
  %4036 = vmatpush1.xpose.msra.mxu0 0.0
  %4037 = vmatprep.subr.mxu0 0.0
  %4038 = vmatpush1.xpose.msra.mxu0 0.0
  %4039 = vmatprep.subr.mxu0 0.0
  %4040 = vmatpush1.xpose.msra.mxu0 0.0
  %4041 = vmatprep.subr.mxu0 0.0
  %4042 = vmatpush1.xpose.msra.mxu0 0.0
  %4043 = vmatprep.subr.mxu0 0.0
  %4044 = vmatpush1.xpose.msra.mxu0 0.0
  %4045 = vmatprep.subr.mxu0 0.0
  %4046 = vmatpush1.xpose.msra.mxu0 0.0
  %4047 = vmatprep.subr.mxu0 0.0
  %4048 = vmatpush1.xpose.msra.mxu0 0.0
  %4049 = vmatprep.subr.mxu0 0.0
  %4050 = vmatpush1.xpose.msra.mxu0 0.0
  %4051 = vmatprep.subr.mxu0 0.0
  %4052 = vmatpush1.xpose.msra.mxu0 0.0
  %4053 = vmatprep.subr.mxu0 0.0
  %4054 = vmatpush1.xpose.msra.mxu0 0.0
  %4055 = vmatprep.subr.mxu0 0.0
  %4056 = vmatpush1.xpose.msra.mxu0 0.0
  %4057 = vmatprep.subr.mxu0 0.0
  %4058 = vmatpush1.xpose.msra.mxu0 0.0
  %4059 = vmatprep.subr.mxu0 0.0
  %4060 = vmatpush1.xpose.msra.mxu0 0.0
  %4061 = vmatprep.subr.mxu0 0.0
  %4062 = vmatpush1.xpose.msra.mxu0 0.0
  %4063 = vmatprep.subr.mxu0 0.0
  %4064 = vmatpush1.xpose.msra.mxu0 %v4033
  %4065 = vmatprep.subr.mxu0 0.0
  %4066 = vmatpush1.xpose.msra.mxu0 %v4030
  %4067 = vmatprep.subr.mxu0 0.0
  %4068 = vmatpush2.xpose.msra.mxu0 0.0
  %4069 = vmatprep.subr.mxu0 0.0
  %4070 = vmatpush2.xpose.msra.mxu0 0.0
  %4071 = vmatprep.subr.mxu0 0.0
  %4072 = vmatpush2.xpose.msra.mxu0 0.0
  %4073 = vmatprep.subr.mxu0 0.0
  %4074 = vmatpush2.xpose.msra.mxu0 0.0
  %4075 = vmatprep.subr.mxu0 0.0
  %4076 = vmatpush2.xpose.msra.mxu0 0.0
  %4077 = vmatprep.subr.mxu0 0.0
  %4078 = vmatpush2.xpose.msra.mxu0 0.0
  %4079 = vmatprep.subr.mxu0 0.0
  %4080 = vmatpush2.xpose.msra.mxu0 0.0
  %4081 = vmatprep.subr.mxu0 0.0
  %4082 = vmatpush2.xpose.msra.mxu0 0.0
  %4083 = vmatprep.subr.mxu0 0.0
  %4084 = vmatpush2.xpose.msra.mxu0 0.0
  %4085 = vmatprep.subr.mxu0 0.0
  %4086 = vmatpush2.xpose.msra.mxu0 0.0
  %4087 = vmatprep.subr.mxu0 0.0
  %4088 = vmatpush2.xpose.msra.mxu0 0.0
  %4089 = vmatprep.subr.mxu0 0.0
  %4090 = vmatpush2.xpose.msra.mxu0 0.0
  %4091 = vmatprep.subr.mxu0 0.0
  %4092 = vmatpush2.xpose.msra.mxu0 0.0
  %4093 = vmatprep.subr.mxu0 0.0
  %4094 = vmatpush2.xpose.msra.mxu0 0.0
  %4095 = vmatprep.subr.mxu0 0.0
  %4096 = vmatpush2.xpose.msra.mxu0 0.0
  %4097 = vmatprep.subr.mxu0 0.0
  %4098 = vmatpush2.xpose.msra.mxu0 0.0
  %4099 = vmatprep.mubr.f32.mxu0 0.0
  %4100 = vmatmul.mubr.f32.gmra.mxu0 %v4024
  %v4101 = vpop.f32.mrf.mxu0
  %v4102 = vadd.f32 0.0, %v4101
  %v4103 = vpop.f32.mrf.mxu0
  %4104 = vmatprep.mubr.f32.mxu0 0.0
  %4105 = vmatmul.mubr.f32.gmra.mxu0 %v4027
  %v4106 = vpop.f32.mrf.mxu0
  %v4107 = vadd.f32 0.0, %v4106
  %v4108 = vpop.f32.mrf.mxu0
  %4109 = vdwg.mxu0
  %v4111 = vsel %vm3182, %v1943, 0
  %v4114 = vsel %vm3182, %v2011, 0
  %4116 = vmatprep.subr.mxu0 0.0
  %4117 = vmatpush1.xpose.msra.mxu0 0.0
  %4118 = vmatprep.subr.mxu0 0.0
  %4119 = vmatpush1.xpose.msra.mxu0 0.0
  %4120 = vmatprep.subr.mxu0 0.0
  %4121 = vmatpush1.xpose.msra.mxu0 0.0
  %4122 = vmatprep.subr.mxu0 0.0
  %4123 = vmatpush1.xpose.msra.mxu0 0.0
  %4124 = vmatprep.subr.mxu0 0.0
  %4125 = vmatpush1.xpose.msra.mxu0 0.0
  %4126 = vmatprep.subr.mxu0 0.0
  %4127 = vmatpush1.xpose.msra.mxu0 0.0
  %4128 = vmatprep.subr.mxu0 0.0
  %4129 = vmatpush1.xpose.msra.mxu0 0.0
  %4130 = vmatprep.subr.mxu0 0.0
  %4131 = vmatpush1.xpose.msra.mxu0 0.0
  %4132 = vmatprep.subr.mxu0 0.0
  %4133 = vmatpush1.xpose.msra.mxu0 0.0
  %4134 = vmatprep.subr.mxu0 0.0
  %4135 = vmatpush1.xpose.msra.mxu0 0.0
  %4136 = vmatprep.subr.mxu0 0.0
  %4137 = vmatpush1.xpose.msra.mxu0 0.0
  %4138 = vmatprep.subr.mxu0 0.0
  %4139 = vmatpush1.xpose.msra.mxu0 0.0
  %4140 = vmatprep.subr.mxu0 0.0
  %4141 = vmatpush1.xpose.msra.mxu0 0.0
  %4142 = vmatprep.subr.mxu0 0.0
  %4143 = vmatpush1.xpose.msra.mxu0 0.0
  %4144 = vmatprep.subr.mxu0 0.0
  %4145 = vmatpush1.xpose.msra.mxu0 %v4033
  %4146 = vmatprep.subr.mxu0 0.0
  %4147 = vmatpush1.xpose.msra.mxu0 %v4030
  %4148 = vmatprep.subr.mxu0 0.0
  %4149 = vmatpush2.xpose.msra.mxu0 0.0
  %4150 = vmatprep.subr.mxu0 0.0
  %4151 = vmatpush2.xpose.msra.mxu0 0.0
  %4152 = vmatprep.subr.mxu0 0.0
  %4153 = vmatpush2.xpose.msra.mxu0 0.0
  %4154 = vmatprep.subr.mxu0 0.0
  %4155 = vmatpush2.xpose.msra.mxu0 0.0
  %4156 = vmatprep.subr.mxu0 0.0
  %4157 = vmatpush2.xpose.msra.mxu0 0.0
  %4158 = vmatprep.subr.mxu0 0.0
  %4159 = vmatpush2.xpose.msra.mxu0 0.0
  %4160 = vmatprep.subr.mxu0 0.0
  %4161 = vmatpush2.xpose.msra.mxu0 0.0
  %4162 = vmatprep.subr.mxu0 0.0
  %4163 = vmatpush2.xpose.msra.mxu0 0.0
  %4164 = vmatprep.subr.mxu0 0.0
  %4165 = vmatpush2.xpose.msra.mxu0 0.0
  %4166 = vmatprep.subr.mxu0 0.0
  %4167 = vmatpush2.xpose.msra.mxu0 0.0
  %4168 = vmatprep.subr.mxu0 0.0
  %4169 = vmatpush2.xpose.msra.mxu0 0.0
  %4170 = vmatprep.subr.mxu0 0.0
  %4171 = vmatpush2.xpose.msra.mxu0 0.0
  %4172 = vmatprep.subr.mxu0 0.0
  %4173 = vmatpush2.xpose.msra.mxu0 0.0
  %4174 = vmatprep.subr.mxu0 0.0
  %4175 = vmatpush2.xpose.msra.mxu0 0.0
  %4176 = vmatprep.subr.mxu0 0.0
  %4177 = vmatpush2.xpose.msra.mxu0 0.0
  %4178 = vmatprep.subr.mxu0 0.0
  %4179 = vmatpush2.xpose.msra.mxu0 0.0
  %4180 = vmatprep.mubr.f32.mxu0 0.0
  %4181 = vmatmul.mubr.f32.gmra.mxu0 %v4111
  %v4182 = vpop.f32.mrf.mxu0
  %v4183 = vadd.f32 0.0, %v4182
  %v4184 = vpop.f32.mrf.mxu0
  %4185 = vmatprep.mubr.f32.mxu0 0.0
  %4186 = vmatmul.mubr.f32.gmra.mxu0 %v4114
  %v4187 = vpop.f32.mrf.mxu0
  %v4188 = vadd.f32 0.0, %v4187
  %v4189 = vpop.f32.mrf.mxu0
  %4190 = vdwg.mxu0
  %v4192 = vsel %vm3182, %v1808, 0
  %v4195 = vsel %vm3182, %v1876, 0
  %v4198 = vsel %vm3182, %v2818, 0
  %v4201 = vsel %vm3182, %v2886, 0
  %4203 = vmatprep.subr.mxu0 0.0
  %4204 = vmatpush1.xpose.msra.mxu0 0.0
  %4205 = vmatprep.subr.mxu0 0.0
  %4206 = vmatpush1.xpose.msra.mxu0 0.0
  %4207 = vmatprep.subr.mxu0 0.0
  %4208 = vmatpush1.xpose.msra.mxu0 0.0
  %4209 = vmatprep.subr.mxu0 0.0
  %4210 = vmatpush1.xpose.msra.mxu0 0.0
  %4211 = vmatprep.subr.mxu0 0.0
  %4212 = vmatpush1.xpose.msra.mxu0 0.0
  %4213 = vmatprep.subr.mxu0 0.0
  %4214 = vmatpush1.xpose.msra.mxu0 0.0
  %4215 = vmatprep.subr.mxu0 0.0
  %4216 = vmatpush1.xpose.msra.mxu0 0.0
  %4217 = vmatprep.subr.mxu0 0.0
  %4218 = vmatpush1.xpose.msra.mxu0 0.0
  %4219 = vmatprep.subr.mxu0 0.0
  %4220 = vmatpush1.xpose.msra.mxu0 0.0
  %4221 = vmatprep.subr.mxu0 0.0
  %4222 = vmatpush1.xpose.msra.mxu0 0.0
  %4223 = vmatprep.subr.mxu0 0.0
  %4224 = vmatpush1.xpose.msra.mxu0 0.0
  %4225 = vmatprep.subr.mxu0 0.0
  %4226 = vmatpush1.xpose.msra.mxu0 0.0
  %4227 = vmatprep.subr.mxu0 0.0
  %4228 = vmatpush1.xpose.msra.mxu0 0.0
  %4229 = vmatprep.subr.mxu0 0.0
  %4230 = vmatpush1.xpose.msra.mxu0 0.0
  %4231 = vmatprep.subr.mxu0 0.0
  %4232 = vmatpush1.xpose.msra.mxu0 %v4201
  %4233 = vmatprep.subr.mxu0 0.0
  %4234 = vmatpush1.xpose.msra.mxu0 %v4198
  %4235 = vmatprep.subr.mxu0 0.0
  %4236 = vmatpush2.xpose.msra.mxu0 0.0
  %4237 = vmatprep.subr.mxu0 0.0
  %4238 = vmatpush2.xpose.msra.mxu0 0.0
  %4239 = vmatprep.subr.mxu0 0.0
  %4240 = vmatpush2.xpose.msra.mxu0 0.0
  %4241 = vmatprep.subr.mxu0 0.0
  %4242 = vmatpush2.xpose.msra.mxu0 0.0
  %4243 = vmatprep.subr.mxu0 0.0
  %4244 = vmatpush2.xpose.msra.mxu0 0.0
  %4245 = vmatprep.subr.mxu0 0.0
  %4246 = vmatpush2.xpose.msra.mxu0 0.0
  %4247 = vmatprep.subr.mxu0 0.0
  %4248 = vmatpush2.xpose.msra.mxu0 0.0
  %4249 = vmatprep.subr.mxu0 0.0
  %4250 = vmatpush2.xpose.msra.mxu0 0.0
  %4251 = vmatprep.subr.mxu0 0.0
  %4252 = vmatpush2.xpose.msra.mxu0 0.0
  %4253 = vmatprep.subr.mxu0 0.0
  %4254 = vmatpush2.xpose.msra.mxu0 0.0
  %4255 = vmatprep.subr.mxu0 0.0
  %4256 = vmatpush2.xpose.msra.mxu0 0.0
  %4257 = vmatprep.subr.mxu0 0.0
  %4258 = vmatpush2.xpose.msra.mxu0 0.0
  %4259 = vmatprep.subr.mxu0 0.0
  %4260 = vmatpush2.xpose.msra.mxu0 0.0
  %4261 = vmatprep.subr.mxu0 0.0
  %4262 = vmatpush2.xpose.msra.mxu0 0.0
  %4263 = vmatprep.subr.mxu0 0.0
  %4264 = vmatpush2.xpose.msra.mxu0 0.0
  %4265 = vmatprep.subr.mxu0 0.0
  %4266 = vmatpush2.xpose.msra.mxu0 0.0
  %4267 = vmatprep.mubr.f32.mxu0 0.0
  %4268 = vmatmul.mubr.f32.gmra.mxu0 %v4192
  %v4269 = vpop.f32.mrf.mxu0
  %v4270 = vadd.f32 0.0, %v4269
  %v4271 = vpop.f32.mrf.mxu0
  %4272 = vmatprep.mubr.f32.mxu0 0.0
  %4273 = vmatmul.mubr.f32.gmra.mxu0 %v4195
  %v4274 = vpop.f32.mrf.mxu0
  %v4275 = vadd.f32 0.0, %v4274
  %v4276 = vpop.f32.mrf.mxu0
  %4277 = vdwg.mxu0
  %v4279 = vsel %vm3182, %v1944, 0
  %v4282 = vsel %vm3182, %v2012, 0
  %4284 = vmatprep.subr.mxu0 0.0
  %4285 = vmatpush1.xpose.msra.mxu0 0.0
  %4286 = vmatprep.subr.mxu0 0.0
  %4287 = vmatpush1.xpose.msra.mxu0 0.0
  %4288 = vmatprep.subr.mxu0 0.0
  %4289 = vmatpush1.xpose.msra.mxu0 0.0
  %4290 = vmatprep.subr.mxu0 0.0
  %4291 = vmatpush1.xpose.msra.mxu0 0.0
  %4292 = vmatprep.subr.mxu0 0.0
  %4293 = vmatpush1.xpose.msra.mxu0 0.0
  %4294 = vmatprep.subr.mxu0 0.0
  %4295 = vmatpush1.xpose.msra.mxu0 0.0
  %4296 = vmatprep.subr.mxu0 0.0
  %4297 = vmatpush1.xpose.msra.mxu0 0.0
  %4298 = vmatprep.subr.mxu0 0.0
  %4299 = vmatpush1.xpose.msra.mxu0 0.0
  %4300 = vmatprep.subr.mxu0 0.0
  %4301 = vmatpush1.xpose.msra.mxu0 0.0
  %4302 = vmatprep.subr.mxu0 0.0
  %4303 = vmatpush1.xpose.msra.mxu0 0.0
  %4304 = vmatprep.subr.mxu0 0.0
  %4305 = vmatpush1.xpose.msra.mxu0 0.0
  %4306 = vmatprep.subr.mxu0 0.0
  %4307 = vmatpush1.xpose.msra.mxu0 0.0
  %4308 = vmatprep.subr.mxu0 0.0
  %4309 = vmatpush1.xpose.msra.mxu0 0.0
  %4310 = vmatprep.subr.mxu0 0.0
  %4311 = vmatpush1.xpose.msra.mxu0 0.0
  %4312 = vmatprep.subr.mxu0 0.0
  %4313 = vmatpush1.xpose.msra.mxu0 %v4201
  %4314 = vmatprep.subr.mxu0 0.0
  %4315 = vmatpush1.xpose.msra.mxu0 %v4198
  %4316 = vmatprep.subr.mxu0 0.0
  %4317 = vmatpush2.xpose.msra.mxu0 0.0
  %4318 = vmatprep.subr.mxu0 0.0
  %4319 = vmatpush2.xpose.msra.mxu0 0.0
  %4320 = vmatprep.subr.mxu0 0.0
  %4321 = vmatpush2.xpose.msra.mxu0 0.0
  %4322 = vmatprep.subr.mxu0 0.0
  %4323 = vmatpush2.xpose.msra.mxu0 0.0
  %4324 = vmatprep.subr.mxu0 0.0
  %4325 = vmatpush2.xpose.msra.mxu0 0.0
  %4326 = vmatprep.subr.mxu0 0.0
  %4327 = vmatpush2.xpose.msra.mxu0 0.0
  %4328 = vmatprep.subr.mxu0 0.0
  %4329 = vmatpush2.xpose.msra.mxu0 0.0
  %4330 = vmatprep.subr.mxu0 0.0
  %4331 = vmatpush2.xpose.msra.mxu0 0.0
  %4332 = vmatprep.subr.mxu0 0.0
  %4333 = vmatpush2.xpose.msra.mxu0 0.0
  %4334 = vmatprep.subr.mxu0 0.0
  %4335 = vmatpush2.xpose.msra.mxu0 0.0
  %4336 = vmatprep.subr.mxu0 0.0
  %4337 = vmatpush2.xpose.msra.mxu0 0.0
  %4338 = vmatprep.subr.mxu0 0.0
  %4339 = vmatpush2.xpose.msra.mxu0 0.0
  %4340 = vmatprep.subr.mxu0 0.0
  %4341 = vmatpush2.xpose.msra.mxu0 0.0
  %4342 = vmatprep.subr.mxu0 0.0
  %4343 = vmatpush2.xpose.msra.mxu0 0.0
  %4344 = vmatprep.subr.mxu0 0.0
  %4345 = vmatpush2.xpose.msra.mxu0 0.0
  %4346 = vmatprep.subr.mxu0 0.0
  %4347 = vmatpush2.xpose.msra.mxu0 0.0
  %4348 = vmatprep.mubr.f32.mxu0 0.0
  %4349 = vmatmul.mubr.f32.gmra.mxu0 %v4279
  %v4350 = vpop.f32.mrf.mxu0
  %v4351 = vadd.f32 0.0, %v4350
  %v4352 = vpop.f32.mrf.mxu0
  %4353 = vmatprep.mubr.f32.mxu0 0.0
  %4354 = vmatmul.mubr.f32.gmra.mxu0 %v4282
  %v4355 = vpop.f32.mrf.mxu0
  %v4356 = vadd.f32 0.0, %v4355
  %v4357 = vpop.f32.mrf.mxu0
  %4358 = vdwg.mxu0
  %v4360 = vsel %vm3182, %v1809, 0
  %v4363 = vsel %vm3182, %v1877, 0
  %v4366 = vsel %vm3182, %v2819, 0
  %v4369 = vsel %vm3182, %v2887, 0
  %4371 = vmatprep.subr.mxu0 0.0
  %4372 = vmatpush1.xpose.msra.mxu0 0.0
  %4373 = vmatprep.subr.mxu0 0.0
  %4374 = vmatpush1.xpose.msra.mxu0 0.0
  %4375 = vmatprep.subr.mxu0 0.0
  %4376 = vmatpush1.xpose.msra.mxu0 0.0
  %4377 = vmatprep.subr.mxu0 0.0
  %4378 = vmatpush1.xpose.msra.mxu0 0.0
  %4379 = vmatprep.subr.mxu0 0.0
  %4380 = vmatpush1.xpose.msra.mxu0 0.0
  %4381 = vmatprep.subr.mxu0 0.0
  %4382 = vmatpush1.xpose.msra.mxu0 0.0
  %4383 = vmatprep.subr.mxu0 0.0
  %4384 = vmatpush1.xpose.msra.mxu0 0.0
  %4385 = vmatprep.subr.mxu0 0.0
  %4386 = vmatpush1.xpose.msra.mxu0 0.0
  %4387 = vmatprep.subr.mxu0 0.0
  %4388 = vmatpush1.xpose.msra.mxu0 0.0
  %4389 = vmatprep.subr.mxu0 0.0
  %4390 = vmatpush1.xpose.msra.mxu0 0.0
  %4391 = vmatprep.subr.mxu0 0.0
  %4392 = vmatpush1.xpose.msra.mxu0 0.0
  %4393 = vmatprep.subr.mxu0 0.0
  %4394 = vmatpush1.xpose.msra.mxu0 0.0
  %4395 = vmatprep.subr.mxu0 0.0
  %4396 = vmatpush1.xpose.msra.mxu0 0.0
  %4397 = vmatprep.subr.mxu0 0.0
  %4398 = vmatpush1.xpose.msra.mxu0 0.0
  %4399 = vmatprep.subr.mxu0 0.0
  %4400 = vmatpush1.xpose.msra.mxu0 %v4369
  %4401 = vmatprep.subr.mxu0 0.0
  %4402 = vmatpush1.xpose.msra.mxu0 %v4366
  %4403 = vmatprep.subr.mxu0 0.0
  %4404 = vmatpush2.xpose.msra.mxu0 0.0
  %4405 = vmatprep.subr.mxu0 0.0
  %4406 = vmatpush2.xpose.msra.mxu0 0.0
  %4407 = vmatprep.subr.mxu0 0.0
  %4408 = vmatpush2.xpose.msra.mxu0 0.0
  %4409 = vmatprep.subr.mxu0 0.0
  %4410 = vmatpush2.xpose.msra.mxu0 0.0
  %4411 = vmatprep.subr.mxu0 0.0
  %4412 = vmatpush2.xpose.msra.mxu0 0.0
  %4413 = vmatprep.subr.mxu0 0.0
  %4414 = vmatpush2.xpose.msra.mxu0 0.0
  %4415 = vmatprep.subr.mxu0 0.0
  %4416 = vmatpush2.xpose.msra.mxu0 0.0
  %4417 = vmatprep.subr.mxu0 0.0
  %4418 = vmatpush2.xpose.msra.mxu0 0.0
  %4419 = vmatprep.subr.mxu0 0.0
  %4420 = vmatpush2.xpose.msra.mxu0 0.0
  %4421 = vmatprep.subr.mxu0 0.0
  %4422 = vmatpush2.xpose.msra.mxu0 0.0
  %4423 = vmatprep.subr.mxu0 0.0
  %4424 = vmatpush2.xpose.msra.mxu0 0.0
  %4425 = vmatprep.subr.mxu0 0.0
  %4426 = vmatpush2.xpose.msra.mxu0 0.0
  %4427 = vmatprep.subr.mxu0 0.0
  %4428 = vmatpush2.xpose.msra.mxu0 0.0
  %4429 = vmatprep.subr.mxu0 0.0
  %4430 = vmatpush2.xpose.msra.mxu0 0.0
  %4431 = vmatprep.subr.mxu0 0.0
  %4432 = vmatpush2.xpose.msra.mxu0 0.0
  %4433 = vmatprep.subr.mxu0 0.0
  %4434 = vmatpush2.xpose.msra.mxu0 0.0
  %4435 = vmatprep.mubr.f32.mxu0 0.0
  %4436 = vmatmul.mubr.f32.gmra.mxu0 %v4360
  %v4437 = vpop.f32.mrf.mxu0
  %v4438 = vadd.f32 0.0, %v4437
  %v4439 = vpop.f32.mrf.mxu0
  %4440 = vmatprep.mubr.f32.mxu0 0.0
  %4441 = vmatmul.mubr.f32.gmra.mxu0 %v4363
  %v4442 = vpop.f32.mrf.mxu0
  %v4443 = vadd.f32 0.0, %v4442
  %v4444 = vpop.f32.mrf.mxu0
  %4445 = vdwg.mxu0
  %v4447 = vsel %vm3182, %v1945, 0
  %v4450 = vsel %vm3182, %v2013, 0
  %4452 = vmatprep.subr.mxu0 0.0
  %4453 = vmatpush1.xpose.msra.mxu0 0.0
  %4454 = vmatprep.subr.mxu0 0.0
  %4455 = vmatpush1.xpose.msra.mxu0 0.0
  %4456 = vmatprep.subr.mxu0 0.0
  %4457 = vmatpush1.xpose.msra.mxu0 0.0
  %4458 = vmatprep.subr.mxu0 0.0
  %4459 = vmatpush1.xpose.msra.mxu0 0.0
  %4460 = vmatprep.subr.mxu0 0.0
  %4461 = vmatpush1.xpose.msra.mxu0 0.0
  %4462 = vmatprep.subr.mxu0 0.0
  %4463 = vmatpush1.xpose.msra.mxu0 0.0
  %4464 = vmatprep.subr.mxu0 0.0
  %4465 = vmatpush1.xpose.msra.mxu0 0.0
  %4466 = vmatprep.subr.mxu0 0.0
  %4467 = vmatpush1.xpose.msra.mxu0 0.0
  %4468 = vmatprep.subr.mxu0 0.0
  %4469 = vmatpush1.xpose.msra.mxu0 0.0
  %4470 = vmatprep.subr.mxu0 0.0
  %4471 = vmatpush1.xpose.msra.mxu0 0.0
  %4472 = vmatprep.subr.mxu0 0.0
  %4473 = vmatpush1.xpose.msra.mxu0 0.0
  %4474 = vmatprep.subr.mxu0 0.0
  %4475 = vmatpush1.xpose.msra.mxu0 0.0
  %4476 = vmatprep.subr.mxu0 0.0
  %4477 = vmatpush1.xpose.msra.mxu0 0.0
  %4478 = vmatprep.subr.mxu0 0.0
  %4479 = vmatpush1.xpose.msra.mxu0 0.0
  %4480 = vmatprep.subr.mxu0 0.0
  %4481 = vmatpush1.xpose.msra.mxu0 %v4369
  %4482 = vmatprep.subr.mxu0 0.0
  %4483 = vmatpush1.xpose.msra.mxu0 %v4366
  %4484 = vmatprep.subr.mxu0 0.0
  %4485 = vmatpush2.xpose.msra.mxu0 0.0
  %4486 = vmatprep.subr.mxu0 0.0
  %4487 = vmatpush2.xpose.msra.mxu0 0.0
  %4488 = vmatprep.subr.mxu0 0.0
  %4489 = vmatpush2.xpose.msra.mxu0 0.0
  %4490 = vmatprep.subr.mxu0 0.0
  %4491 = vmatpush2.xpose.msra.mxu0 0.0
  %4492 = vmatprep.subr.mxu0 0.0
  %4493 = vmatpush2.xpose.msra.mxu0 0.0
  %4494 = vmatprep.subr.mxu0 0.0
  %4495 = vmatpush2.xpose.msra.mxu0 0.0
  %4496 = vmatprep.subr.mxu0 0.0
  %4497 = vmatpush2.xpose.msra.mxu0 0.0
  %4498 = vmatprep.subr.mxu0 0.0
  %4499 = vmatpush2.xpose.msra.mxu0 0.0
  %4500 = vmatprep.subr.mxu0 0.0
  %4501 = vmatpush2.xpose.msra.mxu0 0.0
  %4502 = vmatprep.subr.mxu0 0.0
  %4503 = vmatpush2.xpose.msra.mxu0 0.0
  %4504 = vmatprep.subr.mxu0 0.0
  %4505 = vmatpush2.xpose.msra.mxu0 0.0
  %4506 = vmatprep.subr.mxu0 0.0
  %4507 = vmatpush2.xpose.msra.mxu0 0.0
  %4508 = vmatprep.subr.mxu0 0.0
  %4509 = vmatpush2.xpose.msra.mxu0 0.0
  %4510 = vmatprep.subr.mxu0 0.0
  %4511 = vmatpush2.xpose.msra.mxu0 0.0
  %4512 = vmatprep.subr.mxu0 0.0
  %4513 = vmatpush2.xpose.msra.mxu0 0.0
  %4514 = vmatprep.subr.mxu0 0.0
  %4515 = vmatpush2.xpose.msra.mxu0 0.0
  %4516 = vmatprep.mubr.f32.mxu0 0.0
  %4517 = vmatmul.mubr.f32.gmra.mxu0 %v4447
  %v4518 = vpop.f32.mrf.mxu0
  %v4519 = vadd.f32 0.0, %v4518
  %v4520 = vpop.f32.mrf.mxu0
  %4521 = vmatprep.mubr.f32.mxu0 0.0
  %4522 = vmatmul.mubr.f32.gmra.mxu0 %v4450
  %v4523 = vpop.f32.mrf.mxu0
  %v4524 = vadd.f32 0.0, %v4523
  %v4525 = vpop.f32.mrf.mxu0
  %4526 = vdwg.mxu0
  %v4527 = vcombine.low %v3262, %v3430
  %v4528 = vcombine.high %v3262, %v3430
  %v4530 = vunpack.c.l.s4 1983009808
  %v4531 = vunpack.c.0.s8 %v4530
  %v4532 = vlaneseq
  %v4533 = vshrl.u32 %v4532, 7
  %v4534 = vsub.s32 %v4531, %v4533
  %v4535 = vrot.slane %v4527, %v4534
  %v4537 = vunpack.c.l.s4 1983009808
  %v4538 = vunpack.c.0.s8 %v4537
  %v4539 = vlaneseq
  %v4540 = vshrl.u32 %v4539, 7
  %v4541 = vsub.s32 %v4538, %v4540
  %v4542 = vrot.slane %v4528, %v4541
  %v4543 = vcombine.low %v3343, %v3511
  %v4544 = vcombine.high %v3343, %v3511
  %v4546 = vunpack.c.l.s4 1983009808
  %v4547 = vunpack.c.0.s8 %v4546
  %v4548 = vlaneseq
  %v4549 = vshrl.u32 %v4548, 7
  %v4550 = vsub.s32 %v4547, %v4549
  %v4551 = vrot.slane %v4543, %v4550
  %v4553 = vunpack.c.l.s4 1983009808
  %v4554 = vunpack.c.0.s8 %v4553
  %v4555 = vlaneseq
  %v4556 = vshrl.u32 %v4555, 7
  %v4557 = vsub.s32 %v4554, %v4556
  %v4558 = vrot.slane %v4544, %v4557
  %v4559 = vcombine.low %v3598, %v3766
  %v4560 = vcombine.high %v3598, %v3766
  %v4562 = vunpack.c.l.s4 1983009808
  %v4563 = vunpack.c.0.s8 %v4562
  %v4564 = vlaneseq
  %v4565 = vshrl.u32 %v4564, 7
  %v4566 = vsub.s32 %v4563, %v4565
  %v4567 = vrot.slane %v4559, %v4566
  %v4569 = vunpack.c.l.s4 1983009808
  %v4570 = vunpack.c.0.s8 %v4569
  %v4571 = vlaneseq
  %v4572 = vshrl.u32 %v4571, 7
  %v4573 = vsub.s32 %v4570, %v4572
  %v4574 = vrot.slane %v4560, %v4573
  %v4575 = vcombine.low %v3679, %v3847
  %v4576 = vcombine.high %v3679, %v3847
  %v4578 = vunpack.c.l.s4 1983009808
  %v4579 = vunpack.c.0.s8 %v4578
  %v4580 = vlaneseq
  %v4581 = vshrl.u32 %v4580, 7
  %v4582 = vsub.s32 %v4579, %v4581
  %v4583 = vrot.slane %v4575, %v4582
  %v4585 = vunpack.c.l.s4 1983009808
  %v4586 = vunpack.c.0.s8 %v4585
  %v4587 = vlaneseq
  %v4588 = vshrl.u32 %v4587, 7
  %v4589 = vsub.s32 %v4586, %v4588
  %v4590 = vrot.slane %v4576, %v4589
  %v4591 = vcombine.low %v4535, %v4551
  %v4592 = vcombine.high %v4535, %v4551
  %v4594 = vunpack.c.l.s4 1934713408
  %v4595 = vunpack.c.0.s8 %v4594
  %v4596 = vlaneseq
  %v4597 = vshrl.u32 %v4596, 7
  %v4598 = vsub.s32 %v4595, %v4597
  %v4599 = vrot.slane %v4591, %v4598
  %v4601 = vunpack.c.l.s4 1934713408
  %v4602 = vunpack.c.0.s8 %v4601
  %v4603 = vlaneseq
  %v4604 = vshrl.u32 %v4603, 7
  %v4605 = vsub.s32 %v4602, %v4604
  %v4606 = vrot.slane %v4592, %v4605
  %v4607 = vcombine.low %v4542, %v4558
  %v4608 = vcombine.high %v4542, %v4558
  %v4610 = vunpack.c.l.s4 1934713408
  %v4611 = vunpack.c.0.s8 %v4610
  %v4612 = vlaneseq
  %v4613 = vshrl.u32 %v4612, 7
  %v4614 = vsub.s32 %v4611, %v4613
  %v4615 = vrot.slane %v4607, %v4614
  %v4617 = vunpack.c.l.s4 1934713408
  %v4618 = vunpack.c.0.s8 %v4617
  %v4619 = vlaneseq
  %v4620 = vshrl.u32 %v4619, 7
  %v4621 = vsub.s32 %v4618, %v4620
  %v4622 = vrot.slane %v4608, %v4621
  %v4623 = vcombine.low %v4567, %v4583
  %v4624 = vcombine.high %v4567, %v4583
  %v4626 = vunpack.c.l.s4 1934713408
  %v4627 = vunpack.c.0.s8 %v4626
  %v4628 = vlaneseq
  %v4629 = vshrl.u32 %v4628, 7
  %v4630 = vsub.s32 %v4627, %v4629
  %v4631 = vrot.slane %v4623, %v4630
  %v4633 = vunpack.c.l.s4 1934713408
  %v4634 = vunpack.c.0.s8 %v4633
  %v4635 = vlaneseq
  %v4636 = vshrl.u32 %v4635, 7
  %v4637 = vsub.s32 %v4634, %v4636
  %v4638 = vrot.slane %v4624, %v4637
  %v4639 = vcombine.low %v4574, %v4590
  %v4640 = vcombine.high %v4574, %v4590
  %v4642 = vunpack.c.l.s4 1934713408
  %v4643 = vunpack.c.0.s8 %v4642
  %v4644 = vlaneseq
  %v4645 = vshrl.u32 %v4644, 7
  %v4646 = vsub.s32 %v4643, %v4645
  %v4647 = vrot.slane %v4639, %v4646
  %v4649 = vunpack.c.l.s4 1934713408
  %v4650 = vunpack.c.0.s8 %v4649
  %v4651 = vlaneseq
  %v4652 = vshrl.u32 %v4651, 7
  %v4653 = vsub.s32 %v4650, %v4652
  %v4654 = vrot.slane %v4640, %v4653
  %v4655 = vcombine.low %v4599, %v4631
  %v4656 = vcombine.high %v4599, %v4631
  %v4657 = vcombine.low %v4606, %v4638
  %v4658 = vcombine.high %v4606, %v4638
  %v4659 = vcombine.low %v4615, %v4647
  %v4660 = vcombine.high %v4615, %v4647
  %v4661 = vcombine.low %v4622, %v4654
  %v4662 = vcombine.high %v4622, %v4654
  %v4663 = vcombine.low %v3267, %v3435
  %v4664 = vcombine.high %v3267, %v3435
  %v4666 = vunpack.c.l.s4 1983009808
  %v4667 = vunpack.c.0.s8 %v4666
  %v4668 = vlaneseq
  %v4669 = vshrl.u32 %v4668, 7
  %v4670 = vsub.s32 %v4667, %v4669
  %v4671 = vrot.slane %v4663, %v4670
  %v4673 = vunpack.c.l.s4 1983009808
  %v4674 = vunpack.c.0.s8 %v4673
  %v4675 = vlaneseq
  %v4676 = vshrl.u32 %v4675, 7
  %v4677 = vsub.s32 %v4674, %v4676
  %v4678 = vrot.slane %v4664, %v4677
  %v4679 = vcombine.low %v3348, %v3516
  %v4680 = vcombine.high %v3348, %v3516
  %v4682 = vunpack.c.l.s4 1983009808
  %v4683 = vunpack.c.0.s8 %v4682
  %v4684 = vlaneseq
  %v4685 = vshrl.u32 %v4684, 7
  %v4686 = vsub.s32 %v4683, %v4685
  %v4687 = vrot.slane %v4679, %v4686
  %v4689 = vunpack.c.l.s4 1983009808
  %v4690 = vunpack.c.0.s8 %v4689
  %v4691 = vlaneseq
  %v4692 = vshrl.u32 %v4691, 7
  %v4693 = vsub.s32 %v4690, %v4692
  %v4694 = vrot.slane %v4680, %v4693
  %v4695 = vcombine.low %v3603, %v3771
  %v4696 = vcombine.high %v3603, %v3771
  %v4698 = vunpack.c.l.s4 1983009808
  %v4699 = vunpack.c.0.s8 %v4698
  %v4700 = vlaneseq
  %v4701 = vshrl.u32 %v4700, 7
  %v4702 = vsub.s32 %v4699, %v4701
  %v4703 = vrot.slane %v4695, %v4702
  %v4705 = vunpack.c.l.s4 1983009808
  %v4706 = vunpack.c.0.s8 %v4705
  %v4707 = vlaneseq
  %v4708 = vshrl.u32 %v4707, 7
  %v4709 = vsub.s32 %v4706, %v4708
  %v4710 = vrot.slane %v4696, %v4709
  %v4711 = vcombine.low %v3684, %v3852
  %v4712 = vcombine.high %v3684, %v3852
  %v4714 = vunpack.c.l.s4 1983009808
  %v4715 = vunpack.c.0.s8 %v4714
  %v4716 = vlaneseq
  %v4717 = vshrl.u32 %v4716, 7
  %v4718 = vsub.s32 %v4715, %v4717
  %v4719 = vrot.slane %v4711, %v4718
  %v4721 = vunpack.c.l.s4 1983009808
  %v4722 = vunpack.c.0.s8 %v4721
  %v4723 = vlaneseq
  %v4724 = vshrl.u32 %v4723, 7
  %v4725 = vsub.s32 %v4722, %v4724
  %v4726 = vrot.slane %v4712, %v4725
  %v4727 = vcombine.low %v4671, %v4687
  %v4728 = vcombine.high %v4671, %v4687
  %v4730 = vunpack.c.l.s4 1934713408
  %v4731 = vunpack.c.0.s8 %v4730
  %v4732 = vlaneseq
  %v4733 = vshrl.u32 %v4732, 7
  %v4734 = vsub.s32 %v4731, %v4733
  %v4735 = vrot.slane %v4727, %v4734
  %v4737 = vunpack.c.l.s4 1934713408
  %v4738 = vunpack.c.0.s8 %v4737
  %v4739 = vlaneseq
  %v4740 = vshrl.u32 %v4739, 7
  %v4741 = vsub.s32 %v4738, %v4740
  %v4742 = vrot.slane %v4728, %v4741
  %v4743 = vcombine.low %v4678, %v4694
  %v4744 = vcombine.high %v4678, %v4694
  %v4746 = vunpack.c.l.s4 1934713408
  %v4747 = vunpack.c.0.s8 %v4746
  %v4748 = vlaneseq
  %v4749 = vshrl.u32 %v4748, 7
  %v4750 = vsub.s32 %v4747, %v4749
  %v4751 = vrot.slane %v4743, %v4750
  %v4753 = vunpack.c.l.s4 1934713408
  %v4754 = vunpack.c.0.s8 %v4753
  %v4755 = vlaneseq
  %v4756 = vshrl.u32 %v4755, 7
  %v4757 = vsub.s32 %v4754, %v4756
  %v4758 = vrot.slane %v4744, %v4757
  %v4759 = vcombine.low %v4703, %v4719
  %v4760 = vcombine.high %v4703, %v4719
  %v4762 = vunpack.c.l.s4 1934713408
  %v4763 = vunpack.c.0.s8 %v4762
  %v4764 = vlaneseq
  %v4765 = vshrl.u32 %v4764, 7
  %v4766 = vsub.s32 %v4763, %v4765
  %v4767 = vrot.slane %v4759, %v4766
  %v4769 = vunpack.c.l.s4 1934713408
  %v4770 = vunpack.c.0.s8 %v4769
  %v4771 = vlaneseq
  %v4772 = vshrl.u32 %v4771, 7
  %v4773 = vsub.s32 %v4770, %v4772
  %v4774 = vrot.slane %v4760, %v4773
  %v4775 = vcombine.low %v4710, %v4726
  %v4776 = vcombine.high %v4710, %v4726
  %v4778 = vunpack.c.l.s4 1934713408
  %v4779 = vunpack.c.0.s8 %v4778
  %v4780 = vlaneseq
  %v4781 = vshrl.u32 %v4780, 7
  %v4782 = vsub.s32 %v4779, %v4781
  %v4783 = vrot.slane %v4775, %v4782
  %v4785 = vunpack.c.l.s4 1934713408
  %v4786 = vunpack.c.0.s8 %v4785
  %v4787 = vlaneseq
  %v4788 = vshrl.u32 %v4787, 7
  %v4789 = vsub.s32 %v4786, %v4788
  %v4790 = vrot.slane %v4776, %v4789
  %v4791 = vcombine.low %v4735, %v4767
  %v4792 = vcombine.high %v4735, %v4767
  %v4793 = vcombine.low %v4742, %v4774
  %v4794 = vcombine.high %v4742, %v4774
  %v4795 = vcombine.low %v4751, %v4783
  %v4796 = vcombine.high %v4751, %v4783
  %v4797 = vcombine.low %v4758, %v4790
  %v4798 = vcombine.high %v4758, %v4790
  %4800 = vrot.lane.b32.xlu0 %v4656, 15
  %v4801 = vpop.permute.xlu0 %4800
  %4804 = vrot.lane.b32.xlu0 %v4657, 30
  %v4805 = vpop.permute.xlu0 %4804
  %4808 = vrot.lane.b32.xlu0 %v4658, 45
  %v4809 = vpop.permute.xlu0 %4808
  %4812 = vrot.lane.b32.xlu0 %v4659, 60
  %v4813 = vpop.permute.xlu0 %4812
  %4816 = vrot.lane.b32.xlu0 %v4660, 75
  %v4817 = vpop.permute.xlu0 %4816
  %4820 = vrot.lane.b32.xlu0 %v4661, 90
  %v4821 = vpop.permute.xlu0 %4820
  %4824 = vrot.lane.b32.xlu0 %v4662, 105
  %v4825 = vpop.permute.xlu0 %4824
  %4828 = vrot.lane.b32.xlu0 %v4791, 120
  %v4829 = vpop.permute.xlu0 %4828
  %4832 = vrot.lane.b32.xlu0 %v4792, 7
  %v4833 = vpop.permute.xlu0 %4832
  %4836 = vrot.lane.b32.xlu0 %v4793, 22
  %v4837 = vpop.permute.xlu0 %4836
  %4840 = vrot.lane.b32.xlu0 %v4794, 37
  %v4841 = vpop.permute.xlu0 %4840
  %4844 = vrot.lane.b32.xlu0 %v4795, 52
  %v4845 = vpop.permute.xlu0 %4844
  %4848 = vrot.lane.b32.xlu0 %v4796, 67
  %v4849 = vpop.permute.xlu0 %4848
  %4852 = vrot.lane.b32.xlu0 %v4797, 82
  %v4853 = vpop.permute.xlu0 %4852
  %4856 = vrot.lane.b32.xlu0 %v4798, 97
  %v4857 = vpop.permute.xlu0 %4856
  %vm4859 = vcmask 121856
  %v4860 = vsel %vm4859, %v4655, %v4801
  %vm4861 = vcmask 244736
  %v4862 = vsel %vm4861, %v4860, %v4805
  %vm4863 = vcmask 367616
  %v4864 = vsel %vm4863, %v4862, %v4809
  %vm4865 = vcmask 490496
  %v4866 = vsel %vm4865, %v4864, %v4813
  %vm4867 = vcmask 613376
  %v4868 = vsel %vm4867, %v4866, %v4817
  %vm4869 = vcmask 736256
  %v4870 = vsel %vm4869, %v4868, %v4821
  %vm4871 = vcmask 859136
  %v4872 = vsel %vm4871, %v4870, %v4825
  %vm4873 = vcmask 982016
  %v4874 = vsel %vm4873, %v4872, %v4829
  %vm4875 = vcmask 56320
  %v4876 = vsel %vm4875, %v4829, %v4833
  %vm4877 = vcmask 179200
  %v4878 = vsel %vm4877, %v4876, %v4837
  %vm4879 = vcmask 302080
  %v4880 = vsel %vm4879, %v4878, %v4841
  %vm4881 = vcmask 424960
  %v4882 = vsel %vm4881, %v4880, %v4845
  %vm4883 = vcmask 547840
  %v4884 = vsel %vm4883, %v4882, %v4849
  %vm4885 = vcmask 670720
  %v4886 = vsel %vm4885, %v4884, %v4853
  %vm4887 = vcmask 793600
  %v4888 = vsel %vm4887, %v4886, %v4857
  %v4889 = vld [vmem:[%s10] sm:$0xff]
  %v4890 = vld [vmem:[%s10 + $0x8] sm:$0xff]
  %v4891 = vld [vmem:[%s10 + $0x10] sm:$0xff]
  %v4892 = vld [vmem:[%s10 + $0x18] sm:$0xff]
  %v4893 = vld [vmem:[%s10 + $0x20] sm:$0xff]
  %v4894 = vld [vmem:[%s10 + $0x28] sm:$0xff]
  %v4895 = vld [vmem:[%s10 + $0x30] sm:$0xff]
  %v4896 = vld [vmem:[%s10 + $0x38] sm:$0xff]
  %v4897 = vld [vmem:[%s10 + $0x40] sm:$0xff]
  %v4898 = vld [vmem:[%s10 + $0x48] sm:$0xff]
  %v4899 = vld [vmem:[%s10 + $0x50] sm:$0xff]
  %v4900 = vld [vmem:[%s10 + $0x58] sm:$0xff]
  %v4901 = vld [vmem:[%s10 + $0x60] sm:$0xff]
  %v4902 = vld [vmem:[%s10 + $0x68] sm:$0xff]
  %v4903 = vld [vmem:[%s10 + $0x70] sm:$0xff]
  %v4904 = vld [vmem:[%s10 + $0x78] sm:$0xff]
  %v4905 = vld [vmem:[%s10 + $0x80] sm:$0xff]
  %v4906 = vld [vmem:[%s10 + $0x88] sm:$0xff]
  %v4907 = vld [vmem:[%s10 + $0x90] sm:$0xff]
  %v4908 = vld [vmem:[%s10 + $0x98] sm:$0xff]
  %v4909 = vld [vmem:[%s10 + $0xa0] sm:$0xff]
  %v4910 = vld [vmem:[%s10 + $0xa8] sm:$0xff]
  %v4911 = vld [vmem:[%s10 + $0xb0] sm:$0xff]
  %v4912 = vld [vmem:[%s10 + $0xb8] sm:$0xff]
  %v4913 = vld [vmem:[%s10 + $0xc0] sm:$0xff]
  %v4914 = vld [vmem:[%s10 + $0xc8] sm:$0xff]
  %v4915 = vld [vmem:[%s10 + $0xd0] sm:$0xff]
  %v4916 = vld [vmem:[%s10 + $0xd8] sm:$0xff]
  %v4917 = vld [vmem:[%s10 + $0xe0] sm:$0xff]
  %v4918 = vld [vmem:[%s10 + $0xe8] sm:$0xff]
  %v4919 = vld [vmem:[%s10 + $0xf0] sm:$0xff]
  %v4920 = vld [vmem:[%s10 + $0xf8] sm:$0xff]
  %v4921 = vld [vmem:[%s10 + $0x100] sm:$0xff]
  %v4922 = vld [vmem:[%s10 + $0x108] sm:$0xff]
  %v4923 = vld [vmem:[%s10 + $0x110] sm:$0xff]
  %v4924 = vld [vmem:[%s10 + $0x118] sm:$0xff]
  %v4925 = vld [vmem:[%s10 + $0x120] sm:$0xff]
  %v4926 = vld [vmem:[%s10 + $0x128] sm:$0xff]
  %v4927 = vld [vmem:[%s10 + $0x130] sm:$0xff]
  %v4928 = vld [vmem:[%s10 + $0x138] sm:$0xff]
  %v4929 = vld [vmem:[%s10 + $0x140] sm:$0xff]
  %v4930 = vld [vmem:[%s10 + $0x148] sm:$0xff]
  %v4931 = vld [vmem:[%s10 + $0x150] sm:$0xff]
  %v4932 = vld [vmem:[%s10 + $0x158] sm:$0xff]
  %v4933 = vld [vmem:[%s10 + $0x160] sm:$0xff]
  %v4934 = vld [vmem:[%s10 + $0x168] sm:$0xff]
  %v4935 = vld [vmem:[%s10 + $0x170] sm:$0xff]
  %v4936 = vld [vmem:[%s10 + $0x178] sm:$0xff]
  %v4937 = vld [vmem:[%s10 + $0x180] sm:$0xff]
  %v4938 = vld [vmem:[%s10 + $0x188] sm:$0xff]
  %v4939 = vld [vmem:[%s10 + $0x190] sm:$0xff]
  %v4940 = vld [vmem:[%s10 + $0x198] sm:$0xff]
  %v4941 = vld [vmem:[%s10 + $0x1a0] sm:$0xff]
  %v4942 = vld [vmem:[%s10 + $0x1a8] sm:$0xff]
  %v4943 = vld [vmem:[%s10 + $0x1b0] sm:$0xff]
  %v4944 = vld [vmem:[%s10 + $0x1b8] sm:$0xff]
  %v4945 = vld [vmem:[%s10 + $0x1c0] sm:$0xff]
  %v4946 = vld [vmem:[%s10 + $0x1c8] sm:$0xff]
  %v4947 = vld [vmem:[%s10 + $0x1d0] sm:$0xff]
  %v4948 = vld [vmem:[%s10 + $0x1d8] sm:$0xff]
  %vm4949 = vcmask 916480
  %v4951 = vsel %vm4949, %v4888, 0
  %4953 = vmatprep.subr.mxu0 %v4920
  %4954 = vmatpush1.msra.mxu0 %v4919
  %4955 = vmatprep.subr.mxu0 %v4918
  %4956 = vmatpush1.msra.mxu0 %v4917
  %4957 = vmatprep.subr.mxu0 %v4916
  %4958 = vmatpush1.msra.mxu0 %v4915
  %4959 = vmatprep.subr.mxu0 %v4914
  %4960 = vmatpush1.msra.mxu0 %v4913
  %4961 = vmatprep.subr.mxu0 %v4912
  %4962 = vmatpush1.msra.mxu0 %v4911
  %4963 = vmatprep.subr.mxu0 %v4910
  %4964 = vmatpush1.msra.mxu0 %v4909
  %4965 = vmatprep.subr.mxu0 %v4908
  %4966 = vmatpush1.msra.mxu0 %v4907
  %4967 = vmatprep.subr.mxu0 %v4906
  %4968 = vmatpush1.msra.mxu0 %v4905
  %4969 = vmatprep.subr.mxu0 %v4904
  %4970 = vmatpush1.msra.mxu0 %v4903
  %4971 = vmatprep.subr.mxu0 %v4902
  %4972 = vmatpush1.msra.mxu0 %v4901
  %4973 = vmatprep.subr.mxu0 %v4900
  %4974 = vmatpush1.msra.mxu0 %v4899
  %4975 = vmatprep.subr.mxu0 %v4898
  %4976 = vmatpush1.msra.mxu0 %v4897
  %4977 = vmatprep.subr.mxu0 %v4896
  %4978 = vmatpush1.msra.mxu0 %v4895
  %4979 = vmatprep.subr.mxu0 %v4894
  %4980 = vmatpush1.msra.mxu0 %v4893
  %4981 = vmatprep.subr.mxu0 %v4892
  %4982 = vmatpush1.msra.mxu0 %v4891
  %4983 = vmatprep.subr.mxu0 %v4890
  %4984 = vmatpush1.msra.mxu0 %v4889
  %4985 = vmatprep.subr.mxu0 0.0
  %4986 = vmatpush2.msra.mxu0 0.0
  %4987 = vmatprep.subr.mxu0 0.0
  %4988 = vmatpush2.msra.mxu0 0.0
  %4989 = vmatprep.subr.mxu0 %v4948
  %4990 = vmatpush2.msra.mxu0 %v4947
  %4991 = vmatprep.subr.mxu0 %v4946
  %4992 = vmatpush2.msra.mxu0 %v4945
  %4993 = vmatprep.subr.mxu0 %v4944
  %4994 = vmatpush2.msra.mxu0 %v4943
  %4995 = vmatprep.subr.mxu0 %v4942
  %4996 = vmatpush2.msra.mxu0 %v4941
  %4997 = vmatprep.subr.mxu0 %v4940
  %4998 = vmatpush2.msra.mxu0 %v4939
  %4999 = vmatprep.subr.mxu0 %v4938
  %5000 = vmatpush2.msra.mxu0 %v4937
  %5001 = vmatprep.subr.mxu0 %v4936
  %5002 = vmatpush2.msra.mxu0 %v4935
  %5003 = vmatprep.subr.mxu0 %v4934
  %5004 = vmatpush2.msra.mxu0 %v4933
  %5005 = vmatprep.subr.mxu0 %v4932
  %5006 = vmatpush2.msra.mxu0 %v4931
  %5007 = vmatprep.subr.mxu0 %v4930
  %5008 = vmatpush2.msra.mxu0 %v4929
  %5009 = vmatprep.subr.mxu0 %v4928
  %5010 = vmatpush2.msra.mxu0 %v4927
  %5011 = vmatprep.subr.mxu0 %v4926
  %5012 = vmatpush2.msra.mxu0 %v4925
  %5013 = vmatprep.subr.mxu0 %v4924
  %5014 = vmatpush2.msra.mxu0 %v4923
  %5015 = vmatprep.subr.mxu0 %v4922
  %5016 = vmatpush2.msra.mxu0 %v4921
  %5017 = vmatprep.mubr.f32.mxu0 %v4951
  %5018 = vmatmul.mubr.f32.gmra.mxu0 %v4874
  %v5019 = vpop.f32.mrf.mxu0
  %v5020 = vadd.f32 0.0, %v5019
  %v5021 = vpop.f32.mrf.mxu0
  %v5022 = vadd.f32 0.0, %v5021
  %5023 = vdwg.mxu0
  %5025 = vrot.lane.b32.xlu0 %v5020, 112
  %v5026 = vpop.permute.xlu0 %5025
  %5028 = vrot.lane.b32.xlu0 %v5020, 96
  %v5029 = vpop.permute.xlu0 %5028
  %5031 = vrot.lane.b32.xlu0 %v5020, 80
  %v5032 = vpop.permute.xlu0 %5031
  %5034 = vrot.lane.b32.xlu0 %v5020, 64
  %v5035 = vpop.permute.xlu0 %5034
  %5037 = vrot.lane.b32.xlu0 %v5020, 48
  %v5038 = vpop.permute.xlu0 %5037
  %5040 = vrot.lane.b32.xlu0 %v5020, 32
  %v5041 = vpop.permute.xlu0 %5040
  %5043 = vrot.lane.b32.xlu0 %v5020, 16
  %v5044 = vpop.permute.xlu0 %5043
  %5047 = vrot.lane.b32.xlu0 %v5022, 112
  %v5048 = vpop.permute.xlu0 %5047
  %5050 = vrot.lane.b32.xlu0 %v5022, 96
  %v5051 = vpop.permute.xlu0 %5050
  %5053 = vrot.lane.b32.xlu0 %v5022, 80
  %v5054 = vpop.permute.xlu0 %5053
  %5056 = vrot.lane.b32.xlu0 %v5022, 64
  %v5057 = vpop.permute.xlu0 %5056
  %5059 = vrot.lane.b32.xlu0 %v5022, 48
  %v5060 = vpop.permute.xlu0 %5059
  %5062 = vrot.lane.b32.xlu0 %v5022, 32
  %v5063 = vpop.permute.xlu0 %5062
  %5065 = vrot.lane.b32.xlu0 %v5022, 16
  %v5066 = vpop.permute.xlu0 %5065
  %v5068 = vcombine.low %v5020, %v5029
  %v5069 = vcombine.high %v5020, %v5029
  %v5071 = vunpack.c.l.s4 1983009808
  %v5072 = vunpack.c.0.s8 %v5071
  %v5073 = vlaneseq
  %v5074 = vshrl.u32 %v5073, 7
  %v5075 = vsub.s32 %v5072, %v5074
  %v5076 = vrot.slane %v5068, %v5075
  %v5078 = vunpack.c.l.s4 1983009808
  %v5079 = vunpack.c.0.s8 %v5078
  %v5080 = vlaneseq
  %v5081 = vshrl.u32 %v5080, 7
  %v5082 = vsub.s32 %v5079, %v5081
  %v5083 = vrot.slane %v5069, %v5082
  %v5084 = vcombine.low %v5026, %v5032
  %v5085 = vcombine.high %v5026, %v5032
  %v5087 = vunpack.c.l.s4 1983009808
  %v5088 = vunpack.c.0.s8 %v5087
  %v5089 = vlaneseq
  %v5090 = vshrl.u32 %v5089, 7
  %v5091 = vsub.s32 %v5088, %v5090
  %v5092 = vrot.slane %v5084, %v5091
  %v5094 = vunpack.c.l.s4 1983009808
  %v5095 = vunpack.c.0.s8 %v5094
  %v5096 = vlaneseq
  %v5097 = vshrl.u32 %v5096, 7
  %v5098 = vsub.s32 %v5095, %v5097
  %v5099 = vrot.slane %v5085, %v5098
  %v5100 = vcombine.low %v5035, %v5041
  %v5101 = vcombine.high %v5035, %v5041
  %v5103 = vunpack.c.l.s4 1983009808
  %v5104 = vunpack.c.0.s8 %v5103
  %v5105 = vlaneseq
  %v5106 = vshrl.u32 %v5105, 7
  %v5107 = vsub.s32 %v5104, %v5106
  %v5108 = vrot.slane %v5100, %v5107
  %v5110 = vunpack.c.l.s4 1983009808
  %v5111 = vunpack.c.0.s8 %v5110
  %v5112 = vlaneseq
  %v5113 = vshrl.u32 %v5112, 7
  %v5114 = vsub.s32 %v5111, %v5113
  %v5115 = vrot.slane %v5101, %v5114
  %v5116 = vcombine.low %v5038, %v5044
  %v5117 = vcombine.high %v5038, %v5044
  %v5119 = vunpack.c.l.s4 1983009808
  %v5120 = vunpack.c.0.s8 %v5119
  %v5121 = vlaneseq
  %v5122 = vshrl.u32 %v5121, 7
  %v5123 = vsub.s32 %v5120, %v5122
  %v5124 = vrot.slane %v5116, %v5123
  %v5126 = vunpack.c.l.s4 1983009808
  %v5127 = vunpack.c.0.s8 %v5126
  %v5128 = vlaneseq
  %v5129 = vshrl.u32 %v5128, 7
  %v5130 = vsub.s32 %v5127, %v5129
  %v5131 = vrot.slane %v5117, %v5130
  %v5132 = vcombine.low %v5076, %v5092
  %v5133 = vcombine.high %v5076, %v5092
  %v5135 = vunpack.c.l.s4 1934713408
  %v5136 = vunpack.c.0.s8 %v5135
  %v5137 = vlaneseq
  %v5138 = vshrl.u32 %v5137, 7
  %v5139 = vsub.s32 %v5136, %v5138
  %v5140 = vrot.slane %v5132, %v5139
  %v5142 = vunpack.c.l.s4 1934713408
  %v5143 = vunpack.c.0.s8 %v5142
  %v5144 = vlaneseq
  %v5145 = vshrl.u32 %v5144, 7
  %v5146 = vsub.s32 %v5143, %v5145
  %v5147 = vrot.slane %v5133, %v5146
  %v5148 = vcombine.low %v5083, %v5099
  %v5149 = vcombine.high %v5083, %v5099
  %v5151 = vunpack.c.l.s4 1934713408
  %v5152 = vunpack.c.0.s8 %v5151
  %v5153 = vlaneseq
  %v5154 = vshrl.u32 %v5153, 7
  %v5155 = vsub.s32 %v5152, %v5154
  %v5156 = vrot.slane %v5148, %v5155
  %v5158 = vunpack.c.l.s4 1934713408
  %v5159 = vunpack.c.0.s8 %v5158
  %v5160 = vlaneseq
  %v5161 = vshrl.u32 %v5160, 7
  %v5162 = vsub.s32 %v5159, %v5161
  %v5163 = vrot.slane %v5149, %v5162
  %v5164 = vcombine.low %v5108, %v5124
  %v5165 = vcombine.high %v5108, %v5124
  %v5167 = vunpack.c.l.s4 1934713408
  %v5168 = vunpack.c.0.s8 %v5167
  %v5169 = vlaneseq
  %v5170 = vshrl.u32 %v5169, 7
  %v5171 = vsub.s32 %v5168, %v5170
  %v5172 = vrot.slane %v5164, %v5171
  %v5174 = vunpack.c.l.s4 1934713408
  %v5175 = vunpack.c.0.s8 %v5174
  %v5176 = vlaneseq
  %v5177 = vshrl.u32 %v5176, 7
  %v5178 = vsub.s32 %v5175, %v5177
  %v5179 = vrot.slane %v5165, %v5178
  %v5180 = vcombine.low %v5115, %v5131
  %v5181 = vcombine.high %v5115, %v5131
  %v5183 = vunpack.c.l.s4 1934713408
  %v5184 = vunpack.c.0.s8 %v5183
  %v5185 = vlaneseq
  %v5186 = vshrl.u32 %v5185, 7
  %v5187 = vsub.s32 %v5184, %v5186
  %v5188 = vrot.slane %v5180, %v5187
  %v5190 = vunpack.c.l.s4 1934713408
  %v5191 = vunpack.c.0.s8 %v5190
  %v5192 = vlaneseq
  %v5193 = vshrl.u32 %v5192, 7
  %v5194 = vsub.s32 %v5191, %v5193
  %v5195 = vrot.slane %v5181, %v5194
  %v5196 = vcombine.low %v5140, %v5172
  %v5197 = vcombine.high %v5140, %v5172
  %v5198 = vcombine.low %v5147, %v5179
  %v5199 = vcombine.high %v5147, %v5179
  %v5200 = vcombine.low %v5156, %v5188
  %v5201 = vcombine.high %v5156, %v5188
  %v5202 = vcombine.low %v5163, %v5195
  %v5203 = vcombine.high %v5163, %v5195
  %v5204 = vcombine.low %v5022, %v5051
  %v5205 = vcombine.high %v5022, %v5051
  %v5207 = vunpack.c.l.s4 1983009808
  %v5208 = vunpack.c.0.s8 %v5207
  %v5209 = vlaneseq
  %v5210 = vshrl.u32 %v5209, 7
  %v5211 = vsub.s32 %v5208, %v5210
  %v5212 = vrot.slane %v5204, %v5211
  %v5214 = vunpack.c.l.s4 1983009808
  %v5215 = vunpack.c.0.s8 %v5214
  %v5216 = vlaneseq
  %v5217 = vshrl.u32 %v5216, 7
  %v5218 = vsub.s32 %v5215, %v5217
  %v5219 = vrot.slane %v5205, %v5218
  %v5220 = vcombine.low %v5048, %v5054
  %v5221 = vcombine.high %v5048, %v5054
  %v5223 = vunpack.c.l.s4 1983009808
  %v5224 = vunpack.c.0.s8 %v5223
  %v5225 = vlaneseq
  %v5226 = vshrl.u32 %v5225, 7
  %v5227 = vsub.s32 %v5224, %v5226
  %v5228 = vrot.slane %v5220, %v5227
  %v5230 = vunpack.c.l.s4 1983009808
  %v5231 = vunpack.c.0.s8 %v5230
  %v5232 = vlaneseq
  %v5233 = vshrl.u32 %v5232, 7
  %v5234 = vsub.s32 %v5231, %v5233
  %v5235 = vrot.slane %v5221, %v5234
  %v5236 = vcombine.low %v5057, %v5063
  %v5237 = vcombine.high %v5057, %v5063
  %v5239 = vunpack.c.l.s4 1983009808
  %v5240 = vunpack.c.0.s8 %v5239
  %v5241 = vlaneseq
  %v5242 = vshrl.u32 %v5241, 7
  %v5243 = vsub.s32 %v5240, %v5242
  %v5244 = vrot.slane %v5236, %v5243
  %v5246 = vunpack.c.l.s4 1983009808
  %v5247 = vunpack.c.0.s8 %v5246
  %v5248 = vlaneseq
  %v5249 = vshrl.u32 %v5248, 7
  %v5250 = vsub.s32 %v5247, %v5249
  %v5251 = vrot.slane %v5237, %v5250
  %v5252 = vcombine.low %v5060, %v5066
  %v5253 = vcombine.high %v5060, %v5066
  %v5255 = vunpack.c.l.s4 1983009808
  %v5256 = vunpack.c.0.s8 %v5255
  %v5257 = vlaneseq
  %v5258 = vshrl.u32 %v5257, 7
  %v5259 = vsub.s32 %v5256, %v5258
  %v5260 = vrot.slane %v5252, %v5259
  %v5262 = vunpack.c.l.s4 1983009808
  %v5263 = vunpack.c.0.s8 %v5262
  %v5264 = vlaneseq
  %v5265 = vshrl.u32 %v5264, 7
  %v5266 = vsub.s32 %v5263, %v5265
  %v5267 = vrot.slane %v5253, %v5266
  %v5268 = vcombine.low %v5212, %v5228
  %v5269 = vcombine.high %v5212, %v5228
  %v5271 = vunpack.c.l.s4 1934713408
  %v5272 = vunpack.c.0.s8 %v5271
  %v5273 = vlaneseq
  %v5274 = vshrl.u32 %v5273, 7
  %v5275 = vsub.s32 %v5272, %v5274
  %v5276 = vrot.slane %v5268, %v5275
  %v5278 = vunpack.c.l.s4 1934713408
  %v5279 = vunpack.c.0.s8 %v5278
  %v5280 = vlaneseq
  %v5281 = vshrl.u32 %v5280, 7
  %v5282 = vsub.s32 %v5279, %v5281
  %v5283 = vrot.slane %v5269, %v5282
  %v5284 = vcombine.low %v5219, %v5235
  %v5285 = vcombine.high %v5219, %v5235
  %v5287 = vunpack.c.l.s4 1934713408
  %v5288 = vunpack.c.0.s8 %v5287
  %v5289 = vlaneseq
  %v5290 = vshrl.u32 %v5289, 7
  %v5291 = vsub.s32 %v5288, %v5290
  %v5292 = vrot.slane %v5284, %v5291
  %v5294 = vunpack.c.l.s4 1934713408
  %v5295 = vunpack.c.0.s8 %v5294
  %v5296 = vlaneseq
  %v5297 = vshrl.u32 %v5296, 7
  %v5298 = vsub.s32 %v5295, %v5297
  %v5299 = vrot.slane %v5285, %v5298
  %v5300 = vcombine.low %v5244, %v5260
  %v5301 = vcombine.high %v5244, %v5260
  %v5303 = vunpack.c.l.s4 1934713408
  %v5304 = vunpack.c.0.s8 %v5303
  %v5305 = vlaneseq
  %v5306 = vshrl.u32 %v5305, 7
  %v5307 = vsub.s32 %v5304, %v5306
  %v5308 = vrot.slane %v5300, %v5307
  %v5310 = vunpack.c.l.s4 1934713408
  %v5311 = vunpack.c.0.s8 %v5310
  %v5312 = vlaneseq
  %v5313 = vshrl.u32 %v5312, 7
  %v5314 = vsub.s32 %v5311, %v5313
  %v5315 = vrot.slane %v5301, %v5314
  %v5316 = vcombine.low %v5251, %v5267
  %v5317 = vcombine.high %v5251, %v5267
  %v5319 = vunpack.c.l.s4 1934713408
  %v5320 = vunpack.c.0.s8 %v5319
  %v5321 = vlaneseq
  %v5322 = vshrl.u32 %v5321, 7
  %v5323 = vsub.s32 %v5320, %v5322
  %v5324 = vrot.slane %v5316, %v5323
  %v5326 = vunpack.c.l.s4 1934713408
  %v5327 = vunpack.c.0.s8 %v5326
  %v5328 = vlaneseq
  %v5329 = vshrl.u32 %v5328, 7
  %v5330 = vsub.s32 %v5327, %v5329
  %v5331 = vrot.slane %v5317, %v5330
  %v5332 = vcombine.low %v5276, %v5308
  %v5333 = vcombine.high %v5276, %v5308
  %v5334 = vcombine.low %v5283, %v5315
  %v5335 = vcombine.high %v5283, %v5315
  %v5336 = vcombine.low %v5292, %v5324
  %v5337 = vcombine.high %v5292, %v5324
  %v5338 = vcombine.low %v5299, %v5331
  %v5339 = vcombine.high %v5299, %v5331
  %v5340 = vcombine.low %v3934, %v4102
  %v5341 = vcombine.high %v3934, %v4102
  %v5343 = vunpack.c.l.s4 1983009808
  %v5344 = vunpack.c.0.s8 %v5343
  %v5345 = vlaneseq
  %v5346 = vshrl.u32 %v5345, 7
  %v5347 = vsub.s32 %v5344, %v5346
  %v5348 = vrot.slane %v5340, %v5347
  %v5350 = vunpack.c.l.s4 1983009808
  %v5351 = vunpack.c.0.s8 %v5350
  %v5352 = vlaneseq
  %v5353 = vshrl.u32 %v5352, 7
  %v5354 = vsub.s32 %v5351, %v5353
  %v5355 = vrot.slane %v5341, %v5354
  %v5356 = vcombine.low %v4015, %v4183
  %v5357 = vcombine.high %v4015, %v4183
  %v5359 = vunpack.c.l.s4 1983009808
  %v5360 = vunpack.c.0.s8 %v5359
  %v5361 = vlaneseq
  %v5362 = vshrl.u32 %v5361, 7
  %v5363 = vsub.s32 %v5360, %v5362
  %v5364 = vrot.slane %v5356, %v5363
  %v5366 = vunpack.c.l.s4 1983009808
  %v5367 = vunpack.c.0.s8 %v5366
  %v5368 = vlaneseq
  %v5369 = vshrl.u32 %v5368, 7
  %v5370 = vsub.s32 %v5367, %v5369
  %v5371 = vrot.slane %v5357, %v5370
  %v5372 = vcombine.low %v4270, %v4438
  %v5373 = vcombine.high %v4270, %v4438
  %v5375 = vunpack.c.l.s4 1983009808
  %v5376 = vunpack.c.0.s8 %v5375
  %v5377 = vlaneseq
  %v5378 = vshrl.u32 %v5377, 7
  %v5379 = vsub.s32 %v5376, %v5378
  %v5380 = vrot.slane %v5372, %v5379
  %v5382 = vunpack.c.l.s4 1983009808
  %v5383 = vunpack.c.0.s8 %v5382
  %v5384 = vlaneseq
  %v5385 = vshrl.u32 %v5384, 7
  %v5386 = vsub.s32 %v5383, %v5385
  %v5387 = vrot.slane %v5373, %v5386
  %v5388 = vcombine.low %v4351, %v4519
  %v5389 = vcombine.high %v4351, %v4519
  %v5391 = vunpack.c.l.s4 1983009808
  %v5392 = vunpack.c.0.s8 %v5391
  %v5393 = vlaneseq
  %v5394 = vshrl.u32 %v5393, 7
  %v5395 = vsub.s32 %v5392, %v5394
  %v5396 = vrot.slane %v5388, %v5395
  %v5398 = vunpack.c.l.s4 1983009808
  %v5399 = vunpack.c.0.s8 %v5398
  %v5400 = vlaneseq
  %v5401 = vshrl.u32 %v5400, 7
  %v5402 = vsub.s32 %v5399, %v5401
  %v5403 = vrot.slane %v5389, %v5402
  %v5404 = vcombine.low %v5348, %v5364
  %v5405 = vcombine.high %v5348, %v5364
  %v5407 = vunpack.c.l.s4 1934713408
  %v5408 = vunpack.c.0.s8 %v5407
  %v5409 = vlaneseq
  %v5410 = vshrl.u32 %v5409, 7
  %v5411 = vsub.s32 %v5408, %v5410
  %v5412 = vrot.slane %v5404, %v5411
  %v5414 = vunpack.c.l.s4 1934713408
  %v5415 = vunpack.c.0.s8 %v5414
  %v5416 = vlaneseq
  %v5417 = vshrl.u32 %v5416, 7
  %v5418 = vsub.s32 %v5415, %v5417
  %v5419 = vrot.slane %v5405, %v5418
  %v5420 = vcombine.low %v5355, %v5371
  %v5421 = vcombine.high %v5355, %v5371
  %v5423 = vunpack.c.l.s4 1934713408
  %v5424 = vunpack.c.0.s8 %v5423
  %v5425 = vlaneseq
  %v5426 = vshrl.u32 %v5425, 7
  %v5427 = vsub.s32 %v5424, %v5426
  %v5428 = vrot.slane %v5420, %v5427
  %v5430 = vunpack.c.l.s4 1934713408
  %v5431 = vunpack.c.0.s8 %v5430
  %v5432 = vlaneseq
  %v5433 = vshrl.u32 %v5432, 7
  %v5434 = vsub.s32 %v5431, %v5433
  %v5435 = vrot.slane %v5421, %v5434
  %v5436 = vcombine.low %v5380, %v5396
  %v5437 = vcombine.high %v5380, %v5396
  %v5439 = vunpack.c.l.s4 1934713408
  %v5440 = vunpack.c.0.s8 %v5439
  %v5441 = vlaneseq
  %v5442 = vshrl.u32 %v5441, 7
  %v5443 = vsub.s32 %v5440, %v5442
  %v5444 = vrot.slane %v5436, %v5443
  %v5446 = vunpack.c.l.s4 1934713408
  %v5447 = vunpack.c.0.s8 %v5446
  %v5448 = vlaneseq
  %v5449 = vshrl.u32 %v5448, 7
  %v5450 = vsub.s32 %v5447, %v5449
  %v5451 = vrot.slane %v5437, %v5450
  %v5452 = vcombine.low %v5387, %v5403
  %v5453 = vcombine.high %v5387, %v5403
  %v5455 = vunpack.c.l.s4 1934713408
  %v5456 = vunpack.c.0.s8 %v5455
  %v5457 = vlaneseq
  %v5458 = vshrl.u32 %v5457, 7
  %v5459 = vsub.s32 %v5456, %v5458
  %v5460 = vrot.slane %v5452, %v5459
  %v5462 = vunpack.c.l.s4 1934713408
  %v5463 = vunpack.c.0.s8 %v5462
  %v5464 = vlaneseq
  %v5465 = vshrl.u32 %v5464, 7
  %v5466 = vsub.s32 %v5463, %v5465
  %v5467 = vrot.slane %v5453, %v5466
  %v5468 = vcombine.low %v5412, %v5444
  %v5469 = vcombine.high %v5412, %v5444
  %v5470 = vcombine.low %v5419, %v5451
  %v5471 = vcombine.high %v5419, %v5451
  %v5472 = vcombine.low %v5428, %v5460
  %v5473 = vcombine.high %v5428, %v5460
  %v5474 = vcombine.low %v5435, %v5467
  %v5475 = vcombine.high %v5435, %v5467
  %v5476 = vcombine.low %v3939, %v4107
  %v5477 = vcombine.high %v3939, %v4107
  %v5479 = vunpack.c.l.s4 1983009808
  %v5480 = vunpack.c.0.s8 %v5479
  %v5481 = vlaneseq
  %v5482 = vshrl.u32 %v5481, 7
  %v5483 = vsub.s32 %v5480, %v5482
  %v5484 = vrot.slane %v5476, %v5483
  %v5486 = vunpack.c.l.s4 1983009808
  %v5487 = vunpack.c.0.s8 %v5486
  %v5488 = vlaneseq
  %v5489 = vshrl.u32 %v5488, 7
  %v5490 = vsub.s32 %v5487, %v5489
  %v5491 = vrot.slane %v5477, %v5490
  %v5492 = vcombine.low %v4020, %v4188
  %v5493 = vcombine.high %v4020, %v4188
  %v5495 = vunpack.c.l.s4 1983009808
  %v5496 = vunpack.c.0.s8 %v5495
  %v5497 = vlaneseq
  %v5498 = vshrl.u32 %v5497, 7
  %v5499 = vsub.s32 %v5496, %v5498
  %v5500 = vrot.slane %v5492, %v5499
  %v5502 = vunpack.c.l.s4 1983009808
  %v5503 = vunpack.c.0.s8 %v5502
  %v5504 = vlaneseq
  %v5505 = vshrl.u32 %v5504, 7
  %v5506 = vsub.s32 %v5503, %v5505
  %v5507 = vrot.slane %v5493, %v5506
  %v5508 = vcombine.low %v4275, %v4443
  %v5509 = vcombine.high %v4275, %v4443
  %v5511 = vunpack.c.l.s4 1983009808
  %v5512 = vunpack.c.0.s8 %v5511
  %v5513 = vlaneseq
  %v5514 = vshrl.u32 %v5513, 7
  %v5515 = vsub.s32 %v5512, %v5514
  %v5516 = vrot.slane %v5508, %v5515
  %v5518 = vunpack.c.l.s4 1983009808
  %v5519 = vunpack.c.0.s8 %v5518
  %v5520 = vlaneseq
  %v5521 = vshrl.u32 %v5520, 7
  %v5522 = vsub.s32 %v5519, %v5521
  %v5523 = vrot.slane %v5509, %v5522
  %v5524 = vcombine.low %v4356, %v4524
  %v5525 = vcombine.high %v4356, %v4524
  %v5527 = vunpack.c.l.s4 1983009808
  %v5528 = vunpack.c.0.s8 %v5527
  %v5529 = vlaneseq
  %v5530 = vshrl.u32 %v5529, 7
  %v5531 = vsub.s32 %v5528, %v5530
  %v5532 = vrot.slane %v5524, %v5531
  %v5534 = vunpack.c.l.s4 1983009808
  %v5535 = vunpack.c.0.s8 %v5534
  %v5536 = vlaneseq
  %v5537 = vshrl.u32 %v5536, 7
  %v5538 = vsub.s32 %v5535, %v5537
  %v5539 = vrot.slane %v5525, %v5538
  %v5540 = vcombine.low %v5484, %v5500
  %v5541 = vcombine.high %v5484, %v5500
  %v5543 = vunpack.c.l.s4 1934713408
  %v5544 = vunpack.c.0.s8 %v5543
  %v5545 = vlaneseq
  %v5546 = vshrl.u32 %v5545, 7
  %v5547 = vsub.s32 %v5544, %v5546
  %v5548 = vrot.slane %v5540, %v5547
  %v5550 = vunpack.c.l.s4 1934713408
  %v5551 = vunpack.c.0.s8 %v5550
  %v5552 = vlaneseq
  %v5553 = vshrl.u32 %v5552, 7
  %v5554 = vsub.s32 %v5551, %v5553
  %v5555 = vrot.slane %v5541, %v5554
  %v5556 = vcombine.low %v5491, %v5507
  %v5557 = vcombine.high %v5491, %v5507
  %v5559 = vunpack.c.l.s4 1934713408
  %v5560 = vunpack.c.0.s8 %v5559
  %v5561 = vlaneseq
  %v5562 = vshrl.u32 %v5561, 7
  %v5563 = vsub.s32 %v5560, %v5562
  %v5564 = vrot.slane %v5556, %v5563
  %v5566 = vunpack.c.l.s4 1934713408
  %v5567 = vunpack.c.0.s8 %v5566
  %v5568 = vlaneseq
  %v5569 = vshrl.u32 %v5568, 7
  %v5570 = vsub.s32 %v5567, %v5569
  %v5571 = vrot.slane %v5557, %v5570
  %v5572 = vcombine.low %v5516, %v5532
  %v5573 = vcombine.high %v5516, %v5532
  %v5575 = vunpack.c.l.s4 1934713408
  %v5576 = vunpack.c.0.s8 %v5575
  %v5577 = vlaneseq
  %v5578 = vshrl.u32 %v5577, 7
  %v5579 = vsub.s32 %v5576, %v5578
  %v5580 = vrot.slane %v5572, %v5579
  %v5582 = vunpack.c.l.s4 1934713408
  %v5583 = vunpack.c.0.s8 %v5582
  %v5584 = vlaneseq
  %v5585 = vshrl.u32 %v5584, 7
  %v5586 = vsub.s32 %v5583, %v5585
  %v5587 = vrot.slane %v5573, %v5586
  %v5588 = vcombine.low %v5523, %v5539
  %v5589 = vcombine.high %v5523, %v5539
  %v5591 = vunpack.c.l.s4 1934713408
  %v5592 = vunpack.c.0.s8 %v5591
  %v5593 = vlaneseq
  %v5594 = vshrl.u32 %v5593, 7
  %v5595 = vsub.s32 %v5592, %v5594
  %v5596 = vrot.slane %v5588, %v5595
  %v5598 = vunpack.c.l.s4 1934713408
  %v5599 = vunpack.c.0.s8 %v5598
  %v5600 = vlaneseq
  %v5601 = vshrl.u32 %v5600, 7
  %v5602 = vsub.s32 %v5599, %v5601
  %v5603 = vrot.slane %v5589, %v5602
  %v5604 = vcombine.low %v5548, %v5580
  %v5605 = vcombine.high %v5548, %v5580
  %v5606 = vcombine.low %v5555, %v5587
  %v5607 = vcombine.high %v5555, %v5587
  %v5608 = vcombine.low %v5564, %v5596
  %v5609 = vcombine.high %v5564, %v5596
  %v5610 = vcombine.low %v5571, %v5603
  %v5611 = vcombine.high %v5571, %v5603
  %5613 = vrot.lane.b32.xlu0 %v5469, 15
  %v5614 = vpop.permute.xlu0 %5613
  %5617 = vrot.lane.b32.xlu0 %v5470, 30
  %v5618 = vpop.permute.xlu0 %5617
  %5621 = vrot.lane.b32.xlu0 %v5471, 45
  %v5622 = vpop.permute.xlu0 %5621
  %5625 = vrot.lane.b32.xlu0 %v5472, 60
  %v5626 = vpop.permute.xlu0 %5625
  %5629 = vrot.lane.b32.xlu0 %v5473, 75
  %v5630 = vpop.permute.xlu0 %5629
  %5633 = vrot.lane.b32.xlu0 %v5474, 90
  %v5634 = vpop.permute.xlu0 %5633
  %5637 = vrot.lane.b32.xlu0 %v5475, 105
  %v5638 = vpop.permute.xlu0 %5637
  %5641 = vrot.lane.b32.xlu0 %v5604, 120
  %v5642 = vpop.permute.xlu0 %5641
  %5645 = vrot.lane.b32.xlu0 %v5605, 7
  %v5646 = vpop.permute.xlu0 %5645
  %5649 = vrot.lane.b32.xlu0 %v5606, 22
  %v5650 = vpop.permute.xlu0 %5649
  %5653 = vrot.lane.b32.xlu0 %v5607, 37
  %v5654 = vpop.permute.xlu0 %5653
  %5657 = vrot.lane.b32.xlu0 %v5608, 52
  %v5658 = vpop.permute.xlu0 %5657
  %5661 = vrot.lane.b32.xlu0 %v5609, 67
  %v5662 = vpop.permute.xlu0 %5661
  %5665 = vrot.lane.b32.xlu0 %v5610, 82
  %v5666 = vpop.permute.xlu0 %5665
  %5669 = vrot.lane.b32.xlu0 %v5611, 97
  %v5670 = vpop.permute.xlu0 %5669
  %v5672 = vsel %vm4859, %v5468, %v5614
  %v5673 = vsel %vm4861, %v5672, %v5618
  %v5674 = vsel %vm4863, %v5673, %v5622
  %v5675 = vsel %vm4865, %v5674, %v5626
  %v5676 = vsel %vm4867, %v5675, %v5630
  %v5677 = vsel %vm4869, %v5676, %v5634
  %v5678 = vsel %vm4871, %v5677, %v5638
  %v5679 = vsel %vm4873, %v5678, %v5642
  %v5680 = vsel %vm4875, %v5642, %v5646
  %v5681 = vsel %vm4877, %v5680, %v5650
  %v5682 = vsel %vm4879, %v5681, %v5654
  %v5683 = vsel %vm4881, %v5682, %v5658
  %v5684 = vsel %vm4883, %v5683, %v5662
  %v5685 = vsel %vm4885, %v5684, %v5666
  %v5686 = vsel %vm4887, %v5685, %v5670
  %v5687 = vld [vmem:[%s11] sm:$0xff]
  %v5688 = vld [vmem:[%s11 + $0x8] sm:$0xff]
  %v5689 = vld [vmem:[%s11 + $0x10] sm:$0xff]
  %v5690 = vld [vmem:[%s11 + $0x18] sm:$0xff]
  %v5691 = vld [vmem:[%s11 + $0x20] sm:$0xff]
  %v5692 = vld [vmem:[%s11 + $0x28] sm:$0xff]
  %v5693 = vld [vmem:[%s11 + $0x30] sm:$0xff]
  %v5694 = vld [vmem:[%s11 + $0x38] sm:$0xff]
  %v5695 = vld [vmem:[%s11 + $0x40] sm:$0xff]
  %v5696 = vld [vmem:[%s11 + $0x48] sm:$0xff]
  %v5697 = vld [vmem:[%s11 + $0x50] sm:$0xff]
  %v5698 = vld [vmem:[%s11 + $0x58] sm:$0xff]
  %v5699 = vld [vmem:[%s11 + $0x60] sm:$0xff]
  %v5700 = vld [vmem:[%s11 + $0x68] sm:$0xff]
  %v5701 = vld [vmem:[%s11 + $0x70] sm:$0xff]
  %v5702 = vld [vmem:[%s11 + $0x78] sm:$0xff]
  %v5703 = vld [vmem:[%s11 + $0x80] sm:$0xff]
  %v5704 = vld [vmem:[%s11 + $0x88] sm:$0xff]
  %v5705 = vld [vmem:[%s11 + $0x90] sm:$0xff]
  %v5706 = vld [vmem:[%s11 + $0x98] sm:$0xff]
  %v5707 = vld [vmem:[%s11 + $0xa0] sm:$0xff]
  %v5708 = vld [vmem:[%s11 + $0xa8] sm:$0xff]
  %v5709 = vld [vmem:[%s11 + $0xb0] sm:$0xff]
  %v5710 = vld [vmem:[%s11 + $0xb8] sm:$0xff]
  %v5711 = vld [vmem:[%s11 + $0xc0] sm:$0xff]
  %v5712 = vld [vmem:[%s11 + $0xc8] sm:$0xff]
  %v5713 = vld [vmem:[%s11 + $0xd0] sm:$0xff]
  %v5714 = vld [vmem:[%s11 + $0xd8] sm:$0xff]
  %v5715 = vld [vmem:[%s11 + $0xe0] sm:$0xff]
  %v5716 = vld [vmem:[%s11 + $0xe8] sm:$0xff]
  %v5717 = vld [vmem:[%s11 + $0xf0] sm:$0xff]
  %v5718 = vld [vmem:[%s11 + $0xf8] sm:$0xff]
  %v5719 = vld [vmem:[%s11 + $0x100] sm:$0xff]
  %v5720 = vld [vmem:[%s11 + $0x108] sm:$0xff]
  %v5721 = vld [vmem:[%s11 + $0x110] sm:$0xff]
  %v5722 = vld [vmem:[%s11 + $0x118] sm:$0xff]
  %v5723 = vld [vmem:[%s11 + $0x120] sm:$0xff]
  %v5724 = vld [vmem:[%s11 + $0x128] sm:$0xff]
  %v5725 = vld [vmem:[%s11 + $0x130] sm:$0xff]
  %v5726 = vld [vmem:[%s11 + $0x138] sm:$0xff]
  %v5727 = vld [vmem:[%s11 + $0x140] sm:$0xff]
  %v5728 = vld [vmem:[%s11 + $0x148] sm:$0xff]
  %v5729 = vld [vmem:[%s11 + $0x150] sm:$0xff]
  %v5730 = vld [vmem:[%s11 + $0x158] sm:$0xff]
  %v5731 = vld [vmem:[%s11 + $0x160] sm:$0xff]
  %v5732 = vld [vmem:[%s11 + $0x168] sm:$0xff]
  %v5733 = vld [vmem:[%s11 + $0x170] sm:$0xff]
  %v5734 = vld [vmem:[%s11 + $0x178] sm:$0xff]
  %v5735 = vld [vmem:[%s11 + $0x180] sm:$0xff]
  %v5736 = vld [vmem:[%s11 + $0x188] sm:$0xff]
  %v5737 = vld [vmem:[%s11 + $0x190] sm:$0xff]
  %v5738 = vld [vmem:[%s11 + $0x198] sm:$0xff]
  %v5739 = vld [vmem:[%s11 + $0x1a0] sm:$0xff]
  %v5740 = vld [vmem:[%s11 + $0x1a8] sm:$0xff]
  %v5741 = vld [vmem:[%s11 + $0x1b0] sm:$0xff]
  %v5742 = vld [vmem:[%s11 + $0x1b8] sm:$0xff]
  %v5743 = vld [vmem:[%s11 + $0x1c0] sm:$0xff]
  %v5744 = vld [vmem:[%s11 + $0x1c8] sm:$0xff]
  %v5745 = vld [vmem:[%s11 + $0x1d0] sm:$0xff]
  %v5746 = vld [vmem:[%s11 + $0x1d8] sm:$0xff]
  %v5748 = vsel %vm4949, %v5686, 0
  %5750 = vmatprep.subr.mxu0 %v5718
  %5751 = vmatpush1.msra.mxu0 %v5717
  %5752 = vmatprep.subr.mxu0 %v5716
  %5753 = vmatpush1.msra.mxu0 %v5715
  %5754 = vmatprep.subr.mxu0 %v5714
  %5755 = vmatpush1.msra.mxu0 %v5713
  %5756 = vmatprep.subr.mxu0 %v5712
  %5757 = vmatpush1.msra.mxu0 %v5711
  %5758 = vmatprep.subr.mxu0 %v5710
  %5759 = vmatpush1.msra.mxu0 %v5709
  %5760 = vmatprep.subr.mxu0 %v5708
  %5761 = vmatpush1.msra.mxu0 %v5707
  %5762 = vmatprep.subr.mxu0 %v5706
  %5763 = vmatpush1.msra.mxu0 %v5705
  %5764 = vmatprep.subr.mxu0 %v5704
  %5765 = vmatpush1.msra.mxu0 %v5703
  %5766 = vmatprep.subr.mxu0 %v5702
  %5767 = vmatpush1.msra.mxu0 %v5701
  %5768 = vmatprep.subr.mxu0 %v5700
  %5769 = vmatpush1.msra.mxu0 %v5699
  %5770 = vmatprep.subr.mxu0 %v5698
  %5771 = vmatpush1.msra.mxu0 %v5697
  %5772 = vmatprep.subr.mxu0 %v5696
  %5773 = vmatpush1.msra.mxu0 %v5695
  %5774 = vmatprep.subr.mxu0 %v5694
  %5775 = vmatpush1.msra.mxu0 %v5693
  %5776 = vmatprep.subr.mxu0 %v5692
  %5777 = vmatpush1.msra.mxu0 %v5691
  %5778 = vmatprep.subr.mxu0 %v5690
  %5779 = vmatpush1.msra.mxu0 %v5689
  %5780 = vmatprep.subr.mxu0 %v5688
  %5781 = vmatpush1.msra.mxu0 %v5687
  %5782 = vmatprep.subr.mxu0 0.0
  %5783 = vmatpush2.msra.mxu0 0.0
  %5784 = vmatprep.subr.mxu0 0.0
  %5785 = vmatpush2.msra.mxu0 0.0
  %5786 = vmatprep.subr.mxu0 %v5746
  %5787 = vmatpush2.msra.mxu0 %v5745
  %5788 = vmatprep.subr.mxu0 %v5744
  %5789 = vmatpush2.msra.mxu0 %v5743
  %5790 = vmatprep.subr.mxu0 %v5742
  %5791 = vmatpush2.msra.mxu0 %v5741
  %5792 = vmatprep.subr.mxu0 %v5740
  %5793 = vmatpush2.msra.mxu0 %v5739
  %5794 = vmatprep.subr.mxu0 %v5738
  %5795 = vmatpush2.msra.mxu0 %v5737
  %5796 = vmatprep.subr.mxu0 %v5736
  %5797 = vmatpush2.msra.mxu0 %v5735
  %5798 = vmatprep.subr.mxu0 %v5734
  %5799 = vmatpush2.msra.mxu0 %v5733
  %5800 = vmatprep.subr.mxu0 %v5732
  %5801 = vmatpush2.msra.mxu0 %v5731
  %5802 = vmatprep.subr.mxu0 %v5730
  %5803 = vmatpush2.msra.mxu0 %v5729
  %5804 = vmatprep.subr.mxu0 %v5728
  %5805 = vmatpush2.msra.mxu0 %v5727
  %5806 = vmatprep.subr.mxu0 %v5726
  %5807 = vmatpush2.msra.mxu0 %v5725
  %5808 = vmatprep.subr.mxu0 %v5724
  %5809 = vmatpush2.msra.mxu0 %v5723
  %5810 = vmatprep.subr.mxu0 %v5722
  %5811 = vmatpush2.msra.mxu0 %v5721
  %5812 = vmatprep.subr.mxu0 %v5720
  %5813 = vmatpush2.msra.mxu0 %v5719
  %5814 = vmatprep.mubr.f32.mxu0 %v5748
  %5815 = vmatmul.mubr.f32.gmra.mxu0 %v5679
  %v5816 = vpop.f32.mrf.mxu0
  %v5817 = vadd.f32 0.0, %v5816
  %v5818 = vpop.f32.mrf.mxu0
  %v5819 = vadd.f32 0.0, %v5818
  %5820 = vdwg.mxu0
  %5822 = vrot.lane.b32.xlu0 %v5817, 112
  %v5823 = vpop.permute.xlu0 %5822
  %5825 = vrot.lane.b32.xlu0 %v5817, 96
  %v5826 = vpop.permute.xlu0 %5825
  %5828 = vrot.lane.b32.xlu0 %v5817, 80
  %v5829 = vpop.permute.xlu0 %5828
  %5831 = vrot.lane.b32.xlu0 %v5817, 64
  %v5832 = vpop.permute.xlu0 %5831
  %5834 = vrot.lane.b32.xlu0 %v5817, 48
  %v5835 = vpop.permute.xlu0 %5834
  %5837 = vrot.lane.b32.xlu0 %v5817, 32
  %v5838 = vpop.permute.xlu0 %5837
  %5840 = vrot.lane.b32.xlu0 %v5817, 16
  %v5841 = vpop.permute.xlu0 %5840
  %5844 = vrot.lane.b32.xlu0 %v5819, 112
  %v5845 = vpop.permute.xlu0 %5844
  %5847 = vrot.lane.b32.xlu0 %v5819, 96
  %v5848 = vpop.permute.xlu0 %5847
  %5850 = vrot.lane.b32.xlu0 %v5819, 80
  %v5851 = vpop.permute.xlu0 %5850
  %5853 = vrot.lane.b32.xlu0 %v5819, 64
  %v5854 = vpop.permute.xlu0 %5853
  %5856 = vrot.lane.b32.xlu0 %v5819, 48
  %v5857 = vpop.permute.xlu0 %5856
  %5859 = vrot.lane.b32.xlu0 %v5819, 32
  %v5860 = vpop.permute.xlu0 %5859
  %5862 = vrot.lane.b32.xlu0 %v5819, 16
  %v5863 = vpop.permute.xlu0 %5862
  %v5865 = vcombine.low %v5817, %v5826
  %v5866 = vcombine.high %v5817, %v5826
  %v5868 = vunpack.c.l.s4 1983009808
  %v5869 = vunpack.c.0.s8 %v5868
  %v5870 = vlaneseq
  %v5871 = vshrl.u32 %v5870, 7
  %v5872 = vsub.s32 %v5869, %v5871
  %v5873 = vrot.slane %v5865, %v5872
  %v5875 = vunpack.c.l.s4 1983009808
  %v5876 = vunpack.c.0.s8 %v5875
  %v5877 = vlaneseq
  %v5878 = vshrl.u32 %v5877, 7
  %v5879 = vsub.s32 %v5876, %v5878
  %v5880 = vrot.slane %v5866, %v5879
  %v5881 = vcombine.low %v5823, %v5829
  %v5882 = vcombine.high %v5823, %v5829
  %v5884 = vunpack.c.l.s4 1983009808
  %v5885 = vunpack.c.0.s8 %v5884
  %v5886 = vlaneseq
  %v5887 = vshrl.u32 %v5886, 7
  %v5888 = vsub.s32 %v5885, %v5887
  %v5889 = vrot.slane %v5881, %v5888
  %v5891 = vunpack.c.l.s4 1983009808
  %v5892 = vunpack.c.0.s8 %v5891
  %v5893 = vlaneseq
  %v5894 = vshrl.u32 %v5893, 7
  %v5895 = vsub.s32 %v5892, %v5894
  %v5896 = vrot.slane %v5882, %v5895
  %v5897 = vcombine.low %v5832, %v5838
  %v5898 = vcombine.high %v5832, %v5838
  %v5900 = vunpack.c.l.s4 1983009808
  %v5901 = vunpack.c.0.s8 %v5900
  %v5902 = vlaneseq
  %v5903 = vshrl.u32 %v5902, 7
  %v5904 = vsub.s32 %v5901, %v5903
  %v5905 = vrot.slane %v5897, %v5904
  %v5907 = vunpack.c.l.s4 1983009808
  %v5908 = vunpack.c.0.s8 %v5907
  %v5909 = vlaneseq
  %v5910 = vshrl.u32 %v5909, 7
  %v5911 = vsub.s32 %v5908, %v5910
  %v5912 = vrot.slane %v5898, %v5911
  %v5913 = vcombine.low %v5835, %v5841
  %v5914 = vcombine.high %v5835, %v5841
  %v5916 = vunpack.c.l.s4 1983009808
  %v5917 = vunpack.c.0.s8 %v5916
  %v5918 = vlaneseq
  %v5919 = vshrl.u32 %v5918, 7
  %v5920 = vsub.s32 %v5917, %v5919
  %v5921 = vrot.slane %v5913, %v5920
  %v5923 = vunpack.c.l.s4 1983009808
  %v5924 = vunpack.c.0.s8 %v5923
  %v5925 = vlaneseq
  %v5926 = vshrl.u32 %v5925, 7
  %v5927 = vsub.s32 %v5924, %v5926
  %v5928 = vrot.slane %v5914, %v5927
  %v5929 = vcombine.low %v5873, %v5889
  %v5930 = vcombine.high %v5873, %v5889
  %v5932 = vunpack.c.l.s4 1934713408
  %v5933 = vunpack.c.0.s8 %v5932
  %v5934 = vlaneseq
  %v5935 = vshrl.u32 %v5934, 7
  %v5936 = vsub.s32 %v5933, %v5935
  %v5937 = vrot.slane %v5929, %v5936
  %v5939 = vunpack.c.l.s4 1934713408
  %v5940 = vunpack.c.0.s8 %v5939
  %v5941 = vlaneseq
  %v5942 = vshrl.u32 %v5941, 7
  %v5943 = vsub.s32 %v5940, %v5942
  %v5944 = vrot.slane %v5930, %v5943
  %v5945 = vcombine.low %v5880, %v5896
  %v5946 = vcombine.high %v5880, %v5896
  %v5948 = vunpack.c.l.s4 1934713408
  %v5949 = vunpack.c.0.s8 %v5948
  %v5950 = vlaneseq
  %v5951 = vshrl.u32 %v5950, 7
  %v5952 = vsub.s32 %v5949, %v5951
  %v5953 = vrot.slane %v5945, %v5952
  %v5955 = vunpack.c.l.s4 1934713408
  %v5956 = vunpack.c.0.s8 %v5955
  %v5957 = vlaneseq
  %v5958 = vshrl.u32 %v5957, 7
  %v5959 = vsub.s32 %v5956, %v5958
  %v5960 = vrot.slane %v5946, %v5959
  %v5961 = vcombine.low %v5905, %v5921
  %v5962 = vcombine.high %v5905, %v5921
  %v5964 = vunpack.c.l.s4 1934713408
  %v5965 = vunpack.c.0.s8 %v5964
  %v5966 = vlaneseq
  %v5967 = vshrl.u32 %v5966, 7
  %v5968 = vsub.s32 %v5965, %v5967
  %v5969 = vrot.slane %v5961, %v5968
  %v5971 = vunpack.c.l.s4 1934713408
  %v5972 = vunpack.c.0.s8 %v5971
  %v5973 = vlaneseq
  %v5974 = vshrl.u32 %v5973, 7
  %v5975 = vsub.s32 %v5972, %v5974
  %v5976 = vrot.slane %v5962, %v5975
  %v5977 = vcombine.low %v5912, %v5928
  %v5978 = vcombine.high %v5912, %v5928
  %v5980 = vunpack.c.l.s4 1934713408
  %v5981 = vunpack.c.0.s8 %v5980
  %v5982 = vlaneseq
  %v5983 = vshrl.u32 %v5982, 7
  %v5984 = vsub.s32 %v5981, %v5983
  %v5985 = vrot.slane %v5977, %v5984
  %v5987 = vunpack.c.l.s4 1934713408
  %v5988 = vunpack.c.0.s8 %v5987
  %v5989 = vlaneseq
  %v5990 = vshrl.u32 %v5989, 7
  %v5991 = vsub.s32 %v5988, %v5990
  %v5992 = vrot.slane %v5978, %v5991
  %v5993 = vcombine.low %v5937, %v5969
  %v5994 = vcombine.high %v5937, %v5969
  %v5995 = vcombine.low %v5944, %v5976
  %v5996 = vcombine.high %v5944, %v5976
  %v5997 = vcombine.low %v5953, %v5985
  %v5998 = vcombine.high %v5953, %v5985
  %v5999 = vcombine.low %v5960, %v5992
  %v6000 = vcombine.high %v5960, %v5992
  %v6001 = vcombine.low %v5819, %v5848
  %v6002 = vcombine.high %v5819, %v5848
  %v6004 = vunpack.c.l.s4 1983009808
  %v6005 = vunpack.c.0.s8 %v6004
  %v6006 = vlaneseq
  %v6007 = vshrl.u32 %v6006, 7
  %v6008 = vsub.s32 %v6005, %v6007
  %v6009 = vrot.slane %v6001, %v6008
  %v6011 = vunpack.c.l.s4 1983009808
  %v6012 = vunpack.c.0.s8 %v6011
  %v6013 = vlaneseq
  %v6014 = vshrl.u32 %v6013, 7
  %v6015 = vsub.s32 %v6012, %v6014
  %v6016 = vrot.slane %v6002, %v6015
  %v6017 = vcombine.low %v5845, %v5851
  %v6018 = vcombine.high %v5845, %v5851
  %v6020 = vunpack.c.l.s4 1983009808
  %v6021 = vunpack.c.0.s8 %v6020
  %v6022 = vlaneseq
  %v6023 = vshrl.u32 %v6022, 7
  %v6024 = vsub.s32 %v6021, %v6023
  %v6025 = vrot.slane %v6017, %v6024
  %v6027 = vunpack.c.l.s4 1983009808
  %v6028 = vunpack.c.0.s8 %v6027
  %v6029 = vlaneseq
  %v6030 = vshrl.u32 %v6029, 7
  %v6031 = vsub.s32 %v6028, %v6030
  %v6032 = vrot.slane %v6018, %v6031
  %v6033 = vcombine.low %v5854, %v5860
  %v6034 = vcombine.high %v5854, %v5860
  %v6036 = vunpack.c.l.s4 1983009808
  %v6037 = vunpack.c.0.s8 %v6036
  %v6038 = vlaneseq
  %v6039 = vshrl.u32 %v6038, 7
  %v6040 = vsub.s32 %v6037, %v6039
  %v6041 = vrot.slane %v6033, %v6040
  %v6043 = vunpack.c.l.s4 1983009808
  %v6044 = vunpack.c.0.s8 %v6043
  %v6045 = vlaneseq
  %v6046 = vshrl.u32 %v6045, 7
  %v6047 = vsub.s32 %v6044, %v6046
  %v6048 = vrot.slane %v6034, %v6047
  %v6049 = vcombine.low %v5857, %v5863
  %v6050 = vcombine.high %v5857, %v5863
  %v6052 = vunpack.c.l.s4 1983009808
  %v6053 = vunpack.c.0.s8 %v6052
  %v6054 = vlaneseq
  %v6055 = vshrl.u32 %v6054, 7
  %v6056 = vsub.s32 %v6053, %v6055
  %v6057 = vrot.slane %v6049, %v6056
  %v6059 = vunpack.c.l.s4 1983009808
  %v6060 = vunpack.c.0.s8 %v6059
  %v6061 = vlaneseq
  %v6062 = vshrl.u32 %v6061, 7
  %v6063 = vsub.s32 %v6060, %v6062
  %v6064 = vrot.slane %v6050, %v6063
  %v6065 = vcombine.low %v6009, %v6025
  %v6066 = vcombine.high %v6009, %v6025
  %v6068 = vunpack.c.l.s4 1934713408
  %v6069 = vunpack.c.0.s8 %v6068
  %v6070 = vlaneseq
  %v6071 = vshrl.u32 %v6070, 7
  %v6072 = vsub.s32 %v6069, %v6071
  %v6073 = vrot.slane %v6065, %v6072
  %v6075 = vunpack.c.l.s4 1934713408
  %v6076 = vunpack.c.0.s8 %v6075
  %v6077 = vlaneseq
  %v6078 = vshrl.u32 %v6077, 7
  %v6079 = vsub.s32 %v6076, %v6078
  %v6080 = vrot.slane %v6066, %v6079
  %v6081 = vcombine.low %v6016, %v6032
  %v6082 = vcombine.high %v6016, %v6032
  %v6084 = vunpack.c.l.s4 1934713408
  %v6085 = vunpack.c.0.s8 %v6084
  %v6086 = vlaneseq
  %v6087 = vshrl.u32 %v6086, 7
  %v6088 = vsub.s32 %v6085, %v6087
  %v6089 = vrot.slane %v6081, %v6088
  %v6091 = vunpack.c.l.s4 1934713408
  %v6092 = vunpack.c.0.s8 %v6091
  %v6093 = vlaneseq
  %v6094 = vshrl.u32 %v6093, 7
  %v6095 = vsub.s32 %v6092, %v6094
  %v6096 = vrot.slane %v6082, %v6095
  %v6097 = vcombine.low %v6041, %v6057
  %v6098 = vcombine.high %v6041, %v6057
  %v6100 = vunpack.c.l.s4 1934713408
  %v6101 = vunpack.c.0.s8 %v6100
  %v6102 = vlaneseq
  %v6103 = vshrl.u32 %v6102, 7
  %v6104 = vsub.s32 %v6101, %v6103
  %v6105 = vrot.slane %v6097, %v6104
  %v6107 = vunpack.c.l.s4 1934713408
  %v6108 = vunpack.c.0.s8 %v6107
  %v6109 = vlaneseq
  %v6110 = vshrl.u32 %v6109, 7
  %v6111 = vsub.s32 %v6108, %v6110
  %v6112 = vrot.slane %v6098, %v6111
  %v6113 = vcombine.low %v6048, %v6064
  %v6114 = vcombine.high %v6048, %v6064
  %v6116 = vunpack.c.l.s4 1934713408
  %v6117 = vunpack.c.0.s8 %v6116
  %v6118 = vlaneseq
  %v6119 = vshrl.u32 %v6118, 7
  %v6120 = vsub.s32 %v6117, %v6119
  %v6121 = vrot.slane %v6113, %v6120
  %v6123 = vunpack.c.l.s4 1934713408
  %v6124 = vunpack.c.0.s8 %v6123
  %v6125 = vlaneseq
  %v6126 = vshrl.u32 %v6125, 7
  %v6127 = vsub.s32 %v6124, %v6126
  %v6128 = vrot.slane %v6114, %v6127
  %v6129 = vcombine.low %v6073, %v6105
  %v6130 = vcombine.high %v6073, %v6105
  %v6131 = vcombine.low %v6080, %v6112
  %v6132 = vcombine.high %v6080, %v6112
  %v6133 = vcombine.low %v6089, %v6121
  %v6134 = vcombine.high %v6089, %v6121
  %v6135 = vcombine.low %v6096, %v6128
  %v6136 = vcombine.high %v6096, %v6128
  %v6137 = vld [vmem:[%s2] sm:$0xff]
  %v6138 = vld [vmem:[%s2 + $0x8] sm:$0xff]
  %v6139 = vld [vmem:[%s2 + $0x10] sm:$0xff]
  %v6140 = vld [vmem:[%s2 + $0x18] sm:$0xff]
  %v6141 = vld [vmem:[%s2 + $0x20] sm:$0xff]
  %v6142 = vld [vmem:[%s2 + $0x28] sm:$0xff]
  %v6143 = vld [vmem:[%s2 + $0x30] sm:$0xff]
  %v6144 = vld [vmem:[%s2 + $0x38] sm:$0xff]
  %v6145 = vld [vmem:[%s2 + $0x40] sm:$0xff]
  %v6146 = vld [vmem:[%s2 + $0x48] sm:$0xff]
  %v6147 = vld [vmem:[%s2 + $0x50] sm:$0xff]
  %v6148 = vld [vmem:[%s2 + $0x58] sm:$0xff]
  %v6149 = vld [vmem:[%s2 + $0x60] sm:$0xff]
  %v6150 = vld [vmem:[%s2 + $0x68] sm:$0xff]
  %v6151 = vld [vmem:[%s2 + $0x70] sm:$0xff]
  %v6152 = vld [vmem:[%s2 + $0x78] sm:$0xff]
  %6153 = vmatprep.subr.mxu0 0.0
  %6154 = vmatpush1.xpose.msra.mxu0 0.0
  %6155 = vmatprep.subr.mxu0 0.0
  %6156 = vmatpush1.xpose.msra.mxu0 0.0
  %6157 = vmatprep.subr.mxu0 0.0
  %6158 = vmatpush1.xpose.msra.mxu0 0.0
  %6159 = vmatprep.subr.mxu0 0.0
  %6160 = vmatpush1.xpose.msra.mxu0 0.0
  %6161 = vmatprep.subr.mxu0 0.0
  %6162 = vmatpush1.xpose.msra.mxu0 0.0
  %6163 = vmatprep.subr.mxu0 0.0
  %6164 = vmatpush1.xpose.msra.mxu0 0.0
  %6165 = vmatprep.subr.mxu0 0.0
  %6166 = vmatpush1.xpose.msra.mxu0 0.0
  %6167 = vmatprep.subr.mxu0 0.0
  %6168 = vmatpush1.xpose.msra.mxu0 0.0
  %6169 = vmatprep.subr.mxu0 0.0
  %6170 = vmatpush1.xpose.msra.mxu0 0.0
  %6171 = vmatprep.subr.mxu0 0.0
  %6172 = vmatpush1.xpose.msra.mxu0 0.0
  %6173 = vmatprep.subr.mxu0 0.0
  %6174 = vmatpush1.xpose.msra.mxu0 0.0
  %6175 = vmatprep.subr.mxu0 0.0
  %6176 = vmatpush1.xpose.msra.mxu0 0.0
  %6177 = vmatprep.subr.mxu0 0.0
  %6178 = vmatpush1.xpose.msra.mxu0 0.0
  %6179 = vmatprep.subr.mxu0 0.0
  %6180 = vmatpush1.xpose.msra.mxu0 0.0
  %6181 = vmatprep.subr.mxu0 0.0
  %6182 = vmatpush1.xpose.msra.mxu0 %v3859
  %6183 = vmatprep.subr.mxu0 0.0
  %6184 = vmatpush1.xpose.msra.mxu0 %v3856
  %6185 = vmatprep.subr.mxu0 0.0
  %6186 = vmatpush2.xpose.msra.mxu0 0.0
  %6187 = vmatprep.subr.mxu0 0.0
  %6188 = vmatpush2.xpose.msra.mxu0 0.0
  %6189 = vmatprep.subr.mxu0 0.0
  %6190 = vmatpush2.xpose.msra.mxu0 0.0
  %6191 = vmatprep.subr.mxu0 0.0
  %6192 = vmatpush2.xpose.msra.mxu0 0.0
  %6193 = vmatprep.subr.mxu0 0.0
  %6194 = vmatpush2.xpose.msra.mxu0 0.0
  %6195 = vmatprep.subr.mxu0 0.0
  %6196 = vmatpush2.xpose.msra.mxu0 0.0
  %6197 = vmatprep.subr.mxu0 0.0
  %6198 = vmatpush2.xpose.msra.mxu0 0.0
  %6199 = vmatprep.subr.mxu0 0.0
  %6200 = vmatpush2.xpose.msra.mxu0 0.0
  %6201 = vmatprep.subr.mxu0 0.0
  %6202 = vmatpush2.xpose.msra.mxu0 0.0
  %6203 = vmatprep.subr.mxu0 0.0
  %6204 = vmatpush2.xpose.msra.mxu0 0.0
  %6205 = vmatprep.subr.mxu0 0.0
  %6206 = vmatpush2.xpose.msra.mxu0 0.0
  %6207 = vmatprep.subr.mxu0 0.0
  %6208 = vmatpush2.xpose.msra.mxu0 0.0
  %6209 = vmatprep.subr.mxu0 0.0
  %6210 = vmatpush2.xpose.msra.mxu0 0.0
  %6211 = vmatprep.subr.mxu0 0.0
  %6212 = vmatpush2.xpose.msra.mxu0 0.0
  %6213 = vmatprep.subr.mxu0 0.0
  %6214 = vmatpush2.xpose.msra.mxu0 0.0
  %6215 = vmatprep.subr.mxu0 0.0
  %6216 = vmatpush2.xpose.msra.mxu0 0.0
  %6217 = vmatprep.mubr.f32.mxu0 0.0
  %6218 = vmatmul.mubr.f32.gmra.mxu0 %v3184
  %v6219 = vpop.f32.mrf.mxu0
  %v6220 = vadd.f32 %v5196, %v6219
  %v6221 = vpop.f32.mrf.mxu0
  %6222 = vmatprep.mubr.f32.mxu0 0.0
  %6223 = vmatmul.mubr.f32.gmra.mxu0 %v3187
  %v6224 = vpop.f32.mrf.mxu0
  %v6225 = vadd.f32 %v5332, %v6224
  %v6226 = vpop.f32.mrf.mxu0
  %6227 = vdwg.mxu0
  %6228 = vmatprep.subr.mxu0 0.0
  %6229 = vmatpush1.xpose.msra.mxu0 0.0
  %6230 = vmatprep.subr.mxu0 0.0
  %6231 = vmatpush1.xpose.msra.mxu0 0.0
  %6232 = vmatprep.subr.mxu0 0.0
  %6233 = vmatpush1.xpose.msra.mxu0 0.0
  %6234 = vmatprep.subr.mxu0 0.0
  %6235 = vmatpush1.xpose.msra.mxu0 0.0
  %6236 = vmatprep.subr.mxu0 0.0
  %6237 = vmatpush1.xpose.msra.mxu0 0.0
  %6238 = vmatprep.subr.mxu0 0.0
  %6239 = vmatpush1.xpose.msra.mxu0 0.0
  %6240 = vmatprep.subr.mxu0 0.0
  %6241 = vmatpush1.xpose.msra.mxu0 0.0
  %6242 = vmatprep.subr.mxu0 0.0
  %6243 = vmatpush1.xpose.msra.mxu0 0.0
  %6244 = vmatprep.subr.mxu0 0.0
  %6245 = vmatpush1.xpose.msra.mxu0 0.0
  %6246 = vmatprep.subr.mxu0 0.0
  %6247 = vmatpush1.xpose.msra.mxu0 0.0
  %6248 = vmatprep.subr.mxu0 0.0
  %6249 = vmatpush1.xpose.msra.mxu0 0.0
  %6250 = vmatprep.subr.mxu0 0.0
  %6251 = vmatpush1.xpose.msra.mxu0 0.0
  %6252 = vmatprep.subr.mxu0 0.0
  %6253 = vmatpush1.xpose.msra.mxu0 0.0
  %6254 = vmatprep.subr.mxu0 0.0
  %6255 = vmatpush1.xpose.msra.mxu0 0.0
  %6256 = vmatprep.subr.mxu0 0.0
  %6257 = vmatpush1.xpose.msra.mxu0 %v3946
  %6258 = vmatprep.subr.mxu0 0.0
  %6259 = vmatpush1.xpose.msra.mxu0 %v3943
  %6260 = vmatprep.subr.mxu0 0.0
  %6261 = vmatpush2.xpose.msra.mxu0 0.0
  %6262 = vmatprep.subr.mxu0 0.0
  %6263 = vmatpush2.xpose.msra.mxu0 0.0
  %6264 = vmatprep.subr.mxu0 0.0
  %6265 = vmatpush2.xpose.msra.mxu0 0.0
  %6266 = vmatprep.subr.mxu0 0.0
  %6267 = vmatpush2.xpose.msra.mxu0 0.0
  %6268 = vmatprep.subr.mxu0 0.0
  %6269 = vmatpush2.xpose.msra.mxu0 0.0
  %6270 = vmatprep.subr.mxu0 0.0
  %6271 = vmatpush2.xpose.msra.mxu0 0.0
  %6272 = vmatprep.subr.mxu0 0.0
  %6273 = vmatpush2.xpose.msra.mxu0 0.0
  %6274 = vmatprep.subr.mxu0 0.0
  %6275 = vmatpush2.xpose.msra.mxu0 0.0
  %6276 = vmatprep.subr.mxu0 0.0
  %6277 = vmatpush2.xpose.msra.mxu0 0.0
  %6278 = vmatprep.subr.mxu0 0.0
  %6279 = vmatpush2.xpose.msra.mxu0 0.0
  %6280 = vmatprep.subr.mxu0 0.0
  %6281 = vmatpush2.xpose.msra.mxu0 0.0
  %6282 = vmatprep.subr.mxu0 0.0
  %6283 = vmatpush2.xpose.msra.mxu0 0.0
  %6284 = vmatprep.subr.mxu0 0.0
  %6285 = vmatpush2.xpose.msra.mxu0 0.0
  %6286 = vmatprep.subr.mxu0 0.0
  %6287 = vmatpush2.xpose.msra.mxu0 0.0
  %6288 = vmatprep.subr.mxu0 0.0
  %6289 = vmatpush2.xpose.msra.mxu0 0.0
  %6290 = vmatprep.subr.mxu0 0.0
  %6291 = vmatpush2.xpose.msra.mxu0 0.0
  %6292 = vmatprep.mubr.f32.mxu0 0.0
  %6293 = vmatmul.mubr.f32.gmra.mxu0 %v3271
  %v6294 = vpop.f32.mrf.mxu0
  %v6295 = vadd.f32 %v5197, %v6294
  %v6296 = vpop.f32.mrf.mxu0
  %6297 = vmatprep.mubr.f32.mxu0 0.0
  %6298 = vmatmul.mubr.f32.gmra.mxu0 %v3274
  %v6299 = vpop.f32.mrf.mxu0
  %v6300 = vadd.f32 %v5333, %v6299
  %v6301 = vpop.f32.mrf.mxu0
  %6302 = vdwg.mxu0
  %6303 = vmatprep.subr.mxu0 0.0
  %6304 = vmatpush1.xpose.msra.mxu0 0.0
  %6305 = vmatprep.subr.mxu0 0.0
  %6306 = vmatpush1.xpose.msra.mxu0 0.0
  %6307 = vmatprep.subr.mxu0 0.0
  %6308 = vmatpush1.xpose.msra.mxu0 0.0
  %6309 = vmatprep.subr.mxu0 0.0
  %6310 = vmatpush1.xpose.msra.mxu0 0.0
  %6311 = vmatprep.subr.mxu0 0.0
  %6312 = vmatpush1.xpose.msra.mxu0 0.0
  %6313 = vmatprep.subr.mxu0 0.0
  %6314 = vmatpush1.xpose.msra.mxu0 0.0
  %6315 = vmatprep.subr.mxu0 0.0
  %6316 = vmatpush1.xpose.msra.mxu0 0.0
  %6317 = vmatprep.subr.mxu0 0.0
  %6318 = vmatpush1.xpose.msra.mxu0 0.0
  %6319 = vmatprep.subr.mxu0 0.0
  %6320 = vmatpush1.xpose.msra.mxu0 0.0
  %6321 = vmatprep.subr.mxu0 0.0
  %6322 = vmatpush1.xpose.msra.mxu0 0.0
  %6323 = vmatprep.subr.mxu0 0.0
  %6324 = vmatpush1.xpose.msra.mxu0 0.0
  %6325 = vmatprep.subr.mxu0 0.0
  %6326 = vmatpush1.xpose.msra.mxu0 0.0
  %6327 = vmatprep.subr.mxu0 0.0
  %6328 = vmatpush1.xpose.msra.mxu0 0.0
  %6329 = vmatprep.subr.mxu0 0.0
  %6330 = vmatpush1.xpose.msra.mxu0 0.0
  %6331 = vmatprep.subr.mxu0 0.0
  %6332 = vmatpush1.xpose.msra.mxu0 %v4027
  %6333 = vmatprep.subr.mxu0 0.0
  %6334 = vmatpush1.xpose.msra.mxu0 %v4024
  %6335 = vmatprep.subr.mxu0 0.0
  %6336 = vmatpush2.xpose.msra.mxu0 0.0
  %6337 = vmatprep.subr.mxu0 0.0
  %6338 = vmatpush2.xpose.msra.mxu0 0.0
  %6339 = vmatprep.subr.mxu0 0.0
  %6340 = vmatpush2.xpose.msra.mxu0 0.0
  %6341 = vmatprep.subr.mxu0 0.0
  %6342 = vmatpush2.xpose.msra.mxu0 0.0
  %6343 = vmatprep.subr.mxu0 0.0
  %6344 = vmatpush2.xpose.msra.mxu0 0.0
  %6345 = vmatprep.subr.mxu0 0.0
  %6346 = vmatpush2.xpose.msra.mxu0 0.0
  %6347 = vmatprep.subr.mxu0 0.0
  %6348 = vmatpush2.xpose.msra.mxu0 0.0
  %6349 = vmatprep.subr.mxu0 0.0
  %6350 = vmatpush2.xpose.msra.mxu0 0.0
  %6351 = vmatprep.subr.mxu0 0.0
  %6352 = vmatpush2.xpose.msra.mxu0 0.0
  %6353 = vmatprep.subr.mxu0 0.0
  %6354 = vmatpush2.xpose.msra.mxu0 0.0
  %6355 = vmatprep.subr.mxu0 0.0
  %6356 = vmatpush2.xpose.msra.mxu0 0.0
  %6357 = vmatprep.subr.mxu0 0.0
  %6358 = vmatpush2.xpose.msra.mxu0 0.0
  %6359 = vmatprep.subr.mxu0 0.0
  %6360 = vmatpush2.xpose.msra.mxu0 0.0
  %6361 = vmatprep.subr.mxu0 0.0
  %6362 = vmatpush2.xpose.msra.mxu0 0.0
  %6363 = vmatprep.subr.mxu0 0.0
  %6364 = vmatpush2.xpose.msra.mxu0 0.0
  %6365 = vmatprep.subr.mxu0 0.0
  %6366 = vmatpush2.xpose.msra.mxu0 0.0
  %6367 = vmatprep.mubr.f32.mxu0 0.0
  %6368 = vmatmul.mubr.f32.gmra.mxu0 %v3352
  %v6369 = vpop.f32.mrf.mxu0
  %v6370 = vadd.f32 %v5198, %v6369
  %v6371 = vpop.f32.mrf.mxu0
  %6372 = vmatprep.mubr.f32.mxu0 0.0
  %6373 = vmatmul.mubr.f32.gmra.mxu0 %v3355
  %v6374 = vpop.f32.mrf.mxu0
  %v6375 = vadd.f32 %v5334, %v6374
  %v6376 = vpop.f32.mrf.mxu0
  %6377 = vdwg.mxu0
  %6378 = vmatprep.subr.mxu0 0.0
  %6379 = vmatpush1.xpose.msra.mxu0 0.0
  %6380 = vmatprep.subr.mxu0 0.0
  %6381 = vmatpush1.xpose.msra.mxu0 0.0
  %6382 = vmatprep.subr.mxu0 0.0
  %6383 = vmatpush1.xpose.msra.mxu0 0.0
  %6384 = vmatprep.subr.mxu0 0.0
  %6385 = vmatpush1.xpose.msra.mxu0 0.0
  %6386 = vmatprep.subr.mxu0 0.0
  %6387 = vmatpush1.xpose.msra.mxu0 0.0
  %6388 = vmatprep.subr.mxu0 0.0
  %6389 = vmatpush1.xpose.msra.mxu0 0.0
  %6390 = vmatprep.subr.mxu0 0.0
  %6391 = vmatpush1.xpose.msra.mxu0 0.0
  %6392 = vmatprep.subr.mxu0 0.0
  %6393 = vmatpush1.xpose.msra.mxu0 0.0
  %6394 = vmatprep.subr.mxu0 0.0
  %6395 = vmatpush1.xpose.msra.mxu0 0.0
  %6396 = vmatprep.subr.mxu0 0.0
  %6397 = vmatpush1.xpose.msra.mxu0 0.0
  %6398 = vmatprep.subr.mxu0 0.0
  %6399 = vmatpush1.xpose.msra.mxu0 0.0
  %6400 = vmatprep.subr.mxu0 0.0
  %6401 = vmatpush1.xpose.msra.mxu0 0.0
  %6402 = vmatprep.subr.mxu0 0.0
  %6403 = vmatpush1.xpose.msra.mxu0 0.0
  %6404 = vmatprep.subr.mxu0 0.0
  %6405 = vmatpush1.xpose.msra.mxu0 0.0
  %6406 = vmatprep.subr.mxu0 0.0
  %6407 = vmatpush1.xpose.msra.mxu0 %v4114
  %6408 = vmatprep.subr.mxu0 0.0
  %6409 = vmatpush1.xpose.msra.mxu0 %v4111
  %6410 = vmatprep.subr.mxu0 0.0
  %6411 = vmatpush2.xpose.msra.mxu0 0.0
  %6412 = vmatprep.subr.mxu0 0.0
  %6413 = vmatpush2.xpose.msra.mxu0 0.0
  %6414 = vmatprep.subr.mxu0 0.0
  %6415 = vmatpush2.xpose.msra.mxu0 0.0
  %6416 = vmatprep.subr.mxu0 0.0
  %6417 = vmatpush2.xpose.msra.mxu0 0.0
  %6418 = vmatprep.subr.mxu0 0.0
  %6419 = vmatpush2.xpose.msra.mxu0 0.0
  %6420 = vmatprep.subr.mxu0 0.0
  %6421 = vmatpush2.xpose.msra.mxu0 0.0
  %6422 = vmatprep.subr.mxu0 0.0
  %6423 = vmatpush2.xpose.msra.mxu0 0.0
  %6424 = vmatprep.subr.mxu0 0.0
  %6425 = vmatpush2.xpose.msra.mxu0 0.0
  %6426 = vmatprep.subr.mxu0 0.0
  %6427 = vmatpush2.xpose.msra.mxu0 0.0
  %6428 = vmatprep.subr.mxu0 0.0
  %6429 = vmatpush2.xpose.msra.mxu0 0.0
  %6430 = vmatprep.subr.mxu0 0.0
  %6431 = vmatpush2.xpose.msra.mxu0 0.0
  %6432 = vmatprep.subr.mxu0 0.0
  %6433 = vmatpush2.xpose.msra.mxu0 0.0
  %6434 = vmatprep.subr.mxu0 0.0
  %6435 = vmatpush2.xpose.msra.mxu0 0.0
  %6436 = vmatprep.subr.mxu0 0.0
  %6437 = vmatpush2.xpose.msra.mxu0 0.0
  %6438 = vmatprep.subr.mxu0 0.0
  %6439 = vmatpush2.xpose.msra.mxu0 0.0
  %6440 = vmatprep.subr.mxu0 0.0
  %6441 = vmatpush2.xpose.msra.mxu0 0.0
  %6442 = vmatprep.mubr.f32.mxu0 0.0
  %6443 = vmatmul.mubr.f32.gmra.mxu0 %v3439
  %v6444 = vpop.f32.mrf.mxu0
  %v6445 = vadd.f32 %v5199, %v6444
  %v6446 = vpop.f32.mrf.mxu0
  %6447 = vmatprep.mubr.f32.mxu0 0.0
  %6448 = vmatmul.mubr.f32.gmra.mxu0 %v3442
  %v6449 = vpop.f32.mrf.mxu0
  %v6450 = vadd.f32 %v5335, %v6449
  %v6451 = vpop.f32.mrf.mxu0
  %6452 = vdwg.mxu0
  %6453 = vmatprep.subr.mxu0 0.0
  %6454 = vmatpush1.xpose.msra.mxu0 0.0
  %6455 = vmatprep.subr.mxu0 0.0
  %6456 = vmatpush1.xpose.msra.mxu0 0.0
  %6457 = vmatprep.subr.mxu0 0.0
  %6458 = vmatpush1.xpose.msra.mxu0 0.0
  %6459 = vmatprep.subr.mxu0 0.0
  %6460 = vmatpush1.xpose.msra.mxu0 0.0
  %6461 = vmatprep.subr.mxu0 0.0
  %6462 = vmatpush1.xpose.msra.mxu0 0.0
  %6463 = vmatprep.subr.mxu0 0.0
  %6464 = vmatpush1.xpose.msra.mxu0 0.0
  %6465 = vmatprep.subr.mxu0 0.0
  %6466 = vmatpush1.xpose.msra.mxu0 0.0
  %6467 = vmatprep.subr.mxu0 0.0
  %6468 = vmatpush1.xpose.msra.mxu0 0.0
  %6469 = vmatprep.subr.mxu0 0.0
  %6470 = vmatpush1.xpose.msra.mxu0 0.0
  %6471 = vmatprep.subr.mxu0 0.0
  %6472 = vmatpush1.xpose.msra.mxu0 0.0
  %6473 = vmatprep.subr.mxu0 0.0
  %6474 = vmatpush1.xpose.msra.mxu0 0.0
  %6475 = vmatprep.subr.mxu0 0.0
  %6476 = vmatpush1.xpose.msra.mxu0 0.0
  %6477 = vmatprep.subr.mxu0 0.0
  %6478 = vmatpush1.xpose.msra.mxu0 0.0
  %6479 = vmatprep.subr.mxu0 0.0
  %6480 = vmatpush1.xpose.msra.mxu0 0.0
  %6481 = vmatprep.subr.mxu0 0.0
  %6482 = vmatpush1.xpose.msra.mxu0 %v4195
  %6483 = vmatprep.subr.mxu0 0.0
  %6484 = vmatpush1.xpose.msra.mxu0 %v4192
  %6485 = vmatprep.subr.mxu0 0.0
  %6486 = vmatpush2.xpose.msra.mxu0 0.0
  %6487 = vmatprep.subr.mxu0 0.0
  %6488 = vmatpush2.xpose.msra.mxu0 0.0
  %6489 = vmatprep.subr.mxu0 0.0
  %6490 = vmatpush2.xpose.msra.mxu0 0.0
  %6491 = vmatprep.subr.mxu0 0.0
  %6492 = vmatpush2.xpose.msra.mxu0 0.0
  %6493 = vmatprep.subr.mxu0 0.0
  %6494 = vmatpush2.xpose.msra.mxu0 0.0
  %6495 = vmatprep.subr.mxu0 0.0
  %6496 = vmatpush2.xpose.msra.mxu0 0.0
  %6497 = vmatprep.subr.mxu0 0.0
  %6498 = vmatpush2.xpose.msra.mxu0 0.0
  %6499 = vmatprep.subr.mxu0 0.0
  %6500 = vmatpush2.xpose.msra.mxu0 0.0
  %6501 = vmatprep.subr.mxu0 0.0
  %6502 = vmatpush2.xpose.msra.mxu0 0.0
  %6503 = vmatprep.subr.mxu0 0.0
  %6504 = vmatpush2.xpose.msra.mxu0 0.0
  %6505 = vmatprep.subr.mxu0 0.0
  %6506 = vmatpush2.xpose.msra.mxu0 0.0
  %6507 = vmatprep.subr.mxu0 0.0
  %6508 = vmatpush2.xpose.msra.mxu0 0.0
  %6509 = vmatprep.subr.mxu0 0.0
  %6510 = vmatpush2.xpose.msra.mxu0 0.0
  %6511 = vmatprep.subr.mxu0 0.0
  %6512 = vmatpush2.xpose.msra.mxu0 0.0
  %6513 = vmatprep.subr.mxu0 0.0
  %6514 = vmatpush2.xpose.msra.mxu0 0.0
  %6515 = vmatprep.subr.mxu0 0.0
  %6516 = vmatpush2.xpose.msra.mxu0 0.0
  %6517 = vmatprep.mubr.f32.mxu0 0.0
  %6518 = vmatmul.mubr.f32.gmra.mxu0 %v3520
  %v6519 = vpop.f32.mrf.mxu0
  %v6520 = vadd.f32 %v5200, %v6519
  %v6521 = vpop.f32.mrf.mxu0
  %6522 = vmatprep.mubr.f32.mxu0 0.0
  %6523 = vmatmul.mubr.f32.gmra.mxu0 %v3523
  %v6524 = vpop.f32.mrf.mxu0
  %v6525 = vadd.f32 %v5336, %v6524
  %v6526 = vpop.f32.mrf.mxu0
  %6527 = vdwg.mxu0
  %6528 = vmatprep.subr.mxu0 0.0
  %6529 = vmatpush1.xpose.msra.mxu0 0.0
  %6530 = vmatprep.subr.mxu0 0.0
  %6531 = vmatpush1.xpose.msra.mxu0 0.0
  %6532 = vmatprep.subr.mxu0 0.0
  %6533 = vmatpush1.xpose.msra.mxu0 0.0
  %6534 = vmatprep.subr.mxu0 0.0
  %6535 = vmatpush1.xpose.msra.mxu0 0.0
  %6536 = vmatprep.subr.mxu0 0.0
  %6537 = vmatpush1.xpose.msra.mxu0 0.0
  %6538 = vmatprep.subr.mxu0 0.0
  %6539 = vmatpush1.xpose.msra.mxu0 0.0
  %6540 = vmatprep.subr.mxu0 0.0
  %6541 = vmatpush1.xpose.msra.mxu0 0.0
  %6542 = vmatprep.subr.mxu0 0.0
  %6543 = vmatpush1.xpose.msra.mxu0 0.0
  %6544 = vmatprep.subr.mxu0 0.0
  %6545 = vmatpush1.xpose.msra.mxu0 0.0
  %6546 = vmatprep.subr.mxu0 0.0
  %6547 = vmatpush1.xpose.msra.mxu0 0.0
  %6548 = vmatprep.subr.mxu0 0.0
  %6549 = vmatpush1.xpose.msra.mxu0 0.0
  %6550 = vmatprep.subr.mxu0 0.0
  %6551 = vmatpush1.xpose.msra.mxu0 0.0
  %6552 = vmatprep.subr.mxu0 0.0
  %6553 = vmatpush1.xpose.msra.mxu0 0.0
  %6554 = vmatprep.subr.mxu0 0.0
  %6555 = vmatpush1.xpose.msra.mxu0 0.0
  %6556 = vmatprep.subr.mxu0 0.0
  %6557 = vmatpush1.xpose.msra.mxu0 %v4282
  %6558 = vmatprep.subr.mxu0 0.0
  %6559 = vmatpush1.xpose.msra.mxu0 %v4279
  %6560 = vmatprep.subr.mxu0 0.0
  %6561 = vmatpush2.xpose.msra.mxu0 0.0
  %6562 = vmatprep.subr.mxu0 0.0
  %6563 = vmatpush2.xpose.msra.mxu0 0.0
  %6564 = vmatprep.subr.mxu0 0.0
  %6565 = vmatpush2.xpose.msra.mxu0 0.0
  %6566 = vmatprep.subr.mxu0 0.0
  %6567 = vmatpush2.xpose.msra.mxu0 0.0
  %6568 = vmatprep.subr.mxu0 0.0
  %6569 = vmatpush2.xpose.msra.mxu0 0.0
  %6570 = vmatprep.subr.mxu0 0.0
  %6571 = vmatpush2.xpose.msra.mxu0 0.0
  %6572 = vmatprep.subr.mxu0 0.0
  %6573 = vmatpush2.xpose.msra.mxu0 0.0
  %6574 = vmatprep.subr.mxu0 0.0
  %6575 = vmatpush2.xpose.msra.mxu0 0.0
  %6576 = vmatprep.subr.mxu0 0.0
  %6577 = vmatpush2.xpose.msra.mxu0 0.0
  %6578 = vmatprep.subr.mxu0 0.0
  %6579 = vmatpush2.xpose.msra.mxu0 0.0
  %6580 = vmatprep.subr.mxu0 0.0
  %6581 = vmatpush2.xpose.msra.mxu0 0.0
  %6582 = vmatprep.subr.mxu0 0.0
  %6583 = vmatpush2.xpose.msra.mxu0 0.0
  %6584 = vmatprep.subr.mxu0 0.0
  %6585 = vmatpush2.xpose.msra.mxu0 0.0
  %6586 = vmatprep.subr.mxu0 0.0
  %6587 = vmatpush2.xpose.msra.mxu0 0.0
  %6588 = vmatprep.subr.mxu0 0.0
  %6589 = vmatpush2.xpose.msra.mxu0 0.0
  %6590 = vmatprep.subr.mxu0 0.0
  %6591 = vmatpush2.xpose.msra.mxu0 0.0
  %6592 = vmatprep.mubr.f32.mxu0 0.0
  %6593 = vmatmul.mubr.f32.gmra.mxu0 %v3607
  %v6594 = vpop.f32.mrf.mxu0
  %v6595 = vadd.f32 %v5201, %v6594
  %v6596 = vpop.f32.mrf.mxu0
  %6597 = vmatprep.mubr.f32.mxu0 0.0
  %6598 = vmatmul.mubr.f32.gmra.mxu0 %v3610
  %v6599 = vpop.f32.mrf.mxu0
  %v6600 = vadd.f32 %v5337, %v6599
  %v6601 = vpop.f32.mrf.mxu0
  %6602 = vdwg.mxu0
  %6603 = vmatprep.subr.mxu0 0.0
  %6604 = vmatpush1.xpose.msra.mxu0 0.0
  %6605 = vmatprep.subr.mxu0 0.0
  %6606 = vmatpush1.xpose.msra.mxu0 0.0
  %6607 = vmatprep.subr.mxu0 0.0
  %6608 = vmatpush1.xpose.msra.mxu0 0.0
  %6609 = vmatprep.subr.mxu0 0.0
  %6610 = vmatpush1.xpose.msra.mxu0 0.0
  %6611 = vmatprep.subr.mxu0 0.0
  %6612 = vmatpush1.xpose.msra.mxu0 0.0
  %6613 = vmatprep.subr.mxu0 0.0
  %6614 = vmatpush1.xpose.msra.mxu0 0.0
  %6615 = vmatprep.subr.mxu0 0.0
  %6616 = vmatpush1.xpose.msra.mxu0 0.0
  %6617 = vmatprep.subr.mxu0 0.0
  %6618 = vmatpush1.xpose.msra.mxu0 0.0
  %6619 = vmatprep.subr.mxu0 0.0
  %6620 = vmatpush1.xpose.msra.mxu0 0.0
  %6621 = vmatprep.subr.mxu0 0.0
  %6622 = vmatpush1.xpose.msra.mxu0 0.0
  %6623 = vmatprep.subr.mxu0 0.0
  %6624 = vmatpush1.xpose.msra.mxu0 0.0
  %6625 = vmatprep.subr.mxu0 0.0
  %6626 = vmatpush1.xpose.msra.mxu0 0.0
  %6627 = vmatprep.subr.mxu0 0.0
  %6628 = vmatpush1.xpose.msra.mxu0 0.0
  %6629 = vmatprep.subr.mxu0 0.0
  %6630 = vmatpush1.xpose.msra.mxu0 0.0
  %6631 = vmatprep.subr.mxu0 0.0
  %6632 = vmatpush1.xpose.msra.mxu0 %v4363
  %6633 = vmatprep.subr.mxu0 0.0
  %6634 = vmatpush1.xpose.msra.mxu0 %v4360
  %6635 = vmatprep.subr.mxu0 0.0
  %6636 = vmatpush2.xpose.msra.mxu0 0.0
  %6637 = vmatprep.subr.mxu0 0.0
  %6638 = vmatpush2.xpose.msra.mxu0 0.0
  %6639 = vmatprep.subr.mxu0 0.0
  %6640 = vmatpush2.xpose.msra.mxu0 0.0
  %6641 = vmatprep.subr.mxu0 0.0
  %6642 = vmatpush2.xpose.msra.mxu0 0.0
  %6643 = vmatprep.subr.mxu0 0.0
  %6644 = vmatpush2.xpose.msra.mxu0 0.0
  %6645 = vmatprep.subr.mxu0 0.0
  %6646 = vmatpush2.xpose.msra.mxu0 0.0
  %6647 = vmatprep.subr.mxu0 0.0
  %6648 = vmatpush2.xpose.msra.mxu0 0.0
  %6649 = vmatprep.subr.mxu0 0.0
  %6650 = vmatpush2.xpose.msra.mxu0 0.0
  %6651 = vmatprep.subr.mxu0 0.0
  %6652 = vmatpush2.xpose.msra.mxu0 0.0
  %6653 = vmatprep.subr.mxu0 0.0
  %6654 = vmatpush2.xpose.msra.mxu0 0.0
  %6655 = vmatprep.subr.mxu0 0.0
  %6656 = vmatpush2.xpose.msra.mxu0 0.0
  %6657 = vmatprep.subr.mxu0 0.0
  %6658 = vmatpush2.xpose.msra.mxu0 0.0
  %6659 = vmatprep.subr.mxu0 0.0
  %6660 = vmatpush2.xpose.msra.mxu0 0.0
  %6661 = vmatprep.subr.mxu0 0.0
  %6662 = vmatpush2.xpose.msra.mxu0 0.0
  %6663 = vmatprep.subr.mxu0 0.0
  %6664 = vmatpush2.xpose.msra.mxu0 0.0
  %6665 = vmatprep.subr.mxu0 0.0
  %6666 = vmatpush2.xpose.msra.mxu0 0.0
  %6667 = vmatprep.mubr.f32.mxu0 0.0
  %6668 = vmatmul.mubr.f32.gmra.mxu0 %v3688
  %v6669 = vpop.f32.mrf.mxu0
  %v6670 = vadd.f32 %v5202, %v6669
  %v6671 = vpop.f32.mrf.mxu0
  %6672 = vmatprep.mubr.f32.mxu0 0.0
  %6673 = vmatmul.mubr.f32.gmra.mxu0 %v3691
  %v6674 = vpop.f32.mrf.mxu0
  %v6675 = vadd.f32 %v5338, %v6674
  %v6676 = vpop.f32.mrf.mxu0
  %6677 = vdwg.mxu0
  %6678 = vmatprep.subr.mxu0 0.0
  %6679 = vmatpush1.xpose.msra.mxu0 0.0
  %6680 = vmatprep.subr.mxu0 0.0
  %6681 = vmatpush1.xpose.msra.mxu0 0.0
  %6682 = vmatprep.subr.mxu0 0.0
  %6683 = vmatpush1.xpose.msra.mxu0 0.0
  %6684 = vmatprep.subr.mxu0 0.0
  %6685 = vmatpush1.xpose.msra.mxu0 0.0
  %6686 = vmatprep.subr.mxu0 0.0
  %6687 = vmatpush1.xpose.msra.mxu0 0.0
  %6688 = vmatprep.subr.mxu0 0.0
  %6689 = vmatpush1.xpose.msra.mxu0 0.0
  %6690 = vmatprep.subr.mxu0 0.0
  %6691 = vmatpush1.xpose.msra.mxu0 0.0
  %6692 = vmatprep.subr.mxu0 0.0
  %6693 = vmatpush1.xpose.msra.mxu0 0.0
  %6694 = vmatprep.subr.mxu0 0.0
  %6695 = vmatpush1.xpose.msra.mxu0 0.0
  %6696 = vmatprep.subr.mxu0 0.0
  %6697 = vmatpush1.xpose.msra.mxu0 0.0
  %6698 = vmatprep.subr.mxu0 0.0
  %6699 = vmatpush1.xpose.msra.mxu0 0.0
  %6700 = vmatprep.subr.mxu0 0.0
  %6701 = vmatpush1.xpose.msra.mxu0 0.0
  %6702 = vmatprep.subr.mxu0 0.0
  %6703 = vmatpush1.xpose.msra.mxu0 0.0
  %6704 = vmatprep.subr.mxu0 0.0
  %6705 = vmatpush1.xpose.msra.mxu0 0.0
  %6706 = vmatprep.subr.mxu0 0.0
  %6707 = vmatpush1.xpose.msra.mxu0 %v4450
  %6708 = vmatprep.subr.mxu0 0.0
  %6709 = vmatpush1.xpose.msra.mxu0 %v4447
  %6710 = vmatprep.subr.mxu0 0.0
  %6711 = vmatpush2.xpose.msra.mxu0 0.0
  %6712 = vmatprep.subr.mxu0 0.0
  %6713 = vmatpush2.xpose.msra.mxu0 0.0
  %6714 = vmatprep.subr.mxu0 0.0
  %6715 = vmatpush2.xpose.msra.mxu0 0.0
  %6716 = vmatprep.subr.mxu0 0.0
  %6717 = vmatpush2.xpose.msra.mxu0 0.0
  %6718 = vmatprep.subr.mxu0 0.0
  %6719 = vmatpush2.xpose.msra.mxu0 0.0
  %6720 = vmatprep.subr.mxu0 0.0
  %6721 = vmatpush2.xpose.msra.mxu0 0.0
  %6722 = vmatprep.subr.mxu0 0.0
  %6723 = vmatpush2.xpose.msra.mxu0 0.0
  %6724 = vmatprep.subr.mxu0 0.0
  %6725 = vmatpush2.xpose.msra.mxu0 0.0
  %6726 = vmatprep.subr.mxu0 0.0
  %6727 = vmatpush2.xpose.msra.mxu0 0.0
  %6728 = vmatprep.subr.mxu0 0.0
  %6729 = vmatpush2.xpose.msra.mxu0 0.0
  %6730 = vmatprep.subr.mxu0 0.0
  %6731 = vmatpush2.xpose.msra.mxu0 0.0
  %6732 = vmatprep.subr.mxu0 0.0
  %6733 = vmatpush2.xpose.msra.mxu0 0.0
  %6734 = vmatprep.subr.mxu0 0.0
  %6735 = vmatpush2.xpose.msra.mxu0 0.0
  %6736 = vmatprep.subr.mxu0 0.0
  %6737 = vmatpush2.xpose.msra.mxu0 0.0
  %6738 = vmatprep.subr.mxu0 0.0
  %6739 = vmatpush2.xpose.msra.mxu0 0.0
  %6740 = vmatprep.subr.mxu0 0.0
  %6741 = vmatpush2.xpose.msra.mxu0 0.0
  %6742 = vmatprep.mubr.f32.mxu0 0.0
  %6743 = vmatmul.mubr.f32.gmra.mxu0 %v3775
  %v6744 = vpop.f32.mrf.mxu0
  %v6745 = vadd.f32 %v5203, %v6744
  %v6746 = vpop.f32.mrf.mxu0
  %6747 = vmatprep.mubr.f32.mxu0 0.0
  %6748 = vmatmul.mubr.f32.gmra.mxu0 %v3778
  %v6749 = vpop.f32.mrf.mxu0
  %v6750 = vadd.f32 %v5339, %v6749
  %v6751 = vpop.f32.mrf.mxu0
  %6752 = vdwg.mxu0
  %v6753 = vadd.f32 %v6220, %v5993
  %v6754 = vadd.f32 %v6225, %v6129
  %v6755 = vadd.f32 %v6295, %v5994
  %v6756 = vadd.f32 %v6300, %v6130
  %v6757 = vadd.f32 %v6370, %v5995
  %v6758 = vadd.f32 %v6375, %v6131
  %v6759 = vadd.f32 %v6445, %v5996
  %v6760 = vadd.f32 %v6450, %v6132
  %v6761 = vadd.f32 %v6520, %v5997
  %v6762 = vadd.f32 %v6525, %v6133
  %v6763 = vadd.f32 %v6595, %v5998
  %v6764 = vadd.f32 %v6600, %v6134
  %v6765 = vadd.f32 %v6670, %v5999
  %v6766 = vadd.f32 %v6675, %v6135
  %v6767 = vadd.f32 %v6745, %v6000
  %v6768 = vadd.f32 %v6750, %v6136
  %v6769 = vmul.f32 %v6753, 0.14433756
  %v6770 = vmul.f32 %v6754, 0.14433756
  %v6771 = vmul.f32 %v6755, 0.14433756
  %v6772 = vmul.f32 %v6756, 0.14433756
  %v6773 = vmul.f32 %v6757, 0.14433756
  %v6774 = vmul.f32 %v6758, 0.14433756
  %v6775 = vmul.f32 %v6759, 0.14433756
  %v6776 = vmul.f32 %v6760, 0.14433756
  %v6777 = vmul.f32 %v6761, 0.14433756
  %v6778 = vmul.f32 %v6762, 0.14433756
  %v6779 = vmul.f32 %v6763, 0.14433756
  %v6780 = vmul.f32 %v6764, 0.14433756
  %v6781 = vmul.f32 %v6765, 0.14433756
  %v6782 = vmul.f32 %v6766, 0.14433756
  %v6783 = vmul.f32 %v6767, 0.14433756
  %v6784 = vmul.f32 %v6768, 0.14433756
  %v6785 = vadd.f32 %v6769, %v6137
  %v6786 = vadd.f32 %v6770, %v6138
  %v6787 = vadd.f32 %v6771, %v6139
  %v6788 = vadd.f32 %v6772, %v6140
  %v6789 = vadd.f32 %v6773, %v6141
  %v6790 = vadd.f32 %v6774, %v6142
  %v6791 = vadd.f32 %v6775, %v6143
  %v6792 = vadd.f32 %v6776, %v6144
  %v6793 = vadd.f32 %v6777, %v6145
  %v6794 = vadd.f32 %v6778, %v6146
  %v6795 = vadd.f32 %v6779, %v6147
  %v6796 = vadd.f32 %v6780, %v6148
  %v6797 = vadd.f32 %v6781, %v6149
  %v6798 = vadd.f32 %v6782, %v6150
  %v6799 = vadd.f32 %v6783, %v6151
  %v6800 = vadd.f32 %v6784, %v6152
  %v6801 = vsel %vm3182, %v6785, -inf
  %6802 = vmax.xlane.f32.xlu0 %v6801
  %v6803 = vpop.xlane.xlu0 %6802
  %v6804 = vsel %vm3182, %v6786, -inf
  %6805 = vmax.xlane.f32.xlu0 %v6804
  %v6806 = vpop.xlane.xlu0 %6805
  %v6807 = vsel %vm3182, %v6787, -inf
  %6808 = vmax.xlane.f32.xlu0 %v6807
  %v6809 = vpop.xlane.xlu0 %6808
  %v6810 = vsel %vm3182, %v6788, -inf
  %6811 = vmax.xlane.f32.xlu0 %v6810
  %v6812 = vpop.xlane.xlu0 %6811
  %v6813 = vsel %vm3182, %v6789, -inf
  %6814 = vmax.xlane.f32.xlu0 %v6813
  %v6815 = vpop.xlane.xlu0 %6814
  %v6816 = vsel %vm3182, %v6790, -inf
  %6817 = vmax.xlane.f32.xlu0 %v6816
  %v6818 = vpop.xlane.xlu0 %6817
  %v6819 = vsel %vm3182, %v6791, -inf
  %6820 = vmax.xlane.f32.xlu0 %v6819
  %v6821 = vpop.xlane.xlu0 %6820
  %v6822 = vsel %vm3182, %v6792, -inf
  %6823 = vmax.xlane.f32.xlu0 %v6822
  %v6824 = vpop.xlane.xlu0 %6823
  %v6825 = vsel %vm3182, %v6793, -inf
  %6826 = vmax.xlane.f32.xlu0 %v6825
  %v6827 = vpop.xlane.xlu0 %6826
  %v6828 = vsel %vm3182, %v6794, -inf
  %6829 = vmax.xlane.f32.xlu0 %v6828
  %v6830 = vpop.xlane.xlu0 %6829
  %v6831 = vsel %vm3182, %v6795, -inf
  %6832 = vmax.xlane.f32.xlu0 %v6831
  %v6833 = vpop.xlane.xlu0 %6832
  %v6834 = vsel %vm3182, %v6796, -inf
  %6835 = vmax.xlane.f32.xlu0 %v6834
  %v6836 = vpop.xlane.xlu0 %6835
  %v6837 = vsel %vm3182, %v6797, -inf
  %6838 = vmax.xlane.f32.xlu0 %v6837
  %v6839 = vpop.xlane.xlu0 %6838
  %v6840 = vsel %vm3182, %v6798, -inf
  %6841 = vmax.xlane.f32.xlu0 %v6840
  %v6842 = vpop.xlane.xlu0 %6841
  %v6843 = vsel %vm3182, %v6799, -inf
  %6844 = vmax.xlane.f32.xlu0 %v6843
  %v6845 = vpop.xlane.xlu0 %6844
  %v6846 = vsel %vm3182, %v6800, -inf
  %6847 = vmax.xlane.f32.xlu0 %v6846
  %v6848 = vpop.xlane.xlu0 %6847
  %v6849 = vsub.f32 %v6785, %v6803
  %v6850 = vsub.f32 %v6786, %v6806
  %v6851 = vsub.f32 %v6787, %v6809
  %v6852 = vsub.f32 %v6788, %v6812
  %v6853 = vsub.f32 %v6789, %v6815
  %v6854 = vsub.f32 %v6790, %v6818
  %v6855 = vsub.f32 %v6791, %v6821
  %v6856 = vsub.f32 %v6792, %v6824
  %v6857 = vsub.f32 %v6793, %v6827
  %v6858 = vsub.f32 %v6794, %v6830
  %v6859 = vsub.f32 %v6795, %v6833
  %v6860 = vsub.f32 %v6796, %v6836
  %v6861 = vsub.f32 %v6797, %v6839
  %v6862 = vsub.f32 %v6798, %v6842
  %v6863 = vsub.f32 %v6799, %v6845
  %v6864 = vsub.f32 %v6800, %v6848
  %v6865 = vmul.f32 %v6849, 1.442695
  %v6866 = vpow.pop %v6865
  %v6867 = vmul.f32 %v6850, 1.442695
  %v6868 = vpow.pop %v6867
  %v6869 = vmul.f32 %v6851, 1.442695
  %v6870 = vpow.pop %v6869
  %v6871 = vmul.f32 %v6852, 1.442695
  %v6872 = vpow.pop %v6871
  %v6873 = vmul.f32 %v6853, 1.442695
  %v6874 = vpow.pop %v6873
  %v6875 = vmul.f32 %v6854, 1.442695
  %v6876 = vpow.pop %v6875
  %v6877 = vmul.f32 %v6855, 1.442695
  %v6878 = vpow.pop %v6877
  %v6879 = vmul.f32 %v6856, 1.442695
  %v6880 = vpow.pop %v6879
  %v6881 = vmul.f32 %v6857, 1.442695
  %v6882 = vpow.pop %v6881
  %v6883 = vmul.f32 %v6858, 1.442695
  %v6884 = vpow.pop %v6883
  %v6885 = vmul.f32 %v6859, 1.442695
  %v6886 = vpow.pop %v6885
  %v6887 = vmul.f32 %v6860, 1.442695
  %v6888 = vpow.pop %v6887
  %v6889 = vmul.f32 %v6861, 1.442695
  %v6890 = vpow.pop %v6889
  %v6891 = vmul.f32 %v6862, 1.442695
  %v6892 = vpow.pop %v6891
  %v6893 = vmul.f32 %v6863, 1.442695
  %v6894 = vpow.pop %v6893
  %v6895 = vmul.f32 %v6864, 1.442695
  %v6896 = vpow.pop %v6895
  %v6897 = vsel %vm3182, %v6866, 0.0
  %6898 = vadd.xlane.f32.xlu0 %v6897
  %v6899 = vpop.xlane.xlu0 %6898
  %v6900 = vsel %vm3182, %v6868, 0.0
  %6901 = vadd.xlane.f32.xlu0 %v6900
  %v6902 = vpop.xlane.xlu0 %6901
  %v6903 = vsel %vm3182, %v6870, 0.0
  %6904 = vadd.xlane.f32.xlu0 %v6903
  %v6905 = vpop.xlane.xlu0 %6904
  %v6906 = vsel %vm3182, %v6872, 0.0
  %6907 = vadd.xlane.f32.xlu0 %v6906
  %v6908 = vpop.xlane.xlu0 %6907
  %v6909 = vsel %vm3182, %v6874, 0.0
  %6910 = vadd.xlane.f32.xlu0 %v6909
  %v6911 = vpop.xlane.xlu0 %6910
  %v6912 = vsel %vm3182, %v6876, 0.0
  %6913 = vadd.xlane.f32.xlu0 %v6912
  %v6914 = vpop.xlane.xlu0 %6913
  %v6915 = vsel %vm3182, %v6878, 0.0
  %6916 = vadd.xlane.f32.xlu0 %v6915
  %v6917 = vpop.xlane.xlu0 %6916
  %v6918 = vsel %vm3182, %v6880, 0.0
  %6919 = vadd.xlane.f32.xlu0 %v6918
  %v6920 = vpop.xlane.xlu0 %6919
  %v6921 = vsel %vm3182, %v6882, 0.0
  %6922 = vadd.xlane.f32.xlu0 %v6921
  %v6923 = vpop.xlane.xlu0 %6922
  %v6924 = vsel %vm3182, %v6884, 0.0
  %6925 = vadd.xlane.f32.xlu0 %v6924
  %v6926 = vpop.xlane.xlu0 %6925
  %v6927 = vsel %vm3182, %v6886, 0.0
  %6928 = vadd.xlane.f32.xlu0 %v6927
  %v6929 = vpop.xlane.xlu0 %6928
  %v6930 = vsel %vm3182, %v6888, 0.0
  %6931 = vadd.xlane.f32.xlu0 %v6930
  %v6932 = vpop.xlane.xlu0 %6931
  %v6933 = vsel %vm3182, %v6890, 0.0
  %6934 = vadd.xlane.f32.xlu0 %v6933
  %v6935 = vpop.xlane.xlu0 %6934
  %v6936 = vsel %vm3182, %v6892, 0.0
  %6937 = vadd.xlane.f32.xlu0 %v6936
  %v6938 = vpop.xlane.xlu0 %6937
  %v6939 = vsel %vm3182, %v6894, 0.0
  %6940 = vadd.xlane.f32.xlu0 %v6939
  %v6941 = vpop.xlane.xlu0 %6940
  %v6942 = vsel %vm3182, %v6896, 0.0
  %6943 = vadd.xlane.f32.xlu0 %v6942
  %v6944 = vpop.xlane.xlu0 %6943
  %v6945 = vrcp.pop %v6899
  %v6946 = vmul.f32 %v6866, %v6945
  %v6947 = vrcp.pop %v6902
  %v6948 = vmul.f32 %v6868, %v6947
  %v6949 = vrcp.pop %v6905
  %v6950 = vmul.f32 %v6870, %v6949
  %v6951 = vrcp.pop %v6908
  %v6952 = vmul.f32 %v6872, %v6951
  %v6953 = vrcp.pop %v6911
  %v6954 = vmul.f32 %v6874, %v6953
  %v6955 = vrcp.pop %v6914
  %v6956 = vmul.f32 %v6876, %v6955
  %v6957 = vrcp.pop %v6917
  %v6958 = vmul.f32 %v6878, %v6957
  %v6959 = vrcp.pop %v6920
  %v6960 = vmul.f32 %v6880, %v6959
  %v6961 = vrcp.pop %v6923
  %v6962 = vmul.f32 %v6882, %v6961
  %v6963 = vrcp.pop %v6926
  %v6964 = vmul.f32 %v6884, %v6963
  %v6965 = vrcp.pop %v6929
  %v6966 = vmul.f32 %v6886, %v6965
  %v6967 = vrcp.pop %v6932
  %v6968 = vmul.f32 %v6888, %v6967
  %v6969 = vrcp.pop %v6935
  %v6970 = vmul.f32 %v6890, %v6969
  %v6971 = vrcp.pop %v6938
  %v6972 = vmul.f32 %v6892, %v6971
  %v6973 = vrcp.pop %v6941
  %v6974 = vmul.f32 %v6894, %v6973
  %v6975 = vrcp.pop %v6944
  %v6976 = vmul.f32 %v6896, %v6975
  %vm6977 = vcmp.lt.f32.partialorder %v6137, -0.5
  %vm6978 = vcmp.lt.f32.partialorder %v6138, -0.5
  %vm6979 = vcmp.lt.f32.partialorder %v6139, -0.5
  %vm6980 = vcmp.lt.f32.partialorder %v6140, -0.5
  %vm6981 = vcmp.lt.f32.partialorder %v6141, -0.5
  %vm6982 = vcmp.lt.f32.partialorder %v6142, -0.5
  %vm6983 = vcmp.lt.f32.partialorder %v6143, -0.5
  %vm6984 = vcmp.lt.f32.partialorder %v6144, -0.5
  %vm6985 = vcmp.lt.f32.partialorder %v6145, -0.5
  %vm6986 = vcmp.lt.f32.partialorder %v6146, -0.5
  %vm6987 = vcmp.lt.f32.partialorder %v6147, -0.5
  %vm6988 = vcmp.lt.f32.partialorder %v6148, -0.5
  %vm6989 = vcmp.lt.f32.partialorder %v6149, -0.5
  %vm6990 = vcmp.lt.f32.partialorder %v6150, -0.5
  %vm6991 = vcmp.lt.f32.partialorder %v6151, -0.5
  %vm6992 = vcmp.lt.f32.partialorder %v6152, -0.5
  %v6993 = vsel %vm6977, 0.0, %v6946
  %v6994 = vsel %vm6978, 0.0, %v6948
  %v6995 = vsel %vm6979, 0.0, %v6950
  %v6996 = vsel %vm6980, 0.0, %v6952
  %v6997 = vsel %vm6981, 0.0, %v6954
  %v6998 = vsel %vm6982, 0.0, %v6956
  %v6999 = vsel %vm6983, 0.0, %v6958
  %v7000 = vsel %vm6984, 0.0, %v6960
  %v7001 = vsel %vm6985, 0.0, %v6962
  %v7002 = vsel %vm6986, 0.0, %v6964
  %v7003 = vsel %vm6987, 0.0, %v6966
  %v7004 = vsel %vm6988, 0.0, %v6968
  %v7005 = vsel %vm6989, 0.0, %v6970
  %v7006 = vsel %vm6990, 0.0, %v6972
  %v7007 = vsel %vm6991, 0.0, %v6974
  %v7008 = vsel %vm6992, 0.0, %v6976
  %v7010 = vsel %vm3182, %v6993, 0
  %v7013 = vsel %vm3182, %v6994, 0
  %7015 = vmatprep.subr.mxu0 0.0
  %7016 = vmatpush1.msra.mxu0 0.0
  %7017 = vmatprep.subr.mxu0 0.0
  %7018 = vmatpush1.msra.mxu0 0.0
  %7019 = vmatprep.subr.mxu0 0.0
  %7020 = vmatpush1.msra.mxu0 0.0
  %7021 = vmatprep.subr.mxu0 0.0
  %7022 = vmatpush1.msra.mxu0 0.0
  %7023 = vmatprep.subr.mxu0 0.0
  %7024 = vmatpush1.msra.mxu0 0.0
  %7025 = vmatprep.subr.mxu0 0.0
  %7026 = vmatpush1.msra.mxu0 0.0
  %7027 = vmatprep.subr.mxu0 0.0
  %7028 = vmatpush1.msra.mxu0 0.0
  %7029 = vmatprep.subr.mxu0 0.0
  %7030 = vmatpush1.msra.mxu0 0.0
  %7031 = vmatprep.subr.mxu0 0.0
  %7032 = vmatpush1.msra.mxu0 0.0
  %7033 = vmatprep.subr.mxu0 0.0
  %7034 = vmatpush1.msra.mxu0 0.0
  %7035 = vmatprep.subr.mxu0 0.0
  %7036 = vmatpush1.msra.mxu0 0.0
  %7037 = vmatprep.subr.mxu0 0.0
  %7038 = vmatpush1.msra.mxu0 0.0
  %7039 = vmatprep.subr.mxu0 0.0
  %7040 = vmatpush1.msra.mxu0 0.0
  %7041 = vmatprep.subr.mxu0 0.0
  %7042 = vmatpush1.msra.mxu0 0.0
  %7043 = vmatprep.subr.mxu0 0.0
  %7044 = vmatpush1.msra.mxu0 %v2458
  %7045 = vmatprep.subr.mxu0 0.0
  %7046 = vmatpush1.msra.mxu0 %v2390
  %7047 = vmatprep.subr.mxu0 0.0
  %7048 = vmatpush2.msra.mxu0 0.0
  %7049 = vmatprep.subr.mxu0 0.0
  %7050 = vmatpush2.msra.mxu0 0.0
  %7051 = vmatprep.subr.mxu0 0.0
  %7052 = vmatpush2.msra.mxu0 0.0
  %7053 = vmatprep.subr.mxu0 0.0
  %7054 = vmatpush2.msra.mxu0 0.0
  %7055 = vmatprep.subr.mxu0 0.0
  %7056 = vmatpush2.msra.mxu0 0.0
  %7057 = vmatprep.subr.mxu0 0.0
  %7058 = vmatpush2.msra.mxu0 0.0
  %7059 = vmatprep.subr.mxu0 0.0
  %7060 = vmatpush2.msra.mxu0 0.0
  %7061 = vmatprep.subr.mxu0 0.0
  %7062 = vmatpush2.msra.mxu0 0.0
  %7063 = vmatprep.subr.mxu0 0.0
  %7064 = vmatpush2.msra.mxu0 0.0
  %7065 = vmatprep.subr.mxu0 0.0
  %7066 = vmatpush2.msra.mxu0 0.0
  %7067 = vmatprep.subr.mxu0 0.0
  %7068 = vmatpush2.msra.mxu0 0.0
  %7069 = vmatprep.subr.mxu0 0.0
  %7070 = vmatpush2.msra.mxu0 0.0
  %7071 = vmatprep.subr.mxu0 0.0
  %7072 = vmatpush2.msra.mxu0 0.0
  %7073 = vmatprep.subr.mxu0 0.0
  %7074 = vmatpush2.msra.mxu0 0.0
  %7075 = vmatprep.subr.mxu0 0.0
  %7076 = vmatpush2.msra.mxu0 0.0
  %7077 = vmatprep.subr.mxu0 0.0
  %7078 = vmatpush2.msra.mxu0 0.0
  %7079 = vmatprep.mubr.f32.mxu0 0.0
  %7080 = vmatmul.mubr.f32.gmra.mxu0 %v7010
  %v7081 = vpop.f32.mrf.mxu0
  %v7082 = vadd.f32 0.0, %v7081
  %v7083 = vpop.f32.mrf.mxu0
  %7084 = vmatprep.mubr.f32.mxu0 0.0
  %7085 = vmatmul.mubr.f32.gmra.mxu0 %v7013
  %v7086 = vpop.f32.mrf.mxu0
  %v7087 = vadd.f32 0.0, %v7086
  %v7088 = vpop.f32.mrf.mxu0
  %7089 = vdwg.mxu0
  %v7091 = vsel %vm3182, %v6995, 0
  %v7094 = vsel %vm3182, %v6996, 0
  %7096 = vmatprep.subr.mxu0 0.0
  %7097 = vmatpush1.msra.mxu0 0.0
  %7098 = vmatprep.subr.mxu0 0.0
  %7099 = vmatpush1.msra.mxu0 0.0
  %7100 = vmatprep.subr.mxu0 0.0
  %7101 = vmatpush1.msra.mxu0 0.0
  %7102 = vmatprep.subr.mxu0 0.0
  %7103 = vmatpush1.msra.mxu0 0.0
  %7104 = vmatprep.subr.mxu0 0.0
  %7105 = vmatpush1.msra.mxu0 0.0
  %7106 = vmatprep.subr.mxu0 0.0
  %7107 = vmatpush1.msra.mxu0 0.0
  %7108 = vmatprep.subr.mxu0 0.0
  %7109 = vmatpush1.msra.mxu0 0.0
  %7110 = vmatprep.subr.mxu0 0.0
  %7111 = vmatpush1.msra.mxu0 0.0
  %7112 = vmatprep.subr.mxu0 0.0
  %7113 = vmatpush1.msra.mxu0 0.0
  %7114 = vmatprep.subr.mxu0 0.0
  %7115 = vmatpush1.msra.mxu0 0.0
  %7116 = vmatprep.subr.mxu0 0.0
  %7117 = vmatpush1.msra.mxu0 0.0
  %7118 = vmatprep.subr.mxu0 0.0
  %7119 = vmatpush1.msra.mxu0 0.0
  %7120 = vmatprep.subr.mxu0 0.0
  %7121 = vmatpush1.msra.mxu0 0.0
  %7122 = vmatprep.subr.mxu0 0.0
  %7123 = vmatpush1.msra.mxu0 0.0
  %7124 = vmatprep.subr.mxu0 0.0
  %7125 = vmatpush1.msra.mxu0 %v2594
  %7126 = vmatprep.subr.mxu0 0.0
  %7127 = vmatpush1.msra.mxu0 %v2526
  %7128 = vmatprep.subr.mxu0 0.0
  %7129 = vmatpush2.msra.mxu0 0.0
  %7130 = vmatprep.subr.mxu0 0.0
  %7131 = vmatpush2.msra.mxu0 0.0
  %7132 = vmatprep.subr.mxu0 0.0
  %7133 = vmatpush2.msra.mxu0 0.0
  %7134 = vmatprep.subr.mxu0 0.0
  %7135 = vmatpush2.msra.mxu0 0.0
  %7136 = vmatprep.subr.mxu0 0.0
  %7137 = vmatpush2.msra.mxu0 0.0
  %7138 = vmatprep.subr.mxu0 0.0
  %7139 = vmatpush2.msra.mxu0 0.0
  %7140 = vmatprep.subr.mxu0 0.0
  %7141 = vmatpush2.msra.mxu0 0.0
  %7142 = vmatprep.subr.mxu0 0.0
  %7143 = vmatpush2.msra.mxu0 0.0
  %7144 = vmatprep.subr.mxu0 0.0
  %7145 = vmatpush2.msra.mxu0 0.0
  %7146 = vmatprep.subr.mxu0 0.0
  %7147 = vmatpush2.msra.mxu0 0.0
  %7148 = vmatprep.subr.mxu0 0.0
  %7149 = vmatpush2.msra.mxu0 0.0
  %7150 = vmatprep.subr.mxu0 0.0
  %7151 = vmatpush2.msra.mxu0 0.0
  %7152 = vmatprep.subr.mxu0 0.0
  %7153 = vmatpush2.msra.mxu0 0.0
  %7154 = vmatprep.subr.mxu0 0.0
  %7155 = vmatpush2.msra.mxu0 0.0
  %7156 = vmatprep.subr.mxu0 0.0
  %7157 = vmatpush2.msra.mxu0 0.0
  %7158 = vmatprep.subr.mxu0 0.0
  %7159 = vmatpush2.msra.mxu0 0.0
  %7160 = vmatprep.mubr.f32.mxu0 0.0
  %7161 = vmatmul.mubr.f32.gmra.mxu0 %v7091
  %v7162 = vpop.f32.mrf.mxu0
  %v7163 = vadd.f32 0.0, %v7162
  %v7164 = vpop.f32.mrf.mxu0
  %7165 = vmatprep.mubr.f32.mxu0 0.0
  %7166 = vmatmul.mubr.f32.gmra.mxu0 %v7094
  %v7167 = vpop.f32.mrf.mxu0
  %v7168 = vadd.f32 0.0, %v7167
  %v7169 = vpop.f32.mrf.mxu0
  %7170 = vdwg.mxu0
  %v7172 = vsel %vm3182, %v6997, 0
  %v7175 = vsel %vm3182, %v6998, 0
  %7177 = vmatprep.subr.mxu0 0.0
  %7178 = vmatpush1.msra.mxu0 0.0
  %7179 = vmatprep.subr.mxu0 0.0
  %7180 = vmatpush1.msra.mxu0 0.0
  %7181 = vmatprep.subr.mxu0 0.0
  %7182 = vmatpush1.msra.mxu0 0.0
  %7183 = vmatprep.subr.mxu0 0.0
  %7184 = vmatpush1.msra.mxu0 0.0
  %7185 = vmatprep.subr.mxu0 0.0
  %7186 = vmatpush1.msra.mxu0 0.0
  %7187 = vmatprep.subr.mxu0 0.0
  %7188 = vmatpush1.msra.mxu0 0.0
  %7189 = vmatprep.subr.mxu0 0.0
  %7190 = vmatpush1.msra.mxu0 0.0
  %7191 = vmatprep.subr.mxu0 0.0
  %7192 = vmatpush1.msra.mxu0 0.0
  %7193 = vmatprep.subr.mxu0 0.0
  %7194 = vmatpush1.msra.mxu0 0.0
  %7195 = vmatprep.subr.mxu0 0.0
  %7196 = vmatpush1.msra.mxu0 0.0
  %7197 = vmatprep.subr.mxu0 0.0
  %7198 = vmatpush1.msra.mxu0 0.0
  %7199 = vmatprep.subr.mxu0 0.0
  %7200 = vmatpush1.msra.mxu0 0.0
  %7201 = vmatprep.subr.mxu0 0.0
  %7202 = vmatpush1.msra.mxu0 0.0
  %7203 = vmatprep.subr.mxu0 0.0
  %7204 = vmatpush1.msra.mxu0 0.0
  %7205 = vmatprep.subr.mxu0 0.0
  %7206 = vmatpush1.msra.mxu0 %v2459
  %7207 = vmatprep.subr.mxu0 0.0
  %7208 = vmatpush1.msra.mxu0 %v2391
  %7209 = vmatprep.subr.mxu0 0.0
  %7210 = vmatpush2.msra.mxu0 0.0
  %7211 = vmatprep.subr.mxu0 0.0
  %7212 = vmatpush2.msra.mxu0 0.0
  %7213 = vmatprep.subr.mxu0 0.0
  %7214 = vmatpush2.msra.mxu0 0.0
  %7215 = vmatprep.subr.mxu0 0.0
  %7216 = vmatpush2.msra.mxu0 0.0
  %7217 = vmatprep.subr.mxu0 0.0
  %7218 = vmatpush2.msra.mxu0 0.0
  %7219 = vmatprep.subr.mxu0 0.0
  %7220 = vmatpush2.msra.mxu0 0.0
  %7221 = vmatprep.subr.mxu0 0.0
  %7222 = vmatpush2.msra.mxu0 0.0
  %7223 = vmatprep.subr.mxu0 0.0
  %7224 = vmatpush2.msra.mxu0 0.0
  %7225 = vmatprep.subr.mxu0 0.0
  %7226 = vmatpush2.msra.mxu0 0.0
  %7227 = vmatprep.subr.mxu0 0.0
  %7228 = vmatpush2.msra.mxu0 0.0
  %7229 = vmatprep.subr.mxu0 0.0
  %7230 = vmatpush2.msra.mxu0 0.0
  %7231 = vmatprep.subr.mxu0 0.0
  %7232 = vmatpush2.msra.mxu0 0.0
  %7233 = vmatprep.subr.mxu0 0.0
  %7234 = vmatpush2.msra.mxu0 0.0
  %7235 = vmatprep.subr.mxu0 0.0
  %7236 = vmatpush2.msra.mxu0 0.0
  %7237 = vmatprep.subr.mxu0 0.0
  %7238 = vmatpush2.msra.mxu0 0.0
  %7239 = vmatprep.subr.mxu0 0.0
  %7240 = vmatpush2.msra.mxu0 0.0
  %7241 = vmatprep.mubr.f32.mxu0 0.0
  %7242 = vmatmul.mubr.f32.gmra.mxu0 %v7172
  %v7243 = vpop.f32.mrf.mxu0
  %v7244 = vadd.f32 0.0, %v7243
  %v7245 = vpop.f32.mrf.mxu0
  %7246 = vmatprep.mubr.f32.mxu0 0.0
  %7247 = vmatmul.mubr.f32.gmra.mxu0 %v7175
  %v7248 = vpop.f32.mrf.mxu0
  %v7249 = vadd.f32 0.0, %v7248
  %v7250 = vpop.f32.mrf.mxu0
  %7251 = vdwg.mxu0
  %v7253 = vsel %vm3182, %v6999, 0
  %v7256 = vsel %vm3182, %v7000, 0
  %7258 = vmatprep.subr.mxu0 0.0
  %7259 = vmatpush1.msra.mxu0 0.0
  %7260 = vmatprep.subr.mxu0 0.0
  %7261 = vmatpush1.msra.mxu0 0.0
  %7262 = vmatprep.subr.mxu0 0.0
  %7263 = vmatpush1.msra.mxu0 0.0
  %7264 = vmatprep.subr.mxu0 0.0
  %7265 = vmatpush1.msra.mxu0 0.0
  %7266 = vmatprep.subr.mxu0 0.0
  %7267 = vmatpush1.msra.mxu0 0.0
  %7268 = vmatprep.subr.mxu0 0.0
  %7269 = vmatpush1.msra.mxu0 0.0
  %7270 = vmatprep.subr.mxu0 0.0
  %7271 = vmatpush1.msra.mxu0 0.0
  %7272 = vmatprep.subr.mxu0 0.0
  %7273 = vmatpush1.msra.mxu0 0.0
  %7274 = vmatprep.subr.mxu0 0.0
  %7275 = vmatpush1.msra.mxu0 0.0
  %7276 = vmatprep.subr.mxu0 0.0
  %7277 = vmatpush1.msra.mxu0 0.0
  %7278 = vmatprep.subr.mxu0 0.0
  %7279 = vmatpush1.msra.mxu0 0.0
  %7280 = vmatprep.subr.mxu0 0.0
  %7281 = vmatpush1.msra.mxu0 0.0
  %7282 = vmatprep.subr.mxu0 0.0
  %7283 = vmatpush1.msra.mxu0 0.0
  %7284 = vmatprep.subr.mxu0 0.0
  %7285 = vmatpush1.msra.mxu0 0.0
  %7286 = vmatprep.subr.mxu0 0.0
  %7287 = vmatpush1.msra.mxu0 %v2595
  %7288 = vmatprep.subr.mxu0 0.0
  %7289 = vmatpush1.msra.mxu0 %v2527
  %7290 = vmatprep.subr.mxu0 0.0
  %7291 = vmatpush2.msra.mxu0 0.0
  %7292 = vmatprep.subr.mxu0 0.0
  %7293 = vmatpush2.msra.mxu0 0.0
  %7294 = vmatprep.subr.mxu0 0.0
  %7295 = vmatpush2.msra.mxu0 0.0
  %7296 = vmatprep.subr.mxu0 0.0
  %7297 = vmatpush2.msra.mxu0 0.0
  %7298 = vmatprep.subr.mxu0 0.0
  %7299 = vmatpush2.msra.mxu0 0.0
  %7300 = vmatprep.subr.mxu0 0.0
  %7301 = vmatpush2.msra.mxu0 0.0
  %7302 = vmatprep.subr.mxu0 0.0
  %7303 = vmatpush2.msra.mxu0 0.0
  %7304 = vmatprep.subr.mxu0 0.0
  %7305 = vmatpush2.msra.mxu0 0.0
  %7306 = vmatprep.subr.mxu0 0.0
  %7307 = vmatpush2.msra.mxu0 0.0
  %7308 = vmatprep.subr.mxu0 0.0
  %7309 = vmatpush2.msra.mxu0 0.0
  %7310 = vmatprep.subr.mxu0 0.0
  %7311 = vmatpush2.msra.mxu0 0.0
  %7312 = vmatprep.subr.mxu0 0.0
  %7313 = vmatpush2.msra.mxu0 0.0
  %7314 = vmatprep.subr.mxu0 0.0
  %7315 = vmatpush2.msra.mxu0 0.0
  %7316 = vmatprep.subr.mxu0 0.0
  %7317 = vmatpush2.msra.mxu0 0.0
  %7318 = vmatprep.subr.mxu0 0.0
  %7319 = vmatpush2.msra.mxu0 0.0
  %7320 = vmatprep.subr.mxu0 0.0
  %7321 = vmatpush2.msra.mxu0 0.0
  %7322 = vmatprep.mubr.f32.mxu0 0.0
  %7323 = vmatmul.mubr.f32.gmra.mxu0 %v7253
  %v7324 = vpop.f32.mrf.mxu0
  %v7325 = vadd.f32 0.0, %v7324
  %v7326 = vpop.f32.mrf.mxu0
  %7327 = vmatprep.mubr.f32.mxu0 0.0
  %7328 = vmatmul.mubr.f32.gmra.mxu0 %v7256
  %v7329 = vpop.f32.mrf.mxu0
  %v7330 = vadd.f32 0.0, %v7329
  %v7331 = vpop.f32.mrf.mxu0
  %7332 = vdwg.mxu0
  %v7334 = vsel %vm3182, %v7001, 0
  %v7337 = vsel %vm3182, %v7002, 0
  %7339 = vmatprep.subr.mxu0 0.0
  %7340 = vmatpush1.msra.mxu0 0.0
  %7341 = vmatprep.subr.mxu0 0.0
  %7342 = vmatpush1.msra.mxu0 0.0
  %7343 = vmatprep.subr.mxu0 0.0
  %7344 = vmatpush1.msra.mxu0 0.0
  %7345 = vmatprep.subr.mxu0 0.0
  %7346 = vmatpush1.msra.mxu0 0.0
  %7347 = vmatprep.subr.mxu0 0.0
  %7348 = vmatpush1.msra.mxu0 0.0
  %7349 = vmatprep.subr.mxu0 0.0
  %7350 = vmatpush1.msra.mxu0 0.0
  %7351 = vmatprep.subr.mxu0 0.0
  %7352 = vmatpush1.msra.mxu0 0.0
  %7353 = vmatprep.subr.mxu0 0.0
  %7354 = vmatpush1.msra.mxu0 0.0
  %7355 = vmatprep.subr.mxu0 0.0
  %7356 = vmatpush1.msra.mxu0 0.0
  %7357 = vmatprep.subr.mxu0 0.0
  %7358 = vmatpush1.msra.mxu0 0.0
  %7359 = vmatprep.subr.mxu0 0.0
  %7360 = vmatpush1.msra.mxu0 0.0
  %7361 = vmatprep.subr.mxu0 0.0
  %7362 = vmatpush1.msra.mxu0 0.0
  %7363 = vmatprep.subr.mxu0 0.0
  %7364 = vmatpush1.msra.mxu0 0.0
  %7365 = vmatprep.subr.mxu0 0.0
  %7366 = vmatpush1.msra.mxu0 0.0
  %7367 = vmatprep.subr.mxu0 0.0
  %7368 = vmatpush1.msra.mxu0 %v2460
  %7369 = vmatprep.subr.mxu0 0.0
  %7370 = vmatpush1.msra.mxu0 %v2392
  %7371 = vmatprep.subr.mxu0 0.0
  %7372 = vmatpush2.msra.mxu0 0.0
  %7373 = vmatprep.subr.mxu0 0.0
  %7374 = vmatpush2.msra.mxu0 0.0
  %7375 = vmatprep.subr.mxu0 0.0
  %7376 = vmatpush2.msra.mxu0 0.0
  %7377 = vmatprep.subr.mxu0 0.0
  %7378 = vmatpush2.msra.mxu0 0.0
  %7379 = vmatprep.subr.mxu0 0.0
  %7380 = vmatpush2.msra.mxu0 0.0
  %7381 = vmatprep.subr.mxu0 0.0
  %7382 = vmatpush2.msra.mxu0 0.0
  %7383 = vmatprep.subr.mxu0 0.0
  %7384 = vmatpush2.msra.mxu0 0.0
  %7385 = vmatprep.subr.mxu0 0.0
  %7386 = vmatpush2.msra.mxu0 0.0
  %7387 = vmatprep.subr.mxu0 0.0
  %7388 = vmatpush2.msra.mxu0 0.0
  %7389 = vmatprep.subr.mxu0 0.0
  %7390 = vmatpush2.msra.mxu0 0.0
  %7391 = vmatprep.subr.mxu0 0.0
  %7392 = vmatpush2.msra.mxu0 0.0
  %7393 = vmatprep.subr.mxu0 0.0
  %7394 = vmatpush2.msra.mxu0 0.0
  %7395 = vmatprep.subr.mxu0 0.0
  %7396 = vmatpush2.msra.mxu0 0.0
  %7397 = vmatprep.subr.mxu0 0.0
  %7398 = vmatpush2.msra.mxu0 0.0
  %7399 = vmatprep.subr.mxu0 0.0
  %7400 = vmatpush2.msra.mxu0 0.0
  %7401 = vmatprep.subr.mxu0 0.0
  %7402 = vmatpush2.msra.mxu0 0.0
  %7403 = vmatprep.mubr.f32.mxu0 0.0
  %7404 = vmatmul.mubr.f32.gmra.mxu0 %v7334
  %v7405 = vpop.f32.mrf.mxu0
  %v7406 = vadd.f32 0.0, %v7405
  %v7407 = vpop.f32.mrf.mxu0
  %7408 = vmatprep.mubr.f32.mxu0 0.0
  %7409 = vmatmul.mubr.f32.gmra.mxu0 %v7337
  %v7410 = vpop.f32.mrf.mxu0
  %v7411 = vadd.f32 0.0, %v7410
  %v7412 = vpop.f32.mrf.mxu0
  %7413 = vdwg.mxu0
  %v7415 = vsel %vm3182, %v7003, 0
  %v7418 = vsel %vm3182, %v7004, 0
  %7420 = vmatprep.subr.mxu0 0.0
  %7421 = vmatpush1.msra.mxu0 0.0
  %7422 = vmatprep.subr.mxu0 0.0
  %7423 = vmatpush1.msra.mxu0 0.0
  %7424 = vmatprep.subr.mxu0 0.0
  %7425 = vmatpush1.msra.mxu0 0.0
  %7426 = vmatprep.subr.mxu0 0.0
  %7427 = vmatpush1.msra.mxu0 0.0
  %7428 = vmatprep.subr.mxu0 0.0
  %7429 = vmatpush1.msra.mxu0 0.0
  %7430 = vmatprep.subr.mxu0 0.0
  %7431 = vmatpush1.msra.mxu0 0.0
  %7432 = vmatprep.subr.mxu0 0.0
  %7433 = vmatpush1.msra.mxu0 0.0
  %7434 = vmatprep.subr.mxu0 0.0
  %7435 = vmatpush1.msra.mxu0 0.0
  %7436 = vmatprep.subr.mxu0 0.0
  %7437 = vmatpush1.msra.mxu0 0.0
  %7438 = vmatprep.subr.mxu0 0.0
  %7439 = vmatpush1.msra.mxu0 0.0
  %7440 = vmatprep.subr.mxu0 0.0
  %7441 = vmatpush1.msra.mxu0 0.0
  %7442 = vmatprep.subr.mxu0 0.0
  %7443 = vmatpush1.msra.mxu0 0.0
  %7444 = vmatprep.subr.mxu0 0.0
  %7445 = vmatpush1.msra.mxu0 0.0
  %7446 = vmatprep.subr.mxu0 0.0
  %7447 = vmatpush1.msra.mxu0 0.0
  %7448 = vmatprep.subr.mxu0 0.0
  %7449 = vmatpush1.msra.mxu0 %v2596
  %7450 = vmatprep.subr.mxu0 0.0
  %7451 = vmatpush1.msra.mxu0 %v2528
  %7452 = vmatprep.subr.mxu0 0.0
  %7453 = vmatpush2.msra.mxu0 0.0
  %7454 = vmatprep.subr.mxu0 0.0
  %7455 = vmatpush2.msra.mxu0 0.0
  %7456 = vmatprep.subr.mxu0 0.0
  %7457 = vmatpush2.msra.mxu0 0.0
  %7458 = vmatprep.subr.mxu0 0.0
  %7459 = vmatpush2.msra.mxu0 0.0
  %7460 = vmatprep.subr.mxu0 0.0
  %7461 = vmatpush2.msra.mxu0 0.0
  %7462 = vmatprep.subr.mxu0 0.0
  %7463 = vmatpush2.msra.mxu0 0.0
  %7464 = vmatprep.subr.mxu0 0.0
  %7465 = vmatpush2.msra.mxu0 0.0
  %7466 = vmatprep.subr.mxu0 0.0
  %7467 = vmatpush2.msra.mxu0 0.0
  %7468 = vmatprep.subr.mxu0 0.0
  %7469 = vmatpush2.msra.mxu0 0.0
  %7470 = vmatprep.subr.mxu0 0.0
  %7471 = vmatpush2.msra.mxu0 0.0
  %7472 = vmatprep.subr.mxu0 0.0
  %7473 = vmatpush2.msra.mxu0 0.0
  %7474 = vmatprep.subr.mxu0 0.0
  %7475 = vmatpush2.msra.mxu0 0.0
  %7476 = vmatprep.subr.mxu0 0.0
  %7477 = vmatpush2.msra.mxu0 0.0
  %7478 = vmatprep.subr.mxu0 0.0
  %7479 = vmatpush2.msra.mxu0 0.0
  %7480 = vmatprep.subr.mxu0 0.0
  %7481 = vmatpush2.msra.mxu0 0.0
  %7482 = vmatprep.subr.mxu0 0.0
  %7483 = vmatpush2.msra.mxu0 0.0
  %7484 = vmatprep.mubr.f32.mxu0 0.0
  %7485 = vmatmul.mubr.f32.gmra.mxu0 %v7415
  %v7486 = vpop.f32.mrf.mxu0
  %v7487 = vadd.f32 0.0, %v7486
  %v7488 = vpop.f32.mrf.mxu0
  %7489 = vmatprep.mubr.f32.mxu0 0.0
  %7490 = vmatmul.mubr.f32.gmra.mxu0 %v7418
  %v7491 = vpop.f32.mrf.mxu0
  %v7492 = vadd.f32 0.0, %v7491
  %v7493 = vpop.f32.mrf.mxu0
  %7494 = vdwg.mxu0
  %v7496 = vsel %vm3182, %v7005, 0
  %v7499 = vsel %vm3182, %v7006, 0
  %7501 = vmatprep.subr.mxu0 0.0
  %7502 = vmatpush1.msra.mxu0 0.0
  %7503 = vmatprep.subr.mxu0 0.0
  %7504 = vmatpush1.msra.mxu0 0.0
  %7505 = vmatprep.subr.mxu0 0.0
  %7506 = vmatpush1.msra.mxu0 0.0
  %7507 = vmatprep.subr.mxu0 0.0
  %7508 = vmatpush1.msra.mxu0 0.0
  %7509 = vmatprep.subr.mxu0 0.0
  %7510 = vmatpush1.msra.mxu0 0.0
  %7511 = vmatprep.subr.mxu0 0.0
  %7512 = vmatpush1.msra.mxu0 0.0
  %7513 = vmatprep.subr.mxu0 0.0
  %7514 = vmatpush1.msra.mxu0 0.0
  %7515 = vmatprep.subr.mxu0 0.0
  %7516 = vmatpush1.msra.mxu0 0.0
  %7517 = vmatprep.subr.mxu0 0.0
  %7518 = vmatpush1.msra.mxu0 0.0
  %7519 = vmatprep.subr.mxu0 0.0
  %7520 = vmatpush1.msra.mxu0 0.0
  %7521 = vmatprep.subr.mxu0 0.0
  %7522 = vmatpush1.msra.mxu0 0.0
  %7523 = vmatprep.subr.mxu0 0.0
  %7524 = vmatpush1.msra.mxu0 0.0
  %7525 = vmatprep.subr.mxu0 0.0
  %7526 = vmatpush1.msra.mxu0 0.0
  %7527 = vmatprep.subr.mxu0 0.0
  %7528 = vmatpush1.msra.mxu0 0.0
  %7529 = vmatprep.subr.mxu0 0.0
  %7530 = vmatpush1.msra.mxu0 %v2461
  %7531 = vmatprep.subr.mxu0 0.0
  %7532 = vmatpush1.msra.mxu0 %v2393
  %7533 = vmatprep.subr.mxu0 0.0
  %7534 = vmatpush2.msra.mxu0 0.0
  %7535 = vmatprep.subr.mxu0 0.0
  %7536 = vmatpush2.msra.mxu0 0.0
  %7537 = vmatprep.subr.mxu0 0.0
  %7538 = vmatpush2.msra.mxu0 0.0
  %7539 = vmatprep.subr.mxu0 0.0
  %7540 = vmatpush2.msra.mxu0 0.0
  %7541 = vmatprep.subr.mxu0 0.0
  %7542 = vmatpush2.msra.mxu0 0.0
  %7543 = vmatprep.subr.mxu0 0.0
  %7544 = vmatpush2.msra.mxu0 0.0
  %7545 = vmatprep.subr.mxu0 0.0
  %7546 = vmatpush2.msra.mxu0 0.0
  %7547 = vmatprep.subr.mxu0 0.0
  %7548 = vmatpush2.msra.mxu0 0.0
  %7549 = vmatprep.subr.mxu0 0.0
  %7550 = vmatpush2.msra.mxu0 0.0
  %7551 = vmatprep.subr.mxu0 0.0
  %7552 = vmatpush2.msra.mxu0 0.0
  %7553 = vmatprep.subr.mxu0 0.0
  %7554 = vmatpush2.msra.mxu0 0.0
  %7555 = vmatprep.subr.mxu0 0.0
  %7556 = vmatpush2.msra.mxu0 0.0
  %7557 = vmatprep.subr.mxu0 0.0
  %7558 = vmatpush2.msra.mxu0 0.0
  %7559 = vmatprep.subr.mxu0 0.0
  %7560 = vmatpush2.msra.mxu0 0.0
  %7561 = vmatprep.subr.mxu0 0.0
  %7562 = vmatpush2.msra.mxu0 0.0
  %7563 = vmatprep.subr.mxu0 0.0
  %7564 = vmatpush2.msra.mxu0 0.0
  %7565 = vmatprep.mubr.f32.mxu0 0.0
  %7566 = vmatmul.mubr.f32.gmra.mxu0 %v7496
  %v7567 = vpop.f32.mrf.mxu0
  %v7568 = vadd.f32 0.0, %v7567
  %v7569 = vpop.f32.mrf.mxu0
  %7570 = vmatprep.mubr.f32.mxu0 0.0
  %7571 = vmatmul.mubr.f32.gmra.mxu0 %v7499
  %v7572 = vpop.f32.mrf.mxu0
  %v7573 = vadd.f32 0.0, %v7572
  %v7574 = vpop.f32.mrf.mxu0
  %7575 = vdwg.mxu0
  %v7577 = vsel %vm3182, %v7007, 0
  %v7580 = vsel %vm3182, %v7008, 0
  %7582 = vmatprep.subr.mxu0 0.0
  %7583 = vmatpush1.msra.mxu0 0.0
  %7584 = vmatprep.subr.mxu0 0.0
  %7585 = vmatpush1.msra.mxu0 0.0
  %7586 = vmatprep.subr.mxu0 0.0
  %7587 = vmatpush1.msra.mxu0 0.0
  %7588 = vmatprep.subr.mxu0 0.0
  %7589 = vmatpush1.msra.mxu0 0.0
  %7590 = vmatprep.subr.mxu0 0.0
  %7591 = vmatpush1.msra.mxu0 0.0
  %7592 = vmatprep.subr.mxu0 0.0
  %7593 = vmatpush1.msra.mxu0 0.0
  %7594 = vmatprep.subr.mxu0 0.0
  %7595 = vmatpush1.msra.mxu0 0.0
  %7596 = vmatprep.subr.mxu0 0.0
  %7597 = vmatpush1.msra.mxu0 0.0
  %7598 = vmatprep.subr.mxu0 0.0
  %7599 = vmatpush1.msra.mxu0 0.0
  %7600 = vmatprep.subr.mxu0 0.0
  %7601 = vmatpush1.msra.mxu0 0.0
  %7602 = vmatprep.subr.mxu0 0.0
  %7603 = vmatpush1.msra.mxu0 0.0
  %7604 = vmatprep.subr.mxu0 0.0
  %7605 = vmatpush1.msra.mxu0 0.0
  %7606 = vmatprep.subr.mxu0 0.0
  %7607 = vmatpush1.msra.mxu0 0.0
  %7608 = vmatprep.subr.mxu0 0.0
  %7609 = vmatpush1.msra.mxu0 0.0
  %7610 = vmatprep.subr.mxu0 0.0
  %7611 = vmatpush1.msra.mxu0 %v2597
  %7612 = vmatprep.subr.mxu0 0.0
  %7613 = vmatpush1.msra.mxu0 %v2529
  %7614 = vmatprep.subr.mxu0 0.0
  %7615 = vmatpush2.msra.mxu0 0.0
  %7616 = vmatprep.subr.mxu0 0.0
  %7617 = vmatpush2.msra.mxu0 0.0
  %7618 = vmatprep.subr.mxu0 0.0
  %7619 = vmatpush2.msra.mxu0 0.0
  %7620 = vmatprep.subr.mxu0 0.0
  %7621 = vmatpush2.msra.mxu0 0.0
  %7622 = vmatprep.subr.mxu0 0.0
  %7623 = vmatpush2.msra.mxu0 0.0
  %7624 = vmatprep.subr.mxu0 0.0
  %7625 = vmatpush2.msra.mxu0 0.0
  %7626 = vmatprep.subr.mxu0 0.0
  %7627 = vmatpush2.msra.mxu0 0.0
  %7628 = vmatprep.subr.mxu0 0.0
  %7629 = vmatpush2.msra.mxu0 0.0
  %7630 = vmatprep.subr.mxu0 0.0
  %7631 = vmatpush2.msra.mxu0 0.0
  %7632 = vmatprep.subr.mxu0 0.0
  %7633 = vmatpush2.msra.mxu0 0.0
  %7634 = vmatprep.subr.mxu0 0.0
  %7635 = vmatpush2.msra.mxu0 0.0
  %7636 = vmatprep.subr.mxu0 0.0
  %7637 = vmatpush2.msra.mxu0 0.0
  %7638 = vmatprep.subr.mxu0 0.0
  %7639 = vmatpush2.msra.mxu0 0.0
  %7640 = vmatprep.subr.mxu0 0.0
  %7641 = vmatpush2.msra.mxu0 0.0
  %7642 = vmatprep.subr.mxu0 0.0
  %7643 = vmatpush2.msra.mxu0 0.0
  %7644 = vmatprep.subr.mxu0 0.0
  %7645 = vmatpush2.msra.mxu0 0.0
  %7646 = vmatprep.mubr.f32.mxu0 0.0
  %7647 = vmatmul.mubr.f32.gmra.mxu0 %v7577
  %v7648 = vpop.f32.mrf.mxu0
  %v7649 = vadd.f32 0.0, %v7648
  %v7650 = vpop.f32.mrf.mxu0
  %7651 = vmatprep.mubr.f32.mxu0 0.0
  %7652 = vmatmul.mubr.f32.gmra.mxu0 %v7580
  %v7653 = vpop.f32.mrf.mxu0
  %v7654 = vadd.f32 0.0, %v7653
  %v7655 = vpop.f32.mrf.mxu0
  %7656 = vdwg.mxu0
  %v7657 = vcombine.low %v7082, %v7406
  %v7658 = vcombine.high %v7082, %v7406
  %v7660 = vunpack.c.l.s4 1983009808
  %v7661 = vunpack.c.0.s8 %v7660
  %v7662 = vlaneseq
  %v7663 = vshrl.u32 %v7662, 7
  %v7664 = vsub.s32 %v7661, %v7663
  %v7665 = vrot.slane %v7657, %v7664
  %v7667 = vunpack.c.l.s4 1983009808
  %v7668 = vunpack.c.0.s8 %v7667
  %v7669 = vlaneseq
  %v7670 = vshrl.u32 %v7669, 7
  %v7671 = vsub.s32 %v7668, %v7670
  %v7672 = vrot.slane %v7658, %v7671
  %v7673 = vcombine.low %v7244, %v7568
  %v7674 = vcombine.high %v7244, %v7568
  %v7676 = vunpack.c.l.s4 1983009808
  %v7677 = vunpack.c.0.s8 %v7676
  %v7678 = vlaneseq
  %v7679 = vshrl.u32 %v7678, 7
  %v7680 = vsub.s32 %v7677, %v7679
  %v7681 = vrot.slane %v7673, %v7680
  %v7683 = vunpack.c.l.s4 1983009808
  %v7684 = vunpack.c.0.s8 %v7683
  %v7685 = vlaneseq
  %v7686 = vshrl.u32 %v7685, 7
  %v7687 = vsub.s32 %v7684, %v7686
  %v7688 = vrot.slane %v7674, %v7687
  %v7689 = vcombine.low %v7665, %v7681
  %v7690 = vcombine.high %v7665, %v7681
  %v7692 = vunpack.c.l.s4 1934713408
  %v7693 = vunpack.c.0.s8 %v7692
  %v7694 = vlaneseq
  %v7695 = vshrl.u32 %v7694, 7
  %v7696 = vsub.s32 %v7693, %v7695
  %v7697 = vrot.slane %v7689, %v7696
  %v7699 = vunpack.c.l.s4 1934713408
  %v7700 = vunpack.c.0.s8 %v7699
  %v7701 = vlaneseq
  %v7702 = vshrl.u32 %v7701, 7
  %v7703 = vsub.s32 %v7700, %v7702
  %v7704 = vrot.slane %v7690, %v7703
  %v7705 = vcombine.low %v7672, %v7688
  %v7706 = vcombine.high %v7672, %v7688
  %v7708 = vunpack.c.l.s4 1934713408
  %v7709 = vunpack.c.0.s8 %v7708
  %v7710 = vlaneseq
  %v7711 = vshrl.u32 %v7710, 7
  %v7712 = vsub.s32 %v7709, %v7711
  %v7713 = vrot.slane %v7705, %v7712
  %v7715 = vunpack.c.l.s4 1934713408
  %v7716 = vunpack.c.0.s8 %v7715
  %v7717 = vlaneseq
  %v7718 = vshrl.u32 %v7717, 7
  %v7719 = vsub.s32 %v7716, %v7718
  %v7720 = vrot.slane %v7706, %v7719
  %v7721 = vcombine.high %v7697, 0.0
  %v7722 = vcombine.high %v7704, 0.0
  %v7723 = vcombine.high %v7713, 0.0
  %v7724 = vcombine.high %v7720, 0.0
  %v7725 = vcombine.low %v7087, %v7411
  %v7726 = vcombine.high %v7087, %v7411
  %v7728 = vunpack.c.l.s4 1983009808
  %v7729 = vunpack.c.0.s8 %v7728
  %v7730 = vlaneseq
  %v7731 = vshrl.u32 %v7730, 7
  %v7732 = vsub.s32 %v7729, %v7731
  %v7733 = vrot.slane %v7725, %v7732
  %v7735 = vunpack.c.l.s4 1983009808
  %v7736 = vunpack.c.0.s8 %v7735
  %v7737 = vlaneseq
  %v7738 = vshrl.u32 %v7737, 7
  %v7739 = vsub.s32 %v7736, %v7738
  %v7740 = vrot.slane %v7726, %v7739
  %v7741 = vcombine.low %v7249, %v7573
  %v7742 = vcombine.high %v7249, %v7573
  %v7744 = vunpack.c.l.s4 1983009808
  %v7745 = vunpack.c.0.s8 %v7744
  %v7746 = vlaneseq
  %v7747 = vshrl.u32 %v7746, 7
  %v7748 = vsub.s32 %v7745, %v7747
  %v7749 = vrot.slane %v7741, %v7748
  %v7751 = vunpack.c.l.s4 1983009808
  %v7752 = vunpack.c.0.s8 %v7751
  %v7753 = vlaneseq
  %v7754 = vshrl.u32 %v7753, 7
  %v7755 = vsub.s32 %v7752, %v7754
  %v7756 = vrot.slane %v7742, %v7755
  %v7757 = vcombine.low %v7733, %v7749
  %v7758 = vcombine.high %v7733, %v7749
  %v7760 = vunpack.c.l.s4 1934713408
  %v7761 = vunpack.c.0.s8 %v7760
  %v7762 = vlaneseq
  %v7763 = vshrl.u32 %v7762, 7
  %v7764 = vsub.s32 %v7761, %v7763
  %v7765 = vrot.slane %v7757, %v7764
  %v7767 = vunpack.c.l.s4 1934713408
  %v7768 = vunpack.c.0.s8 %v7767
  %v7769 = vlaneseq
  %v7770 = vshrl.u32 %v7769, 7
  %v7771 = vsub.s32 %v7768, %v7770
  %v7772 = vrot.slane %v7758, %v7771
  %v7773 = vcombine.low %v7740, %v7756
  %v7774 = vcombine.high %v7740, %v7756
  %v7776 = vunpack.c.l.s4 1934713408
  %v7777 = vunpack.c.0.s8 %v7776
  %v7778 = vlaneseq
  %v7779 = vshrl.u32 %v7778, 7
  %v7780 = vsub.s32 %v7777, %v7779
  %v7781 = vrot.slane %v7773, %v7780
  %v7783 = vunpack.c.l.s4 1934713408
  %v7784 = vunpack.c.0.s8 %v7783
  %v7785 = vlaneseq
  %v7786 = vshrl.u32 %v7785, 7
  %v7787 = vsub.s32 %v7784, %v7786
  %v7788 = vrot.slane %v7774, %v7787
  %v7789 = vcombine.high %v7765, 0.0
  %v7790 = vcombine.high %v7772, 0.0
  %v7791 = vcombine.high %v7781, 0.0
  %v7792 = vcombine.high %v7788, 0.0
  %v7793 = vcombine.low %v7163, %v7487
  %v7794 = vcombine.high %v7163, %v7487
  %v7796 = vunpack.c.l.s4 1983009808
  %v7797 = vunpack.c.0.s8 %v7796
  %v7798 = vlaneseq
  %v7799 = vshrl.u32 %v7798, 7
  %v7800 = vsub.s32 %v7797, %v7799
  %v7801 = vrot.slane %v7793, %v7800
  %v7803 = vunpack.c.l.s4 1983009808
  %v7804 = vunpack.c.0.s8 %v7803
  %v7805 = vlaneseq
  %v7806 = vshrl.u32 %v7805, 7
  %v7807 = vsub.s32 %v7804, %v7806
  %v7808 = vrot.slane %v7794, %v7807
  %v7809 = vcombine.low %v7325, %v7649
  %v7810 = vcombine.high %v7325, %v7649
  %v7812 = vunpack.c.l.s4 1983009808
  %v7813 = vunpack.c.0.s8 %v7812
  %v7814 = vlaneseq
  %v7815 = vshrl.u32 %v7814, 7
  %v7816 = vsub.s32 %v7813, %v7815
  %v7817 = vrot.slane %v7809, %v7816
  %v7819 = vunpack.c.l.s4 1983009808
  %v7820 = vunpack.c.0.s8 %v7819
  %v7821 = vlaneseq
  %v7822 = vshrl.u32 %v7821, 7
  %v7823 = vsub.s32 %v7820, %v7822
  %v7824 = vrot.slane %v7810, %v7823
  %v7825 = vcombine.low %v7801, %v7817
  %v7826 = vcombine.high %v7801, %v7817
  %v7828 = vunpack.c.l.s4 1934713408
  %v7829 = vunpack.c.0.s8 %v7828
  %v7830 = vlaneseq
  %v7831 = vshrl.u32 %v7830, 7
  %v7832 = vsub.s32 %v7829, %v7831
  %v7833 = vrot.slane %v7825, %v7832
  %v7835 = vunpack.c.l.s4 1934713408
  %v7836 = vunpack.c.0.s8 %v7835
  %v7837 = vlaneseq
  %v7838 = vshrl.u32 %v7837, 7
  %v7839 = vsub.s32 %v7836, %v7838
  %v7840 = vrot.slane %v7826, %v7839
  %v7841 = vcombine.low %v7808, %v7824
  %v7842 = vcombine.high %v7808, %v7824
  %v7844 = vunpack.c.l.s4 1934713408
  %v7845 = vunpack.c.0.s8 %v7844
  %v7846 = vlaneseq
  %v7847 = vshrl.u32 %v7846, 7
  %v7848 = vsub.s32 %v7845, %v7847
  %v7849 = vrot.slane %v7841, %v7848
  %v7851 = vunpack.c.l.s4 1934713408
  %v7852 = vunpack.c.0.s8 %v7851
  %v7853 = vlaneseq
  %v7854 = vshrl.u32 %v7853, 7
  %v7855 = vsub.s32 %v7852, %v7854
  %v7856 = vrot.slane %v7842, %v7855
  %v7857 = vcombine.high %v7833, 0.0
  %v7858 = vcombine.high %v7840, 0.0
  %v7859 = vcombine.high %v7849, 0.0
  %v7860 = vcombine.high %v7856, 0.0
  %v7861 = vcombine.low %v7168, %v7492
  %v7862 = vcombine.high %v7168, %v7492
  %v7864 = vunpack.c.l.s4 1983009808
  %v7865 = vunpack.c.0.s8 %v7864
  %v7866 = vlaneseq
  %v7867 = vshrl.u32 %v7866, 7
  %v7868 = vsub.s32 %v7865, %v7867
  %v7869 = vrot.slane %v7861, %v7868
  %v7871 = vunpack.c.l.s4 1983009808
  %v7872 = vunpack.c.0.s8 %v7871
  %v7873 = vlaneseq
  %v7874 = vshrl.u32 %v7873, 7
  %v7875 = vsub.s32 %v7872, %v7874
  %v7876 = vrot.slane %v7862, %v7875
  %v7877 = vcombine.low %v7330, %v7654
  %v7878 = vcombine.high %v7330, %v7654
  %v7880 = vunpack.c.l.s4 1983009808
  %v7881 = vunpack.c.0.s8 %v7880
  %v7882 = vlaneseq
  %v7883 = vshrl.u32 %v7882, 7
  %v7884 = vsub.s32 %v7881, %v7883
  %v7885 = vrot.slane %v7877, %v7884
  %v7887 = vunpack.c.l.s4 1983009808
  %v7888 = vunpack.c.0.s8 %v7887
  %v7889 = vlaneseq
  %v7890 = vshrl.u32 %v7889, 7
  %v7891 = vsub.s32 %v7888, %v7890
  %v7892 = vrot.slane %v7878, %v7891
  %v7893 = vcombine.low %v7869, %v7885
  %v7894 = vcombine.high %v7869, %v7885
  %v7896 = vunpack.c.l.s4 1934713408
  %v7897 = vunpack.c.0.s8 %v7896
  %v7898 = vlaneseq
  %v7899 = vshrl.u32 %v7898, 7
  %v7900 = vsub.s32 %v7897, %v7899
  %v7901 = vrot.slane %v7893, %v7900
  %v7903 = vunpack.c.l.s4 1934713408
  %v7904 = vunpack.c.0.s8 %v7903
  %v7905 = vlaneseq
  %v7906 = vshrl.u32 %v7905, 7
  %v7907 = vsub.s32 %v7904, %v7906
  %v7908 = vrot.slane %v7894, %v7907
  %v7909 = vcombine.low %v7876, %v7892
  %v7910 = vcombine.high %v7876, %v7892
  %v7912 = vunpack.c.l.s4 1934713408
  %v7913 = vunpack.c.0.s8 %v7912
  %v7914 = vlaneseq
  %v7915 = vshrl.u32 %v7914, 7
  %v7916 = vsub.s32 %v7913, %v7915
  %v7917 = vrot.slane %v7909, %v7916
  %v7919 = vunpack.c.l.s4 1934713408
  %v7920 = vunpack.c.0.s8 %v7919
  %v7921 = vlaneseq
  %v7922 = vshrl.u32 %v7921, 7
  %v7923 = vsub.s32 %v7920, %v7922
  %v7924 = vrot.slane %v7910, %v7923
  %v7925 = vcombine.high %v7901, 0.0
  %v7926 = vcombine.high %v7908, 0.0
  %v7927 = vcombine.high %v7917, 0.0
  %v7928 = vcombine.high %v7924, 0.0
  %v7929 = vcombine.low %v7697, %v7704
  %v7931 = vunpack.c.l.s4 1983009808
  %v7932 = vunpack.c.0.s8 %v7931
  %v7933 = vlaneseq
  %v7934 = vshrl.u32 %v7933, 7
  %v7935 = vsub.s32 %v7932, %v7934
  %v7936 = vrot.slane %v7929, %v7935
  %v7937 = vcombine.low %v7721, %v7722
  %v7939 = vunpack.c.l.s4 1983009808
  %v7940 = vunpack.c.0.s8 %v7939
  %v7941 = vlaneseq
  %v7942 = vshrl.u32 %v7941, 7
  %v7943 = vsub.s32 %v7940, %v7942
  %v7944 = vrot.slane %v7937, %v7943
  %v7945 = vcombine.low %v7713, %v7720
  %v7947 = vunpack.c.l.s4 1983009808
  %v7948 = vunpack.c.0.s8 %v7947
  %v7949 = vlaneseq
  %v7950 = vshrl.u32 %v7949, 7
  %v7951 = vsub.s32 %v7948, %v7950
  %v7952 = vrot.slane %v7945, %v7951
  %v7953 = vcombine.low %v7723, %v7724
  %v7955 = vunpack.c.l.s4 1983009808
  %v7956 = vunpack.c.0.s8 %v7955
  %v7957 = vlaneseq
  %v7958 = vshrl.u32 %v7957, 7
  %v7959 = vsub.s32 %v7956, %v7958
  %v7960 = vrot.slane %v7953, %v7959
  %v7961 = vcombine.low %v7936, %v7944
  %v7962 = vcombine.high %v7936, %v7944
  %v7964 = vunpack.c.l.s4 1934713408
  %v7965 = vunpack.c.0.s8 %v7964
  %v7966 = vlaneseq
  %v7967 = vshrl.u32 %v7966, 7
  %v7968 = vsub.s32 %v7965, %v7967
  %v7969 = vrot.slane %v7961, %v7968
  %v7971 = vunpack.c.l.s4 1934713408
  %v7972 = vunpack.c.0.s8 %v7971
  %v7973 = vlaneseq
  %v7974 = vshrl.u32 %v7973, 7
  %v7975 = vsub.s32 %v7972, %v7974
  %v7976 = vrot.slane %v7962, %v7975
  %v7977 = vcombine.low %v7952, %v7960
  %v7978 = vcombine.high %v7952, %v7960
  %v7980 = vunpack.c.l.s4 1934713408
  %v7981 = vunpack.c.0.s8 %v7980
  %v7982 = vlaneseq
  %v7983 = vshrl.u32 %v7982, 7
  %v7984 = vsub.s32 %v7981, %v7983
  %v7985 = vrot.slane %v7977, %v7984
  %v7987 = vunpack.c.l.s4 1934713408
  %v7988 = vunpack.c.0.s8 %v7987
  %v7989 = vlaneseq
  %v7990 = vshrl.u32 %v7989, 7
  %v7991 = vsub.s32 %v7988, %v7990
  %v7992 = vrot.slane %v7978, %v7991
  %v7993 = vcombine.low %v7969, %v7985
  %v7994 = vcombine.high %v7969, %v7985
  %v7995 = vcombine.low %v7976, %v7992
  %v7996 = vcombine.high %v7976, %v7992
  %v7997 = vcombine.low %v7765, %v7772
  %v7999 = vunpack.c.l.s4 1983009808
  %v8000 = vunpack.c.0.s8 %v7999
  %v8001 = vlaneseq
  %v8002 = vshrl.u32 %v8001, 7
  %v8003 = vsub.s32 %v8000, %v8002
  %v8004 = vrot.slane %v7997, %v8003
  %v8005 = vcombine.low %v7789, %v7790
  %v8007 = vunpack.c.l.s4 1983009808
  %v8008 = vunpack.c.0.s8 %v8007
  %v8009 = vlaneseq
  %v8010 = vshrl.u32 %v8009, 7
  %v8011 = vsub.s32 %v8008, %v8010
  %v8012 = vrot.slane %v8005, %v8011
  %v8013 = vcombine.low %v7781, %v7788
  %v8015 = vunpack.c.l.s4 1983009808
  %v8016 = vunpack.c.0.s8 %v8015
  %v8017 = vlaneseq
  %v8018 = vshrl.u32 %v8017, 7
  %v8019 = vsub.s32 %v8016, %v8018
  %v8020 = vrot.slane %v8013, %v8019
  %v8021 = vcombine.low %v7791, %v7792
  %v8023 = vunpack.c.l.s4 1983009808
  %v8024 = vunpack.c.0.s8 %v8023
  %v8025 = vlaneseq
  %v8026 = vshrl.u32 %v8025, 7
  %v8027 = vsub.s32 %v8024, %v8026
  %v8028 = vrot.slane %v8021, %v8027
  %v8029 = vcombine.low %v8004, %v8012
  %v8030 = vcombine.high %v8004, %v8012
  %v8032 = vunpack.c.l.s4 1934713408
  %v8033 = vunpack.c.0.s8 %v8032
  %v8034 = vlaneseq
  %v8035 = vshrl.u32 %v8034, 7
  %v8036 = vsub.s32 %v8033, %v8035
  %v8037 = vrot.slane %v8029, %v8036
  %v8039 = vunpack.c.l.s4 1934713408
  %v8040 = vunpack.c.0.s8 %v8039
  %v8041 = vlaneseq
  %v8042 = vshrl.u32 %v8041, 7
  %v8043 = vsub.s32 %v8040, %v8042
  %v8044 = vrot.slane %v8030, %v8043
  %v8045 = vcombine.low %v8020, %v8028
  %v8046 = vcombine.high %v8020, %v8028
  %v8048 = vunpack.c.l.s4 1934713408
  %v8049 = vunpack.c.0.s8 %v8048
  %v8050 = vlaneseq
  %v8051 = vshrl.u32 %v8050, 7
  %v8052 = vsub.s32 %v8049, %v8051
  %v8053 = vrot.slane %v8045, %v8052
  %v8055 = vunpack.c.l.s4 1934713408
  %v8056 = vunpack.c.0.s8 %v8055
  %v8057 = vlaneseq
  %v8058 = vshrl.u32 %v8057, 7
  %v8059 = vsub.s32 %v8056, %v8058
  %v8060 = vrot.slane %v8046, %v8059
  %v8061 = vcombine.low %v8037, %v8053
  %v8062 = vcombine.high %v8037, %v8053
  %v8063 = vcombine.low %v8044, %v8060
  %v8064 = vcombine.high %v8044, %v8060
  %v8065 = vcombine.low %v7833, %v7840
  %v8067 = vunpack.c.l.s4 1983009808
  %v8068 = vunpack.c.0.s8 %v8067
  %v8069 = vlaneseq
  %v8070 = vshrl.u32 %v8069, 7
  %v8071 = vsub.s32 %v8068, %v8070
  %v8072 = vrot.slane %v8065, %v8071
  %v8073 = vcombine.low %v7857, %v7858
  %v8075 = vunpack.c.l.s4 1983009808
  %v8076 = vunpack.c.0.s8 %v8075
  %v8077 = vlaneseq
  %v8078 = vshrl.u32 %v8077, 7
  %v8079 = vsub.s32 %v8076, %v8078
  %v8080 = vrot.slane %v8073, %v8079
  %v8081 = vcombine.low %v7849, %v7856
  %v8083 = vunpack.c.l.s4 1983009808
  %v8084 = vunpack.c.0.s8 %v8083
  %v8085 = vlaneseq
  %v8086 = vshrl.u32 %v8085, 7
  %v8087 = vsub.s32 %v8084, %v8086
  %v8088 = vrot.slane %v8081, %v8087
  %v8089 = vcombine.low %v7859, %v7860
  %v8091 = vunpack.c.l.s4 1983009808
  %v8092 = vunpack.c.0.s8 %v8091
  %v8093 = vlaneseq
  %v8094 = vshrl.u32 %v8093, 7
  %v8095 = vsub.s32 %v8092, %v8094
  %v8096 = vrot.slane %v8089, %v8095
  %v8097 = vcombine.low %v8072, %v8080
  %v8098 = vcombine.high %v8072, %v8080
  %v8100 = vunpack.c.l.s4 1934713408
  %v8101 = vunpack.c.0.s8 %v8100
  %v8102 = vlaneseq
  %v8103 = vshrl.u32 %v8102, 7
  %v8104 = vsub.s32 %v8101, %v8103
  %v8105 = vrot.slane %v8097, %v8104
  %v8107 = vunpack.c.l.s4 1934713408
  %v8108 = vunpack.c.0.s8 %v8107
  %v8109 = vlaneseq
  %v8110 = vshrl.u32 %v8109, 7
  %v8111 = vsub.s32 %v8108, %v8110
  %v8112 = vrot.slane %v8098, %v8111
  %v8113 = vcombine.low %v8088, %v8096
  %v8114 = vcombine.high %v8088, %v8096
  %v8116 = vunpack.c.l.s4 1934713408
  %v8117 = vunpack.c.0.s8 %v8116
  %v8118 = vlaneseq
  %v8119 = vshrl.u32 %v8118, 7
  %v8120 = vsub.s32 %v8117, %v8119
  %v8121 = vrot.slane %v8113, %v8120
  %v8123 = vunpack.c.l.s4 1934713408
  %v8124 = vunpack.c.0.s8 %v8123
  %v8125 = vlaneseq
  %v8126 = vshrl.u32 %v8125, 7
  %v8127 = vsub.s32 %v8124, %v8126
  %v8128 = vrot.slane %v8114, %v8127
  %v8129 = vcombine.low %v8105, %v8121
  %v8130 = vcombine.high %v8105, %v8121
  %v8131 = vcombine.low %v8112, %v8128
  %v8132 = vcombine.high %v8112, %v8128
  %v8133 = vcombine.low %v7901, %v7908
  %v8135 = vunpack.c.l.s4 1983009808
  %v8136 = vunpack.c.0.s8 %v8135
  %v8137 = vlaneseq
  %v8138 = vshrl.u32 %v8137, 7
  %v8139 = vsub.s32 %v8136, %v8138
  %v8140 = vrot.slane %v8133, %v8139
  %v8141 = vcombine.low %v7925, %v7926
  %v8143 = vunpack.c.l.s4 1983009808
  %v8144 = vunpack.c.0.s8 %v8143
  %v8145 = vlaneseq
  %v8146 = vshrl.u32 %v8145, 7
  %v8147 = vsub.s32 %v8144, %v8146
  %v8148 = vrot.slane %v8141, %v8147
  %v8149 = vcombine.low %v7917, %v7924
  %v8151 = vunpack.c.l.s4 1983009808
  %v8152 = vunpack.c.0.s8 %v8151
  %v8153 = vlaneseq
  %v8154 = vshrl.u32 %v8153, 7
  %v8155 = vsub.s32 %v8152, %v8154
  %v8156 = vrot.slane %v8149, %v8155
  %v8157 = vcombine.low %v7927, %v7928
  %v8159 = vunpack.c.l.s4 1983009808
  %v8160 = vunpack.c.0.s8 %v8159
  %v8161 = vlaneseq
  %v8162 = vshrl.u32 %v8161, 7
  %v8163 = vsub.s32 %v8160, %v8162
  %v8164 = vrot.slane %v8157, %v8163
  %v8165 = vcombine.low %v8140, %v8148
  %v8166 = vcombine.high %v8140, %v8148
  %v8168 = vunpack.c.l.s4 1934713408
  %v8169 = vunpack.c.0.s8 %v8168
  %v8170 = vlaneseq
  %v8171 = vshrl.u32 %v8170, 7
  %v8172 = vsub.s32 %v8169, %v8171
  %v8173 = vrot.slane %v8165, %v8172
  %v8175 = vunpack.c.l.s4 1934713408
  %v8176 = vunpack.c.0.s8 %v8175
  %v8177 = vlaneseq
  %v8178 = vshrl.u32 %v8177, 7
  %v8179 = vsub.s32 %v8176, %v8178
  %v8180 = vrot.slane %v8166, %v8179
  %v8181 = vcombine.low %v8156, %v8164
  %v8182 = vcombine.high %v8156, %v8164
  %v8184 = vunpack.c.l.s4 1934713408
  %v8185 = vunpack.c.0.s8 %v8184
  %v8186 = vlaneseq
  %v8187 = vshrl.u32 %v8186, 7
  %v8188 = vsub.s32 %v8185, %v8187
  %v8189 = vrot.slane %v8181, %v8188
  %v8191 = vunpack.c.l.s4 1934713408
  %v8192 = vunpack.c.0.s8 %v8191
  %v8193 = vlaneseq
  %v8194 = vshrl.u32 %v8193, 7
  %v8195 = vsub.s32 %v8192, %v8194
  %v8196 = vrot.slane %v8182, %v8195
  %v8197 = vcombine.low %v8173, %v8189
  %v8198 = vcombine.high %v8173, %v8189
  %v8199 = vcombine.low %v8180, %v8196
  %v8200 = vcombine.high %v8180, %v8196
  %8205 = vrot.lane.b32.xlu0 %v7994, 16
  %v8206 = vpop.permute.xlu0 %8205
  %8207 = vrot.lane.b32.xlu0 %v8062, 16
  %v8208 = vpop.permute.xlu0 %8207
  %8209 = vrot.lane.b32.xlu0 %v8130, 16
  %v8210 = vpop.permute.xlu0 %8209
  %8211 = vrot.lane.b32.xlu0 %v8198, 16
  %v8212 = vpop.permute.xlu0 %8211
  %8221 = vrot.lane.b32.xlu0 %v7995, 32
  %v8222 = vpop.permute.xlu0 %8221
  %8223 = vrot.lane.b32.xlu0 %v8063, 32
  %v8224 = vpop.permute.xlu0 %8223
  %8225 = vrot.lane.b32.xlu0 %v8131, 32
  %v8226 = vpop.permute.xlu0 %8225
  %8227 = vrot.lane.b32.xlu0 %v8199, 32
  %v8228 = vpop.permute.xlu0 %8227
  %8237 = vrot.lane.b32.xlu0 %v7996, 48
  %v8238 = vpop.permute.xlu0 %8237
  %8239 = vrot.lane.b32.xlu0 %v8064, 48
  %v8240 = vpop.permute.xlu0 %8239
  %8241 = vrot.lane.b32.xlu0 %v8132, 48
  %v8242 = vpop.permute.xlu0 %8241
  %8243 = vrot.lane.b32.xlu0 %v8200, 48
  %v8244 = vpop.permute.xlu0 %8243
  %v8249 = vsel %vm3182, %v7993, %v8206
  %v8250 = vsel %vm3182, %v8061, %v8208
  %v8251 = vsel %vm3182, %v8129, %v8210
  %v8252 = vsel %vm3182, %v8197, %v8212
  %vm8253 = vcmask 261120
  %v8254 = vsel %vm8253, %v8249, %v8222
  %v8255 = vsel %vm8253, %v8250, %v8224
  %v8256 = vsel %vm8253, %v8251, %v8226
  %v8257 = vsel %vm8253, %v8252, %v8228
  %vm8258 = vcmask 392192
  %v8259 = vsel %vm8258, %v8254, %v8238
  %v8260 = vsel %vm8258, %v8255, %v8240
  %v8261 = vsel %vm8258, %v8256, %v8242
  %v8262 = vsel %vm8258, %v8257, %v8244
  %v8263 = vld [vmem:[%s6] sm:$0xff]
  %v8264 = vld [vmem:[%s6 + $0x8] sm:$0xff]
  %v8265 = vld [vmem:[%s6 + $0x10] sm:$0xff]
  %v8266 = vld [vmem:[%s6 + $0x18] sm:$0xff]
  %v8267 = vld [vmem:[%s6 + $0x20] sm:$0xff]
  %v8268 = vld [vmem:[%s6 + $0x28] sm:$0xff]
  %v8269 = vld [vmem:[%s6 + $0x30] sm:$0xff]
  %v8270 = vld [vmem:[%s6 + $0x38] sm:$0xff]
  %v8271 = vld [vmem:[%s7] sm:$0x1]
  %v8273 = vlaneseq
  %v8274 = vshrl.u32 %v8273, 7
  %v8275 = vsub.s32 0, %v8274
  %v8276 = vrot.slane %v8271, %v8275
  %v8279 = vsel %vm525, %v8259, 0
  %v8282 = vsel %vm525, %v8260, 0
  %v8285 = vsel %vm525, %v8261, 0
  %v8288 = vsel %vm525, %v8262, 0
  %8290 = vmatprep.subr.mxu0 0.0
  %8291 = vmatpush1.msra.mxu0 0.0
  %8292 = vmatprep.subr.mxu0 0.0
  %8293 = vmatpush1.msra.mxu0 0.0
  %8294 = vmatprep.subr.mxu0 0.0
  %8295 = vmatpush1.msra.mxu0 0.0
  %8296 = vmatprep.subr.mxu0 0.0
  %8297 = vmatpush1.msra.mxu0 0.0
  %8298 = vmatprep.subr.mxu0 0.0
  %8299 = vmatpush1.msra.mxu0 0.0
  %8300 = vmatprep.subr.mxu0 0.0
  %8301 = vmatpush1.msra.mxu0 0.0
  %8302 = vmatprep.subr.mxu0 0.0
  %8303 = vmatpush1.msra.mxu0 0.0
  %8304 = vmatprep.subr.mxu0 0.0
  %8305 = vmatpush1.msra.mxu0 0.0
  %8306 = vmatprep.subr.mxu0 0.0
  %8307 = vmatpush1.msra.mxu0 %v8270
  %8308 = vmatprep.subr.mxu0 0.0
  %8309 = vmatpush1.msra.mxu0 %v8269
  %8310 = vmatprep.subr.mxu0 0.0
  %8311 = vmatpush1.msra.mxu0 %v8268
  %8312 = vmatprep.subr.mxu0 0.0
  %8313 = vmatpush1.msra.mxu0 %v8267
  %8314 = vmatprep.subr.mxu0 0.0
  %8315 = vmatpush1.msra.mxu0 %v8266
  %8316 = vmatprep.subr.mxu0 0.0
  %8317 = vmatpush1.msra.mxu0 %v8265
  %8318 = vmatprep.subr.mxu0 0.0
  %8319 = vmatpush1.msra.mxu0 %v8264
  %8320 = vmatprep.subr.mxu0 0.0
  %8321 = vmatpush1.msra.mxu0 %v8263
  %8322 = vmatprep.subr.mxu0 0.0
  %8323 = vmatpush2.msra.mxu0 0.0
  %8324 = vmatprep.subr.mxu0 0.0
  %8325 = vmatpush2.msra.mxu0 0.0
  %8326 = vmatprep.subr.mxu0 0.0
  %8327 = vmatpush2.msra.mxu0 0.0
  %8328 = vmatprep.subr.mxu0 0.0
  %8329 = vmatpush2.msra.mxu0 0.0
  %8330 = vmatprep.subr.mxu0 0.0
  %8331 = vmatpush2.msra.mxu0 0.0
  %8332 = vmatprep.subr.mxu0 0.0
  %8333 = vmatpush2.msra.mxu0 0.0
  %8334 = vmatprep.subr.mxu0 0.0
  %8335 = vmatpush2.msra.mxu0 0.0
  %8336 = vmatprep.subr.mxu0 0.0
  %8337 = vmatpush2.msra.mxu0 0.0
  %8338 = vmatprep.subr.mxu0 0.0
  %8339 = vmatpush2.msra.mxu0 0.0
  %8340 = vmatprep.subr.mxu0 0.0
  %8341 = vmatpush2.msra.mxu0 0.0
  %8342 = vmatprep.subr.mxu0 0.0
  %8343 = vmatpush2.msra.mxu0 0.0
  %8344 = vmatprep.subr.mxu0 0.0
  %8345 = vmatpush2.msra.mxu0 0.0
  %8346 = vmatprep.subr.mxu0 0.0
  %8347 = vmatpush2.msra.mxu0 0.0
  %8348 = vmatprep.subr.mxu0 0.0
  %8349 = vmatpush2.msra.mxu0 0.0
  %8350 = vmatprep.subr.mxu0 0.0
  %8351 = vmatpush2.msra.mxu0 0.0
  %8352 = vmatprep.subr.mxu0 0.0
  %8353 = vmatpush2.msra.mxu0 0.0
  %8354 = vmatprep.mubr.f32.mxu0 0.0
  %8355 = vmatmul.mubr.f32.gmra.mxu0 %v8279
  %v8356 = vpop.f32.mrf.mxu0
  %v8357 = vadd.f32 %v8276, %v8356
  %v8358 = vpop.f32.mrf.mxu0
  %8359 = vmatprep.mubr.f32.mxu0 0.0
  %8360 = vmatmul.mubr.f32.gmra.mxu0 %v8282
  %v8361 = vpop.f32.mrf.mxu0
  %v8362 = vadd.f32 %v8276, %v8361
  %v8363 = vpop.f32.mrf.mxu0
  %8364 = vmatprep.mubr.f32.mxu0 0.0
  %8365 = vmatmul.mubr.f32.gmra.mxu0 %v8285
  %v8366 = vpop.f32.mrf.mxu0
  %v8367 = vadd.f32 %v8276, %v8366
  %v8368 = vpop.f32.mrf.mxu0
  %8369 = vmatprep.mubr.f32.mxu0 0.0
  %8370 = vmatmul.mubr.f32.gmra.mxu0 %v8288
  %v8371 = vpop.f32.mrf.mxu0
  %v8372 = vadd.f32 %v8276, %v8371
  %v8373 = vpop.f32.mrf.mxu0
  %8374 = vdwg.mxu0
  %v8375 = vsel %vm525, %v8357, 0.0
  %8376 = vadd.xlane.f32.xlu0 %v8375
  %v8377 = vpop.xlane.xlu0 %8376
  %v8378 = vsel %vm525, %v8362, 0.0
  %8379 = vadd.xlane.f32.xlu0 %v8378
  %v8380 = vpop.xlane.xlu0 %8379
  %v8381 = vsel %vm525, %v8367, 0.0
  %8382 = vadd.xlane.f32.xlu0 %v8381
  %v8383 = vpop.xlane.xlu0 %8382
  %v8384 = vsel %vm525, %v8372, 0.0
  %8385 = vadd.xlane.f32.xlu0 %v8384
  %v8386 = vpop.xlane.xlu0 %8385
  %v8387 = vmul.f32 %v8377, %v550
  %v8388 = vmul.f32 %v8380, %v550
  %v8389 = vmul.f32 %v8383, %v550
  %v8390 = vmul.f32 %v8386, %v550
  %v8391 = vsub.f32 %v8357, %v8387
  %v8392 = vsub.f32 %v8362, %v8388
  %v8393 = vsub.f32 %v8367, %v8389
  %v8394 = vsub.f32 %v8372, %v8390
  %v8395 = vmul.f32 %v8391, %v8391
  %v8396 = vmul.f32 %v8392, %v8392
  %v8397 = vmul.f32 %v8393, %v8393
  %v8398 = vmul.f32 %v8394, %v8394
  %v8399 = vsel %vm525, %v8395, 0.0
  %8400 = vadd.xlane.f32.xlu0 %v8399
  %v8401 = vpop.xlane.xlu0 %8400
  %v8402 = vsel %vm525, %v8396, 0.0
  %8403 = vadd.xlane.f32.xlu0 %v8402
  %v8404 = vpop.xlane.xlu0 %8403
  %v8405 = vsel %vm525, %v8397, 0.0
  %8406 = vadd.xlane.f32.xlu0 %v8405
  %v8407 = vpop.xlane.xlu0 %8406
  %v8408 = vsel %vm525, %v8398, 0.0
  %8409 = vadd.xlane.f32.xlu0 %v8408
  %v8410 = vpop.xlane.xlu0 %8409
  %v8411 = vmul.f32 %v8401, %v550
  %v8412 = vmul.f32 %v8404, %v550
  %v8413 = vmul.f32 %v8407, %v550
  %v8414 = vmul.f32 %v8410, %v550
  %v8415 = vadd.f32 %v8411, 1e-07
  %v8416 = vadd.f32 %v8412, 1e-07
  %v8417 = vadd.f32 %v8413, 1e-07
  %v8418 = vadd.f32 %v8414, 1e-07
  %v8419 = vrsqrt.pop %v8415
  %v8420 = vrsqrt.pop %v8416
  %v8421 = vrsqrt.pop %v8417
  %v8422 = vrsqrt.pop %v8418
  %v8423 = vmul.f32 %v8391, %v8419
  %v8424 = vmul.f32 %v8392, %v8420
  %v8425 = vmul.f32 %v8393, %v8421
  %v8426 = vmul.f32 %v8394, %v8422
  %v8427 = vld [vmem:[%s8] sm:$0x1]
  %v8429 = vlaneseq
  %v8430 = vshrl.u32 %v8429, 7
  %v8431 = vsub.s32 0, %v8430
  %v8432 = vrot.slane %v8427, %v8431
  %v8434 = vmul.f32 %v8423, %v8432
  %v8435 = vmul.f32 %v8424, %v8432
  %v8436 = vmul.f32 %v8425, %v8432
  %v8437 = vmul.f32 %v8426, %v8432
  %v8438 = vld [vmem:[%s9] sm:$0x1]
  %v8440 = vlaneseq
  %v8441 = vshrl.u32 %v8440, 7
  %v8442 = vsub.s32 0, %v8441
  %v8443 = vrot.slane %v8438, %v8442
  %v8445 = vadd.f32 %v8434, %v8443
  %v8446 = vadd.f32 %v8435, %v8443
  %v8447 = vadd.f32 %v8436, %v8443
  %v8448 = vadd.f32 %v8437, %v8443
  %v8449 = vcombine.high %v8445, 0.0
  %v8451 = vunpack.c.l.s4 1983009808
  %v8452 = vunpack.c.0.s8 %v8451
  %v8453 = vlaneseq
  %v8454 = vshrl.u32 %v8453, 7
  %v8455 = vsub.s32 %v8452, %v8454
  %v8456 = vrot.slane %v8445, %v8455
  %v8458 = vunpack.c.l.s4 1983009808
  %v8459 = vunpack.c.0.s8 %v8458
  %v8460 = vlaneseq
  %v8461 = vshrl.u32 %v8460, 7
  %v8462 = vsub.s32 %v8459, %v8461
  %v8463 = vrot.slane %v8449, %v8462
  %v8464 = vcombine.high %v8447, 0.0
  %v8466 = vunpack.c.l.s4 1983009808
  %v8467 = vunpack.c.0.s8 %v8466
  %v8468 = vlaneseq
  %v8469 = vshrl.u32 %v8468, 7
  %v8470 = vsub.s32 %v8467, %v8469
  %v8471 = vrot.slane %v8447, %v8470
  %v8473 = vunpack.c.l.s4 1983009808
  %v8474 = vunpack.c.0.s8 %v8473
  %v8475 = vlaneseq
  %v8476 = vshrl.u32 %v8475, 7
  %v8477 = vsub.s32 %v8474, %v8476
  %v8478 = vrot.slane %v8464, %v8477
  %v8479 = vcombine.low %v8456, %v8471
  %v8480 = vcombine.high %v8456, %v8471
  %v8482 = vunpack.c.l.s4 1934713408
  %v8483 = vunpack.c.0.s8 %v8482
  %v8484 = vlaneseq
  %v8485 = vshrl.u32 %v8484, 7
  %v8486 = vsub.s32 %v8483, %v8485
  %v8487 = vrot.slane %v8479, %v8486
  %v8489 = vunpack.c.l.s4 1934713408
  %v8490 = vunpack.c.0.s8 %v8489
  %v8491 = vlaneseq
  %v8492 = vshrl.u32 %v8491, 7
  %v8493 = vsub.s32 %v8490, %v8492
  %v8494 = vrot.slane %v8480, %v8493
  %v8495 = vcombine.low %v8463, %v8478
  %v8496 = vcombine.high %v8463, %v8478
  %v8498 = vunpack.c.l.s4 1934713408
  %v8499 = vunpack.c.0.s8 %v8498
  %v8500 = vlaneseq
  %v8501 = vshrl.u32 %v8500, 7
  %v8502 = vsub.s32 %v8499, %v8501
  %v8503 = vrot.slane %v8495, %v8502
  %v8505 = vunpack.c.l.s4 1934713408
  %v8506 = vunpack.c.0.s8 %v8505
  %v8507 = vlaneseq
  %v8508 = vshrl.u32 %v8507, 7
  %v8509 = vsub.s32 %v8506, %v8508
  %v8510 = vrot.slane %v8496, %v8509
  %v8511 = vcombine.high %v8487, 0.0
  %v8512 = vcombine.high %v8494, 0.0
  %v8513 = vcombine.high %v8503, 0.0
  %v8514 = vcombine.high %v8510, 0.0
  %v8515 = vcombine.high %v8446, 0.0
  %v8517 = vunpack.c.l.s4 1983009808
  %v8518 = vunpack.c.0.s8 %v8517
  %v8519 = vlaneseq
  %v8520 = vshrl.u32 %v8519, 7
  %v8521 = vsub.s32 %v8518, %v8520
  %v8522 = vrot.slane %v8446, %v8521
  %v8524 = vunpack.c.l.s4 1983009808
  %v8525 = vunpack.c.0.s8 %v8524
  %v8526 = vlaneseq
  %v8527 = vshrl.u32 %v8526, 7
  %v8528 = vsub.s32 %v8525, %v8527
  %v8529 = vrot.slane %v8515, %v8528
  %v8530 = vcombine.high %v8448, 0.0
  %v8532 = vunpack.c.l.s4 1983009808
  %v8533 = vunpack.c.0.s8 %v8532
  %v8534 = vlaneseq
  %v8535 = vshrl.u32 %v8534, 7
  %v8536 = vsub.s32 %v8533, %v8535
  %v8537 = vrot.slane %v8448, %v8536
  %v8539 = vunpack.c.l.s4 1983009808
  %v8540 = vunpack.c.0.s8 %v8539
  %v8541 = vlaneseq
  %v8542 = vshrl.u32 %v8541, 7
  %v8543 = vsub.s32 %v8540, %v8542
  %v8544 = vrot.slane %v8530, %v8543
  %v8545 = vcombine.low %v8522, %v8537
  %v8546 = vcombine.high %v8522, %v8537
  %v8548 = vunpack.c.l.s4 1934713408
  %v8549 = vunpack.c.0.s8 %v8548
  %v8550 = vlaneseq
  %v8551 = vshrl.u32 %v8550, 7
  %v8552 = vsub.s32 %v8549, %v8551
  %v8553 = vrot.slane %v8545, %v8552
  %v8555 = vunpack.c.l.s4 1934713408
  %v8556 = vunpack.c.0.s8 %v8555
  %v8557 = vlaneseq
  %v8558 = vshrl.u32 %v8557, 7
  %v8559 = vsub.s32 %v8556, %v8558
  %v8560 = vrot.slane %v8546, %v8559
  %v8561 = vcombine.low %v8529, %v8544
  %v8562 = vcombine.high %v8529, %v8544
  %v8564 = vunpack.c.l.s4 1934713408
  %v8565 = vunpack.c.0.s8 %v8564
  %v8566 = vlaneseq
  %v8567 = vshrl.u32 %v8566, 7
  %v8568 = vsub.s32 %v8565, %v8567
  %v8569 = vrot.slane %v8561, %v8568
  %v8571 = vunpack.c.l.s4 1934713408
  %v8572 = vunpack.c.0.s8 %v8571
  %v8573 = vlaneseq
  %v8574 = vshrl.u32 %v8573, 7
  %v8575 = vsub.s32 %v8572, %v8574
  %v8576 = vrot.slane %v8562, %v8575
  %v8577 = vcombine.high %v8553, 0.0
  %v8578 = vcombine.high %v8560, 0.0
  %v8579 = vcombine.high %v8569, 0.0
  %v8580 = vcombine.high %v8576, 0.0
  %v8581 = vcombine.low %v8487, %v8494
  %v8583 = vunpack.c.l.s4 1983009808
  %v8584 = vunpack.c.0.s8 %v8583
  %v8585 = vlaneseq
  %v8586 = vshrl.u32 %v8585, 7
  %v8587 = vsub.s32 %v8584, %v8586
  %v8588 = vrot.slane %v8581, %v8587
  %v8589 = vcombine.low %v8511, %v8512
  %v8591 = vunpack.c.l.s4 1983009808
  %v8592 = vunpack.c.0.s8 %v8591
  %v8593 = vlaneseq
  %v8594 = vshrl.u32 %v8593, 7
  %v8595 = vsub.s32 %v8592, %v8594
  %v8596 = vrot.slane %v8589, %v8595
  %v8597 = vcombine.low %v8503, %v8510
  %v8599 = vunpack.c.l.s4 1983009808
  %v8600 = vunpack.c.0.s8 %v8599
  %v8601 = vlaneseq
  %v8602 = vshrl.u32 %v8601, 7
  %v8603 = vsub.s32 %v8600, %v8602
  %v8604 = vrot.slane %v8597, %v8603
  %v8605 = vcombine.low %v8513, %v8514
  %v8607 = vunpack.c.l.s4 1983009808
  %v8608 = vunpack.c.0.s8 %v8607
  %v8609 = vlaneseq
  %v8610 = vshrl.u32 %v8609, 7
  %v8611 = vsub.s32 %v8608, %v8610
  %v8612 = vrot.slane %v8605, %v8611
  %v8613 = vcombine.low %v8588, %v8596
  %v8615 = vunpack.c.l.s4 1934713408
  %v8616 = vunpack.c.0.s8 %v8615
  %v8617 = vlaneseq
  %v8618 = vshrl.u32 %v8617, 7
  %v8619 = vsub.s32 %v8616, %v8618
  %v8620 = vrot.slane %v8613, %v8619
  %v8621 = vcombine.low %v8604, %v8612
  %v8623 = vunpack.c.l.s4 1934713408
  %v8624 = vunpack.c.0.s8 %v8623
  %v8625 = vlaneseq
  %v8626 = vshrl.u32 %v8625, 7
  %v8627 = vsub.s32 %v8624, %v8626
  %v8628 = vrot.slane %v8621, %v8627
  %v8629 = vcombine.low %v8620, %v8628
  %v8630 = vcombine.high %v8620, %v8628
  %v8631 = vcombine.low %v8553, %v8560
  %v8633 = vunpack.c.l.s4 1983009808
  %v8634 = vunpack.c.0.s8 %v8633
  %v8635 = vlaneseq
  %v8636 = vshrl.u32 %v8635, 7
  %v8637 = vsub.s32 %v8634, %v8636
  %v8638 = vrot.slane %v8631, %v8637
  %v8639 = vcombine.low %v8577, %v8578
  %v8641 = vunpack.c.l.s4 1983009808
  %v8642 = vunpack.c.0.s8 %v8641
  %v8643 = vlaneseq
  %v8644 = vshrl.u32 %v8643, 7
  %v8645 = vsub.s32 %v8642, %v8644
  %v8646 = vrot.slane %v8639, %v8645
  %v8647 = vcombine.low %v8569, %v8576
  %v8649 = vunpack.c.l.s4 1983009808
  %v8650 = vunpack.c.0.s8 %v8649
  %v8651 = vlaneseq
  %v8652 = vshrl.u32 %v8651, 7
  %v8653 = vsub.s32 %v8650, %v8652
  %v8654 = vrot.slane %v8647, %v8653
  %v8655 = vcombine.low %v8579, %v8580
  %v8657 = vunpack.c.l.s4 1983009808
  %v8658 = vunpack.c.0.s8 %v8657
  %v8659 = vlaneseq
  %v8660 = vshrl.u32 %v8659, 7
  %v8661 = vsub.s32 %v8658, %v8660
  %v8662 = vrot.slane %v8655, %v8661
  %v8663 = vcombine.low %v8638, %v8646
  %v8665 = vunpack.c.l.s4 1934713408
  %v8666 = vunpack.c.0.s8 %v8665
  %v8667 = vlaneseq
  %v8668 = vshrl.u32 %v8667, 7
  %v8669 = vsub.s32 %v8666, %v8668
  %v8670 = vrot.slane %v8663, %v8669
  %v8671 = vcombine.low %v8654, %v8662
  %v8673 = vunpack.c.l.s4 1934713408
  %v8674 = vunpack.c.0.s8 %v8673
  %v8675 = vlaneseq
  %v8676 = vshrl.u32 %v8675, 7
  %v8677 = vsub.s32 %v8674, %v8676
  %v8678 = vrot.slane %v8671, %v8677
  %v8679 = vcombine.low %v8670, %v8678
  %v8680 = vcombine.high %v8670, %v8678
  %8683 = vrot.lane.b32.xlu0 %v8630, 64
  %v8684 = vpop.permute.xlu0 %8683
  %8685 = vrot.lane.b32.xlu0 %v8680, 64
  %v8686 = vpop.permute.xlu0 %8685
  %v8689 = vsel %vm525, %v8629, %v8684
  %v8690 = vsel %vm525, %v8679, %v8686
  %8691 = vst [vmem:[%s12] sm:$0xff] %v8689
  %8692 = vst [vmem:[%s12 + $0x8] sm:$0xff] %v8690
  // Predicated region
  $region50: #{attention_forward.1} parent=0 // pred_check
    _
  $region51: #{attention_forward.1} parent=0 // pred_check_branch
    %8694 = sbr.rel (0) target = $region53
  $region52: #{attention_forward.1} parent=0 // pred_region
    _
  $region53: #{attention_forward.1} parent=0 // pred_fallthru
    _
  // Predicated region
  $region54: #{attention_forward.1} parent=0 // pred_check
    _
  $region55: #{attention_forward.1} parent=0 // pred_check_branch
    %8696 = sbr.rel (0) target = $region57
  $region56: #{attention_forward.1} parent=0 // pred_region
    _
  $region57: #{attention_forward.1} parent=0 // pred_fallthru
    _

</llo_original>
